<compile_context>
chip_gen: v5e
topology: v5e:2x2
jax: 0.10.0
libtpu: 0.0.40
codegen_flags: <defaults>
</compile_context>

<pallas_src>
import jax
import jax.numpy as jnp
from jax.experimental import pallas as pl
from jax.experimental.pallas import tpu as pltpu


def make_mlp_kernel(batch_tile: int, seq_len: int):
    TB, S = batch_tile, seq_len

    def mlp_kernel(tok_ref,      # SMEM  (B, S) int32        (scalar prefetch)
                   table_hbm,    # HBM   (V, E_pad) f32      (pl.ANY, stays in HBM)
                   w1_ref,       # VMEM  (E_pad, H) bf16
                   b1_ref,       # VMEM  (1, H) f32
                   w2_ref,       # VMEM  (H, O_pad) bf16
                   b2_ref,       # VMEM  (1, O_pad) f32
                   out_ref,      # VMEM  (TB, O_pad) f32
                   emb_buf,      # VMEM scratch (S*TB, E_pad) f32
                   sems):        # DMA semaphores (S*TB,)
        i = pl.program_id(0)

        # ---- fused embedding gather: one row DMA per token -------------------
        # Rows are laid out seq-major (r = s*TB + b) so the per-seq max below is
        # a chain of contiguous-slice jnp.maximum ops (no 3-D reshape needed).
        copies = []
        for s in range(S):
            for b in range(TB):
                r = s * TB + b
                tok = tok_ref[i * TB + b, s]
                cp = pltpu.make_async_copy(
                    table_hbm.at[pl.ds(tok, 1), :],
                    emb_buf.at[pl.ds(r, 1), :],
                    sems.at[r],
                )
                cp.start()
                copies.append(cp)
        for cp in copies:
            cp.wait()
        # TODO(synk): double-buffer the gather across grid steps to overlap the
        # row DMAs with the MXU work of the previous batch tile.

        # ---- fc1: single 2-D MXU matmul, bf16 in / f32 accumulate ------------
        emb = emb_buf[...].astype(jnp.bfloat16)                   # (S*TB, E_pad)
        h = jnp.dot(emb, w1_ref[...],
                    preferred_element_type=jnp.float32)            # (S*TB, H) f32
        h = jnp.maximum(h + b1_ref[...], 0.0)                      # bias + relu, f32

        # ---- torch.max(x, dim=1).values : max over the sequence axis ---------
        m = h[0:TB, :]
        for s in range(1, S):
            m = jnp.maximum(m, h[s * TB:(s + 1) * TB, :])          # (TB, H) f32

        # dropout: eval mode -> identity
        # TODO(synk): training-mode dropout (random mask + scale) not implemented.

        # ---- fc2 --------------------------------------------------------------
        out = jnp.dot(m.astype(jnp.bfloat16), w2_ref[...],
                      preferred_element_type=jnp.float32)          # (TB, O_pad) f32
        out_ref[...] = (out + b2_ref[...]).astype(out_ref.dtype)

    return mlp_kernel


def mlp_forward(token_ids, embed_table, w1, b1, w2, b2, *, batch_tile=8):
    """token_ids: (B, S) int. Returns logits (B, O) float32."""
    B, S = token_ids.shape
    V, E = embed_table.shape
    H = w1.shape[1]
    O = w2.shape[1]

    TB = min(batch_tile, B)
    assert B % TB == 0, "batch must be divisible by the batch tile"

    # Zero-pad the contraction dim (E) and the output dim (O) for aligned,
    # lane-dense tiles; zero padding is numerically a no-op.
    E_pad = ((E + 63) // 64) * 64
    O_pad = ((O + 127) // 128) * 128

    table_p = jnp.pad(embed_table.astype(jnp.float32), ((0, 0), (0, E_pad - E)))
    w1_p = jnp.pad(w1, ((0, E_pad - E), (0, 0))).astype(jnp.bfloat16)
    b1_2d = b1.reshape(1, H).astype(jnp.float32)
    w2_p = jnp.pad(w2, ((0, 0), (0, O_pad - O))).astype(jnp.bfloat16)
    b2_2d = jnp.pad(b2, (0, O_pad - O)).reshape(1, O_pad).astype(jnp.float32)

    kernel = make_mlp_kernel(TB, S)

    out = pl.pallas_call(
        kernel,
        out_shape=jax.ShapeDtypeStruct((B, O_pad), jnp.float32),
        grid_spec=pltpu.PrefetchScalarGridSpec(
            num_scalar_prefetch=1,          # token_ids -> SMEM
            grid=(B // TB,),                # tile over the batch
            in_specs=[
                pl.BlockSpec(memory_space=pl.ANY),                 # embed table stays in HBM
                pl.BlockSpec((E_pad, H), lambda i, tok: (0, 0)),   # w1 (resident)
                pl.BlockSpec((1, H), lambda i, tok: (0, 0)),       # b1
                pl.BlockSpec((H, O_pad), lambda i, tok: (0, 0)),   # w2 (resident)
                pl.BlockSpec((1, O_pad), lambda i, tok: (0, 0)),   # b2
            ],
            out_specs=pl.BlockSpec((TB, O_pad), lambda i, tok: (i, 0)),
            scratch_shapes=[
                pltpu.VMEM((S * TB, E_pad), jnp.float32),  # gathered embedding rows
                pltpu.SemaphoreType.DMA((S * TB,)),
            ],
        ),
        compiler_params=pltpu.CompilerParams(
            dimension_semantics=("parallel",),   # batch tiles shard across TCs (v7x megacore)
            vmem_limit_bytes=32 * 1024 * 1024,
        ),
    )(token_ids.astype(jnp.int32), table_p, w1_p, b1_2d, w2_p, b2_2d)

    return out[:, :O]


# ------------------------------ reference (pure JAX, f32) ---------------------
def mlp_ref(token_ids, embed_table, w1, b1, w2, b2):
    emb = jnp.take(embed_table, token_ids, axis=0).astype(jnp.float32)
    h = jnp.maximum(jnp.einsum("bse,eh->bsh", emb, w1) + b1, 0.0)
    m = jnp.max(h, axis=1)
    return m @ w2 + b2


if __name__ == "__main__":
    # Small shapes consistent with the module (Config: embedding_dim=50,
    # hidden_size=128, output_dim=2); synthetic vocab / batch / seq.
    VOCAB = 512
    E = 50
    H = 128
    O = 2
    B, S = 16, 8
    TB = 8          # batch tile -> grid of 2 pipelined, megacore-shardable steps

    key = jax.random.PRNGKey(0)
    k_emb, k_w1, k_b1, k_w2, k_b2, k_tok = jax.random.split(key, 6)

    embed_table = jax.random.normal(k_emb, (VOCAB, E), dtype=jnp.float32) * 0.1
    w1 = jax.random.normal(k_w1, (E, H), dtype=jnp.float32) * (1.0 / jnp.sqrt(E))
    b1 = jax.random.normal(k_b1, (H,), dtype=jnp.float32) * 0.01
    w2 = jax.random.normal(k_w2, (H, O), dtype=jnp.float32) * (1.0 / jnp.sqrt(H))
    b2 = jax.random.normal(k_b2, (O,), dtype=jnp.float32) * 0.01

    token_ids = jax.random.randint(k_tok, (B, S), 0, VOCAB, dtype=jnp.int32)

    out = mlp_forward(token_ids, embed_table, w1, b1, w2, b2, batch_tile=TB)
    out = jax.block_until_ready(out)

    ref = mlp_ref(token_ids, embed_table, w1, b1, w2, b2)
    assert out.shape == (B, O)
    # bf16 MXU inputs (f32 accumulation) vs full-f32 reference -> modest tolerance.
    assert jnp.allclose(out, ref, atol=2e-2, rtol=2e-2), (out, ref)

    print("KERNEL_OK")
</pallas_src>

<mosaic_0001>
module attributes {stable_mosaic.version = 11 : i64} {
  func.func @mlp_kernel(%arg0: i32, %arg1: memref<16x8xi32, #tpu.memory_space<smem>>, %arg2: memref<512x64xf32, #tpu.memory_space<any>>, %arg3: memref<64x128xbf16, #tpu.memory_space<vmem>>, %arg4: memref<1x128xf32, #tpu.memory_space<vmem>>, %arg5: memref<128x128xbf16, #tpu.memory_space<vmem>>, %arg6: memref<1x128xf32, #tpu.memory_space<vmem>>, %arg7: memref<8x128xf32, #tpu.memory_space<vmem>>, %arg8: memref<64x64xf32, #tpu.memory_space<vmem>>, %arg9: memref<64x!tpu.dma_semaphore, #tpu.memory_space<semaphore_mem>>) attributes {dimension_semantics = [#tpu.dimension_semantics<parallel>], iteration_bounds = array<i64: 2>, scalar_prefetch = 1 : i64, scratch_operands = 2 : i64, tpu.core_type = #tpu.core_type<tc>, window_params = [{}, {pipeline_mode = #tpu.pipeline_mode<synchronous>, transform_indices = @transform_1, window_bounds = array<i64: 64, 128>}, {pipeline_mode = #tpu.pipeline_mode<synchronous>, transform_indices = @transform_2, window_bounds = array<i64: 1, 128>}, {pipeline_mode = #tpu.pipeline_mode<synchronous>, transform_indices = @transform_3, window_bounds = array<i64: 128, 128>}, {pipeline_mode = #tpu.pipeline_mode<synchronous>, transform_indices = @transform_4, window_bounds = array<i64: 1, 128>}, {transform_indices = @transform_5, window_bounds = array<i64: 8, 128>}]} {
    %c8_i32 = arith.constant 8 : i32
    %0 = arith.muli %arg0, %c8_i32 : i32
    %c0_i32 = arith.constant 0 : i32
    %1 = arith.addi %0, %c0_i32 : i32
    %2 = arith.index_cast %1 : i32 to index
    %c0 = arith.constant 0 : index
    %3 = memref.load %arg1[%2, %c0] : memref<16x8xi32, #tpu.memory_space<smem>>
    %c0_i32_0 = arith.constant 0 : i32
    %c0_i32_1 = arith.constant 0 : i32
    %4 = tpu.memref_slice %arg2[%3, %c0_i32_1] : memref<512x64xf32, #tpu.memory_space<any>> -> memref<1x64xf32, #tpu.memory_space<any>>
    %c0_i32_2 = arith.constant 0 : i32
    %c0_i32_3 = arith.constant 0 : i32
    %5 = tpu.memref_slice %arg8[%c0_i32_2, %c0_i32_3] : memref<64x64xf32, #tpu.memory_space<vmem>> -> memref<1x64xf32, #tpu.memory_space<vmem>>
    %6 = tpu.memref_slice %arg9[%c0_i32_0] : memref<64x!tpu.dma_semaphore, #tpu.memory_space<semaphore_mem>> -> memref<1x!tpu.dma_semaphore, #tpu.memory_space<semaphore_mem>>
    %7 = tpu.memref_squeeze %6 : memref<1x!tpu.dma_semaphore, #tpu.memory_space<semaphore_mem>> -> memref<!tpu.dma_semaphore, #tpu.memory_space<semaphore_mem>>
    tpu.enqueue_dma source(%4 : memref<1x64xf32, #tpu.memory_space<any>>) target(%5 : memref<1x64xf32, #tpu.memory_space<vmem>>) target_semaphore(%7 : memref<!tpu.dma_semaphore, #tpu.memory_space<semaphore_mem>>)
    %c8_i32_4 = arith.constant 8 : i32
    %8 = arith.muli %arg0, %c8_i32_4 : i32
    %c1_i32 = arith.constant 1 : i32
    %9 = arith.addi %8, %c1_i32 : i32
    %10 = arith.index_cast %9 : i32 to index
    %c0_5 = arith.constant 0 : index
    %11 = memref.load %arg1[%10, %c0_5] : memref<16x8xi32, #tpu.memory_space<smem>>
    %c1_i32_6 = arith.constant 1 : i32
    %c0_i32_7 = arith.constant 0 : i32
    %12 = tpu.memref_slice %arg2[%11, %c0_i32_7] : memref<512x64xf32, #tpu.memory_space<any>> -> memref<1x64xf32, #tpu.memory_space<any>>
    %c1_i32_8 = arith.constant 1 : i32
    %c0_i32_9 = arith.constant 0 : i32
    %13 = tpu.memref_slice %arg8[%c1_i32_8, %c0_i32_9] : memref<64x64xf32, #tpu.memory_space<vmem>> -> memref<1x64xf32, #tpu.memory_space<vmem>>
    %14 = tpu.memref_slice %arg9[%c1_i32_6] : memref<64x!tpu.dma_semaphore, #tpu.memory_space<semaphore_mem>> -> memref<1x!tpu.dma_semaphore, #tpu.memory_space<semaphore_mem>>
    %15 = tpu.memref_squeeze %14 : memref<1x!tpu.dma_semaphore, #tpu.memory_space<semaphore_mem>> -> memref<!tpu.dma_semaphore, #tpu.memory_space<semaphore_mem>>
    tpu.enqueue_dma source(%12 : memref<1x64xf32, #tpu.memory_space<any>>) target(%13 : memref<1x64xf32, #tpu.memory_space<vmem>>) target_semaphore(%15 : memref<!tpu.dma_semaphore, #tpu.memory_space<semaphore_mem>>)
    %c8_i32_10 = arith.constant 8 : i32
    %16 = arith.muli %arg0, %c8_i32_10 : i32
    %c2_i32 = arith.constant 2 : i32
    %17 = arith.addi %16, %c2_i32 : i32
    %18 = arith.index_cast %17 : i32 to index
    %c0_11 = arith.constant 0 : index
    %19 = memref.load %arg1[%18, %c0_11] : memref<16x8xi32, #tpu.memory_space<smem>>
    %c2_i32_12 = arith.constant 2 : i32
    %c0_i32_13 = arith.constant 0 : i32
    %20 = tpu.memref_slice %arg2[%19, %c0_i32_13] : memref<512x64xf32, #tpu.memory_space<any>> -> memref<1x64xf32, #tpu.memory_space<any>>
    %c2_i32_14 = arith.constant 2 : i32
    %c0_i32_15 = arith.constant 0 : i32
    %21 = tpu.memref_slice %arg8[%c2_i32_14, %c0_i32_15] : memref<64x64xf32, #tpu.memory_space<vmem>> -> memref<1x64xf32, #tpu.memory_space<vmem>>
    %22 = tpu.memref_slice %arg9[%c2_i32_12] : memref<64x!tpu.dma_semaphore, #tpu.memory_space<semaphore_mem>> -> memref<1x!tpu.dma_semaphore, #tpu.memory_space<semaphore_mem>>
    %23 = tpu.memref_squeeze %22 : memref<1x!tpu.dma_semaphore, #tpu.memory_space<semaphore_mem>> -> memref<!tpu.dma_semaphore, #tpu.memory_space<semaphore_mem>>
    tpu.enqueue_dma source(%20 : memref<1x64xf32, #tpu.memory_space<any>>) target(%21 : memref<1x64xf32, #tpu.memory_space<vmem>>) target_semaphore(%23 : memref<!tpu.dma_semaphore, #tpu.memory_space<semaphore_mem>>)
    %c8_i32_16 = arith.constant 8 : i32
    %24 = arith.muli %arg0, %c8_i32_16 : i32
    %c3_i32 = arith.constant 3 : i32
    %25 = arith.addi %24, %c3_i32 : i32
    %26 = arith.index_cast %25 : i32 to index
    %c0_17 = arith.constant 0 : index
    %27 = memref.load %arg1[%26, %c0_17] : memref<16x8xi32, #tpu.memory_space<smem>>
    %c3_i32_18 = arith.constant 3 : i32
    %c0_i32_19 = arith.constant 0 : i32
    %28 = tpu.memref_slice %arg2[%27, %c0_i32_19] : memref<512x64xf32, #tpu.memory_space<any>> -> memref<1x64xf32, #tpu.memory_space<any>>
    %c3_i32_20 = arith.constant 3 : i32
    %c0_i32_21 = arith.constant 0 : i32
    %29 = tpu.memref_slice %arg8[%c3_i32_20, %c0_i32_21] : memref<64x64xf32, #tpu.memory_space<vmem>> -> memref<1x64xf32, #tpu.memory_space<vmem>>
    %30 = tpu.memref_slice %arg9[%c3_i32_18] : memref<64x!tpu.dma_semaphore, #tpu.memory_space<semaphore_mem>> -> memref<1x!tpu.dma_semaphore, #tpu.memory_space<semaphore_mem>>
    %31 = tpu.memref_squeeze %30 : memref<1x!tpu.dma_semaphore, #tpu.memory_space<semaphore_mem>> -> memref<!tpu.dma_semaphore, #tpu.memory_space<semaphore_mem>>
    tpu.enqueue_dma source(%28 : memref<1x64xf32, #tpu.memory_space<any>>) target(%29 : memref<1x64xf32, #tpu.memory_space<vmem>>) target_semaphore(%31 : memref<!tpu.dma_semaphore, #tpu.memory_space<semaphore_mem>>)
    %c8_i32_22 = arith.constant 8 : i32
    %32 = arith.muli %arg0, %c8_i32_22 : i32
    %c4_i32 = arith.constant 4 : i32
    %33 = arith.addi %32, %c4_i32 : i32
    %34 = arith.index_cast %33 : i32 to index
    %c0_23 = arith.constant 0 : index
    %35 = memref.load %arg1[%34, %c0_23] : memref<16x8xi32, #tpu.memory_space<smem>>
    %c4_i32_24 = arith.constant 4 : i32
    %c0_i32_25 = arith.constant 0 : i32
    %36 = tpu.memref_slice %arg2[%35, %c0_i32_25] : memref<512x64xf32, #tpu.memory_space<any>> -> memref<1x64xf32, #tpu.memory_space<any>>
    %c4_i32_26 = arith.constant 4 : i32
    %c0_i32_27 = arith.constant 0 : i32
    %37 = tpu.memref_slice %arg8[%c4_i32_26, %c0_i32_27] : memref<64x64xf32, #tpu.memory_space<vmem>> -> memref<1x64xf32, #tpu.memory_space<vmem>>
    %38 = tpu.memref_slice %arg9[%c4_i32_24] : memref<64x!tpu.dma_semaphore, #tpu.memory_space<semaphore_mem>> -> memref<1x!tpu.dma_semaphore, #tpu.memory_space<semaphore_mem>>
    %39 = tpu.memref_squeeze %38 : memref<1x!tpu.dma_semaphore, #tpu.memory_space<semaphore_mem>> -> memref<!tpu.dma_semaphore, #tpu.memory_space<semaphore_mem>>
    tpu.enqueue_dma source(%36 : memref<1x64xf32, #tpu.memory_space<any>>) target(%37 : memref<1x64xf32, #tpu.memory_space<vmem>>) target_semaphore(%39 : memref<!tpu.dma_semaphore, #tpu.memory_space<semaphore_mem>>)
    %c8_i32_28 = arith.constant 8 : i32
    %40 = arith.muli %arg0, %c8_i32_28 : i32
    %c5_i32 = arith.constant 5 : i32
    %41 = arith.addi %40, %c5_i32 : i32
    %42 = arith.index_cast %41 : i32 to index
    %c0_29 = arith.constant 0 : index
    %43 = memref.load %arg1[%42, %c0_29] : memref<16x8xi32, #tpu.memory_space<smem>>
    %c5_i32_30 = arith.constant 5 : i32
    %c0_i32_31 = arith.constant 0 : i32
    %44 = tpu.memref_slice %arg2[%43, %c0_i32_31] : memref<512x64xf32, #tpu.memory_space<any>> -> memref<1x64xf32, #tpu.memory_space<any>>
    %c5_i32_32 = arith.constant 5 : i32
    %c0_i32_33 = arith.constant 0 : i32
    %45 = tpu.memref_slice %arg8[%c5_i32_32, %c0_i32_33] : memref<64x64xf32, #tpu.memory_space<vmem>> -> memref<1x64xf32, #tpu.memory_space<vmem>>
    %46 = tpu.memref_slice %arg9[%c5_i32_30] : memref<64x!tpu.dma_semaphore, #tpu.memory_space<semaphore_mem>> -> memref<1x!tpu.dma_semaphore, #tpu.memory_space<semaphore_mem>>
    %47 = tpu.memref_squeeze %46 : memref<1x!tpu.dma_semaphore, #tpu.memory_space<semaphore_mem>> -> memref<!tpu.dma_semaphore, #tpu.memory_space<semaphore_mem>>
    tpu.enqueue_dma source(%44 : memref<1x64xf32, #tpu.memory_space<any>>) target(%45 : memref<1x64xf32, #tpu.memory_space<vmem>>) target_semaphore(%47 : memref<!tpu.dma_semaphore, #tpu.memory_space<semaphore_mem>>)
    %c8_i32_34 = arith.constant 8 : i32
    %48 = arith.muli %arg0, %c8_i32_34 : i32
    %c6_i32 = arith.constant 6 : i32
    %49 = arith.addi %48, %c6_i32 : i32
    %50 = arith.index_cast %49 : i32 to index
    %c0_35 = arith.constant 0 : index
    %51 = memref.load %arg1[%50, %c0_35] : memref<16x8xi32, #tpu.memory_space<smem>>
    %c6_i32_36 = arith.constant 6 : i32
    %c0_i32_37 = arith.constant 0 : i32
    %52 = tpu.memref_slice %arg2[%51, %c0_i32_37] : memref<512x64xf32, #tpu.memory_space<any>> -> memref<1x64xf32, #tpu.memory_space<any>>
    %c6_i32_38 = arith.constant 6 : i32
    %c0_i32_39 = arith.constant 0 : i32
    %53 = tpu.memref_slice %arg8[%c6_i32_38, %c0_i32_39] : memref<64x64xf32, #tpu.memory_space<vmem>> -> memref<1x64xf32, #tpu.memory_space<vmem>>
    %54 = tpu.memref_slice %arg9[%c6_i32_36] : memref<64x!tpu.dma_semaphore, #tpu.memory_space<semaphore_mem>> -> memref<1x!tpu.dma_semaphore, #tpu.memory_space<semaphore_mem>>
    %55 = tpu.memref_squeeze %54 : memref<1x!tpu.dma_semaphore, #tpu.memory_space<semaphore_mem>> -> memref<!tpu.dma_semaphore, #tpu.memory_space<semaphore_mem>>
    tpu.enqueue_dma source(%52 : memref<1x64xf32, #tpu.memory_space<any>>) target(%53 : memref<1x64xf32, #tpu.memory_space<vmem>>) target_semaphore(%55 : memref<!tpu.dma_semaphore, #tpu.memory_space<semaphore_mem>>)
    %c8_i32_40 = arith.constant 8 : i32
    %56 = arith.muli %arg0, %c8_i32_40 : i32
    %c7_i32 = arith.constant 7 : i32
    %57 = arith.addi %56, %c7_i32 : i32
    %58 = arith.index_cast %57 : i32 to index
    %c0_41 = arith.constant 0 : index
    %59 = memref.load %arg1[%58, %c0_41] : memref<16x8xi32, #tpu.memory_space<smem>>
    %c7_i32_42 = arith.constant 7 : i32
    %c0_i32_43 = arith.constant 0 : i32
    %60 = tpu.memref_slice %arg2[%59, %c0_i32_43] : memref<512x64xf32, #tpu.memory_space<any>> -> memref<1x64xf32, #tpu.memory_space<any>>
    %c7_i32_44 = arith.constant 7 : i32
    %c0_i32_45 = arith.constant 0 : i32
    %61 = tpu.memref_slice %arg8[%c7_i32_44, %c0_i32_45] : memref<64x64xf32, #tpu.memory_space<vmem>> -> memref<1x64xf32, #tpu.memory_space<vmem>>
    %62 = tpu.memref_slice %arg9[%c7_i32_42] : memref<64x!tpu.dma_semaphore, #tpu.memory_space<semaphore_mem>> -> memref<1x!tpu.dma_semaphore, #tpu.memory_space<semaphore_mem>>
    %63 = tpu.memref_squeeze %62 : memref<1x!tpu.dma_semaphore, #tpu.memory_space<semaphore_mem>> -> memref<!tpu.dma_semaphore, #tpu.memory_space<semaphore_mem>>
    tpu.enqueue_dma source(%60 : memref<1x64xf32, #tpu.memory_space<any>>) target(%61 : memref<1x64xf32, #tpu.memory_space<vmem>>) target_semaphore(%63 : memref<!tpu.dma_semaphore, #tpu.memory_space<semaphore_mem>>)
    %c8_i32_46 = arith.constant 8 : i32
    %64 = arith.muli %arg0, %c8_i32_46 : i32
    %c0_i32_47 = arith.constant 0 : i32
    %65 = arith.addi %64, %c0_i32_47 : i32
    %66 = arith.index_cast %65 : i32 to index
    %c1 = arith.constant 1 : index
    %67 = memref.load %arg1[%66, %c1] : memref<16x8xi32, #tpu.memory_space<smem>>
    %c8_i32_48 = arith.constant 8 : i32
    %c0_i32_49 = arith.constant 0 : i32
    %68 = tpu.memref_slice %arg2[%67, %c0_i32_49] : memref<512x64xf32, #tpu.memory_space<any>> -> memref<1x64xf32, #tpu.memory_space<any>>
    %c8_i32_50 = arith.constant 8 : i32
    %c0_i32_51 = arith.constant 0 : i32
    %69 = tpu.memref_slice %arg8[%c8_i32_50, %c0_i32_51] : memref<64x64xf32, #tpu.memory_space<vmem>> -> memref<1x64xf32, #tpu.memory_space<vmem>>
    %70 = tpu.memref_slice %arg9[%c8_i32_48] : memref<64x!tpu.dma_semaphore, #tpu.memory_space<semaphore_mem>> -> memref<1x!tpu.dma_semaphore, #tpu.memory_space<semaphore_mem>>
    %71 = tpu.memref_squeeze %70 : memref<1x!tpu.dma_semaphore, #tpu.memory_space<semaphore_mem>> -> memref<!tpu.dma_semaphore, #tpu.memory_space<semaphore_mem>>
    tpu.enqueue_dma source(%68 : memref<1x64xf32, #tpu.memory_space<any>>) target(%69 : memref<1x64xf32, #tpu.memory_space<vmem>>) target_semaphore(%71 : memref<!tpu.dma_semaphore, #tpu.memory_space<semaphore_mem>>)
    %c8_i32_52 = arith.constant 8 : i32
    %72 = arith.muli %arg0, %c8_i32_52 : i32
    %c1_i32_53 = arith.constant 1 : i32
    %73 = arith.addi %72, %c1_i32_53 : i32
    %74 = arith.index_cast %73 : i32 to index
    %c1_54 = arith.constant 1 : index
    %75 = memref.load %arg1[%74, %c1_54] : memref<16x8xi32, #tpu.memory_space<smem>>
    %c9_i32 = arith.constant 9 : i32
    %c0_i32_55 = arith.constant 0 : i32
    %76 = tpu.memref_slice %arg2[%75, %c0_i32_55] : memref<512x64xf32, #tpu.memory_space<any>> -> memref<1x64xf32, #tpu.memory_space<any>>
    %c9_i32_56 = arith.constant 9 : i32
    %c0_i32_57 = arith.constant 0 : i32
    %77 = tpu.memref_slice %arg8[%c9_i32_56, %c0_i32_57] : memref<64x64xf32, #tpu.memory_space<vmem>> -> memref<1x64xf32, #tpu.memory_space<vmem>>
    %78 = tpu.memref_slice %arg9[%c9_i32] : memref<64x!tpu.dma_semaphore, #tpu.memory_space<semaphore_mem>> -> memref<1x!tpu.dma_semaphore, #tpu.memory_space<semaphore_mem>>
    %79 = tpu.memref_squeeze %78 : memref<1x!tpu.dma_semaphore, #tpu.memory_space<semaphore_mem>> -> memref<!tpu.dma_semaphore, #tpu.memory_space<semaphore_mem>>
    tpu.enqueue_dma source(%76 : memref<1x64xf32, #tpu.memory_space<any>>) target(%77 : memref<1x64xf32, #tpu.memory_space<vmem>>) target_semaphore(%79 : memref<!tpu.dma_semaphore, #tpu.memory_space<semaphore_mem>>)
    %c8_i32_58 = arith.constant 8 : i32
    %80 = arith.muli %arg0, %c8_i32_58 : i32
    %c2_i32_59 = arith.constant 2 : i32
    %81 = arith.addi %80, %c2_i32_59 : i32
    %82 = arith.index_cast %81 : i32 to index
    %c1_60 = arith.constant 1 : index
    %83 = memref.load %arg1[%82, %c1_60] : memref<16x8xi32, #tpu.memory_space<smem>>
    %c10_i32 = arith.constant 10 : i32
    %c0_i32_61 = arith.constant 0 : i32
    %84 = tpu.memref_slice %arg2[%83, %c0_i32_61] : memref<512x64xf32, #tpu.memory_space<any>> -> memref<1x64xf32, #tpu.memory_space<any>>
    %c10_i32_62 = arith.constant 10 : i32
    %c0_i32_63 = arith.constant 0 : i32
    %85 = tpu.memref_slice %arg8[%c10_i32_62, %c0_i32_63] : memref<64x64xf32, #tpu.memory_space<vmem>> -> memref<1x64xf32, #tpu.memory_space<vmem>>
    %86 = tpu.memref_slice %arg9[%c10_i32] : memref<64x!tpu.dma_semaphore, #tpu.memory_space<semaphore_mem>> -> memref<1x!tpu.dma_semaphore, #tpu.memory_space<semaphore_mem>>
    %87 = tpu.memref_squeeze %86 : memref<1x!tpu.dma_semaphore, #tpu.memory_space<semaphore_mem>> -> memref<!tpu.dma_semaphore, #tpu.memory_space<semaphore_mem>>
    tpu.enqueue_dma source(%84 : memref<1x64xf32, #tpu.memory_space<any>>) target(%85 : memref<1x64xf32, #tpu.memory_space<vmem>>) target_semaphore(%87 : memref<!tpu.dma_semaphore, #tpu.memory_space<semaphore_mem>>)
    %c8_i32_64 = arith.constant 8 : i32
    %88 = arith.muli %arg0, %c8_i32_64 : i32
    %c3_i32_65 = arith.constant 3 : i32
    %89 = arith.addi %88, %c3_i32_65 : i32
    %90 = arith.index_cast %89 : i32 to index
    %c1_66 = arith.constant 1 : index
    %91 = memref.load %arg1[%90, %c1_66] : memref<16x8xi32, #tpu.memory_space<smem>>
    %c11_i32 = arith.constant 11 : i32
    %c0_i32_67 = arith.constant 0 : i32
    %92 = tpu.memref_slice %arg2[%91, %c0_i32_67] : memref<512x64xf32, #tpu.memory_space<any>> -> memref<1x64xf32, #tpu.memory_space<any>>
    %c11_i32_68 = arith.constant 11 : i32
    %c0_i32_69 = arith.constant 0 : i32
    %93 = tpu.memref_slice %arg8[%c11_i32_68, %c0_i32_69] : memref<64x64xf32, #tpu.memory_space<vmem>> -> memref<1x64xf32, #tpu.memory_space<vmem>>
    %94 = tpu.memref_slice %arg9[%c11_i32] : memref<64x!tpu.dma_semaphore, #tpu.memory_space<semaphore_mem>> -> memref<1x!tpu.dma_semaphore, #tpu.memory_space<semaphore_mem>>
    %95 = tpu.memref_squeeze %94 : memref<1x!tpu.dma_semaphore, #tpu.memory_space<semaphore_mem>> -> memref<!tpu.dma_semaphore, #tpu.memory_space<semaphore_mem>>
    tpu.enqueue_dma source(%92 : memref<1x64xf32, #tpu.memory_space<any>>) target(%93 : memref<1x64xf32, #tpu.memory_space<vmem>>) target_semaphore(%95 : memref<!tpu.dma_semaphore, #tpu.memory_space<semaphore_mem>>)
    %c8_i32_70 = arith.constant 8 : i32
    %96 = arith.muli %arg0, %c8_i32_70 : i32
    %c4_i32_71 = arith.constant 4 : i32
    %97 = arith.addi %96, %c4_i32_71 : i32
    %98 = arith.index_cast %97 : i32 to index
    %c1_72 = arith.constant 1 : index
    %99 = memref.load %arg1[%98, %c1_72] : memref<16x8xi32, #tpu.memory_space<smem>>
    %c12_i32 = arith.constant 12 : i32
    %c0_i32_73 = arith.constant 0 : i32
    %100 = tpu.memref_slice %arg2[%99, %c0_i32_73] : memref<512x64xf32, #tpu.memory_space<any>> -> memref<1x64xf32, #tpu.memory_space<any>>
    %c12_i32_74 = arith.constant 12 : i32
    %c0_i32_75 = arith.constant 0 : i32
    %101 = tpu.memref_slice %arg8[%c12_i32_74, %c0_i32_75] : memref<64x64xf32, #tpu.memory_space<vmem>> -> memref<1x64xf32, #tpu.memory_space<vmem>>
    %102 = tpu.memref_slice %arg9[%c12_i32] : memref<64x!tpu.dma_semaphore, #tpu.memory_space<semaphore_mem>> -> memref<1x!tpu.dma_semaphore, #tpu.memory_space<semaphore_mem>>
    %103 = tpu.memref_squeeze %102 : memref<1x!tpu.dma_semaphore, #tpu.memory_space<semaphore_mem>> -> memref<!tpu.dma_semaphore, #tpu.memory_space<semaphore_mem>>
    tpu.enqueue_dma source(%100 : memref<1x64xf32, #tpu.memory_space<any>>) target(%101 : memref<1x64xf32, #tpu.memory_space<vmem>>) target_semaphore(%103 : memref<!tpu.dma_semaphore, #tpu.memory_space<semaphore_mem>>)
    %c8_i32_76 = arith.constant 8 : i32
    %104 = arith.muli %arg0, %c8_i32_76 : i32
    %c5_i32_77 = arith.constant 5 : i32
    %105 = arith.addi %104, %c5_i32_77 : i32
    %106 = arith.index_cast %105 : i32 to index
    %c1_78 = arith.constant 1 : index
    %107 = memref.load %arg1[%106, %c1_78] : memref<16x8xi32, #tpu.memory_space<smem>>
    %c13_i32 = arith.constant 13 : i32
    %c0_i32_79 = arith.constant 0 : i32
    %108 = tpu.memref_slice %arg2[%107, %c0_i32_79] : memref<512x64xf32, #tpu.memory_space<any>> -> memref<1x64xf32, #tpu.memory_space<any>>
    %c13_i32_80 = arith.constant 13 : i32
    %c0_i32_81 = arith.constant 0 : i32
    %109 = tpu.memref_slice %arg8[%c13_i32_80, %c0_i32_81] : memref<64x64xf32, #tpu.memory_space<vmem>> -> memref<1x64xf32, #tpu.memory_space<vmem>>
    %110 = tpu.memref_slice %arg9[%c13_i32] : memref<64x!tpu.dma_semaphore, #tpu.memory_space<semaphore_mem>> -> memref<1x!tpu.dma_semaphore, #tpu.memory_space<semaphore_mem>>
    %111 = tpu.memref_squeeze %110 : memref<1x!tpu.dma_semaphore, #tpu.memory_space<semaphore_mem>> -> memref<!tpu.dma_semaphore, #tpu.memory_space<semaphore_mem>>
    tpu.enqueue_dma source(%108 : memref<1x64xf32, #tpu.memory_space<any>>) target(%109 : memref<1x64xf32, #tpu.memory_space<vmem>>) target_semaphore(%111 : memref<!tpu.dma_semaphore, #tpu.memory_space<semaphore_mem>>)
    %c8_i32_82 = arith.constant 8 : i32
    %112 = arith.muli %arg0, %c8_i32_82 : i32
    %c6_i32_83 = arith.constant 6 : i32
    %113 = arith.addi %112, %c6_i32_83 : i32
    %114 = arith.index_cast %113 : i32 to index
    %c1_84 = arith.constant 1 : index
    %115 = memref.load %arg1[%114, %c1_84] : memref<16x8xi32, #tpu.memory_space<smem>>
    %c14_i32 = arith.constant 14 : i32
    %c0_i32_85 = arith.constant 0 : i32
    %116 = tpu.memref_slice %arg2[%115, %c0_i32_85] : memref<512x64xf32, #tpu.memory_space<any>> -> memref<1x64xf32, #tpu.memory_space<any>>
    %c14_i32_86 = arith.constant 14 : i32
    %c0_i32_87 = arith.constant 0 : i32
    %117 = tpu.memref_slice %arg8[%c14_i32_86, %c0_i32_87] : memref<64x64xf32, #tpu.memory_space<vmem>> -> memref<1x64xf32, #tpu.memory_space<vmem>>
    %118 = tpu.memref_slice %arg9[%c14_i32] : memref<64x!tpu.dma_semaphore, #tpu.memory_space<semaphore_mem>> -> memref<1x!tpu.dma_semaphore, #tpu.memory_space<semaphore_mem>>
    %119 = tpu.memref_squeeze %118 : memref<1x!tpu.dma_semaphore, #tpu.memory_space<semaphore_mem>> -> memref<!tpu.dma_semaphore, #tpu.memory_space<semaphore_mem>>
    tpu.enqueue_dma source(%116 : memref<1x64xf32, #tpu.memory_space<any>>) target(%117 : memref<1x64xf32, #tpu.memory_space<vmem>>) target_semaphore(%119 : memref<!tpu.dma_semaphore, #tpu.memory_space<semaphore_mem>>)
    %c8_i32_88 = arith.constant 8 : i32
    %120 = arith.muli %arg0, %c8_i32_88 : i32
    %c7_i32_89 = arith.constant 7 : i32
    %121 = arith.addi %120, %c7_i32_89 : i32
    %122 = arith.index_cast %121 : i32 to index
    %c1_90 = arith.constant 1 : index
    %123 = memref.load %arg1[%122, %c1_90] : memref<16x8xi32, #tpu.memory_space<smem>>
    %c15_i32 = arith.constant 15 : i32
    %c0_i32_91 = arith.constant 0 : i32
    %124 = tpu.memref_slice %arg2[%123, %c0_i32_91] : memref<512x64xf32, #tpu.memory_space<any>> -> memref<1x64xf32, #tpu.memory_space<any>>
    %c15_i32_92 = arith.constant 15 : i32
    %c0_i32_93 = arith.constant 0 : i32
    %125 = tpu.memref_slice %arg8[%c15_i32_92, %c0_i32_93] : memref<64x64xf32, #tpu.memory_space<vmem>> -> memref<1x64xf32, #tpu.memory_space<vmem>>
    %126 = tpu.memref_slice %arg9[%c15_i32] : memref<64x!tpu.dma_semaphore, #tpu.memory_space<semaphore_mem>> -> memref<1x!tpu.dma_semaphore, #tpu.memory_space<semaphore_mem>>
    %127 = tpu.memref_squeeze %126 : memref<1x!tpu.dma_semaphore, #tpu.memory_space<semaphore_mem>> -> memref<!tpu.dma_semaphore, #tpu.memory_space<semaphore_mem>>
    tpu.enqueue_dma source(%124 : memref<1x64xf32, #tpu.memory_space<any>>) target(%125 : memref<1x64xf32, #tpu.memory_space<vmem>>) target_semaphore(%127 : memref<!tpu.dma_semaphore, #tpu.memory_space<semaphore_mem>>)
    %c8_i32_94 = arith.constant 8 : i32
    %128 = arith.muli %arg0, %c8_i32_94 : i32
    %c0_i32_95 = arith.constant 0 : i32
    %129 = arith.addi %128, %c0_i32_95 : i32
    %130 = arith.index_cast %129 : i32 to index
    %c2 = arith.constant 2 : index
    %131 = memref.load %arg1[%130, %c2] : memref<16x8xi32, #tpu.memory_space<smem>>
    %c16_i32 = arith.constant 16 : i32
    %c0_i32_96 = arith.constant 0 : i32
    %132 = tpu.memref_slice %arg2[%131, %c0_i32_96] : memref<512x64xf32, #tpu.memory_space<any>> -> memref<1x64xf32, #tpu.memory_space<any>>
    %c16_i32_97 = arith.constant 16 : i32
    %c0_i32_98 = arith.constant 0 : i32
    %133 = tpu.memref_slice %arg8[%c16_i32_97, %c0_i32_98] : memref<64x64xf32, #tpu.memory_space<vmem>> -> memref<1x64xf32, #tpu.memory_space<vmem>>
    %134 = tpu.memref_slice %arg9[%c16_i32] : memref<64x!tpu.dma_semaphore, #tpu.memory_space<semaphore_mem>> -> memref<1x!tpu.dma_semaphore, #tpu.memory_space<semaphore_mem>>
    %135 = tpu.memref_squeeze %134 : memref<1x!tpu.dma_semaphore, #tpu.memory_space<semaphore_mem>> -> memref<!tpu.dma_semaphore, #tpu.memory_space<semaphore_mem>>
    tpu.enqueue_dma source(%132 : memref<1x64xf32, #tpu.memory_space<any>>) target(%133 : memref<1x64xf32, #tpu.memory_space<vmem>>) target_semaphore(%135 : memref<!tpu.dma_semaphore, #tpu.memory_space<semaphore_mem>>)
    %c8_i32_99 = arith.constant 8 : i32
    %136 = arith.muli %arg0, %c8_i32_99 : i32
    %c1_i32_100 = arith.constant 1 : i32
    %137 = arith.addi %136, %c1_i32_100 : i32
    %138 = arith.index_cast %137 : i32 to index
    %c2_101 = arith.constant 2 : index
    %139 = memref.load %arg1[%138, %c2_101] : memref<16x8xi32, #tpu.memory_space<smem>>
    %c17_i32 = arith.constant 17 : i32
    %c0_i32_102 = arith.constant 0 : i32
    %140 = tpu.memref_slice %arg2[%139, %c0_i32_102] : memref<512x64xf32, #tpu.memory_space<any>> -> memref<1x64xf32, #tpu.memory_space<any>>
    %c17_i32_103 = arith.constant 17 : i32
    %c0_i32_104 = arith.constant 0 : i32
    %141 = tpu.memref_slice %arg8[%c17_i32_103, %c0_i32_104] : memref<64x64xf32, #tpu.memory_space<vmem>> -> memref<1x64xf32, #tpu.memory_space<vmem>>
    %142 = tpu.memref_slice %arg9[%c17_i32] : memref<64x!tpu.dma_semaphore, #tpu.memory_space<semaphore_mem>> -> memref<1x!tpu.dma_semaphore, #tpu.memory_space<semaphore_mem>>
    %143 = tpu.memref_squeeze %142 : memref<1x!tpu.dma_semaphore, #tpu.memory_space<semaphore_mem>> -> memref<!tpu.dma_semaphore, #tpu.memory_space<semaphore_mem>>
    tpu.enqueue_dma source(%140 : memref<1x64xf32, #tpu.memory_space<any>>) target(%141 : memref<1x64xf32, #tpu.memory_space<vmem>>) target_semaphore(%143 : memref<!tpu.dma_semaphore, #tpu.memory_space<semaphore_mem>>)
    %c8_i32_105 = arith.constant 8 : i32
    %144 = arith.muli %arg0, %c8_i32_105 : i32
    %c2_i32_106 = arith.constant 2 : i32
    %145 = arith.addi %144, %c2_i32_106 : i32
    %146 = arith.index_cast %145 : i32 to index
    %c2_107 = arith.constant 2 : index
    %147 = memref.load %arg1[%146, %c2_107] : memref<16x8xi32, #tpu.memory_space<smem>>
    %c18_i32 = arith.constant 18 : i32
    %c0_i32_108 = arith.constant 0 : i32
    %148 = tpu.memref_slice %arg2[%147, %c0_i32_108] : memref<512x64xf32, #tpu.memory_space<any>> -> memref<1x64xf32, #tpu.memory_space<any>>
    %c18_i32_109 = arith.constant 18 : i32
    %c0_i32_110 = arith.constant 0 : i32
    %149 = tpu.memref_slice %arg8[%c18_i32_109, %c0_i32_110] : memref<64x64xf32, #tpu.memory_space<vmem>> -> memref<1x64xf32, #tpu.memory_space<vmem>>
    %150 = tpu.memref_slice %arg9[%c18_i32] : memref<64x!tpu.dma_semaphore, #tpu.memory_space<semaphore_mem>> -> memref<1x!tpu.dma_semaphore, #tpu.memory_space<semaphore_mem>>
    %151 = tpu.memref_squeeze %150 : memref<1x!tpu.dma_semaphore, #tpu.memory_space<semaphore_mem>> -> memref<!tpu.dma_semaphore, #tpu.memory_space<semaphore_mem>>
    tpu.enqueue_dma source(%148 : memref<1x64xf32, #tpu.memory_space<any>>) target(%149 : memref<1x64xf32, #tpu.memory_space<vmem>>) target_semaphore(%151 : memref<!tpu.dma_semaphore, #tpu.memory_space<semaphore_mem>>)
    %c8_i32_111 = arith.constant 8 : i32
    %152 = arith.muli %arg0, %c8_i32_111 : i32
    %c3_i32_112 = arith.constant 3 : i32
    %153 = arith.addi %152, %c3_i32_112 : i32
    %154 = arith.index_cast %153 : i32 to index
    %c2_113 = arith.constant 2 : index
    %155 = memref.load %arg1[%154, %c2_113] : memref<16x8xi32, #tpu.memory_space<smem>>
    %c19_i32 = arith.constant 19 : i32
    %c0_i32_114 = arith.constant 0 : i32
    %156 = tpu.memref_slice %arg2[%155, %c0_i32_114] : memref<512x64xf32, #tpu.memory_space<any>> -> memref<1x64xf32, #tpu.memory_space<any>>
    %c19_i32_115 = arith.constant 19 : i32
    %c0_i32_116 = arith.constant 0 : i32
    %157 = tpu.memref_slice %arg8[%c19_i32_115, %c0_i32_116] : memref<64x64xf32, #tpu.memory_space<vmem>> -> memref<1x64xf32, #tpu.memory_space<vmem>>
    %158 = tpu.memref_slice %arg9[%c19_i32] : memref<64x!tpu.dma_semaphore, #tpu.memory_space<semaphore_mem>> -> memref<1x!tpu.dma_semaphore, #tpu.memory_space<semaphore_mem>>
    %159 = tpu.memref_squeeze %158 : memref<1x!tpu.dma_semaphore, #tpu.memory_space<semaphore_mem>> -> memref<!tpu.dma_semaphore, #tpu.memory_space<semaphore_mem>>
    tpu.enqueue_dma source(%156 : memref<1x64xf32, #tpu.memory_space<any>>) target(%157 : memref<1x64xf32, #tpu.memory_space<vmem>>) target_semaphore(%159 : memref<!tpu.dma_semaphore, #tpu.memory_space<semaphore_mem>>)
    %c8_i32_117 = arith.constant 8 : i32
    %160 = arith.muli %arg0, %c8_i32_117 : i32
    %c4_i32_118 = arith.constant 4 : i32
    %161 = arith.addi %160, %c4_i32_118 : i32
    %162 = arith.index_cast %161 : i32 to index
    %c2_119 = arith.constant 2 : index
    %163 = memref.load %arg1[%162, %c2_119] : memref<16x8xi32, #tpu.memory_space<smem>>
    %c20_i32 = arith.constant 20 : i32
    %c0_i32_120 = arith.constant 0 : i32
    %164 = tpu.memref_slice %arg2[%163, %c0_i32_120] : memref<512x64xf32, #tpu.memory_space<any>> -> memref<1x64xf32, #tpu.memory_space<any>>
    %c20_i32_121 = arith.constant 20 : i32
    %c0_i32_122 = arith.constant 0 : i32
    %165 = tpu.memref_slice %arg8[%c20_i32_121, %c0_i32_122] : memref<64x64xf32, #tpu.memory_space<vmem>> -> memref<1x64xf32, #tpu.memory_space<vmem>>
    %166 = tpu.memref_slice %arg9[%c20_i32] : memref<64x!tpu.dma_semaphore, #tpu.memory_space<semaphore_mem>> -> memref<1x!tpu.dma_semaphore, #tpu.memory_space<semaphore_mem>>
    %167 = tpu.memref_squeeze %166 : memref<1x!tpu.dma_semaphore, #tpu.memory_space<semaphore_mem>> -> memref<!tpu.dma_semaphore, #tpu.memory_space<semaphore_mem>>
    tpu.enqueue_dma source(%164 : memref<1x64xf32, #tpu.memory_space<any>>) target(%165 : memref<1x64xf32, #tpu.memory_space<vmem>>) target_semaphore(%167 : memref<!tpu.dma_semaphore, #tpu.memory_space<semaphore_mem>>)
    %c8_i32_123 = arith.constant 8 : i32
    %168 = arith.muli %arg0, %c8_i32_123 : i32
    %c5_i32_124 = arith.constant 5 : i32
    %169 = arith.addi %168, %c5_i32_124 : i32
    %170 = arith.index_cast %169 : i32 to index
    %c2_125 = arith.constant 2 : index
    %171 = memref.load %arg1[%170, %c2_125] : memref<16x8xi32, #tpu.memory_space<smem>>
    %c21_i32 = arith.constant 21 : i32
    %c0_i32_126 = arith.constant 0 : i32
    %172 = tpu.memref_slice %arg2[%171, %c0_i32_126] : memref<512x64xf32, #tpu.memory_space<any>> -> memref<1x64xf32, #tpu.memory_space<any>>
    %c21_i32_127 = arith.constant 21 : i32
    %c0_i32_128 = arith.constant 0 : i32
    %173 = tpu.memref_slice %arg8[%c21_i32_127, %c0_i32_128] : memref<64x64xf32, #tpu.memory_space<vmem>> -> memref<1x64xf32, #tpu.memory_space<vmem>>
    %174 = tpu.memref_slice %arg9[%c21_i32] : memref<64x!tpu.dma_semaphore, #tpu.memory_space<semaphore_mem>> -> memref<1x!tpu.dma_semaphore, #tpu.memory_space<semaphore_mem>>
    %175 = tpu.memref_squeeze %174 : memref<1x!tpu.dma_semaphore, #tpu.memory_space<semaphore_mem>> -> memref<!tpu.dma_semaphore, #tpu.memory_space<semaphore_mem>>
    tpu.enqueue_dma source(%172 : memref<1x64xf32, #tpu.memory_space<any>>) target(%173 : memref<1x64xf32, #tpu.memory_space<vmem>>) target_semaphore(%175 : memref<!tpu.dma_semaphore, #tpu.memory_space<semaphore_mem>>)
    %c8_i32_129 = arith.constant 8 : i32
    %176 = arith.muli %arg0, %c8_i32_129 : i32
    %c6_i32_130 = arith.constant 6 : i32
    %177 = arith.addi %176, %c6_i32_130 : i32
    %178 = arith.index_cast %177 : i32 to index
    %c2_131 = arith.constant 2 : index
    %179 = memref.load %arg1[%178, %c2_131] : memref<16x8xi32, #tpu.memory_space<smem>>
    %c22_i32 = arith.constant 22 : i32
    %c0_i32_132 = arith.constant 0 : i32
    %180 = tpu.memref_slice %arg2[%179, %c0_i32_132] : memref<512x64xf32, #tpu.memory_space<any>> -> memref<1x64xf32, #tpu.memory_space<any>>
    %c22_i32_133 = arith.constant 22 : i32
    %c0_i32_134 = arith.constant 0 : i32
    %181 = tpu.memref_slice %arg8[%c22_i32_133, %c0_i32_134] : memref<64x64xf32, #tpu.memory_space<vmem>> -> memref<1x64xf32, #tpu.memory_space<vmem>>
    %182 = tpu.memref_slice %arg9[%c22_i32] : memref<64x!tpu.dma_semaphore, #tpu.memory_space<semaphore_mem>> -> memref<1x!tpu.dma_semaphore, #tpu.memory_space<semaphore_mem>>
    %183 = tpu.memref_squeeze %182 : memref<1x!tpu.dma_semaphore, #tpu.memory_space<semaphore_mem>> -> memref<!tpu.dma_semaphore, #tpu.memory_space<semaphore_mem>>
    tpu.enqueue_dma source(%180 : memref<1x64xf32, #tpu.memory_space<any>>) target(%181 : memref<1x64xf32, #tpu.memory_space<vmem>>) target_semaphore(%183 : memref<!tpu.dma_semaphore, #tpu.memory_space<semaphore_mem>>)
    %c8_i32_135 = arith.constant 8 : i32
    %184 = arith.muli %arg0, %c8_i32_135 : i32
    %c7_i32_136 = arith.constant 7 : i32
    %185 = arith.addi %184, %c7_i32_136 : i32
    %186 = arith.index_cast %185 : i32 to index
    %c2_137 = arith.constant 2 : index
    %187 = memref.load %arg1[%186, %c2_137] : memref<16x8xi32, #tpu.memory_space<smem>>
    %c23_i32 = arith.constant 23 : i32
    %c0_i32_138 = arith.constant 0 : i32
    %188 = tpu.memref_slice %arg2[%187, %c0_i32_138] : memref<512x64xf32, #tpu.memory_space<any>> -> memref<1x64xf32, #tpu.memory_space<any>>
    %c23_i32_139 = arith.constant 23 : i32
    %c0_i32_140 = arith.constant 0 : i32
    %189 = tpu.memref_slice %arg8[%c23_i32_139, %c0_i32_140] : memref<64x64xf32, #tpu.memory_space<vmem>> -> memref<1x64xf32, #tpu.memory_space<vmem>>
    %190 = tpu.memref_slice %arg9[%c23_i32] : memref<64x!tpu.dma_semaphore, #tpu.memory_space<semaphore_mem>> -> memref<1x!tpu.dma_semaphore, #tpu.memory_space<semaphore_mem>>
    %191 = tpu.memref_squeeze %190 : memref<1x!tpu.dma_semaphore, #tpu.memory_space<semaphore_mem>> -> memref<!tpu.dma_semaphore, #tpu.memory_space<semaphore_mem>>
    tpu.enqueue_dma source(%188 : memref<1x64xf32, #tpu.memory_space<any>>) target(%189 : memref<1x64xf32, #tpu.memory_space<vmem>>) target_semaphore(%191 : memref<!tpu.dma_semaphore, #tpu.memory_space<semaphore_mem>>)
    %c8_i32_141 = arith.constant 8 : i32
    %192 = arith.muli %arg0, %c8_i32_141 : i32
    %c0_i32_142 = arith.constant 0 : i32
    %193 = arith.addi %192, %c0_i32_142 : i32
    %194 = arith.index_cast %193 : i32 to index
    %c3 = arith.constant 3 : index
    %195 = memref.load %arg1[%194, %c3] : memref<16x8xi32, #tpu.memory_space<smem>>
    %c24_i32 = arith.constant 24 : i32
    %c0_i32_143 = arith.constant 0 : i32
    %196 = tpu.memref_slice %arg2[%195, %c0_i32_143] : memref<512x64xf32, #tpu.memory_space<any>> -> memref<1x64xf32, #tpu.memory_space<any>>
    %c24_i32_144 = arith.constant 24 : i32
    %c0_i32_145 = arith.constant 0 : i32
    %197 = tpu.memref_slice %arg8[%c24_i32_144, %c0_i32_145] : memref<64x64xf32, #tpu.memory_space<vmem>> -> memref<1x64xf32, #tpu.memory_space<vmem>>
    %198 = tpu.memref_slice %arg9[%c24_i32] : memref<64x!tpu.dma_semaphore, #tpu.memory_space<semaphore_mem>> -> memref<1x!tpu.dma_semaphore, #tpu.memory_space<semaphore_mem>>
    %199 = tpu.memref_squeeze %198 : memref<1x!tpu.dma_semaphore, #tpu.memory_space<semaphore_mem>> -> memref<!tpu.dma_semaphore, #tpu.memory_space<semaphore_mem>>
    tpu.enqueue_dma source(%196 : memref<1x64xf32, #tpu.memory_space<any>>) target(%197 : memref<1x64xf32, #tpu.memory_space<vmem>>) target_semaphore(%199 : memref<!tpu.dma_semaphore, #tpu.memory_space<semaphore_mem>>)
    %c8_i32_146 = arith.constant 8 : i32
    %200 = arith.muli %arg0, %c8_i32_146 : i32
    %c1_i32_147 = arith.constant 1 : i32
    %201 = arith.addi %200, %c1_i32_147 : i32
    %202 = arith.index_cast %201 : i32 to index
    %c3_148 = arith.constant 3 : index
    %203 = memref.load %arg1[%202, %c3_148] : memref<16x8xi32, #tpu.memory_space<smem>>
    %c25_i32 = arith.constant 25 : i32
    %c0_i32_149 = arith.constant 0 : i32
    %204 = tpu.memref_slice %arg2[%203, %c0_i32_149] : memref<512x64xf32, #tpu.memory_space<any>> -> memref<1x64xf32, #tpu.memory_space<any>>
    %c25_i32_150 = arith.constant 25 : i32
    %c0_i32_151 = arith.constant 0 : i32
    %205 = tpu.memref_slice %arg8[%c25_i32_150, %c0_i32_151] : memref<64x64xf32, #tpu.memory_space<vmem>> -> memref<1x64xf32, #tpu.memory_space<vmem>>
    %206 = tpu.memref_slice %arg9[%c25_i32] : memref<64x!tpu.dma_semaphore, #tpu.memory_space<semaphore_mem>> -> memref<1x!tpu.dma_semaphore, #tpu.memory_space<semaphore_mem>>
    %207 = tpu.memref_squeeze %206 : memref<1x!tpu.dma_semaphore, #tpu.memory_space<semaphore_mem>> -> memref<!tpu.dma_semaphore, #tpu.memory_space<semaphore_mem>>
    tpu.enqueue_dma source(%204 : memref<1x64xf32, #tpu.memory_space<any>>) target(%205 : memref<1x64xf32, #tpu.memory_space<vmem>>) target_semaphore(%207 : memref<!tpu.dma_semaphore, #tpu.memory_space<semaphore_mem>>)
    %c8_i32_152 = arith.constant 8 : i32
    %208 = arith.muli %arg0, %c8_i32_152 : i32
    %c2_i32_153 = arith.constant 2 : i32
    %209 = arith.addi %208, %c2_i32_153 : i32
    %210 = arith.index_cast %209 : i32 to index
    %c3_154 = arith.constant 3 : index
    %211 = memref.load %arg1[%210, %c3_154] : memref<16x8xi32, #tpu.memory_space<smem>>
    %c26_i32 = arith.constant 26 : i32
    %c0_i32_155 = arith.constant 0 : i32
    %212 = tpu.memref_slice %arg2[%211, %c0_i32_155] : memref<512x64xf32, #tpu.memory_space<any>> -> memref<1x64xf32, #tpu.memory_space<any>>
    %c26_i32_156 = arith.constant 26 : i32
    %c0_i32_157 = arith.constant 0 : i32
    %213 = tpu.memref_slice %arg8[%c26_i32_156, %c0_i32_157] : memref<64x64xf32, #tpu.memory_space<vmem>> -> memref<1x64xf32, #tpu.memory_space<vmem>>
    %214 = tpu.memref_slice %arg9[%c26_i32] : memref<64x!tpu.dma_semaphore, #tpu.memory_space<semaphore_mem>> -> memref<1x!tpu.dma_semaphore, #tpu.memory_space<semaphore_mem>>
    %215 = tpu.memref_squeeze %214 : memref<1x!tpu.dma_semaphore, #tpu.memory_space<semaphore_mem>> -> memref<!tpu.dma_semaphore, #tpu.memory_space<semaphore_mem>>
    tpu.enqueue_dma source(%212 : memref<1x64xf32, #tpu.memory_space<any>>) target(%213 : memref<1x64xf32, #tpu.memory_space<vmem>>) target_semaphore(%215 : memref<!tpu.dma_semaphore, #tpu.memory_space<semaphore_mem>>)
    %c8_i32_158 = arith.constant 8 : i32
    %216 = arith.muli %arg0, %c8_i32_158 : i32
    %c3_i32_159 = arith.constant 3 : i32
    %217 = arith.addi %216, %c3_i32_159 : i32
    %218 = arith.index_cast %217 : i32 to index
    %c3_160 = arith.constant 3 : index
    %219 = memref.load %arg1[%218, %c3_160] : memref<16x8xi32, #tpu.memory_space<smem>>
    %c27_i32 = arith.constant 27 : i32
    %c0_i32_161 = arith.constant 0 : i32
    %220 = tpu.memref_slice %arg2[%219, %c0_i32_161] : memref<512x64xf32, #tpu.memory_space<any>> -> memref<1x64xf32, #tpu.memory_space<any>>
    %c27_i32_162 = arith.constant 27 : i32
    %c0_i32_163 = arith.constant 0 : i32
    %221 = tpu.memref_slice %arg8[%c27_i32_162, %c0_i32_163] : memref<64x64xf32, #tpu.memory_space<vmem>> -> memref<1x64xf32, #tpu.memory_space<vmem>>
    %222 = tpu.memref_slice %arg9[%c27_i32] : memref<64x!tpu.dma_semaphore, #tpu.memory_space<semaphore_mem>> -> memref<1x!tpu.dma_semaphore, #tpu.memory_space<semaphore_mem>>
    %223 = tpu.memref_squeeze %222 : memref<1x!tpu.dma_semaphore, #tpu.memory_space<semaphore_mem>> -> memref<!tpu.dma_semaphore, #tpu.memory_space<semaphore_mem>>
    tpu.enqueue_dma source(%220 : memref<1x64xf32, #tpu.memory_space<any>>) target(%221 : memref<1x64xf32, #tpu.memory_space<vmem>>) target_semaphore(%223 : memref<!tpu.dma_semaphore, #tpu.memory_space<semaphore_mem>>)
    %c8_i32_164 = arith.constant 8 : i32
    %224 = arith.muli %arg0, %c8_i32_164 : i32
    %c4_i32_165 = arith.constant 4 : i32
    %225 = arith.addi %224, %c4_i32_165 : i32
    %226 = arith.index_cast %225 : i32 to index
    %c3_166 = arith.constant 3 : index
    %227 = memref.load %arg1[%226, %c3_166] : memref<16x8xi32, #tpu.memory_space<smem>>
    %c28_i32 = arith.constant 28 : i32
    %c0_i32_167 = arith.constant 0 : i32
    %228 = tpu.memref_slice %arg2[%227, %c0_i32_167] : memref<512x64xf32, #tpu.memory_space<any>> -> memref<1x64xf32, #tpu.memory_space<any>>
    %c28_i32_168 = arith.constant 28 : i32
    %c0_i32_169 = arith.constant 0 : i32
    %229 = tpu.memref_slice %arg8[%c28_i32_168, %c0_i32_169] : memref<64x64xf32, #tpu.memory_space<vmem>> -> memref<1x64xf32, #tpu.memory_space<vmem>>
    %230 = tpu.memref_slice %arg9[%c28_i32] : memref<64x!tpu.dma_semaphore, #tpu.memory_space<semaphore_mem>> -> memref<1x!tpu.dma_semaphore, #tpu.memory_space<semaphore_mem>>
    %231 = tpu.memref_squeeze %230 : memref<1x!tpu.dma_semaphore, #tpu.memory_space<semaphore_mem>> -> memref<!tpu.dma_semaphore, #tpu.memory_space<semaphore_mem>>
    tpu.enqueue_dma source(%228 : memref<1x64xf32, #tpu.memory_space<any>>) target(%229 : memref<1x64xf32, #tpu.memory_space<vmem>>) target_semaphore(%231 : memref<!tpu.dma_semaphore, #tpu.memory_space<semaphore_mem>>)
    %c8_i32_170 = arith.constant 8 : i32
    %232 = arith.muli %arg0, %c8_i32_170 : i32
    %c5_i32_171 = arith.constant 5 : i32
    %233 = arith.addi %232, %c5_i32_171 : i32
    %234 = arith.index_cast %233 : i32 to index
    %c3_172 = arith.constant 3 : index
    %235 = memref.load %arg1[%234, %c3_172] : memref<16x8xi32, #tpu.memory_space<smem>>
    %c29_i32 = arith.constant 29 : i32
    %c0_i32_173 = arith.constant 0 : i32
    %236 = tpu.memref_slice %arg2[%235, %c0_i32_173] : memref<512x64xf32, #tpu.memory_space<any>> -> memref<1x64xf32, #tpu.memory_space<any>>
    %c29_i32_174 = arith.constant 29 : i32
    %c0_i32_175 = arith.constant 0 : i32
    %237 = tpu.memref_slice %arg8[%c29_i32_174, %c0_i32_175] : memref<64x64xf32, #tpu.memory_space<vmem>> -> memref<1x64xf32, #tpu.memory_space<vmem>>
    %238 = tpu.memref_slice %arg9[%c29_i32] : memref<64x!tpu.dma_semaphore, #tpu.memory_space<semaphore_mem>> -> memref<1x!tpu.dma_semaphore, #tpu.memory_space<semaphore_mem>>
    %239 = tpu.memref_squeeze %238 : memref<1x!tpu.dma_semaphore, #tpu.memory_space<semaphore_mem>> -> memref<!tpu.dma_semaphore, #tpu.memory_space<semaphore_mem>>
    tpu.enqueue_dma source(%236 : memref<1x64xf32, #tpu.memory_space<any>>) target(%237 : memref<1x64xf32, #tpu.memory_space<vmem>>) target_semaphore(%239 : memref<!tpu.dma_semaphore, #tpu.memory_space<semaphore_mem>>)
    %c8_i32_176 = arith.constant 8 : i32
    %240 = arith.muli %arg0, %c8_i32_176 : i32
    %c6_i32_177 = arith.constant 6 : i32
    %241 = arith.addi %240, %c6_i32_177 : i32
    %242 = arith.index_cast %241 : i32 to index
    %c3_178 = arith.constant 3 : index
    %243 = memref.load %arg1[%242, %c3_178] : memref<16x8xi32, #tpu.memory_space<smem>>
    %c30_i32 = arith.constant 30 : i32
    %c0_i32_179 = arith.constant 0 : i32
    %244 = tpu.memref_slice %arg2[%243, %c0_i32_179] : memref<512x64xf32, #tpu.memory_space<any>> -> memref<1x64xf32, #tpu.memory_space<any>>
    %c30_i32_180 = arith.constant 30 : i32
    %c0_i32_181 = arith.constant 0 : i32
    %245 = tpu.memref_slice %arg8[%c30_i32_180, %c0_i32_181] : memref<64x64xf32, #tpu.memory_space<vmem>> -> memref<1x64xf32, #tpu.memory_space<vmem>>
    %246 = tpu.memref_slice %arg9[%c30_i32] : memref<64x!tpu.dma_semaphore, #tpu.memory_space<semaphore_mem>> -> memref<1x!tpu.dma_semaphore, #tpu.memory_space<semaphore_mem>>
    %247 = tpu.memref_squeeze %246 : memref<1x!tpu.dma_semaphore, #tpu.memory_space<semaphore_mem>> -> memref<!tpu.dma_semaphore, #tpu.memory_space<semaphore_mem>>
    tpu.enqueue_dma source(%244 : memref<1x64xf32, #tpu.memory_space<any>>) target(%245 : memref<1x64xf32, #tpu.memory_space<vmem>>) target_semaphore(%247 : memref<!tpu.dma_semaphore, #tpu.memory_space<semaphore_mem>>)
    %c8_i32_182 = arith.constant 8 : i32
    %248 = arith.muli %arg0, %c8_i32_182 : i32
    %c7_i32_183 = arith.constant 7 : i32
    %249 = arith.addi %248, %c7_i32_183 : i32
    %250 = arith.index_cast %249 : i32 to index
    %c3_184 = arith.constant 3 : index
    %251 = memref.load %arg1[%250, %c3_184] : memref<16x8xi32, #tpu.memory_space<smem>>
    %c31_i32 = arith.constant 31 : i32
    %c0_i32_185 = arith.constant 0 : i32
    %252 = tpu.memref_slice %arg2[%251, %c0_i32_185] : memref<512x64xf32, #tpu.memory_space<any>> -> memref<1x64xf32, #tpu.memory_space<any>>
    %c31_i32_186 = arith.constant 31 : i32
    %c0_i32_187 = arith.constant 0 : i32
    %253 = tpu.memref_slice %arg8[%c31_i32_186, %c0_i32_187] : memref<64x64xf32, #tpu.memory_space<vmem>> -> memref<1x64xf32, #tpu.memory_space<vmem>>
    %254 = tpu.memref_slice %arg9[%c31_i32] : memref<64x!tpu.dma_semaphore, #tpu.memory_space<semaphore_mem>> -> memref<1x!tpu.dma_semaphore, #tpu.memory_space<semaphore_mem>>
    %255 = tpu.memref_squeeze %254 : memref<1x!tpu.dma_semaphore, #tpu.memory_space<semaphore_mem>> -> memref<!tpu.dma_semaphore, #tpu.memory_space<semaphore_mem>>
    tpu.enqueue_dma source(%252 : memref<1x64xf32, #tpu.memory_space<any>>) target(%253 : memref<1x64xf32, #tpu.memory_space<vmem>>) target_semaphore(%255 : memref<!tpu.dma_semaphore, #tpu.memory_space<semaphore_mem>>)
    %c8_i32_188 = arith.constant 8 : i32
    %256 = arith.muli %arg0, %c8_i32_188 : i32
    %c0_i32_189 = arith.constant 0 : i32
    %257 = arith.addi %256, %c0_i32_189 : i32
    %258 = arith.index_cast %257 : i32 to index
    %c4 = arith.constant 4 : index
    %259 = memref.load %arg1[%258, %c4] : memref<16x8xi32, #tpu.memory_space<smem>>
    %c32_i32 = arith.constant 32 : i32
    %c0_i32_190 = arith.constant 0 : i32
    %260 = tpu.memref_slice %arg2[%259, %c0_i32_190] : memref<512x64xf32, #tpu.memory_space<any>> -> memref<1x64xf32, #tpu.memory_space<any>>
    %c32_i32_191 = arith.constant 32 : i32
    %c0_i32_192 = arith.constant 0 : i32
    %261 = tpu.memref_slice %arg8[%c32_i32_191, %c0_i32_192] : memref<64x64xf32, #tpu.memory_space<vmem>> -> memref<1x64xf32, #tpu.memory_space<vmem>>
    %262 = tpu.memref_slice %arg9[%c32_i32] : memref<64x!tpu.dma_semaphore, #tpu.memory_space<semaphore_mem>> -> memref<1x!tpu.dma_semaphore, #tpu.memory_space<semaphore_mem>>
    %263 = tpu.memref_squeeze %262 : memref<1x!tpu.dma_semaphore, #tpu.memory_space<semaphore_mem>> -> memref<!tpu.dma_semaphore, #tpu.memory_space<semaphore_mem>>
    tpu.enqueue_dma source(%260 : memref<1x64xf32, #tpu.memory_space<any>>) target(%261 : memref<1x64xf32, #tpu.memory_space<vmem>>) target_semaphore(%263 : memref<!tpu.dma_semaphore, #tpu.memory_space<semaphore_mem>>)
    %c8_i32_193 = arith.constant 8 : i32
    %264 = arith.muli %arg0, %c8_i32_193 : i32
    %c1_i32_194 = arith.constant 1 : i32
    %265 = arith.addi %264, %c1_i32_194 : i32
    %266 = arith.index_cast %265 : i32 to index
    %c4_195 = arith.constant 4 : index
    %267 = memref.load %arg1[%266, %c4_195] : memref<16x8xi32, #tpu.memory_space<smem>>
    %c33_i32 = arith.constant 33 : i32
    %c0_i32_196 = arith.constant 0 : i32
    %268 = tpu.memref_slice %arg2[%267, %c0_i32_196] : memref<512x64xf32, #tpu.memory_space<any>> -> memref<1x64xf32, #tpu.memory_space<any>>
    %c33_i32_197 = arith.constant 33 : i32
    %c0_i32_198 = arith.constant 0 : i32
    %269 = tpu.memref_slice %arg8[%c33_i32_197, %c0_i32_198] : memref<64x64xf32, #tpu.memory_space<vmem>> -> memref<1x64xf32, #tpu.memory_space<vmem>>
    %270 = tpu.memref_slice %arg9[%c33_i32] : memref<64x!tpu.dma_semaphore, #tpu.memory_space<semaphore_mem>> -> memref<1x!tpu.dma_semaphore, #tpu.memory_space<semaphore_mem>>
    %271 = tpu.memref_squeeze %270 : memref<1x!tpu.dma_semaphore, #tpu.memory_space<semaphore_mem>> -> memref<!tpu.dma_semaphore, #tpu.memory_space<semaphore_mem>>
    tpu.enqueue_dma source(%268 : memref<1x64xf32, #tpu.memory_space<any>>) target(%269 : memref<1x64xf32, #tpu.memory_space<vmem>>) target_semaphore(%271 : memref<!tpu.dma_semaphore, #tpu.memory_space<semaphore_mem>>)
    %c8_i32_199 = arith.constant 8 : i32
    %272 = arith.muli %arg0, %c8_i32_199 : i32
    %c2_i32_200 = arith.constant 2 : i32
    %273 = arith.addi %272, %c2_i32_200 : i32
    %274 = arith.index_cast %273 : i32 to index
    %c4_201 = arith.constant 4 : index
    %275 = memref.load %arg1[%274, %c4_201] : memref<16x8xi32, #tpu.memory_space<smem>>
    %c34_i32 = arith.constant 34 : i32
    %c0_i32_202 = arith.constant 0 : i32
    %276 = tpu.memref_slice %arg2[%275, %c0_i32_202] : memref<512x64xf32, #tpu.memory_space<any>> -> memref<1x64xf32, #tpu.memory_space<any>>
    %c34_i32_203 = arith.constant 34 : i32
    %c0_i32_204 = arith.constant 0 : i32
    %277 = tpu.memref_slice %arg8[%c34_i32_203, %c0_i32_204] : memref<64x64xf32, #tpu.memory_space<vmem>> -> memref<1x64xf32, #tpu.memory_space<vmem>>
    %278 = tpu.memref_slice %arg9[%c34_i32] : memref<64x!tpu.dma_semaphore, #tpu.memory_space<semaphore_mem>> -> memref<1x!tpu.dma_semaphore, #tpu.memory_space<semaphore_mem>>
    %279 = tpu.memref_squeeze %278 : memref<1x!tpu.dma_semaphore, #tpu.memory_space<semaphore_mem>> -> memref<!tpu.dma_semaphore, #tpu.memory_space<semaphore_mem>>
    tpu.enqueue_dma source(%276 : memref<1x64xf32, #tpu.memory_space<any>>) target(%277 : memref<1x64xf32, #tpu.memory_space<vmem>>) target_semaphore(%279 : memref<!tpu.dma_semaphore, #tpu.memory_space<semaphore_mem>>)
    %c8_i32_205 = arith.constant 8 : i32
    %280 = arith.muli %arg0, %c8_i32_205 : i32
    %c3_i32_206 = arith.constant 3 : i32
    %281 = arith.addi %280, %c3_i32_206 : i32
    %282 = arith.index_cast %281 : i32 to index
    %c4_207 = arith.constant 4 : index
    %283 = memref.load %arg1[%282, %c4_207] : memref<16x8xi32, #tpu.memory_space<smem>>
    %c35_i32 = arith.constant 35 : i32
    %c0_i32_208 = arith.constant 0 : i32
    %284 = tpu.memref_slice %arg2[%283, %c0_i32_208] : memref<512x64xf32, #tpu.memory_space<any>> -> memref<1x64xf32, #tpu.memory_space<any>>
    %c35_i32_209 = arith.constant 35 : i32
    %c0_i32_210 = arith.constant 0 : i32
    %285 = tpu.memref_slice %arg8[%c35_i32_209, %c0_i32_210] : memref<64x64xf32, #tpu.memory_space<vmem>> -> memref<1x64xf32, #tpu.memory_space<vmem>>
    %286 = tpu.memref_slice %arg9[%c35_i32] : memref<64x!tpu.dma_semaphore, #tpu.memory_space<semaphore_mem>> -> memref<1x!tpu.dma_semaphore, #tpu.memory_space<semaphore_mem>>
    %287 = tpu.memref_squeeze %286 : memref<1x!tpu.dma_semaphore, #tpu.memory_space<semaphore_mem>> -> memref<!tpu.dma_semaphore, #tpu.memory_space<semaphore_mem>>
    tpu.enqueue_dma source(%284 : memref<1x64xf32, #tpu.memory_space<any>>) target(%285 : memref<1x64xf32, #tpu.memory_space<vmem>>) target_semaphore(%287 : memref<!tpu.dma_semaphore, #tpu.memory_space<semaphore_mem>>)
    %c8_i32_211 = arith.constant 8 : i32
    %288 = arith.muli %arg0, %c8_i32_211 : i32
    %c4_i32_212 = arith.constant 4 : i32
    %289 = arith.addi %288, %c4_i32_212 : i32
    %290 = arith.index_cast %289 : i32 to index
    %c4_213 = arith.constant 4 : index
    %291 = memref.load %arg1[%290, %c4_213] : memref<16x8xi32, #tpu.memory_space<smem>>
    %c36_i32 = arith.constant 36 : i32
    %c0_i32_214 = arith.constant 0 : i32
    %292 = tpu.memref_slice %arg2[%291, %c0_i32_214] : memref<512x64xf32, #tpu.memory_space<any>> -> memref<1x64xf32, #tpu.memory_space<any>>
    %c36_i32_215 = arith.constant 36 : i32
    %c0_i32_216 = arith.constant 0 : i32
    %293 = tpu.memref_slice %arg8[%c36_i32_215, %c0_i32_216] : memref<64x64xf32, #tpu.memory_space<vmem>> -> memref<1x64xf32, #tpu.memory_space<vmem>>
    %294 = tpu.memref_slice %arg9[%c36_i32] : memref<64x!tpu.dma_semaphore, #tpu.memory_space<semaphore_mem>> -> memref<1x!tpu.dma_semaphore, #tpu.memory_space<semaphore_mem>>
    %295 = tpu.memref_squeeze %294 : memref<1x!tpu.dma_semaphore, #tpu.memory_space<semaphore_mem>> -> memref<!tpu.dma_semaphore, #tpu.memory_space<semaphore_mem>>
    tpu.enqueue_dma source(%292 : memref<1x64xf32, #tpu.memory_space<any>>) target(%293 : memref<1x64xf32, #tpu.memory_space<vmem>>) target_semaphore(%295 : memref<!tpu.dma_semaphore, #tpu.memory_space<semaphore_mem>>)
    %c8_i32_217 = arith.constant 8 : i32
    %296 = arith.muli %arg0, %c8_i32_217 : i32
    %c5_i32_218 = arith.constant 5 : i32
    %297 = arith.addi %296, %c5_i32_218 : i32
    %298 = arith.index_cast %297 : i32 to index
    %c4_219 = arith.constant 4 : index
    %299 = memref.load %arg1[%298, %c4_219] : memref<16x8xi32, #tpu.memory_space<smem>>
    %c37_i32 = arith.constant 37 : i32
    %c0_i32_220 = arith.constant 0 : i32
    %300 = tpu.memref_slice %arg2[%299, %c0_i32_220] : memref<512x64xf32, #tpu.memory_space<any>> -> memref<1x64xf32, #tpu.memory_space<any>>
    %c37_i32_221 = arith.constant 37 : i32
    %c0_i32_222 = arith.constant 0 : i32
    %301 = tpu.memref_slice %arg8[%c37_i32_221, %c0_i32_222] : memref<64x64xf32, #tpu.memory_space<vmem>> -> memref<1x64xf32, #tpu.memory_space<vmem>>
    %302 = tpu.memref_slice %arg9[%c37_i32] : memref<64x!tpu.dma_semaphore, #tpu.memory_space<semaphore_mem>> -> memref<1x!tpu.dma_semaphore, #tpu.memory_space<semaphore_mem>>
    %303 = tpu.memref_squeeze %302 : memref<1x!tpu.dma_semaphore, #tpu.memory_space<semaphore_mem>> -> memref<!tpu.dma_semaphore, #tpu.memory_space<semaphore_mem>>
    tpu.enqueue_dma source(%300 : memref<1x64xf32, #tpu.memory_space<any>>) target(%301 : memref<1x64xf32, #tpu.memory_space<vmem>>) target_semaphore(%303 : memref<!tpu.dma_semaphore, #tpu.memory_space<semaphore_mem>>)
    %c8_i32_223 = arith.constant 8 : i32
    %304 = arith.muli %arg0, %c8_i32_223 : i32
    %c6_i32_224 = arith.constant 6 : i32
    %305 = arith.addi %304, %c6_i32_224 : i32
    %306 = arith.index_cast %305 : i32 to index
    %c4_225 = arith.constant 4 : index
    %307 = memref.load %arg1[%306, %c4_225] : memref<16x8xi32, #tpu.memory_space<smem>>
    %c38_i32 = arith.constant 38 : i32
    %c0_i32_226 = arith.constant 0 : i32
    %308 = tpu.memref_slice %arg2[%307, %c0_i32_226] : memref<512x64xf32, #tpu.memory_space<any>> -> memref<1x64xf32, #tpu.memory_space<any>>
    %c38_i32_227 = arith.constant 38 : i32
    %c0_i32_228 = arith.constant 0 : i32
    %309 = tpu.memref_slice %arg8[%c38_i32_227, %c0_i32_228] : memref<64x64xf32, #tpu.memory_space<vmem>> -> memref<1x64xf32, #tpu.memory_space<vmem>>
    %310 = tpu.memref_slice %arg9[%c38_i32] : memref<64x!tpu.dma_semaphore, #tpu.memory_space<semaphore_mem>> -> memref<1x!tpu.dma_semaphore, #tpu.memory_space<semaphore_mem>>
    %311 = tpu.memref_squeeze %310 : memref<1x!tpu.dma_semaphore, #tpu.memory_space<semaphore_mem>> -> memref<!tpu.dma_semaphore, #tpu.memory_space<semaphore_mem>>
    tpu.enqueue_dma source(%308 : memref<1x64xf32, #tpu.memory_space<any>>) target(%309 : memref<1x64xf32, #tpu.memory_space<vmem>>) target_semaphore(%311 : memref<!tpu.dma_semaphore, #tpu.memory_space<semaphore_mem>>)
    %c8_i32_229 = arith.constant 8 : i32
    %312 = arith.muli %arg0, %c8_i32_229 : i32
    %c7_i32_230 = arith.constant 7 : i32
    %313 = arith.addi %312, %c7_i32_230 : i32
    %314 = arith.index_cast %313 : i32 to index
    %c4_231 = arith.constant 4 : index
    %315 = memref.load %arg1[%314, %c4_231] : memref<16x8xi32, #tpu.memory_space<smem>>
    %c39_i32 = arith.constant 39 : i32
    %c0_i32_232 = arith.constant 0 : i32
    %316 = tpu.memref_slice %arg2[%315, %c0_i32_232] : memref<512x64xf32, #tpu.memory_space<any>> -> memref<1x64xf32, #tpu.memory_space<any>>
    %c39_i32_233 = arith.constant 39 : i32
    %c0_i32_234 = arith.constant 0 : i32
    %317 = tpu.memref_slice %arg8[%c39_i32_233, %c0_i32_234] : memref<64x64xf32, #tpu.memory_space<vmem>> -> memref<1x64xf32, #tpu.memory_space<vmem>>
    %318 = tpu.memref_slice %arg9[%c39_i32] : memref<64x!tpu.dma_semaphore, #tpu.memory_space<semaphore_mem>> -> memref<1x!tpu.dma_semaphore, #tpu.memory_space<semaphore_mem>>
    %319 = tpu.memref_squeeze %318 : memref<1x!tpu.dma_semaphore, #tpu.memory_space<semaphore_mem>> -> memref<!tpu.dma_semaphore, #tpu.memory_space<semaphore_mem>>
    tpu.enqueue_dma source(%316 : memref<1x64xf32, #tpu.memory_space<any>>) target(%317 : memref<1x64xf32, #tpu.memory_space<vmem>>) target_semaphore(%319 : memref<!tpu.dma_semaphore, #tpu.memory_space<semaphore_mem>>)
    %c8_i32_235 = arith.constant 8 : i32
    %320 = arith.muli %arg0, %c8_i32_235 : i32
    %c0_i32_236 = arith.constant 0 : i32
    %321 = arith.addi %320, %c0_i32_236 : i32
    %322 = arith.index_cast %321 : i32 to index
    %c5 = arith.constant 5 : index
    %323 = memref.load %arg1[%322, %c5] : memref<16x8xi32, #tpu.memory_space<smem>>
    %c40_i32 = arith.constant 40 : i32
    %c0_i32_237 = arith.constant 0 : i32
    %324 = tpu.memref_slice %arg2[%323, %c0_i32_237] : memref<512x64xf32, #tpu.memory_space<any>> -> memref<1x64xf32, #tpu.memory_space<any>>
    %c40_i32_238 = arith.constant 40 : i32
    %c0_i32_239 = arith.constant 0 : i32
    %325 = tpu.memref_slice %arg8[%c40_i32_238, %c0_i32_239] : memref<64x64xf32, #tpu.memory_space<vmem>> -> memref<1x64xf32, #tpu.memory_space<vmem>>
    %326 = tpu.memref_slice %arg9[%c40_i32] : memref<64x!tpu.dma_semaphore, #tpu.memory_space<semaphore_mem>> -> memref<1x!tpu.dma_semaphore, #tpu.memory_space<semaphore_mem>>
    %327 = tpu.memref_squeeze %326 : memref<1x!tpu.dma_semaphore, #tpu.memory_space<semaphore_mem>> -> memref<!tpu.dma_semaphore, #tpu.memory_space<semaphore_mem>>
    tpu.enqueue_dma source(%324 : memref<1x64xf32, #tpu.memory_space<any>>) target(%325 : memref<1x64xf32, #tpu.memory_space<vmem>>) target_semaphore(%327 : memref<!tpu.dma_semaphore, #tpu.memory_space<semaphore_mem>>)
    %c8_i32_240 = arith.constant 8 : i32
    %328 = arith.muli %arg0, %c8_i32_240 : i32
    %c1_i32_241 = arith.constant 1 : i32
    %329 = arith.addi %328, %c1_i32_241 : i32
    %330 = arith.index_cast %329 : i32 to index
    %c5_242 = arith.constant 5 : index
    %331 = memref.load %arg1[%330, %c5_242] : memref<16x8xi32, #tpu.memory_space<smem>>
    %c41_i32 = arith.constant 41 : i32
    %c0_i32_243 = arith.constant 0 : i32
    %332 = tpu.memref_slice %arg2[%331, %c0_i32_243] : memref<512x64xf32, #tpu.memory_space<any>> -> memref<1x64xf32, #tpu.memory_space<any>>
    %c41_i32_244 = arith.constant 41 : i32
    %c0_i32_245 = arith.constant 0 : i32
    %333 = tpu.memref_slice %arg8[%c41_i32_244, %c0_i32_245] : memref<64x64xf32, #tpu.memory_space<vmem>> -> memref<1x64xf32, #tpu.memory_space<vmem>>
    %334 = tpu.memref_slice %arg9[%c41_i32] : memref<64x!tpu.dma_semaphore, #tpu.memory_space<semaphore_mem>> -> memref<1x!tpu.dma_semaphore, #tpu.memory_space<semaphore_mem>>
    %335 = tpu.memref_squeeze %334 : memref<1x!tpu.dma_semaphore, #tpu.memory_space<semaphore_mem>> -> memref<!tpu.dma_semaphore, #tpu.memory_space<semaphore_mem>>
    tpu.enqueue_dma source(%332 : memref<1x64xf32, #tpu.memory_space<any>>) target(%333 : memref<1x64xf32, #tpu.memory_space<vmem>>) target_semaphore(%335 : memref<!tpu.dma_semaphore, #tpu.memory_space<semaphore_mem>>)
    %c8_i32_246 = arith.constant 8 : i32
    %336 = arith.muli %arg0, %c8_i32_246 : i32
    %c2_i32_247 = arith.constant 2 : i32
    %337 = arith.addi %336, %c2_i32_247 : i32
    %338 = arith.index_cast %337 : i32 to index
    %c5_248 = arith.constant 5 : index
    %339 = memref.load %arg1[%338, %c5_248] : memref<16x8xi32, #tpu.memory_space<smem>>
    %c42_i32 = arith.constant 42 : i32
    %c0_i32_249 = arith.constant 0 : i32
    %340 = tpu.memref_slice %arg2[%339, %c0_i32_249] : memref<512x64xf32, #tpu.memory_space<any>> -> memref<1x64xf32, #tpu.memory_space<any>>
    %c42_i32_250 = arith.constant 42 : i32
    %c0_i32_251 = arith.constant 0 : i32
    %341 = tpu.memref_slice %arg8[%c42_i32_250, %c0_i32_251] : memref<64x64xf32, #tpu.memory_space<vmem>> -> memref<1x64xf32, #tpu.memory_space<vmem>>
    %342 = tpu.memref_slice %arg9[%c42_i32] : memref<64x!tpu.dma_semaphore, #tpu.memory_space<semaphore_mem>> -> memref<1x!tpu.dma_semaphore, #tpu.memory_space<semaphore_mem>>
    %343 = tpu.memref_squeeze %342 : memref<1x!tpu.dma_semaphore, #tpu.memory_space<semaphore_mem>> -> memref<!tpu.dma_semaphore, #tpu.memory_space<semaphore_mem>>
    tpu.enqueue_dma source(%340 : memref<1x64xf32, #tpu.memory_space<any>>) target(%341 : memref<1x64xf32, #tpu.memory_space<vmem>>) target_semaphore(%343 : memref<!tpu.dma_semaphore, #tpu.memory_space<semaphore_mem>>)
    %c8_i32_252 = arith.constant 8 : i32
    %344 = arith.muli %arg0, %c8_i32_252 : i32
    %c3_i32_253 = arith.constant 3 : i32
    %345 = arith.addi %344, %c3_i32_253 : i32
    %346 = arith.index_cast %345 : i32 to index
    %c5_254 = arith.constant 5 : index
    %347 = memref.load %arg1[%346, %c5_254] : memref<16x8xi32, #tpu.memory_space<smem>>
    %c43_i32 = arith.constant 43 : i32
    %c0_i32_255 = arith.constant 0 : i32
    %348 = tpu.memref_slice %arg2[%347, %c0_i32_255] : memref<512x64xf32, #tpu.memory_space<any>> -> memref<1x64xf32, #tpu.memory_space<any>>
    %c43_i32_256 = arith.constant 43 : i32
    %c0_i32_257 = arith.constant 0 : i32
    %349 = tpu.memref_slice %arg8[%c43_i32_256, %c0_i32_257] : memref<64x64xf32, #tpu.memory_space<vmem>> -> memref<1x64xf32, #tpu.memory_space<vmem>>
    %350 = tpu.memref_slice %arg9[%c43_i32] : memref<64x!tpu.dma_semaphore, #tpu.memory_space<semaphore_mem>> -> memref<1x!tpu.dma_semaphore, #tpu.memory_space<semaphore_mem>>
    %351 = tpu.memref_squeeze %350 : memref<1x!tpu.dma_semaphore, #tpu.memory_space<semaphore_mem>> -> memref<!tpu.dma_semaphore, #tpu.memory_space<semaphore_mem>>
    tpu.enqueue_dma source(%348 : memref<1x64xf32, #tpu.memory_space<any>>) target(%349 : memref<1x64xf32, #tpu.memory_space<vmem>>) target_semaphore(%351 : memref<!tpu.dma_semaphore, #tpu.memory_space<semaphore_mem>>)
    %c8_i32_258 = arith.constant 8 : i32
    %352 = arith.muli %arg0, %c8_i32_258 : i32
    %c4_i32_259 = arith.constant 4 : i32
    %353 = arith.addi %352, %c4_i32_259 : i32
    %354 = arith.index_cast %353 : i32 to index
    %c5_260 = arith.constant 5 : index
    %355 = memref.load %arg1[%354, %c5_260] : memref<16x8xi32, #tpu.memory_space<smem>>
    %c44_i32 = arith.constant 44 : i32
    %c0_i32_261 = arith.constant 0 : i32
    %356 = tpu.memref_slice %arg2[%355, %c0_i32_261] : memref<512x64xf32, #tpu.memory_space<any>> -> memref<1x64xf32, #tpu.memory_space<any>>
    %c44_i32_262 = arith.constant 44 : i32
    %c0_i32_263 = arith.constant 0 : i32
    %357 = tpu.memref_slice %arg8[%c44_i32_262, %c0_i32_263] : memref<64x64xf32, #tpu.memory_space<vmem>> -> memref<1x64xf32, #tpu.memory_space<vmem>>
    %358 = tpu.memref_slice %arg9[%c44_i32] : memref<64x!tpu.dma_semaphore, #tpu.memory_space<semaphore_mem>> -> memref<1x!tpu.dma_semaphore, #tpu.memory_space<semaphore_mem>>
    %359 = tpu.memref_squeeze %358 : memref<1x!tpu.dma_semaphore, #tpu.memory_space<semaphore_mem>> -> memref<!tpu.dma_semaphore, #tpu.memory_space<semaphore_mem>>
    tpu.enqueue_dma source(%356 : memref<1x64xf32, #tpu.memory_space<any>>) target(%357 : memref<1x64xf32, #tpu.memory_space<vmem>>) target_semaphore(%359 : memref<!tpu.dma_semaphore, #tpu.memory_space<semaphore_mem>>)
    %c8_i32_264 = arith.constant 8 : i32
    %360 = arith.muli %arg0, %c8_i32_264 : i32
    %c5_i32_265 = arith.constant 5 : i32
    %361 = arith.addi %360, %c5_i32_265 : i32
    %362 = arith.index_cast %361 : i32 to index
    %c5_266 = arith.constant 5 : index
    %363 = memref.load %arg1[%362, %c5_266] : memref<16x8xi32, #tpu.memory_space<smem>>
    %c45_i32 = arith.constant 45 : i32
    %c0_i32_267 = arith.constant 0 : i32
    %364 = tpu.memref_slice %arg2[%363, %c0_i32_267] : memref<512x64xf32, #tpu.memory_space<any>> -> memref<1x64xf32, #tpu.memory_space<any>>
    %c45_i32_268 = arith.constant 45 : i32
    %c0_i32_269 = arith.constant 0 : i32
    %365 = tpu.memref_slice %arg8[%c45_i32_268, %c0_i32_269] : memref<64x64xf32, #tpu.memory_space<vmem>> -> memref<1x64xf32, #tpu.memory_space<vmem>>
    %366 = tpu.memref_slice %arg9[%c45_i32] : memref<64x!tpu.dma_semaphore, #tpu.memory_space<semaphore_mem>> -> memref<1x!tpu.dma_semaphore, #tpu.memory_space<semaphore_mem>>
    %367 = tpu.memref_squeeze %366 : memref<1x!tpu.dma_semaphore, #tpu.memory_space<semaphore_mem>> -> memref<!tpu.dma_semaphore, #tpu.memory_space<semaphore_mem>>
    tpu.enqueue_dma source(%364 : memref<1x64xf32, #tpu.memory_space<any>>) target(%365 : memref<1x64xf32, #tpu.memory_space<vmem>>) target_semaphore(%367 : memref<!tpu.dma_semaphore, #tpu.memory_space<semaphore_mem>>)
    %c8_i32_270 = arith.constant 8 : i32
    %368 = arith.muli %arg0, %c8_i32_270 : i32
    %c6_i32_271 = arith.constant 6 : i32
    %369 = arith.addi %368, %c6_i32_271 : i32
    %370 = arith.index_cast %369 : i32 to index
    %c5_272 = arith.constant 5 : index
    %371 = memref.load %arg1[%370, %c5_272] : memref<16x8xi32, #tpu.memory_space<smem>>
    %c46_i32 = arith.constant 46 : i32
    %c0_i32_273 = arith.constant 0 : i32
    %372 = tpu.memref_slice %arg2[%371, %c0_i32_273] : memref<512x64xf32, #tpu.memory_space<any>> -> memref<1x64xf32, #tpu.memory_space<any>>
    %c46_i32_274 = arith.constant 46 : i32
    %c0_i32_275 = arith.constant 0 : i32
    %373 = tpu.memref_slice %arg8[%c46_i32_274, %c0_i32_275] : memref<64x64xf32, #tpu.memory_space<vmem>> -> memref<1x64xf32, #tpu.memory_space<vmem>>
    %374 = tpu.memref_slice %arg9[%c46_i32] : memref<64x!tpu.dma_semaphore, #tpu.memory_space<semaphore_mem>> -> memref<1x!tpu.dma_semaphore, #tpu.memory_space<semaphore_mem>>
    %375 = tpu.memref_squeeze %374 : memref<1x!tpu.dma_semaphore, #tpu.memory_space<semaphore_mem>> -> memref<!tpu.dma_semaphore, #tpu.memory_space<semaphore_mem>>
    tpu.enqueue_dma source(%372 : memref<1x64xf32, #tpu.memory_space<any>>) target(%373 : memref<1x64xf32, #tpu.memory_space<vmem>>) target_semaphore(%375 : memref<!tpu.dma_semaphore, #tpu.memory_space<semaphore_mem>>)
    %c8_i32_276 = arith.constant 8 : i32
    %376 = arith.muli %arg0, %c8_i32_276 : i32
    %c7_i32_277 = arith.constant 7 : i32
    %377 = arith.addi %376, %c7_i32_277 : i32
    %378 = arith.index_cast %377 : i32 to index
    %c5_278 = arith.constant 5 : index
    %379 = memref.load %arg1[%378, %c5_278] : memref<16x8xi32, #tpu.memory_space<smem>>
    %c47_i32 = arith.constant 47 : i32
    %c0_i32_279 = arith.constant 0 : i32
    %380 = tpu.memref_slice %arg2[%379, %c0_i32_279] : memref<512x64xf32, #tpu.memory_space<any>> -> memref<1x64xf32, #tpu.memory_space<any>>
    %c47_i32_280 = arith.constant 47 : i32
    %c0_i32_281 = arith.constant 0 : i32
    %381 = tpu.memref_slice %arg8[%c47_i32_280, %c0_i32_281] : memref<64x64xf32, #tpu.memory_space<vmem>> -> memref<1x64xf32, #tpu.memory_space<vmem>>
    %382 = tpu.memref_slice %arg9[%c47_i32] : memref<64x!tpu.dma_semaphore, #tpu.memory_space<semaphore_mem>> -> memref<1x!tpu.dma_semaphore, #tpu.memory_space<semaphore_mem>>
    %383 = tpu.memref_squeeze %382 : memref<1x!tpu.dma_semaphore, #tpu.memory_space<semaphore_mem>> -> memref<!tpu.dma_semaphore, #tpu.memory_space<semaphore_mem>>
    tpu.enqueue_dma source(%380 : memref<1x64xf32, #tpu.memory_space<any>>) target(%381 : memref<1x64xf32, #tpu.memory_space<vmem>>) target_semaphore(%383 : memref<!tpu.dma_semaphore, #tpu.memory_space<semaphore_mem>>)
    %c8_i32_282 = arith.constant 8 : i32
    %384 = arith.muli %arg0, %c8_i32_282 : i32
    %c0_i32_283 = arith.constant 0 : i32
    %385 = arith.addi %384, %c0_i32_283 : i32
    %386 = arith.index_cast %385 : i32 to index
    %c6 = arith.constant 6 : index
    %387 = memref.load %arg1[%386, %c6] : memref<16x8xi32, #tpu.memory_space<smem>>
    %c48_i32 = arith.constant 48 : i32
    %c0_i32_284 = arith.constant 0 : i32
    %388 = tpu.memref_slice %arg2[%387, %c0_i32_284] : memref<512x64xf32, #tpu.memory_space<any>> -> memref<1x64xf32, #tpu.memory_space<any>>
    %c48_i32_285 = arith.constant 48 : i32
    %c0_i32_286 = arith.constant 0 : i32
    %389 = tpu.memref_slice %arg8[%c48_i32_285, %c0_i32_286] : memref<64x64xf32, #tpu.memory_space<vmem>> -> memref<1x64xf32, #tpu.memory_space<vmem>>
    %390 = tpu.memref_slice %arg9[%c48_i32] : memref<64x!tpu.dma_semaphore, #tpu.memory_space<semaphore_mem>> -> memref<1x!tpu.dma_semaphore, #tpu.memory_space<semaphore_mem>>
    %391 = tpu.memref_squeeze %390 : memref<1x!tpu.dma_semaphore, #tpu.memory_space<semaphore_mem>> -> memref<!tpu.dma_semaphore, #tpu.memory_space<semaphore_mem>>
    tpu.enqueue_dma source(%388 : memref<1x64xf32, #tpu.memory_space<any>>) target(%389 : memref<1x64xf32, #tpu.memory_space<vmem>>) target_semaphore(%391 : memref<!tpu.dma_semaphore, #tpu.memory_space<semaphore_mem>>)
    %c8_i32_287 = arith.constant 8 : i32
    %392 = arith.muli %arg0, %c8_i32_287 : i32
    %c1_i32_288 = arith.constant 1 : i32
    %393 = arith.addi %392, %c1_i32_288 : i32
    %394 = arith.index_cast %393 : i32 to index
    %c6_289 = arith.constant 6 : index
    %395 = memref.load %arg1[%394, %c6_289] : memref<16x8xi32, #tpu.memory_space<smem>>
    %c49_i32 = arith.constant 49 : i32
    %c0_i32_290 = arith.constant 0 : i32
    %396 = tpu.memref_slice %arg2[%395, %c0_i32_290] : memref<512x64xf32, #tpu.memory_space<any>> -> memref<1x64xf32, #tpu.memory_space<any>>
    %c49_i32_291 = arith.constant 49 : i32
    %c0_i32_292 = arith.constant 0 : i32
    %397 = tpu.memref_slice %arg8[%c49_i32_291, %c0_i32_292] : memref<64x64xf32, #tpu.memory_space<vmem>> -> memref<1x64xf32, #tpu.memory_space<vmem>>
    %398 = tpu.memref_slice %arg9[%c49_i32] : memref<64x!tpu.dma_semaphore, #tpu.memory_space<semaphore_mem>> -> memref<1x!tpu.dma_semaphore, #tpu.memory_space<semaphore_mem>>
    %399 = tpu.memref_squeeze %398 : memref<1x!tpu.dma_semaphore, #tpu.memory_space<semaphore_mem>> -> memref<!tpu.dma_semaphore, #tpu.memory_space<semaphore_mem>>
    tpu.enqueue_dma source(%396 : memref<1x64xf32, #tpu.memory_space<any>>) target(%397 : memref<1x64xf32, #tpu.memory_space<vmem>>) target_semaphore(%399 : memref<!tpu.dma_semaphore, #tpu.memory_space<semaphore_mem>>)
    %c8_i32_293 = arith.constant 8 : i32
    %400 = arith.muli %arg0, %c8_i32_293 : i32
    %c2_i32_294 = arith.constant 2 : i32
    %401 = arith.addi %400, %c2_i32_294 : i32
    %402 = arith.index_cast %401 : i32 to index
    %c6_295 = arith.constant 6 : index
    %403 = memref.load %arg1[%402, %c6_295] : memref<16x8xi32, #tpu.memory_space<smem>>
    %c50_i32 = arith.constant 50 : i32
    %c0_i32_296 = arith.constant 0 : i32
    %404 = tpu.memref_slice %arg2[%403, %c0_i32_296] : memref<512x64xf32, #tpu.memory_space<any>> -> memref<1x64xf32, #tpu.memory_space<any>>
    %c50_i32_297 = arith.constant 50 : i32
    %c0_i32_298 = arith.constant 0 : i32
    %405 = tpu.memref_slice %arg8[%c50_i32_297, %c0_i32_298] : memref<64x64xf32, #tpu.memory_space<vmem>> -> memref<1x64xf32, #tpu.memory_space<vmem>>
    %406 = tpu.memref_slice %arg9[%c50_i32] : memref<64x!tpu.dma_semaphore, #tpu.memory_space<semaphore_mem>> -> memref<1x!tpu.dma_semaphore, #tpu.memory_space<semaphore_mem>>
    %407 = tpu.memref_squeeze %406 : memref<1x!tpu.dma_semaphore, #tpu.memory_space<semaphore_mem>> -> memref<!tpu.dma_semaphore, #tpu.memory_space<semaphore_mem>>
    tpu.enqueue_dma source(%404 : memref<1x64xf32, #tpu.memory_space<any>>) target(%405 : memref<1x64xf32, #tpu.memory_space<vmem>>) target_semaphore(%407 : memref<!tpu.dma_semaphore, #tpu.memory_space<semaphore_mem>>)
    %c8_i32_299 = arith.constant 8 : i32
    %408 = arith.muli %arg0, %c8_i32_299 : i32
    %c3_i32_300 = arith.constant 3 : i32
    %409 = arith.addi %408, %c3_i32_300 : i32
    %410 = arith.index_cast %409 : i32 to index
    %c6_301 = arith.constant 6 : index
    %411 = memref.load %arg1[%410, %c6_301] : memref<16x8xi32, #tpu.memory_space<smem>>
    %c51_i32 = arith.constant 51 : i32
    %c0_i32_302 = arith.constant 0 : i32
    %412 = tpu.memref_slice %arg2[%411, %c0_i32_302] : memref<512x64xf32, #tpu.memory_space<any>> -> memref<1x64xf32, #tpu.memory_space<any>>
    %c51_i32_303 = arith.constant 51 : i32
    %c0_i32_304 = arith.constant 0 : i32
    %413 = tpu.memref_slice %arg8[%c51_i32_303, %c0_i32_304] : memref<64x64xf32, #tpu.memory_space<vmem>> -> memref<1x64xf32, #tpu.memory_space<vmem>>
    %414 = tpu.memref_slice %arg9[%c51_i32] : memref<64x!tpu.dma_semaphore, #tpu.memory_space<semaphore_mem>> -> memref<1x!tpu.dma_semaphore, #tpu.memory_space<semaphore_mem>>
    %415 = tpu.memref_squeeze %414 : memref<1x!tpu.dma_semaphore, #tpu.memory_space<semaphore_mem>> -> memref<!tpu.dma_semaphore, #tpu.memory_space<semaphore_mem>>
    tpu.enqueue_dma source(%412 : memref<1x64xf32, #tpu.memory_space<any>>) target(%413 : memref<1x64xf32, #tpu.memory_space<vmem>>) target_semaphore(%415 : memref<!tpu.dma_semaphore, #tpu.memory_space<semaphore_mem>>)
    %c8_i32_305 = arith.constant 8 : i32
    %416 = arith.muli %arg0, %c8_i32_305 : i32
    %c4_i32_306 = arith.constant 4 : i32
    %417 = arith.addi %416, %c4_i32_306 : i32
    %418 = arith.index_cast %417 : i32 to index
    %c6_307 = arith.constant 6 : index
    %419 = memref.load %arg1[%418, %c6_307] : memref<16x8xi32, #tpu.memory_space<smem>>
    %c52_i32 = arith.constant 52 : i32
    %c0_i32_308 = arith.constant 0 : i32
    %420 = tpu.memref_slice %arg2[%419, %c0_i32_308] : memref<512x64xf32, #tpu.memory_space<any>> -> memref<1x64xf32, #tpu.memory_space<any>>
    %c52_i32_309 = arith.constant 52 : i32
    %c0_i32_310 = arith.constant 0 : i32
    %421 = tpu.memref_slice %arg8[%c52_i32_309, %c0_i32_310] : memref<64x64xf32, #tpu.memory_space<vmem>> -> memref<1x64xf32, #tpu.memory_space<vmem>>
    %422 = tpu.memref_slice %arg9[%c52_i32] : memref<64x!tpu.dma_semaphore, #tpu.memory_space<semaphore_mem>> -> memref<1x!tpu.dma_semaphore, #tpu.memory_space<semaphore_mem>>
    %423 = tpu.memref_squeeze %422 : memref<1x!tpu.dma_semaphore, #tpu.memory_space<semaphore_mem>> -> memref<!tpu.dma_semaphore, #tpu.memory_space<semaphore_mem>>
    tpu.enqueue_dma source(%420 : memref<1x64xf32, #tpu.memory_space<any>>) target(%421 : memref<1x64xf32, #tpu.memory_space<vmem>>) target_semaphore(%423 : memref<!tpu.dma_semaphore, #tpu.memory_space<semaphore_mem>>)
    %c8_i32_311 = arith.constant 8 : i32
    %424 = arith.muli %arg0, %c8_i32_311 : i32
    %c5_i32_312 = arith.constant 5 : i32
    %425 = arith.addi %424, %c5_i32_312 : i32
    %426 = arith.index_cast %425 : i32 to index
    %c6_313 = arith.constant 6 : index
    %427 = memref.load %arg1[%426, %c6_313] : memref<16x8xi32, #tpu.memory_space<smem>>
    %c53_i32 = arith.constant 53 : i32
    %c0_i32_314 = arith.constant 0 : i32
    %428 = tpu.memref_slice %arg2[%427, %c0_i32_314] : memref<512x64xf32, #tpu.memory_space<any>> -> memref<1x64xf32, #tpu.memory_space<any>>
    %c53_i32_315 = arith.constant 53 : i32
    %c0_i32_316 = arith.constant 0 : i32
    %429 = tpu.memref_slice %arg8[%c53_i32_315, %c0_i32_316] : memref<64x64xf32, #tpu.memory_space<vmem>> -> memref<1x64xf32, #tpu.memory_space<vmem>>
    %430 = tpu.memref_slice %arg9[%c53_i32] : memref<64x!tpu.dma_semaphore, #tpu.memory_space<semaphore_mem>> -> memref<1x!tpu.dma_semaphore, #tpu.memory_space<semaphore_mem>>
    %431 = tpu.memref_squeeze %430 : memref<1x!tpu.dma_semaphore, #tpu.memory_space<semaphore_mem>> -> memref<!tpu.dma_semaphore, #tpu.memory_space<semaphore_mem>>
    tpu.enqueue_dma source(%428 : memref<1x64xf32, #tpu.memory_space<any>>) target(%429 : memref<1x64xf32, #tpu.memory_space<vmem>>) target_semaphore(%431 : memref<!tpu.dma_semaphore, #tpu.memory_space<semaphore_mem>>)
    %c8_i32_317 = arith.constant 8 : i32
    %432 = arith.muli %arg0, %c8_i32_317 : i32
    %c6_i32_318 = arith.constant 6 : i32
    %433 = arith.addi %432, %c6_i32_318 : i32
    %434 = arith.index_cast %433 : i32 to index
    %c6_319 = arith.constant 6 : index
    %435 = memref.load %arg1[%434, %c6_319] : memref<16x8xi32, #tpu.memory_space<smem>>
    %c54_i32 = arith.constant 54 : i32
    %c0_i32_320 = arith.constant 0 : i32
    %436 = tpu.memref_slice %arg2[%435, %c0_i32_320] : memref<512x64xf32, #tpu.memory_space<any>> -> memref<1x64xf32, #tpu.memory_space<any>>
    %c54_i32_321 = arith.constant 54 : i32
    %c0_i32_322 = arith.constant 0 : i32
    %437 = tpu.memref_slice %arg8[%c54_i32_321, %c0_i32_322] : memref<64x64xf32, #tpu.memory_space<vmem>> -> memref<1x64xf32, #tpu.memory_space<vmem>>
    %438 = tpu.memref_slice %arg9[%c54_i32] : memref<64x!tpu.dma_semaphore, #tpu.memory_space<semaphore_mem>> -> memref<1x!tpu.dma_semaphore, #tpu.memory_space<semaphore_mem>>
    %439 = tpu.memref_squeeze %438 : memref<1x!tpu.dma_semaphore, #tpu.memory_space<semaphore_mem>> -> memref<!tpu.dma_semaphore, #tpu.memory_space<semaphore_mem>>
    tpu.enqueue_dma source(%436 : memref<1x64xf32, #tpu.memory_space<any>>) target(%437 : memref<1x64xf32, #tpu.memory_space<vmem>>) target_semaphore(%439 : memref<!tpu.dma_semaphore, #tpu.memory_space<semaphore_mem>>)
    %c8_i32_323 = arith.constant 8 : i32
    %440 = arith.muli %arg0, %c8_i32_323 : i32
    %c7_i32_324 = arith.constant 7 : i32
    %441 = arith.addi %440, %c7_i32_324 : i32
    %442 = arith.index_cast %441 : i32 to index
    %c6_325 = arith.constant 6 : index
    %443 = memref.load %arg1[%442, %c6_325] : memref<16x8xi32, #tpu.memory_space<smem>>
    %c55_i32 = arith.constant 55 : i32
    %c0_i32_326 = arith.constant 0 : i32
    %444 = tpu.memref_slice %arg2[%443, %c0_i32_326] : memref<512x64xf32, #tpu.memory_space<any>> -> memref<1x64xf32, #tpu.memory_space<any>>
    %c55_i32_327 = arith.constant 55 : i32
    %c0_i32_328 = arith.constant 0 : i32
    %445 = tpu.memref_slice %arg8[%c55_i32_327, %c0_i32_328] : memref<64x64xf32, #tpu.memory_space<vmem>> -> memref<1x64xf32, #tpu.memory_space<vmem>>
    %446 = tpu.memref_slice %arg9[%c55_i32] : memref<64x!tpu.dma_semaphore, #tpu.memory_space<semaphore_mem>> -> memref<1x!tpu.dma_semaphore, #tpu.memory_space<semaphore_mem>>
    %447 = tpu.memref_squeeze %446 : memref<1x!tpu.dma_semaphore, #tpu.memory_space<semaphore_mem>> -> memref<!tpu.dma_semaphore, #tpu.memory_space<semaphore_mem>>
    tpu.enqueue_dma source(%444 : memref<1x64xf32, #tpu.memory_space<any>>) target(%445 : memref<1x64xf32, #tpu.memory_space<vmem>>) target_semaphore(%447 : memref<!tpu.dma_semaphore, #tpu.memory_space<semaphore_mem>>)
    %c8_i32_329 = arith.constant 8 : i32
    %448 = arith.muli %arg0, %c8_i32_329 : i32
    %c0_i32_330 = arith.constant 0 : i32
    %449 = arith.addi %448, %c0_i32_330 : i32
    %450 = arith.index_cast %449 : i32 to index
    %c7 = arith.constant 7 : index
    %451 = memref.load %arg1[%450, %c7] : memref<16x8xi32, #tpu.memory_space<smem>>
    %c56_i32 = arith.constant 56 : i32
    %c0_i32_331 = arith.constant 0 : i32
    %452 = tpu.memref_slice %arg2[%451, %c0_i32_331] : memref<512x64xf32, #tpu.memory_space<any>> -> memref<1x64xf32, #tpu.memory_space<any>>
    %c56_i32_332 = arith.constant 56 : i32
    %c0_i32_333 = arith.constant 0 : i32
    %453 = tpu.memref_slice %arg8[%c56_i32_332, %c0_i32_333] : memref<64x64xf32, #tpu.memory_space<vmem>> -> memref<1x64xf32, #tpu.memory_space<vmem>>
    %454 = tpu.memref_slice %arg9[%c56_i32] : memref<64x!tpu.dma_semaphore, #tpu.memory_space<semaphore_mem>> -> memref<1x!tpu.dma_semaphore, #tpu.memory_space<semaphore_mem>>
    %455 = tpu.memref_squeeze %454 : memref<1x!tpu.dma_semaphore, #tpu.memory_space<semaphore_mem>> -> memref<!tpu.dma_semaphore, #tpu.memory_space<semaphore_mem>>
    tpu.enqueue_dma source(%452 : memref<1x64xf32, #tpu.memory_space<any>>) target(%453 : memref<1x64xf32, #tpu.memory_space<vmem>>) target_semaphore(%455 : memref<!tpu.dma_semaphore, #tpu.memory_space<semaphore_mem>>)
    %c8_i32_334 = arith.constant 8 : i32
    %456 = arith.muli %arg0, %c8_i32_334 : i32
    %c1_i32_335 = arith.constant 1 : i32
    %457 = arith.addi %456, %c1_i32_335 : i32
    %458 = arith.index_cast %457 : i32 to index
    %c7_336 = arith.constant 7 : index
    %459 = memref.load %arg1[%458, %c7_336] : memref<16x8xi32, #tpu.memory_space<smem>>
    %c57_i32 = arith.constant 57 : i32
    %c0_i32_337 = arith.constant 0 : i32
    %460 = tpu.memref_slice %arg2[%459, %c0_i32_337] : memref<512x64xf32, #tpu.memory_space<any>> -> memref<1x64xf32, #tpu.memory_space<any>>
    %c57_i32_338 = arith.constant 57 : i32
    %c0_i32_339 = arith.constant 0 : i32
    %461 = tpu.memref_slice %arg8[%c57_i32_338, %c0_i32_339] : memref<64x64xf32, #tpu.memory_space<vmem>> -> memref<1x64xf32, #tpu.memory_space<vmem>>
    %462 = tpu.memref_slice %arg9[%c57_i32] : memref<64x!tpu.dma_semaphore, #tpu.memory_space<semaphore_mem>> -> memref<1x!tpu.dma_semaphore, #tpu.memory_space<semaphore_mem>>
    %463 = tpu.memref_squeeze %462 : memref<1x!tpu.dma_semaphore, #tpu.memory_space<semaphore_mem>> -> memref<!tpu.dma_semaphore, #tpu.memory_space<semaphore_mem>>
    tpu.enqueue_dma source(%460 : memref<1x64xf32, #tpu.memory_space<any>>) target(%461 : memref<1x64xf32, #tpu.memory_space<vmem>>) target_semaphore(%463 : memref<!tpu.dma_semaphore, #tpu.memory_space<semaphore_mem>>)
    %c8_i32_340 = arith.constant 8 : i32
    %464 = arith.muli %arg0, %c8_i32_340 : i32
    %c2_i32_341 = arith.constant 2 : i32
    %465 = arith.addi %464, %c2_i32_341 : i32
    %466 = arith.index_cast %465 : i32 to index
    %c7_342 = arith.constant 7 : index
    %467 = memref.load %arg1[%466, %c7_342] : memref<16x8xi32, #tpu.memory_space<smem>>
    %c58_i32 = arith.constant 58 : i32
    %c0_i32_343 = arith.constant 0 : i32
    %468 = tpu.memref_slice %arg2[%467, %c0_i32_343] : memref<512x64xf32, #tpu.memory_space<any>> -> memref<1x64xf32, #tpu.memory_space<any>>
    %c58_i32_344 = arith.constant 58 : i32
    %c0_i32_345 = arith.constant 0 : i32
    %469 = tpu.memref_slice %arg8[%c58_i32_344, %c0_i32_345] : memref<64x64xf32, #tpu.memory_space<vmem>> -> memref<1x64xf32, #tpu.memory_space<vmem>>
    %470 = tpu.memref_slice %arg9[%c58_i32] : memref<64x!tpu.dma_semaphore, #tpu.memory_space<semaphore_mem>> -> memref<1x!tpu.dma_semaphore, #tpu.memory_space<semaphore_mem>>
    %471 = tpu.memref_squeeze %470 : memref<1x!tpu.dma_semaphore, #tpu.memory_space<semaphore_mem>> -> memref<!tpu.dma_semaphore, #tpu.memory_space<semaphore_mem>>
    tpu.enqueue_dma source(%468 : memref<1x64xf32, #tpu.memory_space<any>>) target(%469 : memref<1x64xf32, #tpu.memory_space<vmem>>) target_semaphore(%471 : memref<!tpu.dma_semaphore, #tpu.memory_space<semaphore_mem>>)
    %c8_i32_346 = arith.constant 8 : i32
    %472 = arith.muli %arg0, %c8_i32_346 : i32
    %c3_i32_347 = arith.constant 3 : i32
    %473 = arith.addi %472, %c3_i32_347 : i32
    %474 = arith.index_cast %473 : i32 to index
    %c7_348 = arith.constant 7 : index
    %475 = memref.load %arg1[%474, %c7_348] : memref<16x8xi32, #tpu.memory_space<smem>>
    %c59_i32 = arith.constant 59 : i32
    %c0_i32_349 = arith.constant 0 : i32
    %476 = tpu.memref_slice %arg2[%475, %c0_i32_349] : memref<512x64xf32, #tpu.memory_space<any>> -> memref<1x64xf32, #tpu.memory_space<any>>
    %c59_i32_350 = arith.constant 59 : i32
    %c0_i32_351 = arith.constant 0 : i32
    %477 = tpu.memref_slice %arg8[%c59_i32_350, %c0_i32_351] : memref<64x64xf32, #tpu.memory_space<vmem>> -> memref<1x64xf32, #tpu.memory_space<vmem>>
    %478 = tpu.memref_slice %arg9[%c59_i32] : memref<64x!tpu.dma_semaphore, #tpu.memory_space<semaphore_mem>> -> memref<1x!tpu.dma_semaphore, #tpu.memory_space<semaphore_mem>>
    %479 = tpu.memref_squeeze %478 : memref<1x!tpu.dma_semaphore, #tpu.memory_space<semaphore_mem>> -> memref<!tpu.dma_semaphore, #tpu.memory_space<semaphore_mem>>
    tpu.enqueue_dma source(%476 : memref<1x64xf32, #tpu.memory_space<any>>) target(%477 : memref<1x64xf32, #tpu.memory_space<vmem>>) target_semaphore(%479 : memref<!tpu.dma_semaphore, #tpu.memory_space<semaphore_mem>>)
    %c8_i32_352 = arith.constant 8 : i32
    %480 = arith.muli %arg0, %c8_i32_352 : i32
    %c4_i32_353 = arith.constant 4 : i32
    %481 = arith.addi %480, %c4_i32_353 : i32
    %482 = arith.index_cast %481 : i32 to index
    %c7_354 = arith.constant 7 : index
    %483 = memref.load %arg1[%482, %c7_354] : memref<16x8xi32, #tpu.memory_space<smem>>
    %c60_i32 = arith.constant 60 : i32
    %c0_i32_355 = arith.constant 0 : i32
    %484 = tpu.memref_slice %arg2[%483, %c0_i32_355] : memref<512x64xf32, #tpu.memory_space<any>> -> memref<1x64xf32, #tpu.memory_space<any>>
    %c60_i32_356 = arith.constant 60 : i32
    %c0_i32_357 = arith.constant 0 : i32
    %485 = tpu.memref_slice %arg8[%c60_i32_356, %c0_i32_357] : memref<64x64xf32, #tpu.memory_space<vmem>> -> memref<1x64xf32, #tpu.memory_space<vmem>>
    %486 = tpu.memref_slice %arg9[%c60_i32] : memref<64x!tpu.dma_semaphore, #tpu.memory_space<semaphore_mem>> -> memref<1x!tpu.dma_semaphore, #tpu.memory_space<semaphore_mem>>
    %487 = tpu.memref_squeeze %486 : memref<1x!tpu.dma_semaphore, #tpu.memory_space<semaphore_mem>> -> memref<!tpu.dma_semaphore, #tpu.memory_space<semaphore_mem>>
    tpu.enqueue_dma source(%484 : memref<1x64xf32, #tpu.memory_space<any>>) target(%485 : memref<1x64xf32, #tpu.memory_space<vmem>>) target_semaphore(%487 : memref<!tpu.dma_semaphore, #tpu.memory_space<semaphore_mem>>)
    %c8_i32_358 = arith.constant 8 : i32
    %488 = arith.muli %arg0, %c8_i32_358 : i32
    %c5_i32_359 = arith.constant 5 : i32
    %489 = arith.addi %488, %c5_i32_359 : i32
    %490 = arith.index_cast %489 : i32 to index
    %c7_360 = arith.constant 7 : index
    %491 = memref.load %arg1[%490, %c7_360] : memref<16x8xi32, #tpu.memory_space<smem>>
    %c61_i32 = arith.constant 61 : i32
    %c0_i32_361 = arith.constant 0 : i32
    %492 = tpu.memref_slice %arg2[%491, %c0_i32_361] : memref<512x64xf32, #tpu.memory_space<any>> -> memref<1x64xf32, #tpu.memory_space<any>>
    %c61_i32_362 = arith.constant 61 : i32
    %c0_i32_363 = arith.constant 0 : i32
    %493 = tpu.memref_slice %arg8[%c61_i32_362, %c0_i32_363] : memref<64x64xf32, #tpu.memory_space<vmem>> -> memref<1x64xf32, #tpu.memory_space<vmem>>
    %494 = tpu.memref_slice %arg9[%c61_i32] : memref<64x!tpu.dma_semaphore, #tpu.memory_space<semaphore_mem>> -> memref<1x!tpu.dma_semaphore, #tpu.memory_space<semaphore_mem>>
    %495 = tpu.memref_squeeze %494 : memref<1x!tpu.dma_semaphore, #tpu.memory_space<semaphore_mem>> -> memref<!tpu.dma_semaphore, #tpu.memory_space<semaphore_mem>>
    tpu.enqueue_dma source(%492 : memref<1x64xf32, #tpu.memory_space<any>>) target(%493 : memref<1x64xf32, #tpu.memory_space<vmem>>) target_semaphore(%495 : memref<!tpu.dma_semaphore, #tpu.memory_space<semaphore_mem>>)
    %c8_i32_364 = arith.constant 8 : i32
    %496 = arith.muli %arg0, %c8_i32_364 : i32
    %c6_i32_365 = arith.constant 6 : i32
    %497 = arith.addi %496, %c6_i32_365 : i32
    %498 = arith.index_cast %497 : i32 to index
    %c7_366 = arith.constant 7 : index
    %499 = memref.load %arg1[%498, %c7_366] : memref<16x8xi32, #tpu.memory_space<smem>>
    %c62_i32 = arith.constant 62 : i32
    %c0_i32_367 = arith.constant 0 : i32
    %500 = tpu.memref_slice %arg2[%499, %c0_i32_367] : memref<512x64xf32, #tpu.memory_space<any>> -> memref<1x64xf32, #tpu.memory_space<any>>
    %c62_i32_368 = arith.constant 62 : i32
    %c0_i32_369 = arith.constant 0 : i32
    %501 = tpu.memref_slice %arg8[%c62_i32_368, %c0_i32_369] : memref<64x64xf32, #tpu.memory_space<vmem>> -> memref<1x64xf32, #tpu.memory_space<vmem>>
    %502 = tpu.memref_slice %arg9[%c62_i32] : memref<64x!tpu.dma_semaphore, #tpu.memory_space<semaphore_mem>> -> memref<1x!tpu.dma_semaphore, #tpu.memory_space<semaphore_mem>>
    %503 = tpu.memref_squeeze %502 : memref<1x!tpu.dma_semaphore, #tpu.memory_space<semaphore_mem>> -> memref<!tpu.dma_semaphore, #tpu.memory_space<semaphore_mem>>
    tpu.enqueue_dma source(%500 : memref<1x64xf32, #tpu.memory_space<any>>) target(%501 : memref<1x64xf32, #tpu.memory_space<vmem>>) target_semaphore(%503 : memref<!tpu.dma_semaphore, #tpu.memory_space<semaphore_mem>>)
    %c8_i32_370 = arith.constant 8 : i32
    %504 = arith.muli %arg0, %c8_i32_370 : i32
    %c7_i32_371 = arith.constant 7 : i32
    %505 = arith.addi %504, %c7_i32_371 : i32
    %506 = arith.index_cast %505 : i32 to index
    %c7_372 = arith.constant 7 : index
    %507 = memref.load %arg1[%506, %c7_372] : memref<16x8xi32, #tpu.memory_space<smem>>
    %c63_i32 = arith.constant 63 : i32
    %c0_i32_373 = arith.constant 0 : i32
    %508 = tpu.memref_slice %arg2[%507, %c0_i32_373] : memref<512x64xf32, #tpu.memory_space<any>> -> memref<1x64xf32, #tpu.memory_space<any>>
    %c63_i32_374 = arith.constant 63 : i32
    %c0_i32_375 = arith.constant 0 : i32
    %509 = tpu.memref_slice %arg8[%c63_i32_374, %c0_i32_375] : memref<64x64xf32, #tpu.memory_space<vmem>> -> memref<1x64xf32, #tpu.memory_space<vmem>>
    %510 = tpu.memref_slice %arg9[%c63_i32] : memref<64x!tpu.dma_semaphore, #tpu.memory_space<semaphore_mem>> -> memref<1x!tpu.dma_semaphore, #tpu.memory_space<semaphore_mem>>
    %511 = tpu.memref_squeeze %510 : memref<1x!tpu.dma_semaphore, #tpu.memory_space<semaphore_mem>> -> memref<!tpu.dma_semaphore, #tpu.memory_space<semaphore_mem>>
    tpu.enqueue_dma source(%508 : memref<1x64xf32, #tpu.memory_space<any>>) target(%509 : memref<1x64xf32, #tpu.memory_space<vmem>>) target_semaphore(%511 : memref<!tpu.dma_semaphore, #tpu.memory_space<semaphore_mem>>)
    %c0_i32_376 = arith.constant 0 : i32
    %c0_i32_377 = arith.constant 0 : i32
    %512 = tpu.memref_slice %arg2[%3, %c0_i32_377] : memref<512x64xf32, #tpu.memory_space<any>> -> memref<1x64xf32, #tpu.memory_space<any>>
    %c0_i32_378 = arith.constant 0 : i32
    %c0_i32_379 = arith.constant 0 : i32
    %513 = tpu.memref_slice %arg8[%c0_i32_378, %c0_i32_379] : memref<64x64xf32, #tpu.memory_space<vmem>> -> memref<1x64xf32, #tpu.memory_space<vmem>>
    %514 = tpu.memref_slice %arg9[%c0_i32_376] : memref<64x!tpu.dma_semaphore, #tpu.memory_space<semaphore_mem>> -> memref<1x!tpu.dma_semaphore, #tpu.memory_space<semaphore_mem>>
    %515 = tpu.memref_squeeze %514 : memref<1x!tpu.dma_semaphore, #tpu.memory_space<semaphore_mem>> -> memref<!tpu.dma_semaphore, #tpu.memory_space<semaphore_mem>>
    tpu.wait_dma2 semaphore(%515 : memref<!tpu.dma_semaphore, #tpu.memory_space<semaphore_mem>>) src(%512 : memref<1x64xf32, #tpu.memory_space<any>>) dst(%513 : memref<1x64xf32, #tpu.memory_space<vmem>>)
    %c1_i32_380 = arith.constant 1 : i32
    %c0_i32_381 = arith.constant 0 : i32
    %516 = tpu.memref_slice %arg2[%11, %c0_i32_381] : memref<512x64xf32, #tpu.memory_space<any>> -> memref<1x64xf32, #tpu.memory_space<any>>
    %c1_i32_382 = arith.constant 1 : i32
    %c0_i32_383 = arith.constant 0 : i32
    %517 = tpu.memref_slice %arg8[%c1_i32_382, %c0_i32_383] : memref<64x64xf32, #tpu.memory_space<vmem>> -> memref<1x64xf32, #tpu.memory_space<vmem>>
    %518 = tpu.memref_slice %arg9[%c1_i32_380] : memref<64x!tpu.dma_semaphore, #tpu.memory_space<semaphore_mem>> -> memref<1x!tpu.dma_semaphore, #tpu.memory_space<semaphore_mem>>
    %519 = tpu.memref_squeeze %518 : memref<1x!tpu.dma_semaphore, #tpu.memory_space<semaphore_mem>> -> memref<!tpu.dma_semaphore, #tpu.memory_space<semaphore_mem>>
    tpu.wait_dma2 semaphore(%519 : memref<!tpu.dma_semaphore, #tpu.memory_space<semaphore_mem>>) src(%516 : memref<1x64xf32, #tpu.memory_space<any>>) dst(%517 : memref<1x64xf32, #tpu.memory_space<vmem>>)
    %c2_i32_384 = arith.constant 2 : i32
    %c0_i32_385 = arith.constant 0 : i32
    %520 = tpu.memref_slice %arg2[%19, %c0_i32_385] : memref<512x64xf32, #tpu.memory_space<any>> -> memref<1x64xf32, #tpu.memory_space<any>>
    %c2_i32_386 = arith.constant 2 : i32
    %c0_i32_387 = arith.constant 0 : i32
    %521 = tpu.memref_slice %arg8[%c2_i32_386, %c0_i32_387] : memref<64x64xf32, #tpu.memory_space<vmem>> -> memref<1x64xf32, #tpu.memory_space<vmem>>
    %522 = tpu.memref_slice %arg9[%c2_i32_384] : memref<64x!tpu.dma_semaphore, #tpu.memory_space<semaphore_mem>> -> memref<1x!tpu.dma_semaphore, #tpu.memory_space<semaphore_mem>>
    %523 = tpu.memref_squeeze %522 : memref<1x!tpu.dma_semaphore, #tpu.memory_space<semaphore_mem>> -> memref<!tpu.dma_semaphore, #tpu.memory_space<semaphore_mem>>
    tpu.wait_dma2 semaphore(%523 : memref<!tpu.dma_semaphore, #tpu.memory_space<semaphore_mem>>) src(%520 : memref<1x64xf32, #tpu.memory_space<any>>) dst(%521 : memref<1x64xf32, #tpu.memory_space<vmem>>)
    %c3_i32_388 = arith.constant 3 : i32
    %c0_i32_389 = arith.constant 0 : i32
    %524 = tpu.memref_slice %arg2[%27, %c0_i32_389] : memref<512x64xf32, #tpu.memory_space<any>> -> memref<1x64xf32, #tpu.memory_space<any>>
    %c3_i32_390 = arith.constant 3 : i32
    %c0_i32_391 = arith.constant 0 : i32
    %525 = tpu.memref_slice %arg8[%c3_i32_390, %c0_i32_391] : memref<64x64xf32, #tpu.memory_space<vmem>> -> memref<1x64xf32, #tpu.memory_space<vmem>>
    %526 = tpu.memref_slice %arg9[%c3_i32_388] : memref<64x!tpu.dma_semaphore, #tpu.memory_space<semaphore_mem>> -> memref<1x!tpu.dma_semaphore, #tpu.memory_space<semaphore_mem>>
    %527 = tpu.memref_squeeze %526 : memref<1x!tpu.dma_semaphore, #tpu.memory_space<semaphore_mem>> -> memref<!tpu.dma_semaphore, #tpu.memory_space<semaphore_mem>>
    tpu.wait_dma2 semaphore(%527 : memref<!tpu.dma_semaphore, #tpu.memory_space<semaphore_mem>>) src(%524 : memref<1x64xf32, #tpu.memory_space<any>>) dst(%525 : memref<1x64xf32, #tpu.memory_space<vmem>>)
    %c4_i32_392 = arith.constant 4 : i32
    %c0_i32_393 = arith.constant 0 : i32
    %528 = tpu.memref_slice %arg2[%35, %c0_i32_393] : memref<512x64xf32, #tpu.memory_space<any>> -> memref<1x64xf32, #tpu.memory_space<any>>
    %c4_i32_394 = arith.constant 4 : i32
    %c0_i32_395 = arith.constant 0 : i32
    %529 = tpu.memref_slice %arg8[%c4_i32_394, %c0_i32_395] : memref<64x64xf32, #tpu.memory_space<vmem>> -> memref<1x64xf32, #tpu.memory_space<vmem>>
    %530 = tpu.memref_slice %arg9[%c4_i32_392] : memref<64x!tpu.dma_semaphore, #tpu.memory_space<semaphore_mem>> -> memref<1x!tpu.dma_semaphore, #tpu.memory_space<semaphore_mem>>
    %531 = tpu.memref_squeeze %530 : memref<1x!tpu.dma_semaphore, #tpu.memory_space<semaphore_mem>> -> memref<!tpu.dma_semaphore, #tpu.memory_space<semaphore_mem>>
    tpu.wait_dma2 semaphore(%531 : memref<!tpu.dma_semaphore, #tpu.memory_space<semaphore_mem>>) src(%528 : memref<1x64xf32, #tpu.memory_space<any>>) dst(%529 : memref<1x64xf32, #tpu.memory_space<vmem>>)
    %c5_i32_396 = arith.constant 5 : i32
    %c0_i32_397 = arith.constant 0 : i32
    %532 = tpu.memref_slice %arg2[%43, %c0_i32_397] : memref<512x64xf32, #tpu.memory_space<any>> -> memref<1x64xf32, #tpu.memory_space<any>>
    %c5_i32_398 = arith.constant 5 : i32
    %c0_i32_399 = arith.constant 0 : i32
    %533 = tpu.memref_slice %arg8[%c5_i32_398, %c0_i32_399] : memref<64x64xf32, #tpu.memory_space<vmem>> -> memref<1x64xf32, #tpu.memory_space<vmem>>
    %534 = tpu.memref_slice %arg9[%c5_i32_396] : memref<64x!tpu.dma_semaphore, #tpu.memory_space<semaphore_mem>> -> memref<1x!tpu.dma_semaphore, #tpu.memory_space<semaphore_mem>>
    %535 = tpu.memref_squeeze %534 : memref<1x!tpu.dma_semaphore, #tpu.memory_space<semaphore_mem>> -> memref<!tpu.dma_semaphore, #tpu.memory_space<semaphore_mem>>
    tpu.wait_dma2 semaphore(%535 : memref<!tpu.dma_semaphore, #tpu.memory_space<semaphore_mem>>) src(%532 : memref<1x64xf32, #tpu.memory_space<any>>) dst(%533 : memref<1x64xf32, #tpu.memory_space<vmem>>)
    %c6_i32_400 = arith.constant 6 : i32
    %c0_i32_401 = arith.constant 0 : i32
    %536 = tpu.memref_slice %arg2[%51, %c0_i32_401] : memref<512x64xf32, #tpu.memory_space<any>> -> memref<1x64xf32, #tpu.memory_space<any>>
    %c6_i32_402 = arith.constant 6 : i32
    %c0_i32_403 = arith.constant 0 : i32
    %537 = tpu.memref_slice %arg8[%c6_i32_402, %c0_i32_403] : memref<64x64xf32, #tpu.memory_space<vmem>> -> memref<1x64xf32, #tpu.memory_space<vmem>>
    %538 = tpu.memref_slice %arg9[%c6_i32_400] : memref<64x!tpu.dma_semaphore, #tpu.memory_space<semaphore_mem>> -> memref<1x!tpu.dma_semaphore, #tpu.memory_space<semaphore_mem>>
    %539 = tpu.memref_squeeze %538 : memref<1x!tpu.dma_semaphore, #tpu.memory_space<semaphore_mem>> -> memref<!tpu.dma_semaphore, #tpu.memory_space<semaphore_mem>>
    tpu.wait_dma2 semaphore(%539 : memref<!tpu.dma_semaphore, #tpu.memory_space<semaphore_mem>>) src(%536 : memref<1x64xf32, #tpu.memory_space<any>>) dst(%537 : memref<1x64xf32, #tpu.memory_space<vmem>>)
    %c7_i32_404 = arith.constant 7 : i32
    %c0_i32_405 = arith.constant 0 : i32
    %540 = tpu.memref_slice %arg2[%59, %c0_i32_405] : memref<512x64xf32, #tpu.memory_space<any>> -> memref<1x64xf32, #tpu.memory_space<any>>
    %c7_i32_406 = arith.constant 7 : i32
    %c0_i32_407 = arith.constant 0 : i32
    %541 = tpu.memref_slice %arg8[%c7_i32_406, %c0_i32_407] : memref<64x64xf32, #tpu.memory_space<vmem>> -> memref<1x64xf32, #tpu.memory_space<vmem>>
    %542 = tpu.memref_slice %arg9[%c7_i32_404] : memref<64x!tpu.dma_semaphore, #tpu.memory_space<semaphore_mem>> -> memref<1x!tpu.dma_semaphore, #tpu.memory_space<semaphore_mem>>
    %543 = tpu.memref_squeeze %542 : memref<1x!tpu.dma_semaphore, #tpu.memory_space<semaphore_mem>> -> memref<!tpu.dma_semaphore, #tpu.memory_space<semaphore_mem>>
    tpu.wait_dma2 semaphore(%543 : memref<!tpu.dma_semaphore, #tpu.memory_space<semaphore_mem>>) src(%540 : memref<1x64xf32, #tpu.memory_space<any>>) dst(%541 : memref<1x64xf32, #tpu.memory_space<vmem>>)
    %c8_i32_408 = arith.constant 8 : i32
    %c0_i32_409 = arith.constant 0 : i32
    %544 = tpu.memref_slice %arg2[%67, %c0_i32_409] : memref<512x64xf32, #tpu.memory_space<any>> -> memref<1x64xf32, #tpu.memory_space<any>>
    %c8_i32_410 = arith.constant 8 : i32
    %c0_i32_411 = arith.constant 0 : i32
    %545 = tpu.memref_slice %arg8[%c8_i32_410, %c0_i32_411] : memref<64x64xf32, #tpu.memory_space<vmem>> -> memref<1x64xf32, #tpu.memory_space<vmem>>
    %546 = tpu.memref_slice %arg9[%c8_i32_408] : memref<64x!tpu.dma_semaphore, #tpu.memory_space<semaphore_mem>> -> memref<1x!tpu.dma_semaphore, #tpu.memory_space<semaphore_mem>>
    %547 = tpu.memref_squeeze %546 : memref<1x!tpu.dma_semaphore, #tpu.memory_space<semaphore_mem>> -> memref<!tpu.dma_semaphore, #tpu.memory_space<semaphore_mem>>
    tpu.wait_dma2 semaphore(%547 : memref<!tpu.dma_semaphore, #tpu.memory_space<semaphore_mem>>) src(%544 : memref<1x64xf32, #tpu.memory_space<any>>) dst(%545 : memref<1x64xf32, #tpu.memory_space<vmem>>)
    %c9_i32_412 = arith.constant 9 : i32
    %c0_i32_413 = arith.constant 0 : i32
    %548 = tpu.memref_slice %arg2[%75, %c0_i32_413] : memref<512x64xf32, #tpu.memory_space<any>> -> memref<1x64xf32, #tpu.memory_space<any>>
    %c9_i32_414 = arith.constant 9 : i32
    %c0_i32_415 = arith.constant 0 : i32
    %549 = tpu.memref_slice %arg8[%c9_i32_414, %c0_i32_415] : memref<64x64xf32, #tpu.memory_space<vmem>> -> memref<1x64xf32, #tpu.memory_space<vmem>>
    %550 = tpu.memref_slice %arg9[%c9_i32_412] : memref<64x!tpu.dma_semaphore, #tpu.memory_space<semaphore_mem>> -> memref<1x!tpu.dma_semaphore, #tpu.memory_space<semaphore_mem>>
    %551 = tpu.memref_squeeze %550 : memref<1x!tpu.dma_semaphore, #tpu.memory_space<semaphore_mem>> -> memref<!tpu.dma_semaphore, #tpu.memory_space<semaphore_mem>>
    tpu.wait_dma2 semaphore(%551 : memref<!tpu.dma_semaphore, #tpu.memory_space<semaphore_mem>>) src(%548 : memref<1x64xf32, #tpu.memory_space<any>>) dst(%549 : memref<1x64xf32, #tpu.memory_space<vmem>>)
    %c10_i32_416 = arith.constant 10 : i32
    %c0_i32_417 = arith.constant 0 : i32
    %552 = tpu.memref_slice %arg2[%83, %c0_i32_417] : memref<512x64xf32, #tpu.memory_space<any>> -> memref<1x64xf32, #tpu.memory_space<any>>
    %c10_i32_418 = arith.constant 10 : i32
    %c0_i32_419 = arith.constant 0 : i32
    %553 = tpu.memref_slice %arg8[%c10_i32_418, %c0_i32_419] : memref<64x64xf32, #tpu.memory_space<vmem>> -> memref<1x64xf32, #tpu.memory_space<vmem>>
    %554 = tpu.memref_slice %arg9[%c10_i32_416] : memref<64x!tpu.dma_semaphore, #tpu.memory_space<semaphore_mem>> -> memref<1x!tpu.dma_semaphore, #tpu.memory_space<semaphore_mem>>
    %555 = tpu.memref_squeeze %554 : memref<1x!tpu.dma_semaphore, #tpu.memory_space<semaphore_mem>> -> memref<!tpu.dma_semaphore, #tpu.memory_space<semaphore_mem>>
    tpu.wait_dma2 semaphore(%555 : memref<!tpu.dma_semaphore, #tpu.memory_space<semaphore_mem>>) src(%552 : memref<1x64xf32, #tpu.memory_space<any>>) dst(%553 : memref<1x64xf32, #tpu.memory_space<vmem>>)
    %c11_i32_420 = arith.constant 11 : i32
    %c0_i32_421 = arith.constant 0 : i32
    %556 = tpu.memref_slice %arg2[%91, %c0_i32_421] : memref<512x64xf32, #tpu.memory_space<any>> -> memref<1x64xf32, #tpu.memory_space<any>>
    %c11_i32_422 = arith.constant 11 : i32
    %c0_i32_423 = arith.constant 0 : i32
    %557 = tpu.memref_slice %arg8[%c11_i32_422, %c0_i32_423] : memref<64x64xf32, #tpu.memory_space<vmem>> -> memref<1x64xf32, #tpu.memory_space<vmem>>
    %558 = tpu.memref_slice %arg9[%c11_i32_420] : memref<64x!tpu.dma_semaphore, #tpu.memory_space<semaphore_mem>> -> memref<1x!tpu.dma_semaphore, #tpu.memory_space<semaphore_mem>>
    %559 = tpu.memref_squeeze %558 : memref<1x!tpu.dma_semaphore, #tpu.memory_space<semaphore_mem>> -> memref<!tpu.dma_semaphore, #tpu.memory_space<semaphore_mem>>
    tpu.wait_dma2 semaphore(%559 : memref<!tpu.dma_semaphore, #tpu.memory_space<semaphore_mem>>) src(%556 : memref<1x64xf32, #tpu.memory_space<any>>) dst(%557 : memref<1x64xf32, #tpu.memory_space<vmem>>)
    %c12_i32_424 = arith.constant 12 : i32
    %c0_i32_425 = arith.constant 0 : i32
    %560 = tpu.memref_slice %arg2[%99, %c0_i32_425] : memref<512x64xf32, #tpu.memory_space<any>> -> memref<1x64xf32, #tpu.memory_space<any>>
    %c12_i32_426 = arith.constant 12 : i32
    %c0_i32_427 = arith.constant 0 : i32
    %561 = tpu.memref_slice %arg8[%c12_i32_426, %c0_i32_427] : memref<64x64xf32, #tpu.memory_space<vmem>> -> memref<1x64xf32, #tpu.memory_space<vmem>>
    %562 = tpu.memref_slice %arg9[%c12_i32_424] : memref<64x!tpu.dma_semaphore, #tpu.memory_space<semaphore_mem>> -> memref<1x!tpu.dma_semaphore, #tpu.memory_space<semaphore_mem>>
    %563 = tpu.memref_squeeze %562 : memref<1x!tpu.dma_semaphore, #tpu.memory_space<semaphore_mem>> -> memref<!tpu.dma_semaphore, #tpu.memory_space<semaphore_mem>>
    tpu.wait_dma2 semaphore(%563 : memref<!tpu.dma_semaphore, #tpu.memory_space<semaphore_mem>>) src(%560 : memref<1x64xf32, #tpu.memory_space<any>>) dst(%561 : memref<1x64xf32, #tpu.memory_space<vmem>>)
    %c13_i32_428 = arith.constant 13 : i32
    %c0_i32_429 = arith.constant 0 : i32
    %564 = tpu.memref_slice %arg2[%107, %c0_i32_429] : memref<512x64xf32, #tpu.memory_space<any>> -> memref<1x64xf32, #tpu.memory_space<any>>
    %c13_i32_430 = arith.constant 13 : i32
    %c0_i32_431 = arith.constant 0 : i32
    %565 = tpu.memref_slice %arg8[%c13_i32_430, %c0_i32_431] : memref<64x64xf32, #tpu.memory_space<vmem>> -> memref<1x64xf32, #tpu.memory_space<vmem>>
    %566 = tpu.memref_slice %arg9[%c13_i32_428] : memref<64x!tpu.dma_semaphore, #tpu.memory_space<semaphore_mem>> -> memref<1x!tpu.dma_semaphore, #tpu.memory_space<semaphore_mem>>
    %567 = tpu.memref_squeeze %566 : memref<1x!tpu.dma_semaphore, #tpu.memory_space<semaphore_mem>> -> memref<!tpu.dma_semaphore, #tpu.memory_space<semaphore_mem>>
    tpu.wait_dma2 semaphore(%567 : memref<!tpu.dma_semaphore, #tpu.memory_space<semaphore_mem>>) src(%564 : memref<1x64xf32, #tpu.memory_space<any>>) dst(%565 : memref<1x64xf32, #tpu.memory_space<vmem>>)
    %c14_i32_432 = arith.constant 14 : i32
    %c0_i32_433 = arith.constant 0 : i32
    %568 = tpu.memref_slice %arg2[%115, %c0_i32_433] : memref<512x64xf32, #tpu.memory_space<any>> -> memref<1x64xf32, #tpu.memory_space<any>>
    %c14_i32_434 = arith.constant 14 : i32
    %c0_i32_435 = arith.constant 0 : i32
    %569 = tpu.memref_slice %arg8[%c14_i32_434, %c0_i32_435] : memref<64x64xf32, #tpu.memory_space<vmem>> -> memref<1x64xf32, #tpu.memory_space<vmem>>
    %570 = tpu.memref_slice %arg9[%c14_i32_432] : memref<64x!tpu.dma_semaphore, #tpu.memory_space<semaphore_mem>> -> memref<1x!tpu.dma_semaphore, #tpu.memory_space<semaphore_mem>>
    %571 = tpu.memref_squeeze %570 : memref<1x!tpu.dma_semaphore, #tpu.memory_space<semaphore_mem>> -> memref<!tpu.dma_semaphore, #tpu.memory_space<semaphore_mem>>
    tpu.wait_dma2 semaphore(%571 : memref<!tpu.dma_semaphore, #tpu.memory_space<semaphore_mem>>) src(%568 : memref<1x64xf32, #tpu.memory_space<any>>) dst(%569 : memref<1x64xf32, #tpu.memory_space<vmem>>)
    %c15_i32_436 = arith.constant 15 : i32
    %c0_i32_437 = arith.constant 0 : i32
    %572 = tpu.memref_slice %arg2[%123, %c0_i32_437] : memref<512x64xf32, #tpu.memory_space<any>> -> memref<1x64xf32, #tpu.memory_space<any>>
    %c15_i32_438 = arith.constant 15 : i32
    %c0_i32_439 = arith.constant 0 : i32
    %573 = tpu.memref_slice %arg8[%c15_i32_438, %c0_i32_439] : memref<64x64xf32, #tpu.memory_space<vmem>> -> memref<1x64xf32, #tpu.memory_space<vmem>>
    %574 = tpu.memref_slice %arg9[%c15_i32_436] : memref<64x!tpu.dma_semaphore, #tpu.memory_space<semaphore_mem>> -> memref<1x!tpu.dma_semaphore, #tpu.memory_space<semaphore_mem>>
    %575 = tpu.memref_squeeze %574 : memref<1x!tpu.dma_semaphore, #tpu.memory_space<semaphore_mem>> -> memref<!tpu.dma_semaphore, #tpu.memory_space<semaphore_mem>>
    tpu.wait_dma2 semaphore(%575 : memref<!tpu.dma_semaphore, #tpu.memory_space<semaphore_mem>>) src(%572 : memref<1x64xf32, #tpu.memory_space<any>>) dst(%573 : memref<1x64xf32, #tpu.memory_space<vmem>>)
    %c16_i32_440 = arith.constant 16 : i32
    %c0_i32_441 = arith.constant 0 : i32
    %576 = tpu.memref_slice %arg2[%131, %c0_i32_441] : memref<512x64xf32, #tpu.memory_space<any>> -> memref<1x64xf32, #tpu.memory_space<any>>
    %c16_i32_442 = arith.constant 16 : i32
    %c0_i32_443 = arith.constant 0 : i32
    %577 = tpu.memref_slice %arg8[%c16_i32_442, %c0_i32_443] : memref<64x64xf32, #tpu.memory_space<vmem>> -> memref<1x64xf32, #tpu.memory_space<vmem>>
    %578 = tpu.memref_slice %arg9[%c16_i32_440] : memref<64x!tpu.dma_semaphore, #tpu.memory_space<semaphore_mem>> -> memref<1x!tpu.dma_semaphore, #tpu.memory_space<semaphore_mem>>
    %579 = tpu.memref_squeeze %578 : memref<1x!tpu.dma_semaphore, #tpu.memory_space<semaphore_mem>> -> memref<!tpu.dma_semaphore, #tpu.memory_space<semaphore_mem>>
    tpu.wait_dma2 semaphore(%579 : memref<!tpu.dma_semaphore, #tpu.memory_space<semaphore_mem>>) src(%576 : memref<1x64xf32, #tpu.memory_space<any>>) dst(%577 : memref<1x64xf32, #tpu.memory_space<vmem>>)
    %c17_i32_444 = arith.constant 17 : i32
    %c0_i32_445 = arith.constant 0 : i32
    %580 = tpu.memref_slice %arg2[%139, %c0_i32_445] : memref<512x64xf32, #tpu.memory_space<any>> -> memref<1x64xf32, #tpu.memory_space<any>>
    %c17_i32_446 = arith.constant 17 : i32
    %c0_i32_447 = arith.constant 0 : i32
    %581 = tpu.memref_slice %arg8[%c17_i32_446, %c0_i32_447] : memref<64x64xf32, #tpu.memory_space<vmem>> -> memref<1x64xf32, #tpu.memory_space<vmem>>
    %582 = tpu.memref_slice %arg9[%c17_i32_444] : memref<64x!tpu.dma_semaphore, #tpu.memory_space<semaphore_mem>> -> memref<1x!tpu.dma_semaphore, #tpu.memory_space<semaphore_mem>>
    %583 = tpu.memref_squeeze %582 : memref<1x!tpu.dma_semaphore, #tpu.memory_space<semaphore_mem>> -> memref<!tpu.dma_semaphore, #tpu.memory_space<semaphore_mem>>
    tpu.wait_dma2 semaphore(%583 : memref<!tpu.dma_semaphore, #tpu.memory_space<semaphore_mem>>) src(%580 : memref<1x64xf32, #tpu.memory_space<any>>) dst(%581 : memref<1x64xf32, #tpu.memory_space<vmem>>)
    %c18_i32_448 = arith.constant 18 : i32
    %c0_i32_449 = arith.constant 0 : i32
    %584 = tpu.memref_slice %arg2[%147, %c0_i32_449] : memref<512x64xf32, #tpu.memory_space<any>> -> memref<1x64xf32, #tpu.memory_space<any>>
    %c18_i32_450 = arith.constant 18 : i32
    %c0_i32_451 = arith.constant 0 : i32
    %585 = tpu.memref_slice %arg8[%c18_i32_450, %c0_i32_451] : memref<64x64xf32, #tpu.memory_space<vmem>> -> memref<1x64xf32, #tpu.memory_space<vmem>>
    %586 = tpu.memref_slice %arg9[%c18_i32_448] : memref<64x!tpu.dma_semaphore, #tpu.memory_space<semaphore_mem>> -> memref<1x!tpu.dma_semaphore, #tpu.memory_space<semaphore_mem>>
    %587 = tpu.memref_squeeze %586 : memref<1x!tpu.dma_semaphore, #tpu.memory_space<semaphore_mem>> -> memref<!tpu.dma_semaphore, #tpu.memory_space<semaphore_mem>>
    tpu.wait_dma2 semaphore(%587 : memref<!tpu.dma_semaphore, #tpu.memory_space<semaphore_mem>>) src(%584 : memref<1x64xf32, #tpu.memory_space<any>>) dst(%585 : memref<1x64xf32, #tpu.memory_space<vmem>>)
    %c19_i32_452 = arith.constant 19 : i32
    %c0_i32_453 = arith.constant 0 : i32
    %588 = tpu.memref_slice %arg2[%155, %c0_i32_453] : memref<512x64xf32, #tpu.memory_space<any>> -> memref<1x64xf32, #tpu.memory_space<any>>
    %c19_i32_454 = arith.constant 19 : i32
    %c0_i32_455 = arith.constant 0 : i32
    %589 = tpu.memref_slice %arg8[%c19_i32_454, %c0_i32_455] : memref<64x64xf32, #tpu.memory_space<vmem>> -> memref<1x64xf32, #tpu.memory_space<vmem>>
    %590 = tpu.memref_slice %arg9[%c19_i32_452] : memref<64x!tpu.dma_semaphore, #tpu.memory_space<semaphore_mem>> -> memref<1x!tpu.dma_semaphore, #tpu.memory_space<semaphore_mem>>
    %591 = tpu.memref_squeeze %590 : memref<1x!tpu.dma_semaphore, #tpu.memory_space<semaphore_mem>> -> memref<!tpu.dma_semaphore, #tpu.memory_space<semaphore_mem>>
    tpu.wait_dma2 semaphore(%591 : memref<!tpu.dma_semaphore, #tpu.memory_space<semaphore_mem>>) src(%588 : memref<1x64xf32, #tpu.memory_space<any>>) dst(%589 : memref<1x64xf32, #tpu.memory_space<vmem>>)
    %c20_i32_456 = arith.constant 20 : i32
    %c0_i32_457 = arith.constant 0 : i32
    %592 = tpu.memref_slice %arg2[%163, %c0_i32_457] : memref<512x64xf32, #tpu.memory_space<any>> -> memref<1x64xf32, #tpu.memory_space<any>>
    %c20_i32_458 = arith.constant 20 : i32
    %c0_i32_459 = arith.constant 0 : i32
    %593 = tpu.memref_slice %arg8[%c20_i32_458, %c0_i32_459] : memref<64x64xf32, #tpu.memory_space<vmem>> -> memref<1x64xf32, #tpu.memory_space<vmem>>
    %594 = tpu.memref_slice %arg9[%c20_i32_456] : memref<64x!tpu.dma_semaphore, #tpu.memory_space<semaphore_mem>> -> memref<1x!tpu.dma_semaphore, #tpu.memory_space<semaphore_mem>>
    %595 = tpu.memref_squeeze %594 : memref<1x!tpu.dma_semaphore, #tpu.memory_space<semaphore_mem>> -> memref<!tpu.dma_semaphore, #tpu.memory_space<semaphore_mem>>
    tpu.wait_dma2 semaphore(%595 : memref<!tpu.dma_semaphore, #tpu.memory_space<semaphore_mem>>) src(%592 : memref<1x64xf32, #tpu.memory_space<any>>) dst(%593 : memref<1x64xf32, #tpu.memory_space<vmem>>)
    %c21_i32_460 = arith.constant 21 : i32
    %c0_i32_461 = arith.constant 0 : i32
    %596 = tpu.memref_slice %arg2[%171, %c0_i32_461] : memref<512x64xf32, #tpu.memory_space<any>> -> memref<1x64xf32, #tpu.memory_space<any>>
    %c21_i32_462 = arith.constant 21 : i32
    %c0_i32_463 = arith.constant 0 : i32
    %597 = tpu.memref_slice %arg8[%c21_i32_462, %c0_i32_463] : memref<64x64xf32, #tpu.memory_space<vmem>> -> memref<1x64xf32, #tpu.memory_space<vmem>>
    %598 = tpu.memref_slice %arg9[%c21_i32_460] : memref<64x!tpu.dma_semaphore, #tpu.memory_space<semaphore_mem>> -> memref<1x!tpu.dma_semaphore, #tpu.memory_space<semaphore_mem>>
    %599 = tpu.memref_squeeze %598 : memref<1x!tpu.dma_semaphore, #tpu.memory_space<semaphore_mem>> -> memref<!tpu.dma_semaphore, #tpu.memory_space<semaphore_mem>>
    tpu.wait_dma2 semaphore(%599 : memref<!tpu.dma_semaphore, #tpu.memory_space<semaphore_mem>>) src(%596 : memref<1x64xf32, #tpu.memory_space<any>>) dst(%597 : memref<1x64xf32, #tpu.memory_space<vmem>>)
    %c22_i32_464 = arith.constant 22 : i32
    %c0_i32_465 = arith.constant 0 : i32
    %600 = tpu.memref_slice %arg2[%179, %c0_i32_465] : memref<512x64xf32, #tpu.memory_space<any>> -> memref<1x64xf32, #tpu.memory_space<any>>
    %c22_i32_466 = arith.constant 22 : i32
    %c0_i32_467 = arith.constant 0 : i32
    %601 = tpu.memref_slice %arg8[%c22_i32_466, %c0_i32_467] : memref<64x64xf32, #tpu.memory_space<vmem>> -> memref<1x64xf32, #tpu.memory_space<vmem>>
    %602 = tpu.memref_slice %arg9[%c22_i32_464] : memref<64x!tpu.dma_semaphore, #tpu.memory_space<semaphore_mem>> -> memref<1x!tpu.dma_semaphore, #tpu.memory_space<semaphore_mem>>
    %603 = tpu.memref_squeeze %602 : memref<1x!tpu.dma_semaphore, #tpu.memory_space<semaphore_mem>> -> memref<!tpu.dma_semaphore, #tpu.memory_space<semaphore_mem>>
    tpu.wait_dma2 semaphore(%603 : memref<!tpu.dma_semaphore, #tpu.memory_space<semaphore_mem>>) src(%600 : memref<1x64xf32, #tpu.memory_space<any>>) dst(%601 : memref<1x64xf32, #tpu.memory_space<vmem>>)
    %c23_i32_468 = arith.constant 23 : i32
    %c0_i32_469 = arith.constant 0 : i32
    %604 = tpu.memref_slice %arg2[%187, %c0_i32_469] : memref<512x64xf32, #tpu.memory_space<any>> -> memref<1x64xf32, #tpu.memory_space<any>>
    %c23_i32_470 = arith.constant 23 : i32
    %c0_i32_471 = arith.constant 0 : i32
    %605 = tpu.memref_slice %arg8[%c23_i32_470, %c0_i32_471] : memref<64x64xf32, #tpu.memory_space<vmem>> -> memref<1x64xf32, #tpu.memory_space<vmem>>
    %606 = tpu.memref_slice %arg9[%c23_i32_468] : memref<64x!tpu.dma_semaphore, #tpu.memory_space<semaphore_mem>> -> memref<1x!tpu.dma_semaphore, #tpu.memory_space<semaphore_mem>>
    %607 = tpu.memref_squeeze %606 : memref<1x!tpu.dma_semaphore, #tpu.memory_space<semaphore_mem>> -> memref<!tpu.dma_semaphore, #tpu.memory_space<semaphore_mem>>
    tpu.wait_dma2 semaphore(%607 : memref<!tpu.dma_semaphore, #tpu.memory_space<semaphore_mem>>) src(%604 : memref<1x64xf32, #tpu.memory_space<any>>) dst(%605 : memref<1x64xf32, #tpu.memory_space<vmem>>)
    %c24_i32_472 = arith.constant 24 : i32
    %c0_i32_473 = arith.constant 0 : i32
    %608 = tpu.memref_slice %arg2[%195, %c0_i32_473] : memref<512x64xf32, #tpu.memory_space<any>> -> memref<1x64xf32, #tpu.memory_space<any>>
    %c24_i32_474 = arith.constant 24 : i32
    %c0_i32_475 = arith.constant 0 : i32
    %609 = tpu.memref_slice %arg8[%c24_i32_474, %c0_i32_475] : memref<64x64xf32, #tpu.memory_space<vmem>> -> memref<1x64xf32, #tpu.memory_space<vmem>>
    %610 = tpu.memref_slice %arg9[%c24_i32_472] : memref<64x!tpu.dma_semaphore, #tpu.memory_space<semaphore_mem>> -> memref<1x!tpu.dma_semaphore, #tpu.memory_space<semaphore_mem>>
    %611 = tpu.memref_squeeze %610 : memref<1x!tpu.dma_semaphore, #tpu.memory_space<semaphore_mem>> -> memref<!tpu.dma_semaphore, #tpu.memory_space<semaphore_mem>>
    tpu.wait_dma2 semaphore(%611 : memref<!tpu.dma_semaphore, #tpu.memory_space<semaphore_mem>>) src(%608 : memref<1x64xf32, #tpu.memory_space<any>>) dst(%609 : memref<1x64xf32, #tpu.memory_space<vmem>>)
    %c25_i32_476 = arith.constant 25 : i32
    %c0_i32_477 = arith.constant 0 : i32
    %612 = tpu.memref_slice %arg2[%203, %c0_i32_477] : memref<512x64xf32, #tpu.memory_space<any>> -> memref<1x64xf32, #tpu.memory_space<any>>
    %c25_i32_478 = arith.constant 25 : i32
    %c0_i32_479 = arith.constant 0 : i32
    %613 = tpu.memref_slice %arg8[%c25_i32_478, %c0_i32_479] : memref<64x64xf32, #tpu.memory_space<vmem>> -> memref<1x64xf32, #tpu.memory_space<vmem>>
    %614 = tpu.memref_slice %arg9[%c25_i32_476] : memref<64x!tpu.dma_semaphore, #tpu.memory_space<semaphore_mem>> -> memref<1x!tpu.dma_semaphore, #tpu.memory_space<semaphore_mem>>
    %615 = tpu.memref_squeeze %614 : memref<1x!tpu.dma_semaphore, #tpu.memory_space<semaphore_mem>> -> memref<!tpu.dma_semaphore, #tpu.memory_space<semaphore_mem>>
    tpu.wait_dma2 semaphore(%615 : memref<!tpu.dma_semaphore, #tpu.memory_space<semaphore_mem>>) src(%612 : memref<1x64xf32, #tpu.memory_space<any>>) dst(%613 : memref<1x64xf32, #tpu.memory_space<vmem>>)
    %c26_i32_480 = arith.constant 26 : i32
    %c0_i32_481 = arith.constant 0 : i32
    %616 = tpu.memref_slice %arg2[%211, %c0_i32_481] : memref<512x64xf32, #tpu.memory_space<any>> -> memref<1x64xf32, #tpu.memory_space<any>>
    %c26_i32_482 = arith.constant 26 : i32
    %c0_i32_483 = arith.constant 0 : i32
    %617 = tpu.memref_slice %arg8[%c26_i32_482, %c0_i32_483] : memref<64x64xf32, #tpu.memory_space<vmem>> -> memref<1x64xf32, #tpu.memory_space<vmem>>
    %618 = tpu.memref_slice %arg9[%c26_i32_480] : memref<64x!tpu.dma_semaphore, #tpu.memory_space<semaphore_mem>> -> memref<1x!tpu.dma_semaphore, #tpu.memory_space<semaphore_mem>>
    %619 = tpu.memref_squeeze %618 : memref<1x!tpu.dma_semaphore, #tpu.memory_space<semaphore_mem>> -> memref<!tpu.dma_semaphore, #tpu.memory_space<semaphore_mem>>
    tpu.wait_dma2 semaphore(%619 : memref<!tpu.dma_semaphore, #tpu.memory_space<semaphore_mem>>) src(%616 : memref<1x64xf32, #tpu.memory_space<any>>) dst(%617 : memref<1x64xf32, #tpu.memory_space<vmem>>)
    %c27_i32_484 = arith.constant 27 : i32
    %c0_i32_485 = arith.constant 0 : i32
    %620 = tpu.memref_slice %arg2[%219, %c0_i32_485] : memref<512x64xf32, #tpu.memory_space<any>> -> memref<1x64xf32, #tpu.memory_space<any>>
    %c27_i32_486 = arith.constant 27 : i32
    %c0_i32_487 = arith.constant 0 : i32
    %621 = tpu.memref_slice %arg8[%c27_i32_486, %c0_i32_487] : memref<64x64xf32, #tpu.memory_space<vmem>> -> memref<1x64xf32, #tpu.memory_space<vmem>>
    %622 = tpu.memref_slice %arg9[%c27_i32_484] : memref<64x!tpu.dma_semaphore, #tpu.memory_space<semaphore_mem>> -> memref<1x!tpu.dma_semaphore, #tpu.memory_space<semaphore_mem>>
    %623 = tpu.memref_squeeze %622 : memref<1x!tpu.dma_semaphore, #tpu.memory_space<semaphore_mem>> -> memref<!tpu.dma_semaphore, #tpu.memory_space<semaphore_mem>>
    tpu.wait_dma2 semaphore(%623 : memref<!tpu.dma_semaphore, #tpu.memory_space<semaphore_mem>>) src(%620 : memref<1x64xf32, #tpu.memory_space<any>>) dst(%621 : memref<1x64xf32, #tpu.memory_space<vmem>>)
    %c28_i32_488 = arith.constant 28 : i32
    %c0_i32_489 = arith.constant 0 : i32
    %624 = tpu.memref_slice %arg2[%227, %c0_i32_489] : memref<512x64xf32, #tpu.memory_space<any>> -> memref<1x64xf32, #tpu.memory_space<any>>
    %c28_i32_490 = arith.constant 28 : i32
    %c0_i32_491 = arith.constant 0 : i32
    %625 = tpu.memref_slice %arg8[%c28_i32_490, %c0_i32_491] : memref<64x64xf32, #tpu.memory_space<vmem>> -> memref<1x64xf32, #tpu.memory_space<vmem>>
    %626 = tpu.memref_slice %arg9[%c28_i32_488] : memref<64x!tpu.dma_semaphore, #tpu.memory_space<semaphore_mem>> -> memref<1x!tpu.dma_semaphore, #tpu.memory_space<semaphore_mem>>
    %627 = tpu.memref_squeeze %626 : memref<1x!tpu.dma_semaphore, #tpu.memory_space<semaphore_mem>> -> memref<!tpu.dma_semaphore, #tpu.memory_space<semaphore_mem>>
    tpu.wait_dma2 semaphore(%627 : memref<!tpu.dma_semaphore, #tpu.memory_space<semaphore_mem>>) src(%624 : memref<1x64xf32, #tpu.memory_space<any>>) dst(%625 : memref<1x64xf32, #tpu.memory_space<vmem>>)
    %c29_i32_492 = arith.constant 29 : i32
    %c0_i32_493 = arith.constant 0 : i32
    %628 = tpu.memref_slice %arg2[%235, %c0_i32_493] : memref<512x64xf32, #tpu.memory_space<any>> -> memref<1x64xf32, #tpu.memory_space<any>>
    %c29_i32_494 = arith.constant 29 : i32
    %c0_i32_495 = arith.constant 0 : i32
    %629 = tpu.memref_slice %arg8[%c29_i32_494, %c0_i32_495] : memref<64x64xf32, #tpu.memory_space<vmem>> -> memref<1x64xf32, #tpu.memory_space<vmem>>
    %630 = tpu.memref_slice %arg9[%c29_i32_492] : memref<64x!tpu.dma_semaphore, #tpu.memory_space<semaphore_mem>> -> memref<1x!tpu.dma_semaphore, #tpu.memory_space<semaphore_mem>>
    %631 = tpu.memref_squeeze %630 : memref<1x!tpu.dma_semaphore, #tpu.memory_space<semaphore_mem>> -> memref<!tpu.dma_semaphore, #tpu.memory_space<semaphore_mem>>
    tpu.wait_dma2 semaphore(%631 : memref<!tpu.dma_semaphore, #tpu.memory_space<semaphore_mem>>) src(%628 : memref<1x64xf32, #tpu.memory_space<any>>) dst(%629 : memref<1x64xf32, #tpu.memory_space<vmem>>)
    %c30_i32_496 = arith.constant 30 : i32
    %c0_i32_497 = arith.constant 0 : i32
    %632 = tpu.memref_slice %arg2[%243, %c0_i32_497] : memref<512x64xf32, #tpu.memory_space<any>> -> memref<1x64xf32, #tpu.memory_space<any>>
    %c30_i32_498 = arith.constant 30 : i32
    %c0_i32_499 = arith.constant 0 : i32
    %633 = tpu.memref_slice %arg8[%c30_i32_498, %c0_i32_499] : memref<64x64xf32, #tpu.memory_space<vmem>> -> memref<1x64xf32, #tpu.memory_space<vmem>>
    %634 = tpu.memref_slice %arg9[%c30_i32_496] : memref<64x!tpu.dma_semaphore, #tpu.memory_space<semaphore_mem>> -> memref<1x!tpu.dma_semaphore, #tpu.memory_space<semaphore_mem>>
    %635 = tpu.memref_squeeze %634 : memref<1x!tpu.dma_semaphore, #tpu.memory_space<semaphore_mem>> -> memref<!tpu.dma_semaphore, #tpu.memory_space<semaphore_mem>>
    tpu.wait_dma2 semaphore(%635 : memref<!tpu.dma_semaphore, #tpu.memory_space<semaphore_mem>>) src(%632 : memref<1x64xf32, #tpu.memory_space<any>>) dst(%633 : memref<1x64xf32, #tpu.memory_space<vmem>>)
    %c31_i32_500 = arith.constant 31 : i32
    %c0_i32_501 = arith.constant 0 : i32
    %636 = tpu.memref_slice %arg2[%251, %c0_i32_501] : memref<512x64xf32, #tpu.memory_space<any>> -> memref<1x64xf32, #tpu.memory_space<any>>
    %c31_i32_502 = arith.constant 31 : i32
    %c0_i32_503 = arith.constant 0 : i32
    %637 = tpu.memref_slice %arg8[%c31_i32_502, %c0_i32_503] : memref<64x64xf32, #tpu.memory_space<vmem>> -> memref<1x64xf32, #tpu.memory_space<vmem>>
    %638 = tpu.memref_slice %arg9[%c31_i32_500] : memref<64x!tpu.dma_semaphore, #tpu.memory_space<semaphore_mem>> -> memref<1x!tpu.dma_semaphore, #tpu.memory_space<semaphore_mem>>
    %639 = tpu.memref_squeeze %638 : memref<1x!tpu.dma_semaphore, #tpu.memory_space<semaphore_mem>> -> memref<!tpu.dma_semaphore, #tpu.memory_space<semaphore_mem>>
    tpu.wait_dma2 semaphore(%639 : memref<!tpu.dma_semaphore, #tpu.memory_space<semaphore_mem>>) src(%636 : memref<1x64xf32, #tpu.memory_space<any>>) dst(%637 : memref<1x64xf32, #tpu.memory_space<vmem>>)
    %c32_i32_504 = arith.constant 32 : i32
    %c0_i32_505 = arith.constant 0 : i32
    %640 = tpu.memref_slice %arg2[%259, %c0_i32_505] : memref<512x64xf32, #tpu.memory_space<any>> -> memref<1x64xf32, #tpu.memory_space<any>>
    %c32_i32_506 = arith.constant 32 : i32
    %c0_i32_507 = arith.constant 0 : i32
    %641 = tpu.memref_slice %arg8[%c32_i32_506, %c0_i32_507] : memref<64x64xf32, #tpu.memory_space<vmem>> -> memref<1x64xf32, #tpu.memory_space<vmem>>
    %642 = tpu.memref_slice %arg9[%c32_i32_504] : memref<64x!tpu.dma_semaphore, #tpu.memory_space<semaphore_mem>> -> memref<1x!tpu.dma_semaphore, #tpu.memory_space<semaphore_mem>>
    %643 = tpu.memref_squeeze %642 : memref<1x!tpu.dma_semaphore, #tpu.memory_space<semaphore_mem>> -> memref<!tpu.dma_semaphore, #tpu.memory_space<semaphore_mem>>
    tpu.wait_dma2 semaphore(%643 : memref<!tpu.dma_semaphore, #tpu.memory_space<semaphore_mem>>) src(%640 : memref<1x64xf32, #tpu.memory_space<any>>) dst(%641 : memref<1x64xf32, #tpu.memory_space<vmem>>)
    %c33_i32_508 = arith.constant 33 : i32
    %c0_i32_509 = arith.constant 0 : i32
    %644 = tpu.memref_slice %arg2[%267, %c0_i32_509] : memref<512x64xf32, #tpu.memory_space<any>> -> memref<1x64xf32, #tpu.memory_space<any>>
    %c33_i32_510 = arith.constant 33 : i32
    %c0_i32_511 = arith.constant 0 : i32
    %645 = tpu.memref_slice %arg8[%c33_i32_510, %c0_i32_511] : memref<64x64xf32, #tpu.memory_space<vmem>> -> memref<1x64xf32, #tpu.memory_space<vmem>>
    %646 = tpu.memref_slice %arg9[%c33_i32_508] : memref<64x!tpu.dma_semaphore, #tpu.memory_space<semaphore_mem>> -> memref<1x!tpu.dma_semaphore, #tpu.memory_space<semaphore_mem>>
    %647 = tpu.memref_squeeze %646 : memref<1x!tpu.dma_semaphore, #tpu.memory_space<semaphore_mem>> -> memref<!tpu.dma_semaphore, #tpu.memory_space<semaphore_mem>>
    tpu.wait_dma2 semaphore(%647 : memref<!tpu.dma_semaphore, #tpu.memory_space<semaphore_mem>>) src(%644 : memref<1x64xf32, #tpu.memory_space<any>>) dst(%645 : memref<1x64xf32, #tpu.memory_space<vmem>>)
    %c34_i32_512 = arith.constant 34 : i32
    %c0_i32_513 = arith.constant 0 : i32
    %648 = tpu.memref_slice %arg2[%275, %c0_i32_513] : memref<512x64xf32, #tpu.memory_space<any>> -> memref<1x64xf32, #tpu.memory_space<any>>
    %c34_i32_514 = arith.constant 34 : i32
    %c0_i32_515 = arith.constant 0 : i32
    %649 = tpu.memref_slice %arg8[%c34_i32_514, %c0_i32_515] : memref<64x64xf32, #tpu.memory_space<vmem>> -> memref<1x64xf32, #tpu.memory_space<vmem>>
    %650 = tpu.memref_slice %arg9[%c34_i32_512] : memref<64x!tpu.dma_semaphore, #tpu.memory_space<semaphore_mem>> -> memref<1x!tpu.dma_semaphore, #tpu.memory_space<semaphore_mem>>
    %651 = tpu.memref_squeeze %650 : memref<1x!tpu.dma_semaphore, #tpu.memory_space<semaphore_mem>> -> memref<!tpu.dma_semaphore, #tpu.memory_space<semaphore_mem>>
    tpu.wait_dma2 semaphore(%651 : memref<!tpu.dma_semaphore, #tpu.memory_space<semaphore_mem>>) src(%648 : memref<1x64xf32, #tpu.memory_space<any>>) dst(%649 : memref<1x64xf32, #tpu.memory_space<vmem>>)
    %c35_i32_516 = arith.constant 35 : i32
    %c0_i32_517 = arith.constant 0 : i32
    %652 = tpu.memref_slice %arg2[%283, %c0_i32_517] : memref<512x64xf32, #tpu.memory_space<any>> -> memref<1x64xf32, #tpu.memory_space<any>>
    %c35_i32_518 = arith.constant 35 : i32
    %c0_i32_519 = arith.constant 0 : i32
    %653 = tpu.memref_slice %arg8[%c35_i32_518, %c0_i32_519] : memref<64x64xf32, #tpu.memory_space<vmem>> -> memref<1x64xf32, #tpu.memory_space<vmem>>
    %654 = tpu.memref_slice %arg9[%c35_i32_516] : memref<64x!tpu.dma_semaphore, #tpu.memory_space<semaphore_mem>> -> memref<1x!tpu.dma_semaphore, #tpu.memory_space<semaphore_mem>>
    %655 = tpu.memref_squeeze %654 : memref<1x!tpu.dma_semaphore, #tpu.memory_space<semaphore_mem>> -> memref<!tpu.dma_semaphore, #tpu.memory_space<semaphore_mem>>
    tpu.wait_dma2 semaphore(%655 : memref<!tpu.dma_semaphore, #tpu.memory_space<semaphore_mem>>) src(%652 : memref<1x64xf32, #tpu.memory_space<any>>) dst(%653 : memref<1x64xf32, #tpu.memory_space<vmem>>)
    %c36_i32_520 = arith.constant 36 : i32
    %c0_i32_521 = arith.constant 0 : i32
    %656 = tpu.memref_slice %arg2[%291, %c0_i32_521] : memref<512x64xf32, #tpu.memory_space<any>> -> memref<1x64xf32, #tpu.memory_space<any>>
    %c36_i32_522 = arith.constant 36 : i32
    %c0_i32_523 = arith.constant 0 : i32
    %657 = tpu.memref_slice %arg8[%c36_i32_522, %c0_i32_523] : memref<64x64xf32, #tpu.memory_space<vmem>> -> memref<1x64xf32, #tpu.memory_space<vmem>>
    %658 = tpu.memref_slice %arg9[%c36_i32_520] : memref<64x!tpu.dma_semaphore, #tpu.memory_space<semaphore_mem>> -> memref<1x!tpu.dma_semaphore, #tpu.memory_space<semaphore_mem>>
    %659 = tpu.memref_squeeze %658 : memref<1x!tpu.dma_semaphore, #tpu.memory_space<semaphore_mem>> -> memref<!tpu.dma_semaphore, #tpu.memory_space<semaphore_mem>>
    tpu.wait_dma2 semaphore(%659 : memref<!tpu.dma_semaphore, #tpu.memory_space<semaphore_mem>>) src(%656 : memref<1x64xf32, #tpu.memory_space<any>>) dst(%657 : memref<1x64xf32, #tpu.memory_space<vmem>>)
    %c37_i32_524 = arith.constant 37 : i32
    %c0_i32_525 = arith.constant 0 : i32
    %660 = tpu.memref_slice %arg2[%299, %c0_i32_525] : memref<512x64xf32, #tpu.memory_space<any>> -> memref<1x64xf32, #tpu.memory_space<any>>
    %c37_i32_526 = arith.constant 37 : i32
    %c0_i32_527 = arith.constant 0 : i32
    %661 = tpu.memref_slice %arg8[%c37_i32_526, %c0_i32_527] : memref<64x64xf32, #tpu.memory_space<vmem>> -> memref<1x64xf32, #tpu.memory_space<vmem>>
    %662 = tpu.memref_slice %arg9[%c37_i32_524] : memref<64x!tpu.dma_semaphore, #tpu.memory_space<semaphore_mem>> -> memref<1x!tpu.dma_semaphore, #tpu.memory_space<semaphore_mem>>
    %663 = tpu.memref_squeeze %662 : memref<1x!tpu.dma_semaphore, #tpu.memory_space<semaphore_mem>> -> memref<!tpu.dma_semaphore, #tpu.memory_space<semaphore_mem>>
    tpu.wait_dma2 semaphore(%663 : memref<!tpu.dma_semaphore, #tpu.memory_space<semaphore_mem>>) src(%660 : memref<1x64xf32, #tpu.memory_space<any>>) dst(%661 : memref<1x64xf32, #tpu.memory_space<vmem>>)
    %c38_i32_528 = arith.constant 38 : i32
    %c0_i32_529 = arith.constant 0 : i32
    %664 = tpu.memref_slice %arg2[%307, %c0_i32_529] : memref<512x64xf32, #tpu.memory_space<any>> -> memref<1x64xf32, #tpu.memory_space<any>>
    %c38_i32_530 = arith.constant 38 : i32
    %c0_i32_531 = arith.constant 0 : i32
    %665 = tpu.memref_slice %arg8[%c38_i32_530, %c0_i32_531] : memref<64x64xf32, #tpu.memory_space<vmem>> -> memref<1x64xf32, #tpu.memory_space<vmem>>
    %666 = tpu.memref_slice %arg9[%c38_i32_528] : memref<64x!tpu.dma_semaphore, #tpu.memory_space<semaphore_mem>> -> memref<1x!tpu.dma_semaphore, #tpu.memory_space<semaphore_mem>>
    %667 = tpu.memref_squeeze %666 : memref<1x!tpu.dma_semaphore, #tpu.memory_space<semaphore_mem>> -> memref<!tpu.dma_semaphore, #tpu.memory_space<semaphore_mem>>
    tpu.wait_dma2 semaphore(%667 : memref<!tpu.dma_semaphore, #tpu.memory_space<semaphore_mem>>) src(%664 : memref<1x64xf32, #tpu.memory_space<any>>) dst(%665 : memref<1x64xf32, #tpu.memory_space<vmem>>)
    %c39_i32_532 = arith.constant 39 : i32
    %c0_i32_533 = arith.constant 0 : i32
    %668 = tpu.memref_slice %arg2[%315, %c0_i32_533] : memref<512x64xf32, #tpu.memory_space<any>> -> memref<1x64xf32, #tpu.memory_space<any>>
    %c39_i32_534 = arith.constant 39 : i32
    %c0_i32_535 = arith.constant 0 : i32
    %669 = tpu.memref_slice %arg8[%c39_i32_534, %c0_i32_535] : memref<64x64xf32, #tpu.memory_space<vmem>> -> memref<1x64xf32, #tpu.memory_space<vmem>>
    %670 = tpu.memref_slice %arg9[%c39_i32_532] : memref<64x!tpu.dma_semaphore, #tpu.memory_space<semaphore_mem>> -> memref<1x!tpu.dma_semaphore, #tpu.memory_space<semaphore_mem>>
    %671 = tpu.memref_squeeze %670 : memref<1x!tpu.dma_semaphore, #tpu.memory_space<semaphore_mem>> -> memref<!tpu.dma_semaphore, #tpu.memory_space<semaphore_mem>>
    tpu.wait_dma2 semaphore(%671 : memref<!tpu.dma_semaphore, #tpu.memory_space<semaphore_mem>>) src(%668 : memref<1x64xf32, #tpu.memory_space<any>>) dst(%669 : memref<1x64xf32, #tpu.memory_space<vmem>>)
    %c40_i32_536 = arith.constant 40 : i32
    %c0_i32_537 = arith.constant 0 : i32
    %672 = tpu.memref_slice %arg2[%323, %c0_i32_537] : memref<512x64xf32, #tpu.memory_space<any>> -> memref<1x64xf32, #tpu.memory_space<any>>
    %c40_i32_538 = arith.constant 40 : i32
    %c0_i32_539 = arith.constant 0 : i32
    %673 = tpu.memref_slice %arg8[%c40_i32_538, %c0_i32_539] : memref<64x64xf32, #tpu.memory_space<vmem>> -> memref<1x64xf32, #tpu.memory_space<vmem>>
    %674 = tpu.memref_slice %arg9[%c40_i32_536] : memref<64x!tpu.dma_semaphore, #tpu.memory_space<semaphore_mem>> -> memref<1x!tpu.dma_semaphore, #tpu.memory_space<semaphore_mem>>
    %675 = tpu.memref_squeeze %674 : memref<1x!tpu.dma_semaphore, #tpu.memory_space<semaphore_mem>> -> memref<!tpu.dma_semaphore, #tpu.memory_space<semaphore_mem>>
    tpu.wait_dma2 semaphore(%675 : memref<!tpu.dma_semaphore, #tpu.memory_space<semaphore_mem>>) src(%672 : memref<1x64xf32, #tpu.memory_space<any>>) dst(%673 : memref<1x64xf32, #tpu.memory_space<vmem>>)
    %c41_i32_540 = arith.constant 41 : i32
    %c0_i32_541 = arith.constant 0 : i32
    %676 = tpu.memref_slice %arg2[%331, %c0_i32_541] : memref<512x64xf32, #tpu.memory_space<any>> -> memref<1x64xf32, #tpu.memory_space<any>>
    %c41_i32_542 = arith.constant 41 : i32
    %c0_i32_543 = arith.constant 0 : i32
    %677 = tpu.memref_slice %arg8[%c41_i32_542, %c0_i32_543] : memref<64x64xf32, #tpu.memory_space<vmem>> -> memref<1x64xf32, #tpu.memory_space<vmem>>
    %678 = tpu.memref_slice %arg9[%c41_i32_540] : memref<64x!tpu.dma_semaphore, #tpu.memory_space<semaphore_mem>> -> memref<1x!tpu.dma_semaphore, #tpu.memory_space<semaphore_mem>>
    %679 = tpu.memref_squeeze %678 : memref<1x!tpu.dma_semaphore, #tpu.memory_space<semaphore_mem>> -> memref<!tpu.dma_semaphore, #tpu.memory_space<semaphore_mem>>
    tpu.wait_dma2 semaphore(%679 : memref<!tpu.dma_semaphore, #tpu.memory_space<semaphore_mem>>) src(%676 : memref<1x64xf32, #tpu.memory_space<any>>) dst(%677 : memref<1x64xf32, #tpu.memory_space<vmem>>)
    %c42_i32_544 = arith.constant 42 : i32
    %c0_i32_545 = arith.constant 0 : i32
    %680 = tpu.memref_slice %arg2[%339, %c0_i32_545] : memref<512x64xf32, #tpu.memory_space<any>> -> memref<1x64xf32, #tpu.memory_space<any>>
    %c42_i32_546 = arith.constant 42 : i32
    %c0_i32_547 = arith.constant 0 : i32
    %681 = tpu.memref_slice %arg8[%c42_i32_546, %c0_i32_547] : memref<64x64xf32, #tpu.memory_space<vmem>> -> memref<1x64xf32, #tpu.memory_space<vmem>>
    %682 = tpu.memref_slice %arg9[%c42_i32_544] : memref<64x!tpu.dma_semaphore, #tpu.memory_space<semaphore_mem>> -> memref<1x!tpu.dma_semaphore, #tpu.memory_space<semaphore_mem>>
    %683 = tpu.memref_squeeze %682 : memref<1x!tpu.dma_semaphore, #tpu.memory_space<semaphore_mem>> -> memref<!tpu.dma_semaphore, #tpu.memory_space<semaphore_mem>>
    tpu.wait_dma2 semaphore(%683 : memref<!tpu.dma_semaphore, #tpu.memory_space<semaphore_mem>>) src(%680 : memref<1x64xf32, #tpu.memory_space<any>>) dst(%681 : memref<1x64xf32, #tpu.memory_space<vmem>>)
    %c43_i32_548 = arith.constant 43 : i32
    %c0_i32_549 = arith.constant 0 : i32
    %684 = tpu.memref_slice %arg2[%347, %c0_i32_549] : memref<512x64xf32, #tpu.memory_space<any>> -> memref<1x64xf32, #tpu.memory_space<any>>
    %c43_i32_550 = arith.constant 43 : i32
    %c0_i32_551 = arith.constant 0 : i32
    %685 = tpu.memref_slice %arg8[%c43_i32_550, %c0_i32_551] : memref<64x64xf32, #tpu.memory_space<vmem>> -> memref<1x64xf32, #tpu.memory_space<vmem>>
    %686 = tpu.memref_slice %arg9[%c43_i32_548] : memref<64x!tpu.dma_semaphore, #tpu.memory_space<semaphore_mem>> -> memref<1x!tpu.dma_semaphore, #tpu.memory_space<semaphore_mem>>
    %687 = tpu.memref_squeeze %686 : memref<1x!tpu.dma_semaphore, #tpu.memory_space<semaphore_mem>> -> memref<!tpu.dma_semaphore, #tpu.memory_space<semaphore_mem>>
    tpu.wait_dma2 semaphore(%687 : memref<!tpu.dma_semaphore, #tpu.memory_space<semaphore_mem>>) src(%684 : memref<1x64xf32, #tpu.memory_space<any>>) dst(%685 : memref<1x64xf32, #tpu.memory_space<vmem>>)
    %c44_i32_552 = arith.constant 44 : i32
    %c0_i32_553 = arith.constant 0 : i32
    %688 = tpu.memref_slice %arg2[%355, %c0_i32_553] : memref<512x64xf32, #tpu.memory_space<any>> -> memref<1x64xf32, #tpu.memory_space<any>>
    %c44_i32_554 = arith.constant 44 : i32
    %c0_i32_555 = arith.constant 0 : i32
    %689 = tpu.memref_slice %arg8[%c44_i32_554, %c0_i32_555] : memref<64x64xf32, #tpu.memory_space<vmem>> -> memref<1x64xf32, #tpu.memory_space<vmem>>
    %690 = tpu.memref_slice %arg9[%c44_i32_552] : memref<64x!tpu.dma_semaphore, #tpu.memory_space<semaphore_mem>> -> memref<1x!tpu.dma_semaphore, #tpu.memory_space<semaphore_mem>>
    %691 = tpu.memref_squeeze %690 : memref<1x!tpu.dma_semaphore, #tpu.memory_space<semaphore_mem>> -> memref<!tpu.dma_semaphore, #tpu.memory_space<semaphore_mem>>
    tpu.wait_dma2 semaphore(%691 : memref<!tpu.dma_semaphore, #tpu.memory_space<semaphore_mem>>) src(%688 : memref<1x64xf32, #tpu.memory_space<any>>) dst(%689 : memref<1x64xf32, #tpu.memory_space<vmem>>)
    %c45_i32_556 = arith.constant 45 : i32
    %c0_i32_557 = arith.constant 0 : i32
    %692 = tpu.memref_slice %arg2[%363, %c0_i32_557] : memref<512x64xf32, #tpu.memory_space<any>> -> memref<1x64xf32, #tpu.memory_space<any>>
    %c45_i32_558 = arith.constant 45 : i32
    %c0_i32_559 = arith.constant 0 : i32
    %693 = tpu.memref_slice %arg8[%c45_i32_558, %c0_i32_559] : memref<64x64xf32, #tpu.memory_space<vmem>> -> memref<1x64xf32, #tpu.memory_space<vmem>>
    %694 = tpu.memref_slice %arg9[%c45_i32_556] : memref<64x!tpu.dma_semaphore, #tpu.memory_space<semaphore_mem>> -> memref<1x!tpu.dma_semaphore, #tpu.memory_space<semaphore_mem>>
    %695 = tpu.memref_squeeze %694 : memref<1x!tpu.dma_semaphore, #tpu.memory_space<semaphore_mem>> -> memref<!tpu.dma_semaphore, #tpu.memory_space<semaphore_mem>>
    tpu.wait_dma2 semaphore(%695 : memref<!tpu.dma_semaphore, #tpu.memory_space<semaphore_mem>>) src(%692 : memref<1x64xf32, #tpu.memory_space<any>>) dst(%693 : memref<1x64xf32, #tpu.memory_space<vmem>>)
    %c46_i32_560 = arith.constant 46 : i32
    %c0_i32_561 = arith.constant 0 : i32
    %696 = tpu.memref_slice %arg2[%371, %c0_i32_561] : memref<512x64xf32, #tpu.memory_space<any>> -> memref<1x64xf32, #tpu.memory_space<any>>
    %c46_i32_562 = arith.constant 46 : i32
    %c0_i32_563 = arith.constant 0 : i32
    %697 = tpu.memref_slice %arg8[%c46_i32_562, %c0_i32_563] : memref<64x64xf32, #tpu.memory_space<vmem>> -> memref<1x64xf32, #tpu.memory_space<vmem>>
    %698 = tpu.memref_slice %arg9[%c46_i32_560] : memref<64x!tpu.dma_semaphore, #tpu.memory_space<semaphore_mem>> -> memref<1x!tpu.dma_semaphore, #tpu.memory_space<semaphore_mem>>
    %699 = tpu.memref_squeeze %698 : memref<1x!tpu.dma_semaphore, #tpu.memory_space<semaphore_mem>> -> memref<!tpu.dma_semaphore, #tpu.memory_space<semaphore_mem>>
    tpu.wait_dma2 semaphore(%699 : memref<!tpu.dma_semaphore, #tpu.memory_space<semaphore_mem>>) src(%696 : memref<1x64xf32, #tpu.memory_space<any>>) dst(%697 : memref<1x64xf32, #tpu.memory_space<vmem>>)
    %c47_i32_564 = arith.constant 47 : i32
    %c0_i32_565 = arith.constant 0 : i32
    %700 = tpu.memref_slice %arg2[%379, %c0_i32_565] : memref<512x64xf32, #tpu.memory_space<any>> -> memref<1x64xf32, #tpu.memory_space<any>>
    %c47_i32_566 = arith.constant 47 : i32
    %c0_i32_567 = arith.constant 0 : i32
    %701 = tpu.memref_slice %arg8[%c47_i32_566, %c0_i32_567] : memref<64x64xf32, #tpu.memory_space<vmem>> -> memref<1x64xf32, #tpu.memory_space<vmem>>
    %702 = tpu.memref_slice %arg9[%c47_i32_564] : memref<64x!tpu.dma_semaphore, #tpu.memory_space<semaphore_mem>> -> memref<1x!tpu.dma_semaphore, #tpu.memory_space<semaphore_mem>>
    %703 = tpu.memref_squeeze %702 : memref<1x!tpu.dma_semaphore, #tpu.memory_space<semaphore_mem>> -> memref<!tpu.dma_semaphore, #tpu.memory_space<semaphore_mem>>
    tpu.wait_dma2 semaphore(%703 : memref<!tpu.dma_semaphore, #tpu.memory_space<semaphore_mem>>) src(%700 : memref<1x64xf32, #tpu.memory_space<any>>) dst(%701 : memref<1x64xf32, #tpu.memory_space<vmem>>)
    %c48_i32_568 = arith.constant 48 : i32
    %c0_i32_569 = arith.constant 0 : i32
    %704 = tpu.memref_slice %arg2[%387, %c0_i32_569] : memref<512x64xf32, #tpu.memory_space<any>> -> memref<1x64xf32, #tpu.memory_space<any>>
    %c48_i32_570 = arith.constant 48 : i32
    %c0_i32_571 = arith.constant 0 : i32
    %705 = tpu.memref_slice %arg8[%c48_i32_570, %c0_i32_571] : memref<64x64xf32, #tpu.memory_space<vmem>> -> memref<1x64xf32, #tpu.memory_space<vmem>>
    %706 = tpu.memref_slice %arg9[%c48_i32_568] : memref<64x!tpu.dma_semaphore, #tpu.memory_space<semaphore_mem>> -> memref<1x!tpu.dma_semaphore, #tpu.memory_space<semaphore_mem>>
    %707 = tpu.memref_squeeze %706 : memref<1x!tpu.dma_semaphore, #tpu.memory_space<semaphore_mem>> -> memref<!tpu.dma_semaphore, #tpu.memory_space<semaphore_mem>>
    tpu.wait_dma2 semaphore(%707 : memref<!tpu.dma_semaphore, #tpu.memory_space<semaphore_mem>>) src(%704 : memref<1x64xf32, #tpu.memory_space<any>>) dst(%705 : memref<1x64xf32, #tpu.memory_space<vmem>>)
    %c49_i32_572 = arith.constant 49 : i32
    %c0_i32_573 = arith.constant 0 : i32
    %708 = tpu.memref_slice %arg2[%395, %c0_i32_573] : memref<512x64xf32, #tpu.memory_space<any>> -> memref<1x64xf32, #tpu.memory_space<any>>
    %c49_i32_574 = arith.constant 49 : i32
    %c0_i32_575 = arith.constant 0 : i32
    %709 = tpu.memref_slice %arg8[%c49_i32_574, %c0_i32_575] : memref<64x64xf32, #tpu.memory_space<vmem>> -> memref<1x64xf32, #tpu.memory_space<vmem>>
    %710 = tpu.memref_slice %arg9[%c49_i32_572] : memref<64x!tpu.dma_semaphore, #tpu.memory_space<semaphore_mem>> -> memref<1x!tpu.dma_semaphore, #tpu.memory_space<semaphore_mem>>
    %711 = tpu.memref_squeeze %710 : memref<1x!tpu.dma_semaphore, #tpu.memory_space<semaphore_mem>> -> memref<!tpu.dma_semaphore, #tpu.memory_space<semaphore_mem>>
    tpu.wait_dma2 semaphore(%711 : memref<!tpu.dma_semaphore, #tpu.memory_space<semaphore_mem>>) src(%708 : memref<1x64xf32, #tpu.memory_space<any>>) dst(%709 : memref<1x64xf32, #tpu.memory_space<vmem>>)
    %c50_i32_576 = arith.constant 50 : i32
    %c0_i32_577 = arith.constant 0 : i32
    %712 = tpu.memref_slice %arg2[%403, %c0_i32_577] : memref<512x64xf32, #tpu.memory_space<any>> -> memref<1x64xf32, #tpu.memory_space<any>>
    %c50_i32_578 = arith.constant 50 : i32
    %c0_i32_579 = arith.constant 0 : i32
    %713 = tpu.memref_slice %arg8[%c50_i32_578, %c0_i32_579] : memref<64x64xf32, #tpu.memory_space<vmem>> -> memref<1x64xf32, #tpu.memory_space<vmem>>
    %714 = tpu.memref_slice %arg9[%c50_i32_576] : memref<64x!tpu.dma_semaphore, #tpu.memory_space<semaphore_mem>> -> memref<1x!tpu.dma_semaphore, #tpu.memory_space<semaphore_mem>>
    %715 = tpu.memref_squeeze %714 : memref<1x!tpu.dma_semaphore, #tpu.memory_space<semaphore_mem>> -> memref<!tpu.dma_semaphore, #tpu.memory_space<semaphore_mem>>
    tpu.wait_dma2 semaphore(%715 : memref<!tpu.dma_semaphore, #tpu.memory_space<semaphore_mem>>) src(%712 : memref<1x64xf32, #tpu.memory_space<any>>) dst(%713 : memref<1x64xf32, #tpu.memory_space<vmem>>)
    %c51_i32_580 = arith.constant 51 : i32
    %c0_i32_581 = arith.constant 0 : i32
    %716 = tpu.memref_slice %arg2[%411, %c0_i32_581] : memref<512x64xf32, #tpu.memory_space<any>> -> memref<1x64xf32, #tpu.memory_space<any>>
    %c51_i32_582 = arith.constant 51 : i32
    %c0_i32_583 = arith.constant 0 : i32
    %717 = tpu.memref_slice %arg8[%c51_i32_582, %c0_i32_583] : memref<64x64xf32, #tpu.memory_space<vmem>> -> memref<1x64xf32, #tpu.memory_space<vmem>>
    %718 = tpu.memref_slice %arg9[%c51_i32_580] : memref<64x!tpu.dma_semaphore, #tpu.memory_space<semaphore_mem>> -> memref<1x!tpu.dma_semaphore, #tpu.memory_space<semaphore_mem>>
    %719 = tpu.memref_squeeze %718 : memref<1x!tpu.dma_semaphore, #tpu.memory_space<semaphore_mem>> -> memref<!tpu.dma_semaphore, #tpu.memory_space<semaphore_mem>>
    tpu.wait_dma2 semaphore(%719 : memref<!tpu.dma_semaphore, #tpu.memory_space<semaphore_mem>>) src(%716 : memref<1x64xf32, #tpu.memory_space<any>>) dst(%717 : memref<1x64xf32, #tpu.memory_space<vmem>>)
    %c52_i32_584 = arith.constant 52 : i32
    %c0_i32_585 = arith.constant 0 : i32
    %720 = tpu.memref_slice %arg2[%419, %c0_i32_585] : memref<512x64xf32, #tpu.memory_space<any>> -> memref<1x64xf32, #tpu.memory_space<any>>
    %c52_i32_586 = arith.constant 52 : i32
    %c0_i32_587 = arith.constant 0 : i32
    %721 = tpu.memref_slice %arg8[%c52_i32_586, %c0_i32_587] : memref<64x64xf32, #tpu.memory_space<vmem>> -> memref<1x64xf32, #tpu.memory_space<vmem>>
    %722 = tpu.memref_slice %arg9[%c52_i32_584] : memref<64x!tpu.dma_semaphore, #tpu.memory_space<semaphore_mem>> -> memref<1x!tpu.dma_semaphore, #tpu.memory_space<semaphore_mem>>
    %723 = tpu.memref_squeeze %722 : memref<1x!tpu.dma_semaphore, #tpu.memory_space<semaphore_mem>> -> memref<!tpu.dma_semaphore, #tpu.memory_space<semaphore_mem>>
    tpu.wait_dma2 semaphore(%723 : memref<!tpu.dma_semaphore, #tpu.memory_space<semaphore_mem>>) src(%720 : memref<1x64xf32, #tpu.memory_space<any>>) dst(%721 : memref<1x64xf32, #tpu.memory_space<vmem>>)
    %c53_i32_588 = arith.constant 53 : i32
    %c0_i32_589 = arith.constant 0 : i32
    %724 = tpu.memref_slice %arg2[%427, %c0_i32_589] : memref<512x64xf32, #tpu.memory_space<any>> -> memref<1x64xf32, #tpu.memory_space<any>>
    %c53_i32_590 = arith.constant 53 : i32
    %c0_i32_591 = arith.constant 0 : i32
    %725 = tpu.memref_slice %arg8[%c53_i32_590, %c0_i32_591] : memref<64x64xf32, #tpu.memory_space<vmem>> -> memref<1x64xf32, #tpu.memory_space<vmem>>
    %726 = tpu.memref_slice %arg9[%c53_i32_588] : memref<64x!tpu.dma_semaphore, #tpu.memory_space<semaphore_mem>> -> memref<1x!tpu.dma_semaphore, #tpu.memory_space<semaphore_mem>>
    %727 = tpu.memref_squeeze %726 : memref<1x!tpu.dma_semaphore, #tpu.memory_space<semaphore_mem>> -> memref<!tpu.dma_semaphore, #tpu.memory_space<semaphore_mem>>
    tpu.wait_dma2 semaphore(%727 : memref<!tpu.dma_semaphore, #tpu.memory_space<semaphore_mem>>) src(%724 : memref<1x64xf32, #tpu.memory_space<any>>) dst(%725 : memref<1x64xf32, #tpu.memory_space<vmem>>)
    %c54_i32_592 = arith.constant 54 : i32
    %c0_i32_593 = arith.constant 0 : i32
    %728 = tpu.memref_slice %arg2[%435, %c0_i32_593] : memref<512x64xf32, #tpu.memory_space<any>> -> memref<1x64xf32, #tpu.memory_space<any>>
    %c54_i32_594 = arith.constant 54 : i32
    %c0_i32_595 = arith.constant 0 : i32
    %729 = tpu.memref_slice %arg8[%c54_i32_594, %c0_i32_595] : memref<64x64xf32, #tpu.memory_space<vmem>> -> memref<1x64xf32, #tpu.memory_space<vmem>>
    %730 = tpu.memref_slice %arg9[%c54_i32_592] : memref<64x!tpu.dma_semaphore, #tpu.memory_space<semaphore_mem>> -> memref<1x!tpu.dma_semaphore, #tpu.memory_space<semaphore_mem>>
    %731 = tpu.memref_squeeze %730 : memref<1x!tpu.dma_semaphore, #tpu.memory_space<semaphore_mem>> -> memref<!tpu.dma_semaphore, #tpu.memory_space<semaphore_mem>>
    tpu.wait_dma2 semaphore(%731 : memref<!tpu.dma_semaphore, #tpu.memory_space<semaphore_mem>>) src(%728 : memref<1x64xf32, #tpu.memory_space<any>>) dst(%729 : memref<1x64xf32, #tpu.memory_space<vmem>>)
    %c55_i32_596 = arith.constant 55 : i32
    %c0_i32_597 = arith.constant 0 : i32
    %732 = tpu.memref_slice %arg2[%443, %c0_i32_597] : memref<512x64xf32, #tpu.memory_space<any>> -> memref<1x64xf32, #tpu.memory_space<any>>
    %c55_i32_598 = arith.constant 55 : i32
    %c0_i32_599 = arith.constant 0 : i32
    %733 = tpu.memref_slice %arg8[%c55_i32_598, %c0_i32_599] : memref<64x64xf32, #tpu.memory_space<vmem>> -> memref<1x64xf32, #tpu.memory_space<vmem>>
    %734 = tpu.memref_slice %arg9[%c55_i32_596] : memref<64x!tpu.dma_semaphore, #tpu.memory_space<semaphore_mem>> -> memref<1x!tpu.dma_semaphore, #tpu.memory_space<semaphore_mem>>
    %735 = tpu.memref_squeeze %734 : memref<1x!tpu.dma_semaphore, #tpu.memory_space<semaphore_mem>> -> memref<!tpu.dma_semaphore, #tpu.memory_space<semaphore_mem>>
    tpu.wait_dma2 semaphore(%735 : memref<!tpu.dma_semaphore, #tpu.memory_space<semaphore_mem>>) src(%732 : memref<1x64xf32, #tpu.memory_space<any>>) dst(%733 : memref<1x64xf32, #tpu.memory_space<vmem>>)
    %c56_i32_600 = arith.constant 56 : i32
    %c0_i32_601 = arith.constant 0 : i32
    %736 = tpu.memref_slice %arg2[%451, %c0_i32_601] : memref<512x64xf32, #tpu.memory_space<any>> -> memref<1x64xf32, #tpu.memory_space<any>>
    %c56_i32_602 = arith.constant 56 : i32
    %c0_i32_603 = arith.constant 0 : i32
    %737 = tpu.memref_slice %arg8[%c56_i32_602, %c0_i32_603] : memref<64x64xf32, #tpu.memory_space<vmem>> -> memref<1x64xf32, #tpu.memory_space<vmem>>
    %738 = tpu.memref_slice %arg9[%c56_i32_600] : memref<64x!tpu.dma_semaphore, #tpu.memory_space<semaphore_mem>> -> memref<1x!tpu.dma_semaphore, #tpu.memory_space<semaphore_mem>>
    %739 = tpu.memref_squeeze %738 : memref<1x!tpu.dma_semaphore, #tpu.memory_space<semaphore_mem>> -> memref<!tpu.dma_semaphore, #tpu.memory_space<semaphore_mem>>
    tpu.wait_dma2 semaphore(%739 : memref<!tpu.dma_semaphore, #tpu.memory_space<semaphore_mem>>) src(%736 : memref<1x64xf32, #tpu.memory_space<any>>) dst(%737 : memref<1x64xf32, #tpu.memory_space<vmem>>)
    %c57_i32_604 = arith.constant 57 : i32
    %c0_i32_605 = arith.constant 0 : i32
    %740 = tpu.memref_slice %arg2[%459, %c0_i32_605] : memref<512x64xf32, #tpu.memory_space<any>> -> memref<1x64xf32, #tpu.memory_space<any>>
    %c57_i32_606 = arith.constant 57 : i32
    %c0_i32_607 = arith.constant 0 : i32
    %741 = tpu.memref_slice %arg8[%c57_i32_606, %c0_i32_607] : memref<64x64xf32, #tpu.memory_space<vmem>> -> memref<1x64xf32, #tpu.memory_space<vmem>>
    %742 = tpu.memref_slice %arg9[%c57_i32_604] : memref<64x!tpu.dma_semaphore, #tpu.memory_space<semaphore_mem>> -> memref<1x!tpu.dma_semaphore, #tpu.memory_space<semaphore_mem>>
    %743 = tpu.memref_squeeze %742 : memref<1x!tpu.dma_semaphore, #tpu.memory_space<semaphore_mem>> -> memref<!tpu.dma_semaphore, #tpu.memory_space<semaphore_mem>>
    tpu.wait_dma2 semaphore(%743 : memref<!tpu.dma_semaphore, #tpu.memory_space<semaphore_mem>>) src(%740 : memref<1x64xf32, #tpu.memory_space<any>>) dst(%741 : memref<1x64xf32, #tpu.memory_space<vmem>>)
    %c58_i32_608 = arith.constant 58 : i32
    %c0_i32_609 = arith.constant 0 : i32
    %744 = tpu.memref_slice %arg2[%467, %c0_i32_609] : memref<512x64xf32, #tpu.memory_space<any>> -> memref<1x64xf32, #tpu.memory_space<any>>
    %c58_i32_610 = arith.constant 58 : i32
    %c0_i32_611 = arith.constant 0 : i32
    %745 = tpu.memref_slice %arg8[%c58_i32_610, %c0_i32_611] : memref<64x64xf32, #tpu.memory_space<vmem>> -> memref<1x64xf32, #tpu.memory_space<vmem>>
    %746 = tpu.memref_slice %arg9[%c58_i32_608] : memref<64x!tpu.dma_semaphore, #tpu.memory_space<semaphore_mem>> -> memref<1x!tpu.dma_semaphore, #tpu.memory_space<semaphore_mem>>
    %747 = tpu.memref_squeeze %746 : memref<1x!tpu.dma_semaphore, #tpu.memory_space<semaphore_mem>> -> memref<!tpu.dma_semaphore, #tpu.memory_space<semaphore_mem>>
    tpu.wait_dma2 semaphore(%747 : memref<!tpu.dma_semaphore, #tpu.memory_space<semaphore_mem>>) src(%744 : memref<1x64xf32, #tpu.memory_space<any>>) dst(%745 : memref<1x64xf32, #tpu.memory_space<vmem>>)
    %c59_i32_612 = arith.constant 59 : i32
    %c0_i32_613 = arith.constant 0 : i32
    %748 = tpu.memref_slice %arg2[%475, %c0_i32_613] : memref<512x64xf32, #tpu.memory_space<any>> -> memref<1x64xf32, #tpu.memory_space<any>>
    %c59_i32_614 = arith.constant 59 : i32
    %c0_i32_615 = arith.constant 0 : i32
    %749 = tpu.memref_slice %arg8[%c59_i32_614, %c0_i32_615] : memref<64x64xf32, #tpu.memory_space<vmem>> -> memref<1x64xf32, #tpu.memory_space<vmem>>
    %750 = tpu.memref_slice %arg9[%c59_i32_612] : memref<64x!tpu.dma_semaphore, #tpu.memory_space<semaphore_mem>> -> memref<1x!tpu.dma_semaphore, #tpu.memory_space<semaphore_mem>>
    %751 = tpu.memref_squeeze %750 : memref<1x!tpu.dma_semaphore, #tpu.memory_space<semaphore_mem>> -> memref<!tpu.dma_semaphore, #tpu.memory_space<semaphore_mem>>
    tpu.wait_dma2 semaphore(%751 : memref<!tpu.dma_semaphore, #tpu.memory_space<semaphore_mem>>) src(%748 : memref<1x64xf32, #tpu.memory_space<any>>) dst(%749 : memref<1x64xf32, #tpu.memory_space<vmem>>)
    %c60_i32_616 = arith.constant 60 : i32
    %c0_i32_617 = arith.constant 0 : i32
    %752 = tpu.memref_slice %arg2[%483, %c0_i32_617] : memref<512x64xf32, #tpu.memory_space<any>> -> memref<1x64xf32, #tpu.memory_space<any>>
    %c60_i32_618 = arith.constant 60 : i32
    %c0_i32_619 = arith.constant 0 : i32
    %753 = tpu.memref_slice %arg8[%c60_i32_618, %c0_i32_619] : memref<64x64xf32, #tpu.memory_space<vmem>> -> memref<1x64xf32, #tpu.memory_space<vmem>>
    %754 = tpu.memref_slice %arg9[%c60_i32_616] : memref<64x!tpu.dma_semaphore, #tpu.memory_space<semaphore_mem>> -> memref<1x!tpu.dma_semaphore, #tpu.memory_space<semaphore_mem>>
    %755 = tpu.memref_squeeze %754 : memref<1x!tpu.dma_semaphore, #tpu.memory_space<semaphore_mem>> -> memref<!tpu.dma_semaphore, #tpu.memory_space<semaphore_mem>>
    tpu.wait_dma2 semaphore(%755 : memref<!tpu.dma_semaphore, #tpu.memory_space<semaphore_mem>>) src(%752 : memref<1x64xf32, #tpu.memory_space<any>>) dst(%753 : memref<1x64xf32, #tpu.memory_space<vmem>>)
    %c61_i32_620 = arith.constant 61 : i32
    %c0_i32_621 = arith.constant 0 : i32
    %756 = tpu.memref_slice %arg2[%491, %c0_i32_621] : memref<512x64xf32, #tpu.memory_space<any>> -> memref<1x64xf32, #tpu.memory_space<any>>
    %c61_i32_622 = arith.constant 61 : i32
    %c0_i32_623 = arith.constant 0 : i32
    %757 = tpu.memref_slice %arg8[%c61_i32_622, %c0_i32_623] : memref<64x64xf32, #tpu.memory_space<vmem>> -> memref<1x64xf32, #tpu.memory_space<vmem>>
    %758 = tpu.memref_slice %arg9[%c61_i32_620] : memref<64x!tpu.dma_semaphore, #tpu.memory_space<semaphore_mem>> -> memref<1x!tpu.dma_semaphore, #tpu.memory_space<semaphore_mem>>
    %759 = tpu.memref_squeeze %758 : memref<1x!tpu.dma_semaphore, #tpu.memory_space<semaphore_mem>> -> memref<!tpu.dma_semaphore, #tpu.memory_space<semaphore_mem>>
    tpu.wait_dma2 semaphore(%759 : memref<!tpu.dma_semaphore, #tpu.memory_space<semaphore_mem>>) src(%756 : memref<1x64xf32, #tpu.memory_space<any>>) dst(%757 : memref<1x64xf32, #tpu.memory_space<vmem>>)
    %c62_i32_624 = arith.constant 62 : i32
    %c0_i32_625 = arith.constant 0 : i32
    %760 = tpu.memref_slice %arg2[%499, %c0_i32_625] : memref<512x64xf32, #tpu.memory_space<any>> -> memref<1x64xf32, #tpu.memory_space<any>>
    %c62_i32_626 = arith.constant 62 : i32
    %c0_i32_627 = arith.constant 0 : i32
    %761 = tpu.memref_slice %arg8[%c62_i32_626, %c0_i32_627] : memref<64x64xf32, #tpu.memory_space<vmem>> -> memref<1x64xf32, #tpu.memory_space<vmem>>
    %762 = tpu.memref_slice %arg9[%c62_i32_624] : memref<64x!tpu.dma_semaphore, #tpu.memory_space<semaphore_mem>> -> memref<1x!tpu.dma_semaphore, #tpu.memory_space<semaphore_mem>>
    %763 = tpu.memref_squeeze %762 : memref<1x!tpu.dma_semaphore, #tpu.memory_space<semaphore_mem>> -> memref<!tpu.dma_semaphore, #tpu.memory_space<semaphore_mem>>
    tpu.wait_dma2 semaphore(%763 : memref<!tpu.dma_semaphore, #tpu.memory_space<semaphore_mem>>) src(%760 : memref<1x64xf32, #tpu.memory_space<any>>) dst(%761 : memref<1x64xf32, #tpu.memory_space<vmem>>)
    %c63_i32_628 = arith.constant 63 : i32
    %c0_i32_629 = arith.constant 0 : i32
    %764 = tpu.memref_slice %arg2[%507, %c0_i32_629] : memref<512x64xf32, #tpu.memory_space<any>> -> memref<1x64xf32, #tpu.memory_space<any>>
    %c63_i32_630 = arith.constant 63 : i32
    %c0_i32_631 = arith.constant 0 : i32
    %765 = tpu.memref_slice %arg8[%c63_i32_630, %c0_i32_631] : memref<64x64xf32, #tpu.memory_space<vmem>> -> memref<1x64xf32, #tpu.memory_space<vmem>>
    %766 = tpu.memref_slice %arg9[%c63_i32_628] : memref<64x!tpu.dma_semaphore, #tpu.memory_space<semaphore_mem>> -> memref<1x!tpu.dma_semaphore, #tpu.memory_space<semaphore_mem>>
    %767 = tpu.memref_squeeze %766 : memref<1x!tpu.dma_semaphore, #tpu.memory_space<semaphore_mem>> -> memref<!tpu.dma_semaphore, #tpu.memory_space<semaphore_mem>>
    tpu.wait_dma2 semaphore(%767 : memref<!tpu.dma_semaphore, #tpu.memory_space<semaphore_mem>>) src(%764 : memref<1x64xf32, #tpu.memory_space<any>>) dst(%765 : memref<1x64xf32, #tpu.memory_space<vmem>>)
    %c0_632 = arith.constant 0 : index
    %c0_633 = arith.constant 0 : index
    %768 = vector.load %arg8[%c0_632, %c0_633] : memref<64x64xf32, #tpu.memory_space<vmem>>, vector<64x64xf32>
    %769 = arith.truncf %768 : vector<64x64xf32> to vector<64x64xbf16>
    %c0_634 = arith.constant 0 : index
    %c0_635 = arith.constant 0 : index
    %770 = vector.load %arg3[%c0_634, %c0_635] : memref<64x128xbf16, #tpu.memory_space<vmem>>, vector<64x128xbf16>
    %cst = arith.constant dense<0.000000e+00> : vector<64x128xf32>
    %771 = tpu.matmul %769, %770, %cst {dimension_numbers = #tpu.dot_dimension_numbers<[1], [0], [0], [1], [0, 0, 1, 1], [], []>} : vector<64x64xbf16>, vector<64x128xbf16>, vector<64x128xf32> -> vector<64x128xf32>
    %c0_636 = arith.constant 0 : index
    %c0_637 = arith.constant 0 : index
    %772 = vector.load %arg4[%c0_636, %c0_637] : memref<1x128xf32, #tpu.memory_space<vmem>>, vector<1x128xf32>
    %773 = vector.broadcast %772 : vector<1x128xf32> to vector<64x128xf32>
    %774 = arith.addf %771, %773 : vector<64x128xf32>
    %cst_638 = arith.constant 0.000000e+00 : f32
    %775 = vector.broadcast %cst_638 : f32 to vector<64x128xf32>
    %776 = arith.maximumf %774, %775 : vector<64x128xf32>
    %777 = vector.extract_strided_slice %776 {offsets = [0, 0], sizes = [8, 128], strides = [1, 1]} : vector<64x128xf32> to vector<8x128xf32>
    %778 = vector.extract_strided_slice %776 {offsets = [8, 0], sizes = [8, 128], strides = [1, 1]} : vector<64x128xf32> to vector<8x128xf32>
    %779 = arith.maximumf %777, %778 : vector<8x128xf32>
    %780 = vector.extract_strided_slice %776 {offsets = [16, 0], sizes = [8, 128], strides = [1, 1]} : vector<64x128xf32> to vector<8x128xf32>
    %781 = arith.maximumf %779, %780 : vector<8x128xf32>
    %782 = vector.extract_strided_slice %776 {offsets = [24, 0], sizes = [8, 128], strides = [1, 1]} : vector<64x128xf32> to vector<8x128xf32>
    %783 = arith.maximumf %781, %782 : vector<8x128xf32>
    %784 = vector.extract_strided_slice %776 {offsets = [32, 0], sizes = [8, 128], strides = [1, 1]} : vector<64x128xf32> to vector<8x128xf32>
    %785 = arith.maximumf %783, %784 : vector<8x128xf32>
    %786 = vector.extract_strided_slice %776 {offsets = [40, 0], sizes = [8, 128], strides = [1, 1]} : vector<64x128xf32> to vector<8x128xf32>
    %787 = arith.maximumf %785, %786 : vector<8x128xf32>
    %788 = vector.extract_strided_slice %776 {offsets = [48, 0], sizes = [8, 128], strides = [1, 1]} : vector<64x128xf32> to vector<8x128xf32>
    %789 = arith.maximumf %787, %788 : vector<8x128xf32>
    %790 = vector.extract_strided_slice %776 {offsets = [56, 0], sizes = [8, 128], strides = [1, 1]} : vector<64x128xf32> to vector<8x128xf32>
    %791 = arith.maximumf %789, %790 : vector<8x128xf32>
    %792 = arith.truncf %791 : vector<8x128xf32> to vector<8x128xbf16>
    %c0_639 = arith.constant 0 : index
    %c0_640 = arith.constant 0 : index
    %793 = vector.load %arg5[%c0_639, %c0_640] : memref<128x128xbf16, #tpu.memory_space<vmem>>, vector<128x128xbf16>
    %cst_641 = arith.constant dense<0.000000e+00> : vector<8x128xf32>
    %794 = tpu.matmul %792, %793, %cst_641 {dimension_numbers = #tpu.dot_dimension_numbers<[1], [0], [0], [1], [0, 0, 1, 1], [], []>} : vector<8x128xbf16>, vector<128x128xbf16>, vector<8x128xf32> -> vector<8x128xf32>
    %c0_642 = arith.constant 0 : index
    %c0_643 = arith.constant 0 : index
    %795 = vector.load %arg6[%c0_642, %c0_643] : memref<1x128xf32, #tpu.memory_space<vmem>>, vector<1x128xf32>
    %796 = vector.broadcast %795 : vector<1x128xf32> to vector<8x128xf32>
    %797 = arith.addf %794, %796 : vector<8x128xf32>
    %c0_644 = arith.constant 0 : index
    %c0_645 = arith.constant 0 : index
    %798 = vector.load %arg7[%c0_644, %c0_645] : memref<8x128xf32, #tpu.memory_space<vmem>>, vector<8x128xf32>
    tpu.vector_store %arg7[%c0_644, %c0_645], %797 {strides = array<i32>} : memref<8x128xf32, #tpu.memory_space<vmem>>, vector<8x128xf32>,
    return
  }
  func.func @transform_1(%arg0: i32, %arg1: memref<16x8xi32, #tpu.memory_space<smem>>) -> (i32, i32) {
    %c0_i32 = arith.constant 0 : i32
    %c0_i32_0 = arith.constant 0 : i32
    %c0_i32_1 = arith.constant 0 : i32
    return %c0_i32, %c0_i32_0 : i32, i32
  }
  func.func @transform_2(%arg0: i32, %arg1: memref<16x8xi32, #tpu.memory_space<smem>>) -> (i32, i32) {
    %c0_i32 = arith.constant 0 : i32
    %c0_i32_0 = arith.constant 0 : i32
    %c0_i32_1 = arith.constant 0 : i32
    return %c0_i32, %c0_i32_0 : i32, i32
  }
  func.func @transform_3(%arg0: i32, %arg1: memref<16x8xi32, #tpu.memory_space<smem>>) -> (i32, i32) {
    %c0_i32 = arith.constant 0 : i32
    %c0_i32_0 = arith.constant 0 : i32
    %c0_i32_1 = arith.constant 0 : i32
    return %c0_i32, %c0_i32_0 : i32, i32
  }
  func.func @transform_4(%arg0: i32, %arg1: memref<16x8xi32, #tpu.memory_space<smem>>) -> (i32, i32) {
    %c0_i32 = arith.constant 0 : i32
    %c0_i32_0 = arith.constant 0 : i32
    %c0_i32_1 = arith.constant 0 : i32
    return %c0_i32, %c0_i32_0 : i32, i32
  }
  func.func @transform_5(%arg0: i32, %arg1: memref<16x8xi32, #tpu.memory_space<smem>>) -> (i32, i32) {
    %c0_i32 = arith.constant 0 : i32
    %c0_i32_0 = arith.constant 0 : i32
    return %arg0, %c0_i32 : i32, i32
  }
}

</mosaic_0001>

<llo_original>
// kernel: tpu_custom_call.1
$region0: #{tpu_custom_call.1}
  #allocation0 [shape = 'u32[]', space=smem, size = 0x4, offset = 0x4, fixed_abs, tag = 'smem constant byte address 0x4 - core index']
  #allocation1 [shape = 'u32[72,128]{1,0:T(1,128)}', space=vmem, size = 0x9000, scoped, tag = 'internal scratch']
  #allocation2 [shape = 'f32[64,64]{1,0:T(8,128)}', space=vmem, size = 0x8000, scoped, tag = 'scratch operand']
  #allocation3 [shape = 's32[64]{0}', space=sflag, size = 0x100, scoped, tag = 'scratch operand']
  #allocation4 [shape = 's32[1]{0}', space=sflag, size = 0x4, scoped, tag = 'scoped memory for tpu_custom_call.1']
  #allocation5 [shape = 'u8[8192]{0}', space=smem, size = 0x2000, scoped, tag = 'prefetched SMEM operand 0']
  #allocation8 [shape = 's32[]', space=sflag, size = 0x4, offset = 0, fixed_abs, tag = 'sflag constant byte address 0x0 - dummy sync flag']
  #allocation9 [shape = 's32[]', space=sflag, size = 0x4, offset = 0, fixed_abs, tag = 'sflag constant byte address 0x0 - dummy sync flag']
  #allocation10 [shape = 's32[]', space=sflag, size = 0x4, offset = 0, fixed_abs, tag = 'sflag constant byte address 0x0 - dummy sync flag']
  #allocation11 [shape = 's32[]', space=sflag, size = 0x4, offset = 0, fixed_abs, tag = 'sflag constant byte address 0x0 - dummy sync flag']
  #allocation12 [shape = 's32[]', space=sflag, size = 0x4, offset = 0, fixed_abs, tag = 'sflag constant byte address 0x0 - dummy sync flag']
  #allocation13 [shape = 's32[]', space=sflag, size = 0x4, offset = 0, fixed_abs, tag = 'sflag constant byte address 0x0 - dummy sync flag']
  #allocation14 [shape = 's32[]', space=sflag, size = 0x4, offset = 0, fixed_abs, tag = 'sflag constant byte address 0x0 - dummy sync flag']
  #allocation15 [shape = 's32[]', space=sflag, size = 0x4, offset = 0, fixed_abs, tag = 'sflag constant byte address 0x0 - dummy sync flag']
  #allocation16 [shape = 's32[]', space=sflag, size = 0x4, offset = 0, fixed_abs, tag = 'sflag constant byte address 0x0 - dummy sync flag']
  #allocation17 [shape = 's32[]', space=sflag, size = 0x4, offset = 0, fixed_abs, tag = 'sflag constant byte address 0x0 - dummy sync flag']
  #allocation18 [shape = 's32[]', space=sflag, size = 0x4, offset = 0, fixed_abs, tag = 'sflag constant byte address 0x0 - dummy sync flag']
  #allocation19 [shape = 's32[]', space=sflag, size = 0x4, offset = 0, fixed_abs, tag = 'sflag constant byte address 0x0 - dummy sync flag']
  #allocation20 [shape = 's32[]', space=sflag, size = 0x4, offset = 0, fixed_abs, tag = 'sflag constant byte address 0x0 - dummy sync flag']
  #allocation21 [shape = 's32[]', space=sflag, size = 0x4, offset = 0, fixed_abs, tag = 'sflag constant byte address 0x0 - dummy sync flag']
  #allocation22 [shape = 's32[]', space=sflag, size = 0x4, offset = 0, fixed_abs, tag = 'sflag constant byte address 0x0 - dummy sync flag']
  #allocation23 [shape = 's32[]', space=sflag, size = 0x4, offset = 0, fixed_abs, tag = 'sflag constant byte address 0x0 - dummy sync flag']
  #allocation24 [shape = 's32[]', space=sflag, size = 0x4, offset = 0, fixed_abs, tag = 'sflag constant byte address 0x0 - dummy sync flag']
  #allocation25 [shape = 's32[]', space=sflag, size = 0x4, offset = 0, fixed_abs, tag = 'sflag constant byte address 0x0 - dummy sync flag']
  #allocation26 [shape = 's32[]', space=sflag, size = 0x4, offset = 0, fixed_abs, tag = 'sflag constant byte address 0x0 - dummy sync flag']
  #allocation27 [shape = 's32[]', space=sflag, size = 0x4, offset = 0, fixed_abs, tag = 'sflag constant byte address 0x0 - dummy sync flag']
  #allocation28 [shape = 's32[]', space=sflag, size = 0x4, offset = 0, fixed_abs, tag = 'sflag constant byte address 0x0 - dummy sync flag']
  #allocation29 [shape = 's32[]', space=sflag, size = 0x4, offset = 0, fixed_abs, tag = 'sflag constant byte address 0x0 - dummy sync flag']
  #allocation30 [shape = 's32[]', space=sflag, size = 0x4, offset = 0, fixed_abs, tag = 'sflag constant byte address 0x0 - dummy sync flag']
  #allocation31 [shape = 's32[]', space=sflag, size = 0x4, offset = 0, fixed_abs, tag = 'sflag constant byte address 0x0 - dummy sync flag']
  #allocation32 [shape = 's32[]', space=sflag, size = 0x4, offset = 0, fixed_abs, tag = 'sflag constant byte address 0x0 - dummy sync flag']
  #allocation33 [shape = 's32[]', space=sflag, size = 0x4, offset = 0, fixed_abs, tag = 'sflag constant byte address 0x0 - dummy sync flag']
  #allocation34 [shape = 's32[]', space=sflag, size = 0x4, offset = 0, fixed_abs, tag = 'sflag constant byte address 0x0 - dummy sync flag']
  #allocation35 [shape = 's32[]', space=sflag, size = 0x4, offset = 0, fixed_abs, tag = 'sflag constant byte address 0x0 - dummy sync flag']
  #allocation36 [shape = 's32[]', space=sflag, size = 0x4, offset = 0, fixed_abs, tag = 'sflag constant byte address 0x0 - dummy sync flag']
  #allocation37 [shape = 's32[]', space=sflag, size = 0x4, offset = 0, fixed_abs, tag = 'sflag constant byte address 0x0 - dummy sync flag']
  #allocation38 [shape = 's32[]', space=sflag, size = 0x4, offset = 0, fixed_abs, tag = 'sflag constant byte address 0x0 - dummy sync flag']
  #allocation39 [shape = 's32[]', space=sflag, size = 0x4, offset = 0, fixed_abs, tag = 'sflag constant byte address 0x0 - dummy sync flag']
  #allocation40 [shape = 's32[]', space=sflag, size = 0x4, offset = 0, fixed_abs, tag = 'sflag constant byte address 0x0 - dummy sync flag']
  #allocation41 [shape = 's32[]', space=sflag, size = 0x4, offset = 0, fixed_abs, tag = 'sflag constant byte address 0x0 - dummy sync flag']
  #allocation42 [shape = 's32[]', space=sflag, size = 0x4, offset = 0, fixed_abs, tag = 'sflag constant byte address 0x0 - dummy sync flag']
  #allocation43 [shape = 's32[]', space=sflag, size = 0x4, offset = 0, fixed_abs, tag = 'sflag constant byte address 0x0 - dummy sync flag']
  #allocation44 [shape = 's32[]', space=sflag, size = 0x4, offset = 0, fixed_abs, tag = 'sflag constant byte address 0x0 - dummy sync flag']
  #allocation45 [shape = 's32[]', space=sflag, size = 0x4, offset = 0, fixed_abs, tag = 'sflag constant byte address 0x0 - dummy sync flag']
  #allocation46 [shape = 's32[]', space=sflag, size = 0x4, offset = 0, fixed_abs, tag = 'sflag constant byte address 0x0 - dummy sync flag']
  #allocation47 [shape = 's32[]', space=sflag, size = 0x4, offset = 0, fixed_abs, tag = 'sflag constant byte address 0x0 - dummy sync flag']
  #allocation48 [shape = 's32[]', space=sflag, size = 0x4, offset = 0, fixed_abs, tag = 'sflag constant byte address 0x0 - dummy sync flag']
  #allocation49 [shape = 's32[]', space=sflag, size = 0x4, offset = 0, fixed_abs, tag = 'sflag constant byte address 0x0 - dummy sync flag']
  #allocation50 [shape = 's32[]', space=sflag, size = 0x4, offset = 0, fixed_abs, tag = 'sflag constant byte address 0x0 - dummy sync flag']
  #allocation51 [shape = 's32[]', space=sflag, size = 0x4, offset = 0, fixed_abs, tag = 'sflag constant byte address 0x0 - dummy sync flag']
  #allocation52 [shape = 's32[]', space=sflag, size = 0x4, offset = 0, fixed_abs, tag = 'sflag constant byte address 0x0 - dummy sync flag']
  #allocation53 [shape = 's32[]', space=sflag, size = 0x4, offset = 0, fixed_abs, tag = 'sflag constant byte address 0x0 - dummy sync flag']
  #allocation54 [shape = 's32[]', space=sflag, size = 0x4, offset = 0, fixed_abs, tag = 'sflag constant byte address 0x0 - dummy sync flag']
  #allocation55 [shape = 's32[]', space=sflag, size = 0x4, offset = 0, fixed_abs, tag = 'sflag constant byte address 0x0 - dummy sync flag']
  #allocation56 [shape = 's32[]', space=sflag, size = 0x4, offset = 0, fixed_abs, tag = 'sflag constant byte address 0x0 - dummy sync flag']
  #allocation57 [shape = 's32[]', space=sflag, size = 0x4, offset = 0, fixed_abs, tag = 'sflag constant byte address 0x0 - dummy sync flag']
  #allocation58 [shape = 's32[]', space=sflag, size = 0x4, offset = 0, fixed_abs, tag = 'sflag constant byte address 0x0 - dummy sync flag']
  #allocation59 [shape = 's32[]', space=sflag, size = 0x4, offset = 0, fixed_abs, tag = 'sflag constant byte address 0x0 - dummy sync flag']
  #allocation60 [shape = 's32[]', space=sflag, size = 0x4, offset = 0, fixed_abs, tag = 'sflag constant byte address 0x0 - dummy sync flag']
  #allocation61 [shape = 's32[]', space=sflag, size = 0x4, offset = 0, fixed_abs, tag = 'sflag constant byte address 0x0 - dummy sync flag']
  #allocation62 [shape = 's32[]', space=sflag, size = 0x4, offset = 0, fixed_abs, tag = 'sflag constant byte address 0x0 - dummy sync flag']
  #allocation63 [shape = 's32[]', space=sflag, size = 0x4, offset = 0, fixed_abs, tag = 'sflag constant byte address 0x0 - dummy sync flag']
  #allocation64 [shape = 's32[]', space=sflag, size = 0x4, offset = 0, fixed_abs, tag = 'sflag constant byte address 0x0 - dummy sync flag']
  #allocation65 [shape = 's32[]', space=sflag, size = 0x4, offset = 0, fixed_abs, tag = 'sflag constant byte address 0x0 - dummy sync flag']
  #allocation66 [shape = 's32[]', space=sflag, size = 0x4, offset = 0, fixed_abs, tag = 'sflag constant byte address 0x0 - dummy sync flag']
  #allocation67 [shape = 's32[]', space=sflag, size = 0x4, offset = 0, fixed_abs, tag = 'sflag constant byte address 0x0 - dummy sync flag']
  #allocation68 [shape = 's32[]', space=sflag, size = 0x4, offset = 0, fixed_abs, tag = 'sflag constant byte address 0x0 - dummy sync flag']
  #allocation69 [shape = 's32[]', space=sflag, size = 0x4, offset = 0, fixed_abs, tag = 'sflag constant byte address 0x0 - dummy sync flag']
  #allocation70 [shape = 's32[]', space=sflag, size = 0x4, offset = 0, fixed_abs, tag = 'sflag constant byte address 0x0 - dummy sync flag']
  #allocation71 [shape = 's32[]', space=sflag, size = 0x4, offset = 0, fixed_abs, tag = 'sflag constant byte address 0x0 - dummy sync flag']
  %s0 = inlined_call_operand.vmem [shape: s32[16,8], index: 0, kind: input, shape index: {}]
  %s1 = inlined_call_operand.vmem [shape: f32[512,64], index: 1, kind: input, shape index: {}]
  %s2 = inlined_call_operand.vmem [shape: bf16[64,128], index: 2, kind: input, shape index: {}]
  %s3 = inlined_call_operand.vmem [shape: f32[1,128], index: 3, kind: input, shape index: {}]
  %s4 = inlined_call_operand.vmem [shape: bf16[128,128], index: 4, kind: input, shape index: {}]
  %s5 = inlined_call_operand.vmem [shape: f32[1,128], index: 5, kind: input, shape index: {}]
  %s6 = inlined_call_operand.hbm [shape: f32[16,128], index: 6, kind: output, shape index: {}]
  %s7 = sld [smem:[#allocation0]]
  $region1969: #{tpu_custom_call.1} parent=0
    _
  %s9 = ssub.s32 1, %s7
  %s10 = scalar_select 0, %s9, %s7
  %s12 = sshll.u32 %s0, 4
  %s13 = int_to_ptr.vmem [resolvable:$true] %s12
  %15 = dma.vmem_to_smem %s13, 256, [#allocation5], [#allocation4]
  %17 = dma.done [#allocation4], 256
  %18 = sfence
  $region1: #{tpu_custom_call.1} parent=0
    #allocation6 [shape = 'u8[8192]{0}', space=vmem, size = 0x2000, scoped, tag = 'output window, operand 0']
    #allocation7 [shape = 's32[2]{0}', space=sflag, size = 0x8, scoped, tag = 'scoped memory for tpu_custom_call.1']
    %19 = vsyncpa [#allocation7], 0
    %s20 = scalar_lea.sflag [#allocation7], 1
    %21 = vsyncpa %s20, 0
    loop: start=0, step=1, limit=4
    $region2: #{tpu_custom_call.1} parent=1 // loop_pre_header
      _
    $region3: #{tpu_custom_call.1} parent=1 // loop_header
      %s23 = sphi 0, %s27
      %p24 = scmp.ge.s32.totalorder %s23, 4
      %s31 = sphi 0, %s31
      %s33 = sphi 0, %s31
      %s34 = sphi 0, %s33
      %s48 = sphi 0, %s34
      %s52 = sphi 0, %s52
      %s54 = sphi 0, %s52
      %s55 = sphi 0, %s54
      %s69 = sphi 0, %s55
      %s73 = sphi 0, %s73
      %s75 = sphi 0, %s73
      %s76 = sphi 0, %s75
      %s90 = sphi 0, %s76
      %s94 = sphi 0, %s94
      %s96 = sphi 0, %s94
      %s97 = sphi 0, %s96
      %s111 = sphi 0, %s97
      %s117 = sphi 0, %s119
      %s120 = sphi 0, %s117
      %s121 = sphi 0, %s120
      %s137 = sphi 0, %s121
    $region4: #{tpu_custom_call.1} parent=1 // loop_header_branch
      %26 = sbr.rel (%p24) target = $region8
    $region5: #{tpu_custom_call.1} parent=1 // loop_body
      %s28 = ssub.s32 %s23, 1
      %s29 = ssub.s32 %s23, 2
      %s30 = sadd.s32 %s23, 1
      %s32 = sadd.s32 %s31, 1
      %p35 = scmp.eq.s32.totalorder %s23, 1
      %p36 = scmp.ne.s32.totalorder %s31, %s33
      %p37 = scmp.eq.s32.totalorder %s23, 0
      %p38 = por %p36, %p37
      %p39 = scmp.ne.s32.totalorder %s31, %s33
      %p40 = scmp.eq.s32.totalorder %s28, 1
      %p41 = por %p39, %p40
      %p42 = scmp.ne.s32.totalorder %s33, %s34
      %p43 = scmp.eq.s32.totalorder %s28, 0
      %p44 = por %p42, %p43
      %p45 = scmp.ne.s32.totalorder %s33, %s34
      %p46 = scmp.eq.s32.totalorder %s29, 1
      %p47 = por %p45, %p46
      %p49 = scmp.ne.s32.totalorder %s34, %s48
      %p50 = scmp.eq.s32.totalorder %s29, 0
      %p51 = por %p49, %p50
      %s53 = sadd.s32 %s52, 1
      %p56 = scmp.eq.s32.totalorder %s23, 1
      %p57 = scmp.ne.s32.totalorder %s52, %s54
      %p58 = scmp.eq.s32.totalorder %s23, 0
      %p59 = por %p57, %p58
      %p60 = scmp.ne.s32.totalorder %s52, %s54
      %p61 = scmp.eq.s32.totalorder %s28, 1
      %p62 = por %p60, %p61
      %p63 = scmp.ne.s32.totalorder %s54, %s55
      %p64 = scmp.eq.s32.totalorder %s28, 0
      %p65 = por %p63, %p64
      %p66 = scmp.ne.s32.totalorder %s54, %s55
      %p67 = scmp.eq.s32.totalorder %s29, 1
      %p68 = por %p66, %p67
      %p70 = scmp.ne.s32.totalorder %s55, %s69
      %p71 = scmp.eq.s32.totalorder %s29, 0
      %p72 = por %p70, %p71
      %s74 = sadd.s32 %s73, 1
      %p77 = scmp.eq.s32.totalorder %s23, 1
      %p78 = scmp.ne.s32.totalorder %s73, %s75
      %p79 = scmp.eq.s32.totalorder %s23, 0
      %p80 = por %p78, %p79
      %p81 = scmp.ne.s32.totalorder %s73, %s75
      %p82 = scmp.eq.s32.totalorder %s28, 1
      %p83 = por %p81, %p82
      %p84 = scmp.ne.s32.totalorder %s75, %s76
      %p85 = scmp.eq.s32.totalorder %s28, 0
      %p86 = por %p84, %p85
      %p87 = scmp.ne.s32.totalorder %s75, %s76
      %p88 = scmp.eq.s32.totalorder %s29, 1
      %p89 = por %p87, %p88
      %p91 = scmp.ne.s32.totalorder %s76, %s90
      %p92 = scmp.eq.s32.totalorder %s29, 0
      %p93 = por %p91, %p92
      %s95 = sadd.s32 %s94, 1
      %p98 = scmp.eq.s32.totalorder %s23, 1
      %p99 = scmp.ne.s32.totalorder %s94, %s96
      %p100 = scmp.eq.s32.totalorder %s23, 0
      %p101 = por %p99, %p100
      %p102 = scmp.ne.s32.totalorder %s94, %s96
      %p103 = scmp.eq.s32.totalorder %s28, 1
      %p104 = por %p102, %p103
      %p105 = scmp.ne.s32.totalorder %s96, %s97
      %p106 = scmp.eq.s32.totalorder %s28, 0
      %p107 = por %p105, %p106
      %p108 = scmp.ne.s32.totalorder %s96, %s97
      %p109 = scmp.eq.s32.totalorder %s29, 1
      %p110 = por %p108, %p109
      %p112 = scmp.ne.s32.totalorder %s97, %s111
      %p113 = scmp.eq.s32.totalorder %s29, 0
      %p114 = por %p112, %p113
      %s115 = ssub.s32 %s23, %s30
      %p116 = scmp.eq.s32.totalorder %s115, 0
      %s118 = sadd.s32 %s117, 1
      %s119 = scalar_select %p116, %s117, %s118
      %p122 = pneg %p116
      %p123 = scmp.eq.s32.totalorder %s23, 1
      %p124 = por %p122, %p123
      %p125 = scmp.ne.s32.totalorder %s117, %s120
      %p126 = scmp.eq.s32.totalorder %s23, 0
      %p127 = por %p125, %p126
      %p128 = scmp.ne.s32.totalorder %s117, %s120
      %p129 = scmp.eq.s32.totalorder %s28, 1
      %p130 = por %p128, %p129
      %p131 = scmp.ne.s32.totalorder %s120, %s121
      %p132 = scmp.eq.s32.totalorder %s28, 0
      %p133 = por %p131, %p132
      %p134 = scmp.ne.s32.totalorder %s120, %s121
      %p135 = scmp.eq.s32.totalorder %s29, 1
      %p136 = por %p134, %p135
      %p138 = scmp.ne.s32.totalorder %s121, %s137
      %p139 = scmp.eq.s32.totalorder %s29, 0
      %p140 = por %p138, %p139
      %p141 = scmp.le.s32.totalorder 1, %s23
      %p142 = scmp.lt.s32.totalorder %s23, 3
      %p143 = pnand %p141, %p142
      %p144 = pneg %p143
      // Predicated region
      $region9: #{tpu_custom_call.1} parent=5 // pred_check
        _
      $region10: #{tpu_custom_call.1} parent=5 // pred_check_branch
        %146 = sbr.rel (%p143) target = $region12
      $region11: #{tpu_custom_call.1} parent=5 // pred_region
        %s147 = ssub.s32 %s23, 1
        // Predicated region
        $region13: #{tpu_custom_call.1} parent=11 // pred_check
          %p148 = pneg %p44
        $region14: #{tpu_custom_call.1} parent=11 // pred_check_branch
          %150 = sbr.rel (%p148) target = $region16
        $region15: #{tpu_custom_call.1} parent=11 // pred_region
          _
        $region16: #{tpu_custom_call.1} parent=11 // pred_fallthru
          _
        // Predicated region
        $region17: #{tpu_custom_call.1} parent=11 // pred_check
          %p151 = pneg %p65
        $region18: #{tpu_custom_call.1} parent=11 // pred_check_branch
          %153 = sbr.rel (%p151) target = $region20
        $region19: #{tpu_custom_call.1} parent=11 // pred_region
          _
        $region20: #{tpu_custom_call.1} parent=11 // pred_fallthru
          _
        // Predicated region
        $region21: #{tpu_custom_call.1} parent=11 // pred_check
          %p154 = pneg %p86
        $region22: #{tpu_custom_call.1} parent=11 // pred_check_branch
          %156 = sbr.rel (%p154) target = $region24
        $region23: #{tpu_custom_call.1} parent=11 // pred_region
          _
        $region24: #{tpu_custom_call.1} parent=11 // pred_fallthru
          _
        // Predicated region
        $region25: #{tpu_custom_call.1} parent=11 // pred_check
          %p157 = pneg %p107
        $region26: #{tpu_custom_call.1} parent=11 // pred_check_branch
          %159 = sbr.rel (%p157) target = $region28
        $region27: #{tpu_custom_call.1} parent=11 // pred_region
          _
        $region28: #{tpu_custom_call.1} parent=11 // pred_fallthru
          _
      $region12: #{tpu_custom_call.1} parent=5 // pred_fallthru
        _
      %p160 = scmp.lt.s32.totalorder %s23, 2
      // Predicated region
      $region29: #{tpu_custom_call.1} parent=5 // pred_check
        %p161 = pneg %p160
      $region30: #{tpu_custom_call.1} parent=5 // pred_check_branch
        %163 = sbr.rel (%p161) target = $region32
      $region31: #{tpu_custom_call.1} parent=5 // pred_region
        _
      $region32: #{tpu_custom_call.1} parent=5 // pred_fallthru
        _
      %p164 = scmp.le.s32.totalorder 1, %s23
      %p165 = scmp.lt.s32.totalorder %s23, 3
      %p166 = pnand %p164, %p165
      %p167 = pneg %p166
      // Predicated region
      $region33: #{tpu_custom_call.1} parent=5 // pred_check
        _
      $region34: #{tpu_custom_call.1} parent=5 // pred_check_branch
        %169 = sbr.rel (%p166) target = $region36
      $region35: #{tpu_custom_call.1} parent=5 // pred_region
        %s170 = ssub.s32 %s23, 1
        %p171 = pneg %p44
        %p172 = pneg %p41
        %p173 = pneg %p65
        %p174 = pneg %p62
        %p175 = pneg %p86
        %p176 = pneg %p83
        %p177 = pneg %p107
        %p178 = pneg %p104
        %p179 = pneg %p133
        %p180 = pneg %p130
        %s181 = sand.u32 %s120, 1
        %s182 = scalar_lea.sflag [#allocation7], %s181
        %s183 = sand.u32 %s120, 1
        %s184 = smul.addr %s183, 8
        %s185 = scalar_lea.vmem [#allocation6], %s184
        %s187 = smul.u32 %s28, 8
        %s188 = smul.u32 %s187, 128
        %s189 = sld [smem:[#allocation5 + %s188]]
        %s190 = scalar_lea.vmem %s1, %s189
        // Predicated region
        $region37: #{tpu_custom_call.1} parent=35 // pred_check
          _
        $region38: #{tpu_custom_call.1} parent=35 // pred_check_branch
          %192 = sbr.rel target = $region40
        $region39: #{tpu_custom_call.1} parent=35 // pred_region
          // Predicated region
          $region52: #{tpu_custom_call.1} parent=39 // pred_check
            _
          $region53: #{tpu_custom_call.1} parent=39 // pred_check_branch
            %208 = sbr.rel (0) target = $region55
          $region54: #{tpu_custom_call.1} parent=39 // pred_region
            %s210 = ssub.s32 2, 1
            loop: start=0, step=1, limit=1
            $region56: #{tpu_custom_call.1} parent=54 // loop_pre_header
              _
            $region57: #{tpu_custom_call.1} parent=54 // loop_header
              %s212 = sphi 0, %s216
              %p213 = scmp.ge.s32.totalorder %s212, 1
              %s217 = sphi %s190, %s190
              %s218 = sphi [#allocation2], [#allocation2]
            $region58: #{tpu_custom_call.1} parent=54 // loop_header_branch
              %215 = sbr.rel (%p213) target = $region62
            $region59: #{tpu_custom_call.1} parent=54 // loop_body
              %v219 = vld [vmem:[%s217] sm:%s210]
              %220 = vst [vmem:[%s218] sm:%s210] %v219
            $region60: #{tpu_custom_call.1} parent=54 // loop_footer
              %s216 = sadd.s32 1, %s212
            $region61: #{tpu_custom_call.1} parent=54 // loop_footer_branch
              %211 = sbr.rel target = $region57
            $region62: #{tpu_custom_call.1} parent=54 // loop_exit
              _
          $region55: #{tpu_custom_call.1} parent=39 // pred_fallthru
            _
        $region40: #{tpu_custom_call.1} parent=35 // pred_fallthru
          _
        // Predicated region
        $region41: #{tpu_custom_call.1} parent=35 // pred_check
          _
        $region42: #{tpu_custom_call.1} parent=35 // pred_check_branch
          %194 = sbr.rel (0) target = $region44
        $region43: #{tpu_custom_call.1} parent=35 // pred_region
          %s196 = ssub.s32 2, 1
          loop: start=0, step=1, limit=1
          $region45: #{tpu_custom_call.1} parent=43 // loop_pre_header
            _
          $region46: #{tpu_custom_call.1} parent=43 // loop_header
            %s198 = sphi 0, %s202
            %p199 = scmp.ge.s32.totalorder %s198, 1
            %s203 = sphi %s190, %s190
            %s204 = sphi [#allocation2], [#allocation2]
          $region47: #{tpu_custom_call.1} parent=43 // loop_header_branch
            %201 = sbr.rel (%p199) target = $region51
          $region48: #{tpu_custom_call.1} parent=43 // loop_body
            %v205 = vld [vmem:[%s203] sm:%s196]
            %206 = vst [vmem:[%s204] sm:%s196] %v205
          $region49: #{tpu_custom_call.1} parent=43 // loop_footer
            %s202 = sadd.s32 1, %s198
          $region50: #{tpu_custom_call.1} parent=43 // loop_footer_branch
            %197 = sbr.rel target = $region46
          $region51: #{tpu_custom_call.1} parent=43 // loop_exit
            _
        $region44: #{tpu_custom_call.1} parent=35 // pred_fallthru
          _
        // Predicated region
        $region63: #{tpu_custom_call.1} parent=35 // pred_check
          _
        $region64: #{tpu_custom_call.1} parent=35 // pred_check_branch
          %223 = sbr.rel (0) target = $region66
        $region65: #{tpu_custom_call.1} parent=35 // pred_region
          %224 = vsyncadd [#allocation3], 16
        $region66: #{tpu_custom_call.1} parent=35 // pred_fallthru
          _
        %s225 = sadd.s32 %s187, 1
        %s226 = smul.u32 %s225, 128
        %s227 = sld [smem:[#allocation5 + %s226]]
        %s228 = scalar_lea.vmem %s1, %s227
        %s229 = scalar_lea.vmem [#allocation2], 1
        %s230 = scalar_lea.sflag [#allocation3], 1
        // Predicated region
        $region67: #{tpu_custom_call.1} parent=35 // pred_check
          _
        $region68: #{tpu_custom_call.1} parent=35 // pred_check_branch
          %232 = sbr.rel target = $region70
        $region69: #{tpu_custom_call.1} parent=35 // pred_region
          // Predicated region
          $region82: #{tpu_custom_call.1} parent=69 // pred_check
            _
          $region83: #{tpu_custom_call.1} parent=69 // pred_check_branch
            %248 = sbr.rel (0) target = $region85
          $region84: #{tpu_custom_call.1} parent=69 // pred_region
            %s250 = ssub.s32 2, 1
            loop: start=0, step=1, limit=1
            $region86: #{tpu_custom_call.1} parent=84 // loop_pre_header
              _
            $region87: #{tpu_custom_call.1} parent=84 // loop_header
              %s252 = sphi 0, %s256
              %p253 = scmp.ge.s32.totalorder %s252, 1
              %s257 = sphi %s228, %s228
              %s258 = sphi %s229, %s229
            $region88: #{tpu_custom_call.1} parent=84 // loop_header_branch
              %255 = sbr.rel (%p253) target = $region92
            $region89: #{tpu_custom_call.1} parent=84 // loop_body
              %v259 = vld [vmem:[%s257] sm:%s250]
              %260 = vst [vmem:[%s258] sm:%s250] %v259
            $region90: #{tpu_custom_call.1} parent=84 // loop_footer
              %s256 = sadd.s32 1, %s252
            $region91: #{tpu_custom_call.1} parent=84 // loop_footer_branch
              %251 = sbr.rel target = $region87
            $region92: #{tpu_custom_call.1} parent=84 // loop_exit
              _
          $region85: #{tpu_custom_call.1} parent=69 // pred_fallthru
            _
        $region70: #{tpu_custom_call.1} parent=35 // pred_fallthru
          _
        // Predicated region
        $region71: #{tpu_custom_call.1} parent=35 // pred_check
          _
        $region72: #{tpu_custom_call.1} parent=35 // pred_check_branch
          %234 = sbr.rel (0) target = $region74
        $region73: #{tpu_custom_call.1} parent=35 // pred_region
          %s236 = ssub.s32 2, 1
          loop: start=0, step=1, limit=1
          $region75: #{tpu_custom_call.1} parent=73 // loop_pre_header
            _
          $region76: #{tpu_custom_call.1} parent=73 // loop_header
            %s238 = sphi 0, %s242
            %p239 = scmp.ge.s32.totalorder %s238, 1
            %s243 = sphi %s228, %s228
            %s244 = sphi %s229, %s229
          $region77: #{tpu_custom_call.1} parent=73 // loop_header_branch
            %241 = sbr.rel (%p239) target = $region81
          $region78: #{tpu_custom_call.1} parent=73 // loop_body
            %v245 = vld [vmem:[%s243] sm:%s236]
            %246 = vst [vmem:[%s244] sm:%s236] %v245
          $region79: #{tpu_custom_call.1} parent=73 // loop_footer
            %s242 = sadd.s32 1, %s238
          $region80: #{tpu_custom_call.1} parent=73 // loop_footer_branch
            %237 = sbr.rel target = $region76
          $region81: #{tpu_custom_call.1} parent=73 // loop_exit
            _
        $region74: #{tpu_custom_call.1} parent=35 // pred_fallthru
          _
        // Predicated region
        $region93: #{tpu_custom_call.1} parent=35 // pred_check
          _
        $region94: #{tpu_custom_call.1} parent=35 // pred_check_branch
          %263 = sbr.rel (0) target = $region96
        $region95: #{tpu_custom_call.1} parent=35 // pred_region
          %264 = vsyncadd %s230, 16
        $region96: #{tpu_custom_call.1} parent=35 // pred_fallthru
          _
        %s265 = sadd.s32 %s187, 2
        %s266 = smul.u32 %s265, 128
        %s267 = sld [smem:[#allocation5 + %s266]]
        %s268 = scalar_lea.vmem %s1, %s267
        %s269 = scalar_lea.vmem [#allocation2], 2
        %s270 = scalar_lea.sflag [#allocation3], 2
        // Predicated region
        $region97: #{tpu_custom_call.1} parent=35 // pred_check
          _
        $region98: #{tpu_custom_call.1} parent=35 // pred_check_branch
          %272 = sbr.rel target = $region100
        $region99: #{tpu_custom_call.1} parent=35 // pred_region
          // Predicated region
          $region112: #{tpu_custom_call.1} parent=99 // pred_check
            _
          $region113: #{tpu_custom_call.1} parent=99 // pred_check_branch
            %288 = sbr.rel (0) target = $region115
          $region114: #{tpu_custom_call.1} parent=99 // pred_region
            %s290 = ssub.s32 2, 1
            loop: start=0, step=1, limit=1
            $region116: #{tpu_custom_call.1} parent=114 // loop_pre_header
              _
            $region117: #{tpu_custom_call.1} parent=114 // loop_header
              %s292 = sphi 0, %s296
              %p293 = scmp.ge.s32.totalorder %s292, 1
              %s297 = sphi %s268, %s268
              %s298 = sphi %s269, %s269
            $region118: #{tpu_custom_call.1} parent=114 // loop_header_branch
              %295 = sbr.rel (%p293) target = $region122
            $region119: #{tpu_custom_call.1} parent=114 // loop_body
              %v299 = vld [vmem:[%s297] sm:%s290]
              %300 = vst [vmem:[%s298] sm:%s290] %v299
            $region120: #{tpu_custom_call.1} parent=114 // loop_footer
              %s296 = sadd.s32 1, %s292
            $region121: #{tpu_custom_call.1} parent=114 // loop_footer_branch
              %291 = sbr.rel target = $region117
            $region122: #{tpu_custom_call.1} parent=114 // loop_exit
              _
          $region115: #{tpu_custom_call.1} parent=99 // pred_fallthru
            _
        $region100: #{tpu_custom_call.1} parent=35 // pred_fallthru
          _
        // Predicated region
        $region101: #{tpu_custom_call.1} parent=35 // pred_check
          _
        $region102: #{tpu_custom_call.1} parent=35 // pred_check_branch
          %274 = sbr.rel (0) target = $region104
        $region103: #{tpu_custom_call.1} parent=35 // pred_region
          %s276 = ssub.s32 2, 1
          loop: start=0, step=1, limit=1
          $region105: #{tpu_custom_call.1} parent=103 // loop_pre_header
            _
          $region106: #{tpu_custom_call.1} parent=103 // loop_header
            %s278 = sphi 0, %s282
            %p279 = scmp.ge.s32.totalorder %s278, 1
            %s283 = sphi %s268, %s268
            %s284 = sphi %s269, %s269
          $region107: #{tpu_custom_call.1} parent=103 // loop_header_branch
            %281 = sbr.rel (%p279) target = $region111
          $region108: #{tpu_custom_call.1} parent=103 // loop_body
            %v285 = vld [vmem:[%s283] sm:%s276]
            %286 = vst [vmem:[%s284] sm:%s276] %v285
          $region109: #{tpu_custom_call.1} parent=103 // loop_footer
            %s282 = sadd.s32 1, %s278
          $region110: #{tpu_custom_call.1} parent=103 // loop_footer_branch
            %277 = sbr.rel target = $region106
          $region111: #{tpu_custom_call.1} parent=103 // loop_exit
            _
        $region104: #{tpu_custom_call.1} parent=35 // pred_fallthru
          _
        // Predicated region
        $region123: #{tpu_custom_call.1} parent=35 // pred_check
          _
        $region124: #{tpu_custom_call.1} parent=35 // pred_check_branch
          %303 = sbr.rel (0) target = $region126
        $region125: #{tpu_custom_call.1} parent=35 // pred_region
          %304 = vsyncadd %s270, 16
        $region126: #{tpu_custom_call.1} parent=35 // pred_fallthru
          _
        %s305 = sadd.s32 %s187, 3
        %s306 = smul.u32 %s305, 128
        %s307 = sld [smem:[#allocation5 + %s306]]
        %s308 = scalar_lea.vmem %s1, %s307
        %s309 = scalar_lea.vmem [#allocation2], 3
        %s310 = scalar_lea.sflag [#allocation3], 3
        // Predicated region
        $region127: #{tpu_custom_call.1} parent=35 // pred_check
          _
        $region128: #{tpu_custom_call.1} parent=35 // pred_check_branch
          %312 = sbr.rel target = $region130
        $region129: #{tpu_custom_call.1} parent=35 // pred_region
          // Predicated region
          $region142: #{tpu_custom_call.1} parent=129 // pred_check
            _
          $region143: #{tpu_custom_call.1} parent=129 // pred_check_branch
            %328 = sbr.rel (0) target = $region145
          $region144: #{tpu_custom_call.1} parent=129 // pred_region
            %s330 = ssub.s32 2, 1
            loop: start=0, step=1, limit=1
            $region146: #{tpu_custom_call.1} parent=144 // loop_pre_header
              _
            $region147: #{tpu_custom_call.1} parent=144 // loop_header
              %s332 = sphi 0, %s336
              %p333 = scmp.ge.s32.totalorder %s332, 1
              %s337 = sphi %s308, %s308
              %s338 = sphi %s309, %s309
            $region148: #{tpu_custom_call.1} parent=144 // loop_header_branch
              %335 = sbr.rel (%p333) target = $region152
            $region149: #{tpu_custom_call.1} parent=144 // loop_body
              %v339 = vld [vmem:[%s337] sm:%s330]
              %340 = vst [vmem:[%s338] sm:%s330] %v339
            $region150: #{tpu_custom_call.1} parent=144 // loop_footer
              %s336 = sadd.s32 1, %s332
            $region151: #{tpu_custom_call.1} parent=144 // loop_footer_branch
              %331 = sbr.rel target = $region147
            $region152: #{tpu_custom_call.1} parent=144 // loop_exit
              _
          $region145: #{tpu_custom_call.1} parent=129 // pred_fallthru
            _
        $region130: #{tpu_custom_call.1} parent=35 // pred_fallthru
          _
        // Predicated region
        $region131: #{tpu_custom_call.1} parent=35 // pred_check
          _
        $region132: #{tpu_custom_call.1} parent=35 // pred_check_branch
          %314 = sbr.rel (0) target = $region134
        $region133: #{tpu_custom_call.1} parent=35 // pred_region
          %s316 = ssub.s32 2, 1
          loop: start=0, step=1, limit=1
          $region135: #{tpu_custom_call.1} parent=133 // loop_pre_header
            _
          $region136: #{tpu_custom_call.1} parent=133 // loop_header
            %s318 = sphi 0, %s322
            %p319 = scmp.ge.s32.totalorder %s318, 1
            %s323 = sphi %s308, %s308
            %s324 = sphi %s309, %s309
          $region137: #{tpu_custom_call.1} parent=133 // loop_header_branch
            %321 = sbr.rel (%p319) target = $region141
          $region138: #{tpu_custom_call.1} parent=133 // loop_body
            %v325 = vld [vmem:[%s323] sm:%s316]
            %326 = vst [vmem:[%s324] sm:%s316] %v325
          $region139: #{tpu_custom_call.1} parent=133 // loop_footer
            %s322 = sadd.s32 1, %s318
          $region140: #{tpu_custom_call.1} parent=133 // loop_footer_branch
            %317 = sbr.rel target = $region136
          $region141: #{tpu_custom_call.1} parent=133 // loop_exit
            _
        $region134: #{tpu_custom_call.1} parent=35 // pred_fallthru
          _
        // Predicated region
        $region153: #{tpu_custom_call.1} parent=35 // pred_check
          _
        $region154: #{tpu_custom_call.1} parent=35 // pred_check_branch
          %343 = sbr.rel (0) target = $region156
        $region155: #{tpu_custom_call.1} parent=35 // pred_region
          %344 = vsyncadd %s310, 16
        $region156: #{tpu_custom_call.1} parent=35 // pred_fallthru
          _
        %s345 = sadd.s32 %s187, 4
        %s346 = smul.u32 %s345, 128
        %s347 = sld [smem:[#allocation5 + %s346]]
        %s348 = scalar_lea.vmem %s1, %s347
        %s349 = scalar_lea.vmem [#allocation2], 4
        %s350 = scalar_lea.sflag [#allocation3], 4
        // Predicated region
        $region157: #{tpu_custom_call.1} parent=35 // pred_check
          _
        $region158: #{tpu_custom_call.1} parent=35 // pred_check_branch
          %352 = sbr.rel target = $region160
        $region159: #{tpu_custom_call.1} parent=35 // pred_region
          // Predicated region
          $region172: #{tpu_custom_call.1} parent=159 // pred_check
            _
          $region173: #{tpu_custom_call.1} parent=159 // pred_check_branch
            %368 = sbr.rel (0) target = $region175
          $region174: #{tpu_custom_call.1} parent=159 // pred_region
            %s370 = ssub.s32 2, 1
            loop: start=0, step=1, limit=1
            $region176: #{tpu_custom_call.1} parent=174 // loop_pre_header
              _
            $region177: #{tpu_custom_call.1} parent=174 // loop_header
              %s372 = sphi 0, %s376
              %p373 = scmp.ge.s32.totalorder %s372, 1
              %s377 = sphi %s348, %s348
              %s378 = sphi %s349, %s349
            $region178: #{tpu_custom_call.1} parent=174 // loop_header_branch
              %375 = sbr.rel (%p373) target = $region182
            $region179: #{tpu_custom_call.1} parent=174 // loop_body
              %v379 = vld [vmem:[%s377] sm:%s370]
              %380 = vst [vmem:[%s378] sm:%s370] %v379
            $region180: #{tpu_custom_call.1} parent=174 // loop_footer
              %s376 = sadd.s32 1, %s372
            $region181: #{tpu_custom_call.1} parent=174 // loop_footer_branch
              %371 = sbr.rel target = $region177
            $region182: #{tpu_custom_call.1} parent=174 // loop_exit
              _
          $region175: #{tpu_custom_call.1} parent=159 // pred_fallthru
            _
        $region160: #{tpu_custom_call.1} parent=35 // pred_fallthru
          _
        // Predicated region
        $region161: #{tpu_custom_call.1} parent=35 // pred_check
          _
        $region162: #{tpu_custom_call.1} parent=35 // pred_check_branch
          %354 = sbr.rel (0) target = $region164
        $region163: #{tpu_custom_call.1} parent=35 // pred_region
          %s356 = ssub.s32 2, 1
          loop: start=0, step=1, limit=1
          $region165: #{tpu_custom_call.1} parent=163 // loop_pre_header
            _
          $region166: #{tpu_custom_call.1} parent=163 // loop_header
            %s358 = sphi 0, %s362
            %p359 = scmp.ge.s32.totalorder %s358, 1
            %s363 = sphi %s348, %s348
            %s364 = sphi %s349, %s349
          $region167: #{tpu_custom_call.1} parent=163 // loop_header_branch
            %361 = sbr.rel (%p359) target = $region171
          $region168: #{tpu_custom_call.1} parent=163 // loop_body
            %v365 = vld [vmem:[%s363] sm:%s356]
            %366 = vst [vmem:[%s364] sm:%s356] %v365
          $region169: #{tpu_custom_call.1} parent=163 // loop_footer
            %s362 = sadd.s32 1, %s358
          $region170: #{tpu_custom_call.1} parent=163 // loop_footer_branch
            %357 = sbr.rel target = $region166
          $region171: #{tpu_custom_call.1} parent=163 // loop_exit
            _
        $region164: #{tpu_custom_call.1} parent=35 // pred_fallthru
          _
        // Predicated region
        $region183: #{tpu_custom_call.1} parent=35 // pred_check
          _
        $region184: #{tpu_custom_call.1} parent=35 // pred_check_branch
          %383 = sbr.rel (0) target = $region186
        $region185: #{tpu_custom_call.1} parent=35 // pred_region
          %384 = vsyncadd %s350, 16
        $region186: #{tpu_custom_call.1} parent=35 // pred_fallthru
          _
        %s385 = sadd.s32 %s187, 5
        %s386 = smul.u32 %s385, 128
        %s387 = sld [smem:[#allocation5 + %s386]]
        %s388 = scalar_lea.vmem %s1, %s387
        %s389 = scalar_lea.vmem [#allocation2], 5
        %s390 = scalar_lea.sflag [#allocation3], 5
        // Predicated region
        $region187: #{tpu_custom_call.1} parent=35 // pred_check
          _
        $region188: #{tpu_custom_call.1} parent=35 // pred_check_branch
          %392 = sbr.rel target = $region190
        $region189: #{tpu_custom_call.1} parent=35 // pred_region
          // Predicated region
          $region202: #{tpu_custom_call.1} parent=189 // pred_check
            _
          $region203: #{tpu_custom_call.1} parent=189 // pred_check_branch
            %408 = sbr.rel (0) target = $region205
          $region204: #{tpu_custom_call.1} parent=189 // pred_region
            %s410 = ssub.s32 2, 1
            loop: start=0, step=1, limit=1
            $region206: #{tpu_custom_call.1} parent=204 // loop_pre_header
              _
            $region207: #{tpu_custom_call.1} parent=204 // loop_header
              %s412 = sphi 0, %s416
              %p413 = scmp.ge.s32.totalorder %s412, 1
              %s417 = sphi %s388, %s388
              %s418 = sphi %s389, %s389
            $region208: #{tpu_custom_call.1} parent=204 // loop_header_branch
              %415 = sbr.rel (%p413) target = $region212
            $region209: #{tpu_custom_call.1} parent=204 // loop_body
              %v419 = vld [vmem:[%s417] sm:%s410]
              %420 = vst [vmem:[%s418] sm:%s410] %v419
            $region210: #{tpu_custom_call.1} parent=204 // loop_footer
              %s416 = sadd.s32 1, %s412
            $region211: #{tpu_custom_call.1} parent=204 // loop_footer_branch
              %411 = sbr.rel target = $region207
            $region212: #{tpu_custom_call.1} parent=204 // loop_exit
              _
          $region205: #{tpu_custom_call.1} parent=189 // pred_fallthru
            _
        $region190: #{tpu_custom_call.1} parent=35 // pred_fallthru
          _
        // Predicated region
        $region191: #{tpu_custom_call.1} parent=35 // pred_check
          _
        $region192: #{tpu_custom_call.1} parent=35 // pred_check_branch
          %394 = sbr.rel (0) target = $region194
        $region193: #{tpu_custom_call.1} parent=35 // pred_region
          %s396 = ssub.s32 2, 1
          loop: start=0, step=1, limit=1
          $region195: #{tpu_custom_call.1} parent=193 // loop_pre_header
            _
          $region196: #{tpu_custom_call.1} parent=193 // loop_header
            %s398 = sphi 0, %s402
            %p399 = scmp.ge.s32.totalorder %s398, 1
            %s403 = sphi %s388, %s388
            %s404 = sphi %s389, %s389
          $region197: #{tpu_custom_call.1} parent=193 // loop_header_branch
            %401 = sbr.rel (%p399) target = $region201
          $region198: #{tpu_custom_call.1} parent=193 // loop_body
            %v405 = vld [vmem:[%s403] sm:%s396]
            %406 = vst [vmem:[%s404] sm:%s396] %v405
          $region199: #{tpu_custom_call.1} parent=193 // loop_footer
            %s402 = sadd.s32 1, %s398
          $region200: #{tpu_custom_call.1} parent=193 // loop_footer_branch
            %397 = sbr.rel target = $region196
          $region201: #{tpu_custom_call.1} parent=193 // loop_exit
            _
        $region194: #{tpu_custom_call.1} parent=35 // pred_fallthru
          _
        // Predicated region
        $region213: #{tpu_custom_call.1} parent=35 // pred_check
          _
        $region214: #{tpu_custom_call.1} parent=35 // pred_check_branch
          %423 = sbr.rel (0) target = $region216
        $region215: #{tpu_custom_call.1} parent=35 // pred_region
          %424 = vsyncadd %s390, 16
        $region216: #{tpu_custom_call.1} parent=35 // pred_fallthru
          _
        %s425 = sadd.s32 %s187, 6
        %s426 = smul.u32 %s425, 128
        %s427 = sld [smem:[#allocation5 + %s426]]
        %s428 = scalar_lea.vmem %s1, %s427
        %s429 = scalar_lea.vmem [#allocation2], 6
        %s430 = scalar_lea.sflag [#allocation3], 6
        // Predicated region
        $region217: #{tpu_custom_call.1} parent=35 // pred_check
          _
        $region218: #{tpu_custom_call.1} parent=35 // pred_check_branch
          %432 = sbr.rel target = $region220
        $region219: #{tpu_custom_call.1} parent=35 // pred_region
          // Predicated region
          $region232: #{tpu_custom_call.1} parent=219 // pred_check
            _
          $region233: #{tpu_custom_call.1} parent=219 // pred_check_branch
            %448 = sbr.rel (0) target = $region235
          $region234: #{tpu_custom_call.1} parent=219 // pred_region
            %s450 = ssub.s32 2, 1
            loop: start=0, step=1, limit=1
            $region236: #{tpu_custom_call.1} parent=234 // loop_pre_header
              _
            $region237: #{tpu_custom_call.1} parent=234 // loop_header
              %s452 = sphi 0, %s456
              %p453 = scmp.ge.s32.totalorder %s452, 1
              %s457 = sphi %s428, %s428
              %s458 = sphi %s429, %s429
            $region238: #{tpu_custom_call.1} parent=234 // loop_header_branch
              %455 = sbr.rel (%p453) target = $region242
            $region239: #{tpu_custom_call.1} parent=234 // loop_body
              %v459 = vld [vmem:[%s457] sm:%s450]
              %460 = vst [vmem:[%s458] sm:%s450] %v459
            $region240: #{tpu_custom_call.1} parent=234 // loop_footer
              %s456 = sadd.s32 1, %s452
            $region241: #{tpu_custom_call.1} parent=234 // loop_footer_branch
              %451 = sbr.rel target = $region237
            $region242: #{tpu_custom_call.1} parent=234 // loop_exit
              _
          $region235: #{tpu_custom_call.1} parent=219 // pred_fallthru
            _
        $region220: #{tpu_custom_call.1} parent=35 // pred_fallthru
          _
        // Predicated region
        $region221: #{tpu_custom_call.1} parent=35 // pred_check
          _
        $region222: #{tpu_custom_call.1} parent=35 // pred_check_branch
          %434 = sbr.rel (0) target = $region224
        $region223: #{tpu_custom_call.1} parent=35 // pred_region
          %s436 = ssub.s32 2, 1
          loop: start=0, step=1, limit=1
          $region225: #{tpu_custom_call.1} parent=223 // loop_pre_header
            _
          $region226: #{tpu_custom_call.1} parent=223 // loop_header
            %s438 = sphi 0, %s442
            %p439 = scmp.ge.s32.totalorder %s438, 1
            %s443 = sphi %s428, %s428
            %s444 = sphi %s429, %s429
          $region227: #{tpu_custom_call.1} parent=223 // loop_header_branch
            %441 = sbr.rel (%p439) target = $region231
          $region228: #{tpu_custom_call.1} parent=223 // loop_body
            %v445 = vld [vmem:[%s443] sm:%s436]
            %446 = vst [vmem:[%s444] sm:%s436] %v445
          $region229: #{tpu_custom_call.1} parent=223 // loop_footer
            %s442 = sadd.s32 1, %s438
          $region230: #{tpu_custom_call.1} parent=223 // loop_footer_branch
            %437 = sbr.rel target = $region226
          $region231: #{tpu_custom_call.1} parent=223 // loop_exit
            _
        $region224: #{tpu_custom_call.1} parent=35 // pred_fallthru
          _
        // Predicated region
        $region243: #{tpu_custom_call.1} parent=35 // pred_check
          _
        $region244: #{tpu_custom_call.1} parent=35 // pred_check_branch
          %463 = sbr.rel (0) target = $region246
        $region245: #{tpu_custom_call.1} parent=35 // pred_region
          %464 = vsyncadd %s430, 16
        $region246: #{tpu_custom_call.1} parent=35 // pred_fallthru
          _
        %s465 = sadd.s32 %s187, 7
        %s466 = smul.u32 %s465, 128
        %s467 = sld [smem:[#allocation5 + %s466]]
        %s468 = scalar_lea.vmem %s1, %s467
        %s469 = scalar_lea.vmem [#allocation2], 7
        %s470 = scalar_lea.sflag [#allocation3], 7
        // Predicated region
        $region247: #{tpu_custom_call.1} parent=35 // pred_check
          _
        $region248: #{tpu_custom_call.1} parent=35 // pred_check_branch
          %472 = sbr.rel target = $region250
        $region249: #{tpu_custom_call.1} parent=35 // pred_region
          // Predicated region
          $region262: #{tpu_custom_call.1} parent=249 // pred_check
            _
          $region263: #{tpu_custom_call.1} parent=249 // pred_check_branch
            %488 = sbr.rel (0) target = $region265
          $region264: #{tpu_custom_call.1} parent=249 // pred_region
            %s490 = ssub.s32 2, 1
            loop: start=0, step=1, limit=1
            $region266: #{tpu_custom_call.1} parent=264 // loop_pre_header
              _
            $region267: #{tpu_custom_call.1} parent=264 // loop_header
              %s492 = sphi 0, %s496
              %p493 = scmp.ge.s32.totalorder %s492, 1
              %s497 = sphi %s468, %s468
              %s498 = sphi %s469, %s469
            $region268: #{tpu_custom_call.1} parent=264 // loop_header_branch
              %495 = sbr.rel (%p493) target = $region272
            $region269: #{tpu_custom_call.1} parent=264 // loop_body
              %v499 = vld [vmem:[%s497] sm:%s490]
              %500 = vst [vmem:[%s498] sm:%s490] %v499
            $region270: #{tpu_custom_call.1} parent=264 // loop_footer
              %s496 = sadd.s32 1, %s492
            $region271: #{tpu_custom_call.1} parent=264 // loop_footer_branch
              %491 = sbr.rel target = $region267
            $region272: #{tpu_custom_call.1} parent=264 // loop_exit
              _
          $region265: #{tpu_custom_call.1} parent=249 // pred_fallthru
            _
        $region250: #{tpu_custom_call.1} parent=35 // pred_fallthru
          _
        // Predicated region
        $region251: #{tpu_custom_call.1} parent=35 // pred_check
          _
        $region252: #{tpu_custom_call.1} parent=35 // pred_check_branch
          %474 = sbr.rel (0) target = $region254
        $region253: #{tpu_custom_call.1} parent=35 // pred_region
          %s476 = ssub.s32 2, 1
          loop: start=0, step=1, limit=1
          $region255: #{tpu_custom_call.1} parent=253 // loop_pre_header
            _
          $region256: #{tpu_custom_call.1} parent=253 // loop_header
            %s478 = sphi 0, %s482
            %p479 = scmp.ge.s32.totalorder %s478, 1
            %s483 = sphi %s468, %s468
            %s484 = sphi %s469, %s469
          $region257: #{tpu_custom_call.1} parent=253 // loop_header_branch
            %481 = sbr.rel (%p479) target = $region261
          $region258: #{tpu_custom_call.1} parent=253 // loop_body
            %v485 = vld [vmem:[%s483] sm:%s476]
            %486 = vst [vmem:[%s484] sm:%s476] %v485
          $region259: #{tpu_custom_call.1} parent=253 // loop_footer
            %s482 = sadd.s32 1, %s478
          $region260: #{tpu_custom_call.1} parent=253 // loop_footer_branch
            %477 = sbr.rel target = $region256
          $region261: #{tpu_custom_call.1} parent=253 // loop_exit
            _
        $region254: #{tpu_custom_call.1} parent=35 // pred_fallthru
          _
        // Predicated region
        $region273: #{tpu_custom_call.1} parent=35 // pred_check
          _
        $region274: #{tpu_custom_call.1} parent=35 // pred_check_branch
          %503 = sbr.rel (0) target = $region276
        $region275: #{tpu_custom_call.1} parent=35 // pred_region
          %504 = vsyncadd %s470, 16
        $region276: #{tpu_custom_call.1} parent=35 // pred_fallthru
          _
        %s505 = sadd.s32 %s188, 1
        %s506 = sld [smem:[#allocation5 + %s505]]
        %s507 = scalar_lea.vmem %s1, %s506
        %s508 = scalar_lea.vmem [#allocation2], 8
        %s509 = scalar_lea.sflag [#allocation3], 8
        // Predicated region
        $region277: #{tpu_custom_call.1} parent=35 // pred_check
          _
        $region278: #{tpu_custom_call.1} parent=35 // pred_check_branch
          %511 = sbr.rel target = $region280
        $region279: #{tpu_custom_call.1} parent=35 // pred_region
          // Predicated region
          $region292: #{tpu_custom_call.1} parent=279 // pred_check
            _
          $region293: #{tpu_custom_call.1} parent=279 // pred_check_branch
            %527 = sbr.rel (0) target = $region295
          $region294: #{tpu_custom_call.1} parent=279 // pred_region
            %s529 = ssub.s32 2, 1
            loop: start=0, step=1, limit=1
            $region296: #{tpu_custom_call.1} parent=294 // loop_pre_header
              _
            $region297: #{tpu_custom_call.1} parent=294 // loop_header
              %s531 = sphi 0, %s535
              %p532 = scmp.ge.s32.totalorder %s531, 1
              %s536 = sphi %s507, %s507
              %s537 = sphi %s508, %s508
            $region298: #{tpu_custom_call.1} parent=294 // loop_header_branch
              %534 = sbr.rel (%p532) target = $region302
            $region299: #{tpu_custom_call.1} parent=294 // loop_body
              %v538 = vld [vmem:[%s536] sm:%s529]
              %539 = vst [vmem:[%s537] sm:%s529] %v538
            $region300: #{tpu_custom_call.1} parent=294 // loop_footer
              %s535 = sadd.s32 1, %s531
            $region301: #{tpu_custom_call.1} parent=294 // loop_footer_branch
              %530 = sbr.rel target = $region297
            $region302: #{tpu_custom_call.1} parent=294 // loop_exit
              _
          $region295: #{tpu_custom_call.1} parent=279 // pred_fallthru
            _
        $region280: #{tpu_custom_call.1} parent=35 // pred_fallthru
          _
        // Predicated region
        $region281: #{tpu_custom_call.1} parent=35 // pred_check
          _
        $region282: #{tpu_custom_call.1} parent=35 // pred_check_branch
          %513 = sbr.rel (0) target = $region284
        $region283: #{tpu_custom_call.1} parent=35 // pred_region
          %s515 = ssub.s32 2, 1
          loop: start=0, step=1, limit=1
          $region285: #{tpu_custom_call.1} parent=283 // loop_pre_header
            _
          $region286: #{tpu_custom_call.1} parent=283 // loop_header
            %s517 = sphi 0, %s521
            %p518 = scmp.ge.s32.totalorder %s517, 1
            %s522 = sphi %s507, %s507
            %s523 = sphi %s508, %s508
          $region287: #{tpu_custom_call.1} parent=283 // loop_header_branch
            %520 = sbr.rel (%p518) target = $region291
          $region288: #{tpu_custom_call.1} parent=283 // loop_body
            %v524 = vld [vmem:[%s522] sm:%s515]
            %525 = vst [vmem:[%s523] sm:%s515] %v524
          $region289: #{tpu_custom_call.1} parent=283 // loop_footer
            %s521 = sadd.s32 1, %s517
          $region290: #{tpu_custom_call.1} parent=283 // loop_footer_branch
            %516 = sbr.rel target = $region286
          $region291: #{tpu_custom_call.1} parent=283 // loop_exit
            _
        $region284: #{tpu_custom_call.1} parent=35 // pred_fallthru
          _
        // Predicated region
        $region303: #{tpu_custom_call.1} parent=35 // pred_check
          _
        $region304: #{tpu_custom_call.1} parent=35 // pred_check_branch
          %542 = sbr.rel (0) target = $region306
        $region305: #{tpu_custom_call.1} parent=35 // pred_region
          %543 = vsyncadd %s509, 16
        $region306: #{tpu_custom_call.1} parent=35 // pred_fallthru
          _
        %s544 = sadd.s32 %s226, 1
        %s545 = sld [smem:[#allocation5 + %s544]]
        %s546 = scalar_lea.vmem %s1, %s545
        %s547 = scalar_lea.vmem [#allocation2], 9
        %s548 = scalar_lea.sflag [#allocation3], 9
        // Predicated region
        $region307: #{tpu_custom_call.1} parent=35 // pred_check
          _
        $region308: #{tpu_custom_call.1} parent=35 // pred_check_branch
          %550 = sbr.rel target = $region310
        $region309: #{tpu_custom_call.1} parent=35 // pred_region
          // Predicated region
          $region322: #{tpu_custom_call.1} parent=309 // pred_check
            _
          $region323: #{tpu_custom_call.1} parent=309 // pred_check_branch
            %566 = sbr.rel (0) target = $region325
          $region324: #{tpu_custom_call.1} parent=309 // pred_region
            %s568 = ssub.s32 2, 1
            loop: start=0, step=1, limit=1
            $region326: #{tpu_custom_call.1} parent=324 // loop_pre_header
              _
            $region327: #{tpu_custom_call.1} parent=324 // loop_header
              %s570 = sphi 0, %s574
              %p571 = scmp.ge.s32.totalorder %s570, 1
              %s575 = sphi %s546, %s546
              %s576 = sphi %s547, %s547
            $region328: #{tpu_custom_call.1} parent=324 // loop_header_branch
              %573 = sbr.rel (%p571) target = $region332
            $region329: #{tpu_custom_call.1} parent=324 // loop_body
              %v577 = vld [vmem:[%s575] sm:%s568]
              %578 = vst [vmem:[%s576] sm:%s568] %v577
            $region330: #{tpu_custom_call.1} parent=324 // loop_footer
              %s574 = sadd.s32 1, %s570
            $region331: #{tpu_custom_call.1} parent=324 // loop_footer_branch
              %569 = sbr.rel target = $region327
            $region332: #{tpu_custom_call.1} parent=324 // loop_exit
              _
          $region325: #{tpu_custom_call.1} parent=309 // pred_fallthru
            _
        $region310: #{tpu_custom_call.1} parent=35 // pred_fallthru
          _
        // Predicated region
        $region311: #{tpu_custom_call.1} parent=35 // pred_check
          _
        $region312: #{tpu_custom_call.1} parent=35 // pred_check_branch
          %552 = sbr.rel (0) target = $region314
        $region313: #{tpu_custom_call.1} parent=35 // pred_region
          %s554 = ssub.s32 2, 1
          loop: start=0, step=1, limit=1
          $region315: #{tpu_custom_call.1} parent=313 // loop_pre_header
            _
          $region316: #{tpu_custom_call.1} parent=313 // loop_header
            %s556 = sphi 0, %s560
            %p557 = scmp.ge.s32.totalorder %s556, 1
            %s561 = sphi %s546, %s546
            %s562 = sphi %s547, %s547
          $region317: #{tpu_custom_call.1} parent=313 // loop_header_branch
            %559 = sbr.rel (%p557) target = $region321
          $region318: #{tpu_custom_call.1} parent=313 // loop_body
            %v563 = vld [vmem:[%s561] sm:%s554]
            %564 = vst [vmem:[%s562] sm:%s554] %v563
          $region319: #{tpu_custom_call.1} parent=313 // loop_footer
            %s560 = sadd.s32 1, %s556
          $region320: #{tpu_custom_call.1} parent=313 // loop_footer_branch
            %555 = sbr.rel target = $region316
          $region321: #{tpu_custom_call.1} parent=313 // loop_exit
            _
        $region314: #{tpu_custom_call.1} parent=35 // pred_fallthru
          _
        // Predicated region
        $region333: #{tpu_custom_call.1} parent=35 // pred_check
          _
        $region334: #{tpu_custom_call.1} parent=35 // pred_check_branch
          %581 = sbr.rel (0) target = $region336
        $region335: #{tpu_custom_call.1} parent=35 // pred_region
          %582 = vsyncadd %s548, 16
        $region336: #{tpu_custom_call.1} parent=35 // pred_fallthru
          _
        %s583 = sadd.s32 %s266, 1
        %s584 = sld [smem:[#allocation5 + %s583]]
        %s585 = scalar_lea.vmem %s1, %s584
        %s586 = scalar_lea.vmem [#allocation2], 10
        %s587 = scalar_lea.sflag [#allocation3], 10
        // Predicated region
        $region337: #{tpu_custom_call.1} parent=35 // pred_check
          _
        $region338: #{tpu_custom_call.1} parent=35 // pred_check_branch
          %589 = sbr.rel target = $region340
        $region339: #{tpu_custom_call.1} parent=35 // pred_region
          // Predicated region
          $region352: #{tpu_custom_call.1} parent=339 // pred_check
            _
          $region353: #{tpu_custom_call.1} parent=339 // pred_check_branch
            %605 = sbr.rel (0) target = $region355
          $region354: #{tpu_custom_call.1} parent=339 // pred_region
            %s607 = ssub.s32 2, 1
            loop: start=0, step=1, limit=1
            $region356: #{tpu_custom_call.1} parent=354 // loop_pre_header
              _
            $region357: #{tpu_custom_call.1} parent=354 // loop_header
              %s609 = sphi 0, %s613
              %p610 = scmp.ge.s32.totalorder %s609, 1
              %s614 = sphi %s585, %s585
              %s615 = sphi %s586, %s586
            $region358: #{tpu_custom_call.1} parent=354 // loop_header_branch
              %612 = sbr.rel (%p610) target = $region362
            $region359: #{tpu_custom_call.1} parent=354 // loop_body
              %v616 = vld [vmem:[%s614] sm:%s607]
              %617 = vst [vmem:[%s615] sm:%s607] %v616
            $region360: #{tpu_custom_call.1} parent=354 // loop_footer
              %s613 = sadd.s32 1, %s609
            $region361: #{tpu_custom_call.1} parent=354 // loop_footer_branch
              %608 = sbr.rel target = $region357
            $region362: #{tpu_custom_call.1} parent=354 // loop_exit
              _
          $region355: #{tpu_custom_call.1} parent=339 // pred_fallthru
            _
        $region340: #{tpu_custom_call.1} parent=35 // pred_fallthru
          _
        // Predicated region
        $region341: #{tpu_custom_call.1} parent=35 // pred_check
          _
        $region342: #{tpu_custom_call.1} parent=35 // pred_check_branch
          %591 = sbr.rel (0) target = $region344
        $region343: #{tpu_custom_call.1} parent=35 // pred_region
          %s593 = ssub.s32 2, 1
          loop: start=0, step=1, limit=1
          $region345: #{tpu_custom_call.1} parent=343 // loop_pre_header
            _
          $region346: #{tpu_custom_call.1} parent=343 // loop_header
            %s595 = sphi 0, %s599
            %p596 = scmp.ge.s32.totalorder %s595, 1
            %s600 = sphi %s585, %s585
            %s601 = sphi %s586, %s586
          $region347: #{tpu_custom_call.1} parent=343 // loop_header_branch
            %598 = sbr.rel (%p596) target = $region351
          $region348: #{tpu_custom_call.1} parent=343 // loop_body
            %v602 = vld [vmem:[%s600] sm:%s593]
            %603 = vst [vmem:[%s601] sm:%s593] %v602
          $region349: #{tpu_custom_call.1} parent=343 // loop_footer
            %s599 = sadd.s32 1, %s595
          $region350: #{tpu_custom_call.1} parent=343 // loop_footer_branch
            %594 = sbr.rel target = $region346
          $region351: #{tpu_custom_call.1} parent=343 // loop_exit
            _
        $region344: #{tpu_custom_call.1} parent=35 // pred_fallthru
          _
        // Predicated region
        $region363: #{tpu_custom_call.1} parent=35 // pred_check
          _
        $region364: #{tpu_custom_call.1} parent=35 // pred_check_branch
          %620 = sbr.rel (0) target = $region366
        $region365: #{tpu_custom_call.1} parent=35 // pred_region
          %621 = vsyncadd %s587, 16
        $region366: #{tpu_custom_call.1} parent=35 // pred_fallthru
          _
        %s622 = sadd.s32 %s306, 1
        %s623 = sld [smem:[#allocation5 + %s622]]
        %s624 = scalar_lea.vmem %s1, %s623
        %s625 = scalar_lea.vmem [#allocation2], 11
        %s626 = scalar_lea.sflag [#allocation3], 11
        // Predicated region
        $region367: #{tpu_custom_call.1} parent=35 // pred_check
          _
        $region368: #{tpu_custom_call.1} parent=35 // pred_check_branch
          %628 = sbr.rel target = $region370
        $region369: #{tpu_custom_call.1} parent=35 // pred_region
          // Predicated region
          $region382: #{tpu_custom_call.1} parent=369 // pred_check
            _
          $region383: #{tpu_custom_call.1} parent=369 // pred_check_branch
            %644 = sbr.rel (0) target = $region385
          $region384: #{tpu_custom_call.1} parent=369 // pred_region
            %s646 = ssub.s32 2, 1
            loop: start=0, step=1, limit=1
            $region386: #{tpu_custom_call.1} parent=384 // loop_pre_header
              _
            $region387: #{tpu_custom_call.1} parent=384 // loop_header
              %s648 = sphi 0, %s652
              %p649 = scmp.ge.s32.totalorder %s648, 1
              %s653 = sphi %s624, %s624
              %s654 = sphi %s625, %s625
            $region388: #{tpu_custom_call.1} parent=384 // loop_header_branch
              %651 = sbr.rel (%p649) target = $region392
            $region389: #{tpu_custom_call.1} parent=384 // loop_body
              %v655 = vld [vmem:[%s653] sm:%s646]
              %656 = vst [vmem:[%s654] sm:%s646] %v655
            $region390: #{tpu_custom_call.1} parent=384 // loop_footer
              %s652 = sadd.s32 1, %s648
            $region391: #{tpu_custom_call.1} parent=384 // loop_footer_branch
              %647 = sbr.rel target = $region387
            $region392: #{tpu_custom_call.1} parent=384 // loop_exit
              _
          $region385: #{tpu_custom_call.1} parent=369 // pred_fallthru
            _
        $region370: #{tpu_custom_call.1} parent=35 // pred_fallthru
          _
        // Predicated region
        $region371: #{tpu_custom_call.1} parent=35 // pred_check
          _
        $region372: #{tpu_custom_call.1} parent=35 // pred_check_branch
          %630 = sbr.rel (0) target = $region374
        $region373: #{tpu_custom_call.1} parent=35 // pred_region
          %s632 = ssub.s32 2, 1
          loop: start=0, step=1, limit=1
          $region375: #{tpu_custom_call.1} parent=373 // loop_pre_header
            _
          $region376: #{tpu_custom_call.1} parent=373 // loop_header
            %s634 = sphi 0, %s638
            %p635 = scmp.ge.s32.totalorder %s634, 1
            %s639 = sphi %s624, %s624
            %s640 = sphi %s625, %s625
          $region377: #{tpu_custom_call.1} parent=373 // loop_header_branch
            %637 = sbr.rel (%p635) target = $region381
          $region378: #{tpu_custom_call.1} parent=373 // loop_body
            %v641 = vld [vmem:[%s639] sm:%s632]
            %642 = vst [vmem:[%s640] sm:%s632] %v641
          $region379: #{tpu_custom_call.1} parent=373 // loop_footer
            %s638 = sadd.s32 1, %s634
          $region380: #{tpu_custom_call.1} parent=373 // loop_footer_branch
            %633 = sbr.rel target = $region376
          $region381: #{tpu_custom_call.1} parent=373 // loop_exit
            _
        $region374: #{tpu_custom_call.1} parent=35 // pred_fallthru
          _
        // Predicated region
        $region393: #{tpu_custom_call.1} parent=35 // pred_check
          _
        $region394: #{tpu_custom_call.1} parent=35 // pred_check_branch
          %659 = sbr.rel (0) target = $region396
        $region395: #{tpu_custom_call.1} parent=35 // pred_region
          %660 = vsyncadd %s626, 16
        $region396: #{tpu_custom_call.1} parent=35 // pred_fallthru
          _
        %s661 = sadd.s32 %s346, 1
        %s662 = sld [smem:[#allocation5 + %s661]]
        %s663 = scalar_lea.vmem %s1, %s662
        %s664 = scalar_lea.vmem [#allocation2], 12
        %s665 = scalar_lea.sflag [#allocation3], 12
        // Predicated region
        $region397: #{tpu_custom_call.1} parent=35 // pred_check
          _
        $region398: #{tpu_custom_call.1} parent=35 // pred_check_branch
          %667 = sbr.rel target = $region400
        $region399: #{tpu_custom_call.1} parent=35 // pred_region
          // Predicated region
          $region412: #{tpu_custom_call.1} parent=399 // pred_check
            _
          $region413: #{tpu_custom_call.1} parent=399 // pred_check_branch
            %683 = sbr.rel (0) target = $region415
          $region414: #{tpu_custom_call.1} parent=399 // pred_region
            %s685 = ssub.s32 2, 1
            loop: start=0, step=1, limit=1
            $region416: #{tpu_custom_call.1} parent=414 // loop_pre_header
              _
            $region417: #{tpu_custom_call.1} parent=414 // loop_header
              %s687 = sphi 0, %s691
              %p688 = scmp.ge.s32.totalorder %s687, 1
              %s692 = sphi %s663, %s663
              %s693 = sphi %s664, %s664
            $region418: #{tpu_custom_call.1} parent=414 // loop_header_branch
              %690 = sbr.rel (%p688) target = $region422
            $region419: #{tpu_custom_call.1} parent=414 // loop_body
              %v694 = vld [vmem:[%s692] sm:%s685]
              %695 = vst [vmem:[%s693] sm:%s685] %v694
            $region420: #{tpu_custom_call.1} parent=414 // loop_footer
              %s691 = sadd.s32 1, %s687
            $region421: #{tpu_custom_call.1} parent=414 // loop_footer_branch
              %686 = sbr.rel target = $region417
            $region422: #{tpu_custom_call.1} parent=414 // loop_exit
              _
          $region415: #{tpu_custom_call.1} parent=399 // pred_fallthru
            _
        $region400: #{tpu_custom_call.1} parent=35 // pred_fallthru
          _
        // Predicated region
        $region401: #{tpu_custom_call.1} parent=35 // pred_check
          _
        $region402: #{tpu_custom_call.1} parent=35 // pred_check_branch
          %669 = sbr.rel (0) target = $region404
        $region403: #{tpu_custom_call.1} parent=35 // pred_region
          %s671 = ssub.s32 2, 1
          loop: start=0, step=1, limit=1
          $region405: #{tpu_custom_call.1} parent=403 // loop_pre_header
            _
          $region406: #{tpu_custom_call.1} parent=403 // loop_header
            %s673 = sphi 0, %s677
            %p674 = scmp.ge.s32.totalorder %s673, 1
            %s678 = sphi %s663, %s663
            %s679 = sphi %s664, %s664
          $region407: #{tpu_custom_call.1} parent=403 // loop_header_branch
            %676 = sbr.rel (%p674) target = $region411
          $region408: #{tpu_custom_call.1} parent=403 // loop_body
            %v680 = vld [vmem:[%s678] sm:%s671]
            %681 = vst [vmem:[%s679] sm:%s671] %v680
          $region409: #{tpu_custom_call.1} parent=403 // loop_footer
            %s677 = sadd.s32 1, %s673
          $region410: #{tpu_custom_call.1} parent=403 // loop_footer_branch
            %672 = sbr.rel target = $region406
          $region411: #{tpu_custom_call.1} parent=403 // loop_exit
            _
        $region404: #{tpu_custom_call.1} parent=35 // pred_fallthru
          _
        // Predicated region
        $region423: #{tpu_custom_call.1} parent=35 // pred_check
          _
        $region424: #{tpu_custom_call.1} parent=35 // pred_check_branch
          %698 = sbr.rel (0) target = $region426
        $region425: #{tpu_custom_call.1} parent=35 // pred_region
          %699 = vsyncadd %s665, 16
        $region426: #{tpu_custom_call.1} parent=35 // pred_fallthru
          _
        %s700 = sadd.s32 %s386, 1
        %s701 = sld [smem:[#allocation5 + %s700]]
        %s702 = scalar_lea.vmem %s1, %s701
        %s703 = scalar_lea.vmem [#allocation2], 13
        %s704 = scalar_lea.sflag [#allocation3], 13
        // Predicated region
        $region427: #{tpu_custom_call.1} parent=35 // pred_check
          _
        $region428: #{tpu_custom_call.1} parent=35 // pred_check_branch
          %706 = sbr.rel target = $region430
        $region429: #{tpu_custom_call.1} parent=35 // pred_region
          // Predicated region
          $region442: #{tpu_custom_call.1} parent=429 // pred_check
            _
          $region443: #{tpu_custom_call.1} parent=429 // pred_check_branch
            %722 = sbr.rel (0) target = $region445
          $region444: #{tpu_custom_call.1} parent=429 // pred_region
            %s724 = ssub.s32 2, 1
            loop: start=0, step=1, limit=1
            $region446: #{tpu_custom_call.1} parent=444 // loop_pre_header
              _
            $region447: #{tpu_custom_call.1} parent=444 // loop_header
              %s726 = sphi 0, %s730
              %p727 = scmp.ge.s32.totalorder %s726, 1
              %s731 = sphi %s702, %s702
              %s732 = sphi %s703, %s703
            $region448: #{tpu_custom_call.1} parent=444 // loop_header_branch
              %729 = sbr.rel (%p727) target = $region452
            $region449: #{tpu_custom_call.1} parent=444 // loop_body
              %v733 = vld [vmem:[%s731] sm:%s724]
              %734 = vst [vmem:[%s732] sm:%s724] %v733
            $region450: #{tpu_custom_call.1} parent=444 // loop_footer
              %s730 = sadd.s32 1, %s726
            $region451: #{tpu_custom_call.1} parent=444 // loop_footer_branch
              %725 = sbr.rel target = $region447
            $region452: #{tpu_custom_call.1} parent=444 // loop_exit
              _
          $region445: #{tpu_custom_call.1} parent=429 // pred_fallthru
            _
        $region430: #{tpu_custom_call.1} parent=35 // pred_fallthru
          _
        // Predicated region
        $region431: #{tpu_custom_call.1} parent=35 // pred_check
          _
        $region432: #{tpu_custom_call.1} parent=35 // pred_check_branch
          %708 = sbr.rel (0) target = $region434
        $region433: #{tpu_custom_call.1} parent=35 // pred_region
          %s710 = ssub.s32 2, 1
          loop: start=0, step=1, limit=1
          $region435: #{tpu_custom_call.1} parent=433 // loop_pre_header
            _
          $region436: #{tpu_custom_call.1} parent=433 // loop_header
            %s712 = sphi 0, %s716
            %p713 = scmp.ge.s32.totalorder %s712, 1
            %s717 = sphi %s702, %s702
            %s718 = sphi %s703, %s703
          $region437: #{tpu_custom_call.1} parent=433 // loop_header_branch
            %715 = sbr.rel (%p713) target = $region441
          $region438: #{tpu_custom_call.1} parent=433 // loop_body
            %v719 = vld [vmem:[%s717] sm:%s710]
            %720 = vst [vmem:[%s718] sm:%s710] %v719
          $region439: #{tpu_custom_call.1} parent=433 // loop_footer
            %s716 = sadd.s32 1, %s712
          $region440: #{tpu_custom_call.1} parent=433 // loop_footer_branch
            %711 = sbr.rel target = $region436
          $region441: #{tpu_custom_call.1} parent=433 // loop_exit
            _
        $region434: #{tpu_custom_call.1} parent=35 // pred_fallthru
          _
        // Predicated region
        $region453: #{tpu_custom_call.1} parent=35 // pred_check
          _
        $region454: #{tpu_custom_call.1} parent=35 // pred_check_branch
          %737 = sbr.rel (0) target = $region456
        $region455: #{tpu_custom_call.1} parent=35 // pred_region
          %738 = vsyncadd %s704, 16
        $region456: #{tpu_custom_call.1} parent=35 // pred_fallthru
          _
        %s739 = sadd.s32 %s426, 1
        %s740 = sld [smem:[#allocation5 + %s739]]
        %s741 = scalar_lea.vmem %s1, %s740
        %s742 = scalar_lea.vmem [#allocation2], 14
        %s743 = scalar_lea.sflag [#allocation3], 14
        // Predicated region
        $region457: #{tpu_custom_call.1} parent=35 // pred_check
          _
        $region458: #{tpu_custom_call.1} parent=35 // pred_check_branch
          %745 = sbr.rel target = $region460
        $region459: #{tpu_custom_call.1} parent=35 // pred_region
          // Predicated region
          $region472: #{tpu_custom_call.1} parent=459 // pred_check
            _
          $region473: #{tpu_custom_call.1} parent=459 // pred_check_branch
            %761 = sbr.rel (0) target = $region475
          $region474: #{tpu_custom_call.1} parent=459 // pred_region
            %s763 = ssub.s32 2, 1
            loop: start=0, step=1, limit=1
            $region476: #{tpu_custom_call.1} parent=474 // loop_pre_header
              _
            $region477: #{tpu_custom_call.1} parent=474 // loop_header
              %s765 = sphi 0, %s769
              %p766 = scmp.ge.s32.totalorder %s765, 1
              %s770 = sphi %s741, %s741
              %s771 = sphi %s742, %s742
            $region478: #{tpu_custom_call.1} parent=474 // loop_header_branch
              %768 = sbr.rel (%p766) target = $region482
            $region479: #{tpu_custom_call.1} parent=474 // loop_body
              %v772 = vld [vmem:[%s770] sm:%s763]
              %773 = vst [vmem:[%s771] sm:%s763] %v772
            $region480: #{tpu_custom_call.1} parent=474 // loop_footer
              %s769 = sadd.s32 1, %s765
            $region481: #{tpu_custom_call.1} parent=474 // loop_footer_branch
              %764 = sbr.rel target = $region477
            $region482: #{tpu_custom_call.1} parent=474 // loop_exit
              _
          $region475: #{tpu_custom_call.1} parent=459 // pred_fallthru
            _
        $region460: #{tpu_custom_call.1} parent=35 // pred_fallthru
          _
        // Predicated region
        $region461: #{tpu_custom_call.1} parent=35 // pred_check
          _
        $region462: #{tpu_custom_call.1} parent=35 // pred_check_branch
          %747 = sbr.rel (0) target = $region464
        $region463: #{tpu_custom_call.1} parent=35 // pred_region
          %s749 = ssub.s32 2, 1
          loop: start=0, step=1, limit=1
          $region465: #{tpu_custom_call.1} parent=463 // loop_pre_header
            _
          $region466: #{tpu_custom_call.1} parent=463 // loop_header
            %s751 = sphi 0, %s755
            %p752 = scmp.ge.s32.totalorder %s751, 1
            %s756 = sphi %s741, %s741
            %s757 = sphi %s742, %s742
          $region467: #{tpu_custom_call.1} parent=463 // loop_header_branch
            %754 = sbr.rel (%p752) target = $region471
          $region468: #{tpu_custom_call.1} parent=463 // loop_body
            %v758 = vld [vmem:[%s756] sm:%s749]
            %759 = vst [vmem:[%s757] sm:%s749] %v758
          $region469: #{tpu_custom_call.1} parent=463 // loop_footer
            %s755 = sadd.s32 1, %s751
          $region470: #{tpu_custom_call.1} parent=463 // loop_footer_branch
            %750 = sbr.rel target = $region466
          $region471: #{tpu_custom_call.1} parent=463 // loop_exit
            _
        $region464: #{tpu_custom_call.1} parent=35 // pred_fallthru
          _
        // Predicated region
        $region483: #{tpu_custom_call.1} parent=35 // pred_check
          _
        $region484: #{tpu_custom_call.1} parent=35 // pred_check_branch
          %776 = sbr.rel (0) target = $region486
        $region485: #{tpu_custom_call.1} parent=35 // pred_region
          %777 = vsyncadd %s743, 16
        $region486: #{tpu_custom_call.1} parent=35 // pred_fallthru
          _
        %s778 = sadd.s32 %s466, 1
        %s779 = sld [smem:[#allocation5 + %s778]]
        %s780 = scalar_lea.vmem %s1, %s779
        %s781 = scalar_lea.vmem [#allocation2], 15
        %s782 = scalar_lea.sflag [#allocation3], 15
        // Predicated region
        $region487: #{tpu_custom_call.1} parent=35 // pred_check
          _
        $region488: #{tpu_custom_call.1} parent=35 // pred_check_branch
          %784 = sbr.rel target = $region490
        $region489: #{tpu_custom_call.1} parent=35 // pred_region
          // Predicated region
          $region502: #{tpu_custom_call.1} parent=489 // pred_check
            _
          $region503: #{tpu_custom_call.1} parent=489 // pred_check_branch
            %800 = sbr.rel (0) target = $region505
          $region504: #{tpu_custom_call.1} parent=489 // pred_region
            %s802 = ssub.s32 2, 1
            loop: start=0, step=1, limit=1
            $region506: #{tpu_custom_call.1} parent=504 // loop_pre_header
              _
            $region507: #{tpu_custom_call.1} parent=504 // loop_header
              %s804 = sphi 0, %s808
              %p805 = scmp.ge.s32.totalorder %s804, 1
              %s809 = sphi %s780, %s780
              %s810 = sphi %s781, %s781
            $region508: #{tpu_custom_call.1} parent=504 // loop_header_branch
              %807 = sbr.rel (%p805) target = $region512
            $region509: #{tpu_custom_call.1} parent=504 // loop_body
              %v811 = vld [vmem:[%s809] sm:%s802]
              %812 = vst [vmem:[%s810] sm:%s802] %v811
            $region510: #{tpu_custom_call.1} parent=504 // loop_footer
              %s808 = sadd.s32 1, %s804
            $region511: #{tpu_custom_call.1} parent=504 // loop_footer_branch
              %803 = sbr.rel target = $region507
            $region512: #{tpu_custom_call.1} parent=504 // loop_exit
              _
          $region505: #{tpu_custom_call.1} parent=489 // pred_fallthru
            _
        $region490: #{tpu_custom_call.1} parent=35 // pred_fallthru
          _
        // Predicated region
        $region491: #{tpu_custom_call.1} parent=35 // pred_check
          _
        $region492: #{tpu_custom_call.1} parent=35 // pred_check_branch
          %786 = sbr.rel (0) target = $region494
        $region493: #{tpu_custom_call.1} parent=35 // pred_region
          %s788 = ssub.s32 2, 1
          loop: start=0, step=1, limit=1
          $region495: #{tpu_custom_call.1} parent=493 // loop_pre_header
            _
          $region496: #{tpu_custom_call.1} parent=493 // loop_header
            %s790 = sphi 0, %s794
            %p791 = scmp.ge.s32.totalorder %s790, 1
            %s795 = sphi %s780, %s780
            %s796 = sphi %s781, %s781
          $region497: #{tpu_custom_call.1} parent=493 // loop_header_branch
            %793 = sbr.rel (%p791) target = $region501
          $region498: #{tpu_custom_call.1} parent=493 // loop_body
            %v797 = vld [vmem:[%s795] sm:%s788]
            %798 = vst [vmem:[%s796] sm:%s788] %v797
          $region499: #{tpu_custom_call.1} parent=493 // loop_footer
            %s794 = sadd.s32 1, %s790
          $region500: #{tpu_custom_call.1} parent=493 // loop_footer_branch
            %789 = sbr.rel target = $region496
          $region501: #{tpu_custom_call.1} parent=493 // loop_exit
            _
        $region494: #{tpu_custom_call.1} parent=35 // pred_fallthru
          _
        // Predicated region
        $region513: #{tpu_custom_call.1} parent=35 // pred_check
          _
        $region514: #{tpu_custom_call.1} parent=35 // pred_check_branch
          %815 = sbr.rel (0) target = $region516
        $region515: #{tpu_custom_call.1} parent=35 // pred_region
          %816 = vsyncadd %s782, 16
        $region516: #{tpu_custom_call.1} parent=35 // pred_fallthru
          _
        %s817 = sadd.s32 %s188, 2
        %s818 = sld [smem:[#allocation5 + %s817]]
        %s819 = scalar_lea.vmem %s1, %s818
        %s820 = scalar_lea.vmem [#allocation2], 16
        %s821 = scalar_lea.sflag [#allocation3], 16
        // Predicated region
        $region517: #{tpu_custom_call.1} parent=35 // pred_check
          _
        $region518: #{tpu_custom_call.1} parent=35 // pred_check_branch
          %823 = sbr.rel target = $region520
        $region519: #{tpu_custom_call.1} parent=35 // pred_region
          // Predicated region
          $region532: #{tpu_custom_call.1} parent=519 // pred_check
            _
          $region533: #{tpu_custom_call.1} parent=519 // pred_check_branch
            %839 = sbr.rel (0) target = $region535
          $region534: #{tpu_custom_call.1} parent=519 // pred_region
            %s841 = ssub.s32 2, 1
            loop: start=0, step=1, limit=1
            $region536: #{tpu_custom_call.1} parent=534 // loop_pre_header
              _
            $region537: #{tpu_custom_call.1} parent=534 // loop_header
              %s843 = sphi 0, %s847
              %p844 = scmp.ge.s32.totalorder %s843, 1
              %s848 = sphi %s819, %s819
              %s849 = sphi %s820, %s820
            $region538: #{tpu_custom_call.1} parent=534 // loop_header_branch
              %846 = sbr.rel (%p844) target = $region542
            $region539: #{tpu_custom_call.1} parent=534 // loop_body
              %v850 = vld [vmem:[%s848] sm:%s841]
              %851 = vst [vmem:[%s849] sm:%s841] %v850
            $region540: #{tpu_custom_call.1} parent=534 // loop_footer
              %s847 = sadd.s32 1, %s843
            $region541: #{tpu_custom_call.1} parent=534 // loop_footer_branch
              %842 = sbr.rel target = $region537
            $region542: #{tpu_custom_call.1} parent=534 // loop_exit
              _
          $region535: #{tpu_custom_call.1} parent=519 // pred_fallthru
            _
        $region520: #{tpu_custom_call.1} parent=35 // pred_fallthru
          _
        // Predicated region
        $region521: #{tpu_custom_call.1} parent=35 // pred_check
          _
        $region522: #{tpu_custom_call.1} parent=35 // pred_check_branch
          %825 = sbr.rel (0) target = $region524
        $region523: #{tpu_custom_call.1} parent=35 // pred_region
          %s827 = ssub.s32 2, 1
          loop: start=0, step=1, limit=1
          $region525: #{tpu_custom_call.1} parent=523 // loop_pre_header
            _
          $region526: #{tpu_custom_call.1} parent=523 // loop_header
            %s829 = sphi 0, %s833
            %p830 = scmp.ge.s32.totalorder %s829, 1
            %s834 = sphi %s819, %s819
            %s835 = sphi %s820, %s820
          $region527: #{tpu_custom_call.1} parent=523 // loop_header_branch
            %832 = sbr.rel (%p830) target = $region531
          $region528: #{tpu_custom_call.1} parent=523 // loop_body
            %v836 = vld [vmem:[%s834] sm:%s827]
            %837 = vst [vmem:[%s835] sm:%s827] %v836
          $region529: #{tpu_custom_call.1} parent=523 // loop_footer
            %s833 = sadd.s32 1, %s829
          $region530: #{tpu_custom_call.1} parent=523 // loop_footer_branch
            %828 = sbr.rel target = $region526
          $region531: #{tpu_custom_call.1} parent=523 // loop_exit
            _
        $region524: #{tpu_custom_call.1} parent=35 // pred_fallthru
          _
        // Predicated region
        $region543: #{tpu_custom_call.1} parent=35 // pred_check
          _
        $region544: #{tpu_custom_call.1} parent=35 // pred_check_branch
          %854 = sbr.rel (0) target = $region546
        $region545: #{tpu_custom_call.1} parent=35 // pred_region
          %855 = vsyncadd %s821, 16
        $region546: #{tpu_custom_call.1} parent=35 // pred_fallthru
          _
        %s856 = sadd.s32 %s226, 2
        %s857 = sld [smem:[#allocation5 + %s856]]
        %s858 = scalar_lea.vmem %s1, %s857
        %s859 = scalar_lea.vmem [#allocation2], 17
        %s860 = scalar_lea.sflag [#allocation3], 17
        // Predicated region
        $region547: #{tpu_custom_call.1} parent=35 // pred_check
          _
        $region548: #{tpu_custom_call.1} parent=35 // pred_check_branch
          %862 = sbr.rel target = $region550
        $region549: #{tpu_custom_call.1} parent=35 // pred_region
          // Predicated region
          $region562: #{tpu_custom_call.1} parent=549 // pred_check
            _
          $region563: #{tpu_custom_call.1} parent=549 // pred_check_branch
            %878 = sbr.rel (0) target = $region565
          $region564: #{tpu_custom_call.1} parent=549 // pred_region
            %s880 = ssub.s32 2, 1
            loop: start=0, step=1, limit=1
            $region566: #{tpu_custom_call.1} parent=564 // loop_pre_header
              _
            $region567: #{tpu_custom_call.1} parent=564 // loop_header
              %s882 = sphi 0, %s886
              %p883 = scmp.ge.s32.totalorder %s882, 1
              %s887 = sphi %s858, %s858
              %s888 = sphi %s859, %s859
            $region568: #{tpu_custom_call.1} parent=564 // loop_header_branch
              %885 = sbr.rel (%p883) target = $region572
            $region569: #{tpu_custom_call.1} parent=564 // loop_body
              %v889 = vld [vmem:[%s887] sm:%s880]
              %890 = vst [vmem:[%s888] sm:%s880] %v889
            $region570: #{tpu_custom_call.1} parent=564 // loop_footer
              %s886 = sadd.s32 1, %s882
            $region571: #{tpu_custom_call.1} parent=564 // loop_footer_branch
              %881 = sbr.rel target = $region567
            $region572: #{tpu_custom_call.1} parent=564 // loop_exit
              _
          $region565: #{tpu_custom_call.1} parent=549 // pred_fallthru
            _
        $region550: #{tpu_custom_call.1} parent=35 // pred_fallthru
          _
        // Predicated region
        $region551: #{tpu_custom_call.1} parent=35 // pred_check
          _
        $region552: #{tpu_custom_call.1} parent=35 // pred_check_branch
          %864 = sbr.rel (0) target = $region554
        $region553: #{tpu_custom_call.1} parent=35 // pred_region
          %s866 = ssub.s32 2, 1
          loop: start=0, step=1, limit=1
          $region555: #{tpu_custom_call.1} parent=553 // loop_pre_header
            _
          $region556: #{tpu_custom_call.1} parent=553 // loop_header
            %s868 = sphi 0, %s872
            %p869 = scmp.ge.s32.totalorder %s868, 1
            %s873 = sphi %s858, %s858
            %s874 = sphi %s859, %s859
          $region557: #{tpu_custom_call.1} parent=553 // loop_header_branch
            %871 = sbr.rel (%p869) target = $region561
          $region558: #{tpu_custom_call.1} parent=553 // loop_body
            %v875 = vld [vmem:[%s873] sm:%s866]
            %876 = vst [vmem:[%s874] sm:%s866] %v875
          $region559: #{tpu_custom_call.1} parent=553 // loop_footer
            %s872 = sadd.s32 1, %s868
          $region560: #{tpu_custom_call.1} parent=553 // loop_footer_branch
            %867 = sbr.rel target = $region556
          $region561: #{tpu_custom_call.1} parent=553 // loop_exit
            _
        $region554: #{tpu_custom_call.1} parent=35 // pred_fallthru
          _
        // Predicated region
        $region573: #{tpu_custom_call.1} parent=35 // pred_check
          _
        $region574: #{tpu_custom_call.1} parent=35 // pred_check_branch
          %893 = sbr.rel (0) target = $region576
        $region575: #{tpu_custom_call.1} parent=35 // pred_region
          %894 = vsyncadd %s860, 16
        $region576: #{tpu_custom_call.1} parent=35 // pred_fallthru
          _
        %s895 = sadd.s32 %s266, 2
        %s896 = sld [smem:[#allocation5 + %s895]]
        %s897 = scalar_lea.vmem %s1, %s896
        %s898 = scalar_lea.vmem [#allocation2], 18
        %s899 = scalar_lea.sflag [#allocation3], 18
        // Predicated region
        $region577: #{tpu_custom_call.1} parent=35 // pred_check
          _
        $region578: #{tpu_custom_call.1} parent=35 // pred_check_branch
          %901 = sbr.rel target = $region580
        $region579: #{tpu_custom_call.1} parent=35 // pred_region
          // Predicated region
          $region592: #{tpu_custom_call.1} parent=579 // pred_check
            _
          $region593: #{tpu_custom_call.1} parent=579 // pred_check_branch
            %917 = sbr.rel (0) target = $region595
          $region594: #{tpu_custom_call.1} parent=579 // pred_region
            %s919 = ssub.s32 2, 1
            loop: start=0, step=1, limit=1
            $region596: #{tpu_custom_call.1} parent=594 // loop_pre_header
              _
            $region597: #{tpu_custom_call.1} parent=594 // loop_header
              %s921 = sphi 0, %s925
              %p922 = scmp.ge.s32.totalorder %s921, 1
              %s926 = sphi %s897, %s897
              %s927 = sphi %s898, %s898
            $region598: #{tpu_custom_call.1} parent=594 // loop_header_branch
              %924 = sbr.rel (%p922) target = $region602
            $region599: #{tpu_custom_call.1} parent=594 // loop_body
              %v928 = vld [vmem:[%s926] sm:%s919]
              %929 = vst [vmem:[%s927] sm:%s919] %v928
            $region600: #{tpu_custom_call.1} parent=594 // loop_footer
              %s925 = sadd.s32 1, %s921
            $region601: #{tpu_custom_call.1} parent=594 // loop_footer_branch
              %920 = sbr.rel target = $region597
            $region602: #{tpu_custom_call.1} parent=594 // loop_exit
              _
          $region595: #{tpu_custom_call.1} parent=579 // pred_fallthru
            _
        $region580: #{tpu_custom_call.1} parent=35 // pred_fallthru
          _
        // Predicated region
        $region581: #{tpu_custom_call.1} parent=35 // pred_check
          _
        $region582: #{tpu_custom_call.1} parent=35 // pred_check_branch
          %903 = sbr.rel (0) target = $region584
        $region583: #{tpu_custom_call.1} parent=35 // pred_region
          %s905 = ssub.s32 2, 1
          loop: start=0, step=1, limit=1
          $region585: #{tpu_custom_call.1} parent=583 // loop_pre_header
            _
          $region586: #{tpu_custom_call.1} parent=583 // loop_header
            %s907 = sphi 0, %s911
            %p908 = scmp.ge.s32.totalorder %s907, 1
            %s912 = sphi %s897, %s897
            %s913 = sphi %s898, %s898
          $region587: #{tpu_custom_call.1} parent=583 // loop_header_branch
            %910 = sbr.rel (%p908) target = $region591
          $region588: #{tpu_custom_call.1} parent=583 // loop_body
            %v914 = vld [vmem:[%s912] sm:%s905]
            %915 = vst [vmem:[%s913] sm:%s905] %v914
          $region589: #{tpu_custom_call.1} parent=583 // loop_footer
            %s911 = sadd.s32 1, %s907
          $region590: #{tpu_custom_call.1} parent=583 // loop_footer_branch
            %906 = sbr.rel target = $region586
          $region591: #{tpu_custom_call.1} parent=583 // loop_exit
            _
        $region584: #{tpu_custom_call.1} parent=35 // pred_fallthru
          _
        // Predicated region
        $region603: #{tpu_custom_call.1} parent=35 // pred_check
          _
        $region604: #{tpu_custom_call.1} parent=35 // pred_check_branch
          %932 = sbr.rel (0) target = $region606
        $region605: #{tpu_custom_call.1} parent=35 // pred_region
          %933 = vsyncadd %s899, 16
        $region606: #{tpu_custom_call.1} parent=35 // pred_fallthru
          _
        %s934 = sadd.s32 %s306, 2
        %s935 = sld [smem:[#allocation5 + %s934]]
        %s936 = scalar_lea.vmem %s1, %s935
        %s937 = scalar_lea.vmem [#allocation2], 19
        %s938 = scalar_lea.sflag [#allocation3], 19
        // Predicated region
        $region607: #{tpu_custom_call.1} parent=35 // pred_check
          _
        $region608: #{tpu_custom_call.1} parent=35 // pred_check_branch
          %940 = sbr.rel target = $region610
        $region609: #{tpu_custom_call.1} parent=35 // pred_region
          // Predicated region
          $region622: #{tpu_custom_call.1} parent=609 // pred_check
            _
          $region623: #{tpu_custom_call.1} parent=609 // pred_check_branch
            %956 = sbr.rel (0) target = $region625
          $region624: #{tpu_custom_call.1} parent=609 // pred_region
            %s958 = ssub.s32 2, 1
            loop: start=0, step=1, limit=1
            $region626: #{tpu_custom_call.1} parent=624 // loop_pre_header
              _
            $region627: #{tpu_custom_call.1} parent=624 // loop_header
              %s960 = sphi 0, %s964
              %p961 = scmp.ge.s32.totalorder %s960, 1
              %s965 = sphi %s936, %s936
              %s966 = sphi %s937, %s937
            $region628: #{tpu_custom_call.1} parent=624 // loop_header_branch
              %963 = sbr.rel (%p961) target = $region632
            $region629: #{tpu_custom_call.1} parent=624 // loop_body
              %v967 = vld [vmem:[%s965] sm:%s958]
              %968 = vst [vmem:[%s966] sm:%s958] %v967
            $region630: #{tpu_custom_call.1} parent=624 // loop_footer
              %s964 = sadd.s32 1, %s960
            $region631: #{tpu_custom_call.1} parent=624 // loop_footer_branch
              %959 = sbr.rel target = $region627
            $region632: #{tpu_custom_call.1} parent=624 // loop_exit
              _
          $region625: #{tpu_custom_call.1} parent=609 // pred_fallthru
            _
        $region610: #{tpu_custom_call.1} parent=35 // pred_fallthru
          _
        // Predicated region
        $region611: #{tpu_custom_call.1} parent=35 // pred_check
          _
        $region612: #{tpu_custom_call.1} parent=35 // pred_check_branch
          %942 = sbr.rel (0) target = $region614
        $region613: #{tpu_custom_call.1} parent=35 // pred_region
          %s944 = ssub.s32 2, 1
          loop: start=0, step=1, limit=1
          $region615: #{tpu_custom_call.1} parent=613 // loop_pre_header
            _
          $region616: #{tpu_custom_call.1} parent=613 // loop_header
            %s946 = sphi 0, %s950
            %p947 = scmp.ge.s32.totalorder %s946, 1
            %s951 = sphi %s936, %s936
            %s952 = sphi %s937, %s937
          $region617: #{tpu_custom_call.1} parent=613 // loop_header_branch
            %949 = sbr.rel (%p947) target = $region621
          $region618: #{tpu_custom_call.1} parent=613 // loop_body
            %v953 = vld [vmem:[%s951] sm:%s944]
            %954 = vst [vmem:[%s952] sm:%s944] %v953
          $region619: #{tpu_custom_call.1} parent=613 // loop_footer
            %s950 = sadd.s32 1, %s946
          $region620: #{tpu_custom_call.1} parent=613 // loop_footer_branch
            %945 = sbr.rel target = $region616
          $region621: #{tpu_custom_call.1} parent=613 // loop_exit
            _
        $region614: #{tpu_custom_call.1} parent=35 // pred_fallthru
          _
        // Predicated region
        $region633: #{tpu_custom_call.1} parent=35 // pred_check
          _
        $region634: #{tpu_custom_call.1} parent=35 // pred_check_branch
          %971 = sbr.rel (0) target = $region636
        $region635: #{tpu_custom_call.1} parent=35 // pred_region
          %972 = vsyncadd %s938, 16
        $region636: #{tpu_custom_call.1} parent=35 // pred_fallthru
          _
        %s973 = sadd.s32 %s346, 2
        %s974 = sld [smem:[#allocation5 + %s973]]
        %s975 = scalar_lea.vmem %s1, %s974
        %s976 = scalar_lea.vmem [#allocation2], 20
        %s977 = scalar_lea.sflag [#allocation3], 20
        // Predicated region
        $region637: #{tpu_custom_call.1} parent=35 // pred_check
          _
        $region638: #{tpu_custom_call.1} parent=35 // pred_check_branch
          %979 = sbr.rel target = $region640
        $region639: #{tpu_custom_call.1} parent=35 // pred_region
          // Predicated region
          $region652: #{tpu_custom_call.1} parent=639 // pred_check
            _
          $region653: #{tpu_custom_call.1} parent=639 // pred_check_branch
            %995 = sbr.rel (0) target = $region655
          $region654: #{tpu_custom_call.1} parent=639 // pred_region
            %s997 = ssub.s32 2, 1
            loop: start=0, step=1, limit=1
            $region656: #{tpu_custom_call.1} parent=654 // loop_pre_header
              _
            $region657: #{tpu_custom_call.1} parent=654 // loop_header
              %s999 = sphi 0, %s1003
              %p1000 = scmp.ge.s32.totalorder %s999, 1
              %s1004 = sphi %s975, %s975
              %s1005 = sphi %s976, %s976
            $region658: #{tpu_custom_call.1} parent=654 // loop_header_branch
              %1002 = sbr.rel (%p1000) target = $region662
            $region659: #{tpu_custom_call.1} parent=654 // loop_body
              %v1006 = vld [vmem:[%s1004] sm:%s997]
              %1007 = vst [vmem:[%s1005] sm:%s997] %v1006
            $region660: #{tpu_custom_call.1} parent=654 // loop_footer
              %s1003 = sadd.s32 1, %s999
            $region661: #{tpu_custom_call.1} parent=654 // loop_footer_branch
              %998 = sbr.rel target = $region657
            $region662: #{tpu_custom_call.1} parent=654 // loop_exit
              _
          $region655: #{tpu_custom_call.1} parent=639 // pred_fallthru
            _
        $region640: #{tpu_custom_call.1} parent=35 // pred_fallthru
          _
        // Predicated region
        $region641: #{tpu_custom_call.1} parent=35 // pred_check
          _
        $region642: #{tpu_custom_call.1} parent=35 // pred_check_branch
          %981 = sbr.rel (0) target = $region644
        $region643: #{tpu_custom_call.1} parent=35 // pred_region
          %s983 = ssub.s32 2, 1
          loop: start=0, step=1, limit=1
          $region645: #{tpu_custom_call.1} parent=643 // loop_pre_header
            _
          $region646: #{tpu_custom_call.1} parent=643 // loop_header
            %s985 = sphi 0, %s989
            %p986 = scmp.ge.s32.totalorder %s985, 1
            %s990 = sphi %s975, %s975
            %s991 = sphi %s976, %s976
          $region647: #{tpu_custom_call.1} parent=643 // loop_header_branch
            %988 = sbr.rel (%p986) target = $region651
          $region648: #{tpu_custom_call.1} parent=643 // loop_body
            %v992 = vld [vmem:[%s990] sm:%s983]
            %993 = vst [vmem:[%s991] sm:%s983] %v992
          $region649: #{tpu_custom_call.1} parent=643 // loop_footer
            %s989 = sadd.s32 1, %s985
          $region650: #{tpu_custom_call.1} parent=643 // loop_footer_branch
            %984 = sbr.rel target = $region646
          $region651: #{tpu_custom_call.1} parent=643 // loop_exit
            _
        $region644: #{tpu_custom_call.1} parent=35 // pred_fallthru
          _
        // Predicated region
        $region663: #{tpu_custom_call.1} parent=35 // pred_check
          _
        $region664: #{tpu_custom_call.1} parent=35 // pred_check_branch
          %1010 = sbr.rel (0) target = $region666
        $region665: #{tpu_custom_call.1} parent=35 // pred_region
          %1011 = vsyncadd %s977, 16
        $region666: #{tpu_custom_call.1} parent=35 // pred_fallthru
          _
        %s1012 = sadd.s32 %s386, 2
        %s1013 = sld [smem:[#allocation5 + %s1012]]
        %s1014 = scalar_lea.vmem %s1, %s1013
        %s1015 = scalar_lea.vmem [#allocation2], 21
        %s1016 = scalar_lea.sflag [#allocation3], 21
        // Predicated region
        $region667: #{tpu_custom_call.1} parent=35 // pred_check
          _
        $region668: #{tpu_custom_call.1} parent=35 // pred_check_branch
          %1018 = sbr.rel target = $region670
        $region669: #{tpu_custom_call.1} parent=35 // pred_region
          // Predicated region
          $region682: #{tpu_custom_call.1} parent=669 // pred_check
            _
          $region683: #{tpu_custom_call.1} parent=669 // pred_check_branch
            %1034 = sbr.rel (0) target = $region685
          $region684: #{tpu_custom_call.1} parent=669 // pred_region
            %s1036 = ssub.s32 2, 1
            loop: start=0, step=1, limit=1
            $region686: #{tpu_custom_call.1} parent=684 // loop_pre_header
              _
            $region687: #{tpu_custom_call.1} parent=684 // loop_header
              %s1038 = sphi 0, %s1042
              %p1039 = scmp.ge.s32.totalorder %s1038, 1
              %s1043 = sphi %s1014, %s1014
              %s1044 = sphi %s1015, %s1015
            $region688: #{tpu_custom_call.1} parent=684 // loop_header_branch
              %1041 = sbr.rel (%p1039) target = $region692
            $region689: #{tpu_custom_call.1} parent=684 // loop_body
              %v1045 = vld [vmem:[%s1043] sm:%s1036]
              %1046 = vst [vmem:[%s1044] sm:%s1036] %v1045
            $region690: #{tpu_custom_call.1} parent=684 // loop_footer
              %s1042 = sadd.s32 1, %s1038
            $region691: #{tpu_custom_call.1} parent=684 // loop_footer_branch
              %1037 = sbr.rel target = $region687
            $region692: #{tpu_custom_call.1} parent=684 // loop_exit
              _
          $region685: #{tpu_custom_call.1} parent=669 // pred_fallthru
            _
        $region670: #{tpu_custom_call.1} parent=35 // pred_fallthru
          _
        // Predicated region
        $region671: #{tpu_custom_call.1} parent=35 // pred_check
          _
        $region672: #{tpu_custom_call.1} parent=35 // pred_check_branch
          %1020 = sbr.rel (0) target = $region674
        $region673: #{tpu_custom_call.1} parent=35 // pred_region
          %s1022 = ssub.s32 2, 1
          loop: start=0, step=1, limit=1
          $region675: #{tpu_custom_call.1} parent=673 // loop_pre_header
            _
          $region676: #{tpu_custom_call.1} parent=673 // loop_header
            %s1024 = sphi 0, %s1028
            %p1025 = scmp.ge.s32.totalorder %s1024, 1
            %s1029 = sphi %s1014, %s1014
            %s1030 = sphi %s1015, %s1015
          $region677: #{tpu_custom_call.1} parent=673 // loop_header_branch
            %1027 = sbr.rel (%p1025) target = $region681
          $region678: #{tpu_custom_call.1} parent=673 // loop_body
            %v1031 = vld [vmem:[%s1029] sm:%s1022]
            %1032 = vst [vmem:[%s1030] sm:%s1022] %v1031
          $region679: #{tpu_custom_call.1} parent=673 // loop_footer
            %s1028 = sadd.s32 1, %s1024
          $region680: #{tpu_custom_call.1} parent=673 // loop_footer_branch
            %1023 = sbr.rel target = $region676
          $region681: #{tpu_custom_call.1} parent=673 // loop_exit
            _
        $region674: #{tpu_custom_call.1} parent=35 // pred_fallthru
          _
        // Predicated region
        $region693: #{tpu_custom_call.1} parent=35 // pred_check
          _
        $region694: #{tpu_custom_call.1} parent=35 // pred_check_branch
          %1049 = sbr.rel (0) target = $region696
        $region695: #{tpu_custom_call.1} parent=35 // pred_region
          %1050 = vsyncadd %s1016, 16
        $region696: #{tpu_custom_call.1} parent=35 // pred_fallthru
          _
        %s1051 = sadd.s32 %s426, 2
        %s1052 = sld [smem:[#allocation5 + %s1051]]
        %s1053 = scalar_lea.vmem %s1, %s1052
        %s1054 = scalar_lea.vmem [#allocation2], 22
        %s1055 = scalar_lea.sflag [#allocation3], 22
        // Predicated region
        $region697: #{tpu_custom_call.1} parent=35 // pred_check
          _
        $region698: #{tpu_custom_call.1} parent=35 // pred_check_branch
          %1057 = sbr.rel target = $region700
        $region699: #{tpu_custom_call.1} parent=35 // pred_region
          // Predicated region
          $region712: #{tpu_custom_call.1} parent=699 // pred_check
            _
          $region713: #{tpu_custom_call.1} parent=699 // pred_check_branch
            %1073 = sbr.rel (0) target = $region715
          $region714: #{tpu_custom_call.1} parent=699 // pred_region
            %s1075 = ssub.s32 2, 1
            loop: start=0, step=1, limit=1
            $region716: #{tpu_custom_call.1} parent=714 // loop_pre_header
              _
            $region717: #{tpu_custom_call.1} parent=714 // loop_header
              %s1077 = sphi 0, %s1081
              %p1078 = scmp.ge.s32.totalorder %s1077, 1
              %s1082 = sphi %s1053, %s1053
              %s1083 = sphi %s1054, %s1054
            $region718: #{tpu_custom_call.1} parent=714 // loop_header_branch
              %1080 = sbr.rel (%p1078) target = $region722
            $region719: #{tpu_custom_call.1} parent=714 // loop_body
              %v1084 = vld [vmem:[%s1082] sm:%s1075]
              %1085 = vst [vmem:[%s1083] sm:%s1075] %v1084
            $region720: #{tpu_custom_call.1} parent=714 // loop_footer
              %s1081 = sadd.s32 1, %s1077
            $region721: #{tpu_custom_call.1} parent=714 // loop_footer_branch
              %1076 = sbr.rel target = $region717
            $region722: #{tpu_custom_call.1} parent=714 // loop_exit
              _
          $region715: #{tpu_custom_call.1} parent=699 // pred_fallthru
            _
        $region700: #{tpu_custom_call.1} parent=35 // pred_fallthru
          _
        // Predicated region
        $region701: #{tpu_custom_call.1} parent=35 // pred_check
          _
        $region702: #{tpu_custom_call.1} parent=35 // pred_check_branch
          %1059 = sbr.rel (0) target = $region704
        $region703: #{tpu_custom_call.1} parent=35 // pred_region
          %s1061 = ssub.s32 2, 1
          loop: start=0, step=1, limit=1
          $region705: #{tpu_custom_call.1} parent=703 // loop_pre_header
            _
          $region706: #{tpu_custom_call.1} parent=703 // loop_header
            %s1063 = sphi 0, %s1067
            %p1064 = scmp.ge.s32.totalorder %s1063, 1
            %s1068 = sphi %s1053, %s1053
            %s1069 = sphi %s1054, %s1054
          $region707: #{tpu_custom_call.1} parent=703 // loop_header_branch
            %1066 = sbr.rel (%p1064) target = $region711
          $region708: #{tpu_custom_call.1} parent=703 // loop_body
            %v1070 = vld [vmem:[%s1068] sm:%s1061]
            %1071 = vst [vmem:[%s1069] sm:%s1061] %v1070
          $region709: #{tpu_custom_call.1} parent=703 // loop_footer
            %s1067 = sadd.s32 1, %s1063
          $region710: #{tpu_custom_call.1} parent=703 // loop_footer_branch
            %1062 = sbr.rel target = $region706
          $region711: #{tpu_custom_call.1} parent=703 // loop_exit
            _
        $region704: #{tpu_custom_call.1} parent=35 // pred_fallthru
          _
        // Predicated region
        $region723: #{tpu_custom_call.1} parent=35 // pred_check
          _
        $region724: #{tpu_custom_call.1} parent=35 // pred_check_branch
          %1088 = sbr.rel (0) target = $region726
        $region725: #{tpu_custom_call.1} parent=35 // pred_region
          %1089 = vsyncadd %s1055, 16
        $region726: #{tpu_custom_call.1} parent=35 // pred_fallthru
          _
        %s1090 = sadd.s32 %s466, 2
        %s1091 = sld [smem:[#allocation5 + %s1090]]
        %s1092 = scalar_lea.vmem %s1, %s1091
        %s1093 = scalar_lea.vmem [#allocation2], 23
        %s1094 = scalar_lea.sflag [#allocation3], 23
        // Predicated region
        $region727: #{tpu_custom_call.1} parent=35 // pred_check
          _
        $region728: #{tpu_custom_call.1} parent=35 // pred_check_branch
          %1096 = sbr.rel target = $region730
        $region729: #{tpu_custom_call.1} parent=35 // pred_region
          // Predicated region
          $region742: #{tpu_custom_call.1} parent=729 // pred_check
            _
          $region743: #{tpu_custom_call.1} parent=729 // pred_check_branch
            %1112 = sbr.rel (0) target = $region745
          $region744: #{tpu_custom_call.1} parent=729 // pred_region
            %s1114 = ssub.s32 2, 1
            loop: start=0, step=1, limit=1
            $region746: #{tpu_custom_call.1} parent=744 // loop_pre_header
              _
            $region747: #{tpu_custom_call.1} parent=744 // loop_header
              %s1116 = sphi 0, %s1120
              %p1117 = scmp.ge.s32.totalorder %s1116, 1
              %s1121 = sphi %s1092, %s1092
              %s1122 = sphi %s1093, %s1093
            $region748: #{tpu_custom_call.1} parent=744 // loop_header_branch
              %1119 = sbr.rel (%p1117) target = $region752
            $region749: #{tpu_custom_call.1} parent=744 // loop_body
              %v1123 = vld [vmem:[%s1121] sm:%s1114]
              %1124 = vst [vmem:[%s1122] sm:%s1114] %v1123
            $region750: #{tpu_custom_call.1} parent=744 // loop_footer
              %s1120 = sadd.s32 1, %s1116
            $region751: #{tpu_custom_call.1} parent=744 // loop_footer_branch
              %1115 = sbr.rel target = $region747
            $region752: #{tpu_custom_call.1} parent=744 // loop_exit
              _
          $region745: #{tpu_custom_call.1} parent=729 // pred_fallthru
            _
        $region730: #{tpu_custom_call.1} parent=35 // pred_fallthru
          _
        // Predicated region
        $region731: #{tpu_custom_call.1} parent=35 // pred_check
          _
        $region732: #{tpu_custom_call.1} parent=35 // pred_check_branch
          %1098 = sbr.rel (0) target = $region734
        $region733: #{tpu_custom_call.1} parent=35 // pred_region
          %s1100 = ssub.s32 2, 1
          loop: start=0, step=1, limit=1
          $region735: #{tpu_custom_call.1} parent=733 // loop_pre_header
            _
          $region736: #{tpu_custom_call.1} parent=733 // loop_header
            %s1102 = sphi 0, %s1106
            %p1103 = scmp.ge.s32.totalorder %s1102, 1
            %s1107 = sphi %s1092, %s1092
            %s1108 = sphi %s1093, %s1093
          $region737: #{tpu_custom_call.1} parent=733 // loop_header_branch
            %1105 = sbr.rel (%p1103) target = $region741
          $region738: #{tpu_custom_call.1} parent=733 // loop_body
            %v1109 = vld [vmem:[%s1107] sm:%s1100]
            %1110 = vst [vmem:[%s1108] sm:%s1100] %v1109
          $region739: #{tpu_custom_call.1} parent=733 // loop_footer
            %s1106 = sadd.s32 1, %s1102
          $region740: #{tpu_custom_call.1} parent=733 // loop_footer_branch
            %1101 = sbr.rel target = $region736
          $region741: #{tpu_custom_call.1} parent=733 // loop_exit
            _
        $region734: #{tpu_custom_call.1} parent=35 // pred_fallthru
          _
        // Predicated region
        $region753: #{tpu_custom_call.1} parent=35 // pred_check
          _
        $region754: #{tpu_custom_call.1} parent=35 // pred_check_branch
          %1127 = sbr.rel (0) target = $region756
        $region755: #{tpu_custom_call.1} parent=35 // pred_region
          %1128 = vsyncadd %s1094, 16
        $region756: #{tpu_custom_call.1} parent=35 // pred_fallthru
          _
        %s1129 = sadd.s32 %s188, 3
        %s1130 = sld [smem:[#allocation5 + %s1129]]
        %s1131 = scalar_lea.vmem %s1, %s1130
        %s1132 = scalar_lea.vmem [#allocation2], 24
        %s1133 = scalar_lea.sflag [#allocation3], 24
        // Predicated region
        $region757: #{tpu_custom_call.1} parent=35 // pred_check
          _
        $region758: #{tpu_custom_call.1} parent=35 // pred_check_branch
          %1135 = sbr.rel target = $region760
        $region759: #{tpu_custom_call.1} parent=35 // pred_region
          // Predicated region
          $region772: #{tpu_custom_call.1} parent=759 // pred_check
            _
          $region773: #{tpu_custom_call.1} parent=759 // pred_check_branch
            %1151 = sbr.rel (0) target = $region775
          $region774: #{tpu_custom_call.1} parent=759 // pred_region
            %s1153 = ssub.s32 2, 1
            loop: start=0, step=1, limit=1
            $region776: #{tpu_custom_call.1} parent=774 // loop_pre_header
              _
            $region777: #{tpu_custom_call.1} parent=774 // loop_header
              %s1155 = sphi 0, %s1159
              %p1156 = scmp.ge.s32.totalorder %s1155, 1
              %s1160 = sphi %s1131, %s1131
              %s1161 = sphi %s1132, %s1132
            $region778: #{tpu_custom_call.1} parent=774 // loop_header_branch
              %1158 = sbr.rel (%p1156) target = $region782
            $region779: #{tpu_custom_call.1} parent=774 // loop_body
              %v1162 = vld [vmem:[%s1160] sm:%s1153]
              %1163 = vst [vmem:[%s1161] sm:%s1153] %v1162
            $region780: #{tpu_custom_call.1} parent=774 // loop_footer
              %s1159 = sadd.s32 1, %s1155
            $region781: #{tpu_custom_call.1} parent=774 // loop_footer_branch
              %1154 = sbr.rel target = $region777
            $region782: #{tpu_custom_call.1} parent=774 // loop_exit
              _
          $region775: #{tpu_custom_call.1} parent=759 // pred_fallthru
            _
        $region760: #{tpu_custom_call.1} parent=35 // pred_fallthru
          _
        // Predicated region
        $region761: #{tpu_custom_call.1} parent=35 // pred_check
          _
        $region762: #{tpu_custom_call.1} parent=35 // pred_check_branch
          %1137 = sbr.rel (0) target = $region764
        $region763: #{tpu_custom_call.1} parent=35 // pred_region
          %s1139 = ssub.s32 2, 1
          loop: start=0, step=1, limit=1
          $region765: #{tpu_custom_call.1} parent=763 // loop_pre_header
            _
          $region766: #{tpu_custom_call.1} parent=763 // loop_header
            %s1141 = sphi 0, %s1145
            %p1142 = scmp.ge.s32.totalorder %s1141, 1
            %s1146 = sphi %s1131, %s1131
            %s1147 = sphi %s1132, %s1132
          $region767: #{tpu_custom_call.1} parent=763 // loop_header_branch
            %1144 = sbr.rel (%p1142) target = $region771
          $region768: #{tpu_custom_call.1} parent=763 // loop_body
            %v1148 = vld [vmem:[%s1146] sm:%s1139]
            %1149 = vst [vmem:[%s1147] sm:%s1139] %v1148
          $region769: #{tpu_custom_call.1} parent=763 // loop_footer
            %s1145 = sadd.s32 1, %s1141
          $region770: #{tpu_custom_call.1} parent=763 // loop_footer_branch
            %1140 = sbr.rel target = $region766
          $region771: #{tpu_custom_call.1} parent=763 // loop_exit
            _
        $region764: #{tpu_custom_call.1} parent=35 // pred_fallthru
          _
        // Predicated region
        $region783: #{tpu_custom_call.1} parent=35 // pred_check
          _
        $region784: #{tpu_custom_call.1} parent=35 // pred_check_branch
          %1166 = sbr.rel (0) target = $region786
        $region785: #{tpu_custom_call.1} parent=35 // pred_region
          %1167 = vsyncadd %s1133, 16
        $region786: #{tpu_custom_call.1} parent=35 // pred_fallthru
          _
        %s1168 = sadd.s32 %s226, 3
        %s1169 = sld [smem:[#allocation5 + %s1168]]
        %s1170 = scalar_lea.vmem %s1, %s1169
        %s1171 = scalar_lea.vmem [#allocation2], 25
        %s1172 = scalar_lea.sflag [#allocation3], 25
        // Predicated region
        $region787: #{tpu_custom_call.1} parent=35 // pred_check
          _
        $region788: #{tpu_custom_call.1} parent=35 // pred_check_branch
          %1174 = sbr.rel target = $region790
        $region789: #{tpu_custom_call.1} parent=35 // pred_region
          // Predicated region
          $region802: #{tpu_custom_call.1} parent=789 // pred_check
            _
          $region803: #{tpu_custom_call.1} parent=789 // pred_check_branch
            %1190 = sbr.rel (0) target = $region805
          $region804: #{tpu_custom_call.1} parent=789 // pred_region
            %s1192 = ssub.s32 2, 1
            loop: start=0, step=1, limit=1
            $region806: #{tpu_custom_call.1} parent=804 // loop_pre_header
              _
            $region807: #{tpu_custom_call.1} parent=804 // loop_header
              %s1194 = sphi 0, %s1198
              %p1195 = scmp.ge.s32.totalorder %s1194, 1
              %s1199 = sphi %s1170, %s1170
              %s1200 = sphi %s1171, %s1171
            $region808: #{tpu_custom_call.1} parent=804 // loop_header_branch
              %1197 = sbr.rel (%p1195) target = $region812
            $region809: #{tpu_custom_call.1} parent=804 // loop_body
              %v1201 = vld [vmem:[%s1199] sm:%s1192]
              %1202 = vst [vmem:[%s1200] sm:%s1192] %v1201
            $region810: #{tpu_custom_call.1} parent=804 // loop_footer
              %s1198 = sadd.s32 1, %s1194
            $region811: #{tpu_custom_call.1} parent=804 // loop_footer_branch
              %1193 = sbr.rel target = $region807
            $region812: #{tpu_custom_call.1} parent=804 // loop_exit
              _
          $region805: #{tpu_custom_call.1} parent=789 // pred_fallthru
            _
        $region790: #{tpu_custom_call.1} parent=35 // pred_fallthru
          _
        // Predicated region
        $region791: #{tpu_custom_call.1} parent=35 // pred_check
          _
        $region792: #{tpu_custom_call.1} parent=35 // pred_check_branch
          %1176 = sbr.rel (0) target = $region794
        $region793: #{tpu_custom_call.1} parent=35 // pred_region
          %s1178 = ssub.s32 2, 1
          loop: start=0, step=1, limit=1
          $region795: #{tpu_custom_call.1} parent=793 // loop_pre_header
            _
          $region796: #{tpu_custom_call.1} parent=793 // loop_header
            %s1180 = sphi 0, %s1184
            %p1181 = scmp.ge.s32.totalorder %s1180, 1
            %s1185 = sphi %s1170, %s1170
            %s1186 = sphi %s1171, %s1171
          $region797: #{tpu_custom_call.1} parent=793 // loop_header_branch
            %1183 = sbr.rel (%p1181) target = $region801
          $region798: #{tpu_custom_call.1} parent=793 // loop_body
            %v1187 = vld [vmem:[%s1185] sm:%s1178]
            %1188 = vst [vmem:[%s1186] sm:%s1178] %v1187
          $region799: #{tpu_custom_call.1} parent=793 // loop_footer
            %s1184 = sadd.s32 1, %s1180
          $region800: #{tpu_custom_call.1} parent=793 // loop_footer_branch
            %1179 = sbr.rel target = $region796
          $region801: #{tpu_custom_call.1} parent=793 // loop_exit
            _
        $region794: #{tpu_custom_call.1} parent=35 // pred_fallthru
          _
        // Predicated region
        $region813: #{tpu_custom_call.1} parent=35 // pred_check
          _
        $region814: #{tpu_custom_call.1} parent=35 // pred_check_branch
          %1205 = sbr.rel (0) target = $region816
        $region815: #{tpu_custom_call.1} parent=35 // pred_region
          %1206 = vsyncadd %s1172, 16
        $region816: #{tpu_custom_call.1} parent=35 // pred_fallthru
          _
        %s1207 = sadd.s32 %s266, 3
        %s1208 = sld [smem:[#allocation5 + %s1207]]
        %s1209 = scalar_lea.vmem %s1, %s1208
        %s1210 = scalar_lea.vmem [#allocation2], 26
        %s1211 = scalar_lea.sflag [#allocation3], 26
        // Predicated region
        $region817: #{tpu_custom_call.1} parent=35 // pred_check
          _
        $region818: #{tpu_custom_call.1} parent=35 // pred_check_branch
          %1213 = sbr.rel target = $region820
        $region819: #{tpu_custom_call.1} parent=35 // pred_region
          // Predicated region
          $region832: #{tpu_custom_call.1} parent=819 // pred_check
            _
          $region833: #{tpu_custom_call.1} parent=819 // pred_check_branch
            %1229 = sbr.rel (0) target = $region835
          $region834: #{tpu_custom_call.1} parent=819 // pred_region
            %s1231 = ssub.s32 2, 1
            loop: start=0, step=1, limit=1
            $region836: #{tpu_custom_call.1} parent=834 // loop_pre_header
              _
            $region837: #{tpu_custom_call.1} parent=834 // loop_header
              %s1233 = sphi 0, %s1237
              %p1234 = scmp.ge.s32.totalorder %s1233, 1
              %s1238 = sphi %s1209, %s1209
              %s1239 = sphi %s1210, %s1210
            $region838: #{tpu_custom_call.1} parent=834 // loop_header_branch
              %1236 = sbr.rel (%p1234) target = $region842
            $region839: #{tpu_custom_call.1} parent=834 // loop_body
              %v1240 = vld [vmem:[%s1238] sm:%s1231]
              %1241 = vst [vmem:[%s1239] sm:%s1231] %v1240
            $region840: #{tpu_custom_call.1} parent=834 // loop_footer
              %s1237 = sadd.s32 1, %s1233
            $region841: #{tpu_custom_call.1} parent=834 // loop_footer_branch
              %1232 = sbr.rel target = $region837
            $region842: #{tpu_custom_call.1} parent=834 // loop_exit
              _
          $region835: #{tpu_custom_call.1} parent=819 // pred_fallthru
            _
        $region820: #{tpu_custom_call.1} parent=35 // pred_fallthru
          _
        // Predicated region
        $region821: #{tpu_custom_call.1} parent=35 // pred_check
          _
        $region822: #{tpu_custom_call.1} parent=35 // pred_check_branch
          %1215 = sbr.rel (0) target = $region824
        $region823: #{tpu_custom_call.1} parent=35 // pred_region
          %s1217 = ssub.s32 2, 1
          loop: start=0, step=1, limit=1
          $region825: #{tpu_custom_call.1} parent=823 // loop_pre_header
            _
          $region826: #{tpu_custom_call.1} parent=823 // loop_header
            %s1219 = sphi 0, %s1223
            %p1220 = scmp.ge.s32.totalorder %s1219, 1
            %s1224 = sphi %s1209, %s1209
            %s1225 = sphi %s1210, %s1210
          $region827: #{tpu_custom_call.1} parent=823 // loop_header_branch
            %1222 = sbr.rel (%p1220) target = $region831
          $region828: #{tpu_custom_call.1} parent=823 // loop_body
            %v1226 = vld [vmem:[%s1224] sm:%s1217]
            %1227 = vst [vmem:[%s1225] sm:%s1217] %v1226
          $region829: #{tpu_custom_call.1} parent=823 // loop_footer
            %s1223 = sadd.s32 1, %s1219
          $region830: #{tpu_custom_call.1} parent=823 // loop_footer_branch
            %1218 = sbr.rel target = $region826
          $region831: #{tpu_custom_call.1} parent=823 // loop_exit
            _
        $region824: #{tpu_custom_call.1} parent=35 // pred_fallthru
          _
        // Predicated region
        $region843: #{tpu_custom_call.1} parent=35 // pred_check
          _
        $region844: #{tpu_custom_call.1} parent=35 // pred_check_branch
          %1244 = sbr.rel (0) target = $region846
        $region845: #{tpu_custom_call.1} parent=35 // pred_region
          %1245 = vsyncadd %s1211, 16
        $region846: #{tpu_custom_call.1} parent=35 // pred_fallthru
          _
        %s1246 = sadd.s32 %s306, 3
        %s1247 = sld [smem:[#allocation5 + %s1246]]
        %s1248 = scalar_lea.vmem %s1, %s1247
        %s1249 = scalar_lea.vmem [#allocation2], 27
        %s1250 = scalar_lea.sflag [#allocation3], 27
        // Predicated region
        $region847: #{tpu_custom_call.1} parent=35 // pred_check
          _
        $region848: #{tpu_custom_call.1} parent=35 // pred_check_branch
          %1252 = sbr.rel target = $region850
        $region849: #{tpu_custom_call.1} parent=35 // pred_region
          // Predicated region
          $region862: #{tpu_custom_call.1} parent=849 // pred_check
            _
          $region863: #{tpu_custom_call.1} parent=849 // pred_check_branch
            %1268 = sbr.rel (0) target = $region865
          $region864: #{tpu_custom_call.1} parent=849 // pred_region
            %s1270 = ssub.s32 2, 1
            loop: start=0, step=1, limit=1
            $region866: #{tpu_custom_call.1} parent=864 // loop_pre_header
              _
            $region867: #{tpu_custom_call.1} parent=864 // loop_header
              %s1272 = sphi 0, %s1276
              %p1273 = scmp.ge.s32.totalorder %s1272, 1
              %s1277 = sphi %s1248, %s1248
              %s1278 = sphi %s1249, %s1249
            $region868: #{tpu_custom_call.1} parent=864 // loop_header_branch
              %1275 = sbr.rel (%p1273) target = $region872
            $region869: #{tpu_custom_call.1} parent=864 // loop_body
              %v1279 = vld [vmem:[%s1277] sm:%s1270]
              %1280 = vst [vmem:[%s1278] sm:%s1270] %v1279
            $region870: #{tpu_custom_call.1} parent=864 // loop_footer
              %s1276 = sadd.s32 1, %s1272
            $region871: #{tpu_custom_call.1} parent=864 // loop_footer_branch
              %1271 = sbr.rel target = $region867
            $region872: #{tpu_custom_call.1} parent=864 // loop_exit
              _
          $region865: #{tpu_custom_call.1} parent=849 // pred_fallthru
            _
        $region850: #{tpu_custom_call.1} parent=35 // pred_fallthru
          _
        // Predicated region
        $region851: #{tpu_custom_call.1} parent=35 // pred_check
          _
        $region852: #{tpu_custom_call.1} parent=35 // pred_check_branch
          %1254 = sbr.rel (0) target = $region854
        $region853: #{tpu_custom_call.1} parent=35 // pred_region
          %s1256 = ssub.s32 2, 1
          loop: start=0, step=1, limit=1
          $region855: #{tpu_custom_call.1} parent=853 // loop_pre_header
            _
          $region856: #{tpu_custom_call.1} parent=853 // loop_header
            %s1258 = sphi 0, %s1262
            %p1259 = scmp.ge.s32.totalorder %s1258, 1
            %s1263 = sphi %s1248, %s1248
            %s1264 = sphi %s1249, %s1249
          $region857: #{tpu_custom_call.1} parent=853 // loop_header_branch
            %1261 = sbr.rel (%p1259) target = $region861
          $region858: #{tpu_custom_call.1} parent=853 // loop_body
            %v1265 = vld [vmem:[%s1263] sm:%s1256]
            %1266 = vst [vmem:[%s1264] sm:%s1256] %v1265
          $region859: #{tpu_custom_call.1} parent=853 // loop_footer
            %s1262 = sadd.s32 1, %s1258
          $region860: #{tpu_custom_call.1} parent=853 // loop_footer_branch
            %1257 = sbr.rel target = $region856
          $region861: #{tpu_custom_call.1} parent=853 // loop_exit
            _
        $region854: #{tpu_custom_call.1} parent=35 // pred_fallthru
          _
        // Predicated region
        $region873: #{tpu_custom_call.1} parent=35 // pred_check
          _
        $region874: #{tpu_custom_call.1} parent=35 // pred_check_branch
          %1283 = sbr.rel (0) target = $region876
        $region875: #{tpu_custom_call.1} parent=35 // pred_region
          %1284 = vsyncadd %s1250, 16
        $region876: #{tpu_custom_call.1} parent=35 // pred_fallthru
          _
        %s1285 = sadd.s32 %s346, 3
        %s1286 = sld [smem:[#allocation5 + %s1285]]
        %s1287 = scalar_lea.vmem %s1, %s1286
        %s1288 = scalar_lea.vmem [#allocation2], 28
        %s1289 = scalar_lea.sflag [#allocation3], 28
        // Predicated region
        $region877: #{tpu_custom_call.1} parent=35 // pred_check
          _
        $region878: #{tpu_custom_call.1} parent=35 // pred_check_branch
          %1291 = sbr.rel target = $region880
        $region879: #{tpu_custom_call.1} parent=35 // pred_region
          // Predicated region
          $region892: #{tpu_custom_call.1} parent=879 // pred_check
            _
          $region893: #{tpu_custom_call.1} parent=879 // pred_check_branch
            %1307 = sbr.rel (0) target = $region895
          $region894: #{tpu_custom_call.1} parent=879 // pred_region
            %s1309 = ssub.s32 2, 1
            loop: start=0, step=1, limit=1
            $region896: #{tpu_custom_call.1} parent=894 // loop_pre_header
              _
            $region897: #{tpu_custom_call.1} parent=894 // loop_header
              %s1311 = sphi 0, %s1315
              %p1312 = scmp.ge.s32.totalorder %s1311, 1
              %s1316 = sphi %s1287, %s1287
              %s1317 = sphi %s1288, %s1288
            $region898: #{tpu_custom_call.1} parent=894 // loop_header_branch
              %1314 = sbr.rel (%p1312) target = $region902
            $region899: #{tpu_custom_call.1} parent=894 // loop_body
              %v1318 = vld [vmem:[%s1316] sm:%s1309]
              %1319 = vst [vmem:[%s1317] sm:%s1309] %v1318
            $region900: #{tpu_custom_call.1} parent=894 // loop_footer
              %s1315 = sadd.s32 1, %s1311
            $region901: #{tpu_custom_call.1} parent=894 // loop_footer_branch
              %1310 = sbr.rel target = $region897
            $region902: #{tpu_custom_call.1} parent=894 // loop_exit
              _
          $region895: #{tpu_custom_call.1} parent=879 // pred_fallthru
            _
        $region880: #{tpu_custom_call.1} parent=35 // pred_fallthru
          _
        // Predicated region
        $region881: #{tpu_custom_call.1} parent=35 // pred_check
          _
        $region882: #{tpu_custom_call.1} parent=35 // pred_check_branch
          %1293 = sbr.rel (0) target = $region884
        $region883: #{tpu_custom_call.1} parent=35 // pred_region
          %s1295 = ssub.s32 2, 1
          loop: start=0, step=1, limit=1
          $region885: #{tpu_custom_call.1} parent=883 // loop_pre_header
            _
          $region886: #{tpu_custom_call.1} parent=883 // loop_header
            %s1297 = sphi 0, %s1301
            %p1298 = scmp.ge.s32.totalorder %s1297, 1
            %s1302 = sphi %s1287, %s1287
            %s1303 = sphi %s1288, %s1288
          $region887: #{tpu_custom_call.1} parent=883 // loop_header_branch
            %1300 = sbr.rel (%p1298) target = $region891
          $region888: #{tpu_custom_call.1} parent=883 // loop_body
            %v1304 = vld [vmem:[%s1302] sm:%s1295]
            %1305 = vst [vmem:[%s1303] sm:%s1295] %v1304
          $region889: #{tpu_custom_call.1} parent=883 // loop_footer
            %s1301 = sadd.s32 1, %s1297
          $region890: #{tpu_custom_call.1} parent=883 // loop_footer_branch
            %1296 = sbr.rel target = $region886
          $region891: #{tpu_custom_call.1} parent=883 // loop_exit
            _
        $region884: #{tpu_custom_call.1} parent=35 // pred_fallthru
          _
        // Predicated region
        $region903: #{tpu_custom_call.1} parent=35 // pred_check
          _
        $region904: #{tpu_custom_call.1} parent=35 // pred_check_branch
          %1322 = sbr.rel (0) target = $region906
        $region905: #{tpu_custom_call.1} parent=35 // pred_region
          %1323 = vsyncadd %s1289, 16
        $region906: #{tpu_custom_call.1} parent=35 // pred_fallthru
          _
        %s1324 = sadd.s32 %s386, 3
        %s1325 = sld [smem:[#allocation5 + %s1324]]
        %s1326 = scalar_lea.vmem %s1, %s1325
        %s1327 = scalar_lea.vmem [#allocation2], 29
        %s1328 = scalar_lea.sflag [#allocation3], 29
        // Predicated region
        $region907: #{tpu_custom_call.1} parent=35 // pred_check
          _
        $region908: #{tpu_custom_call.1} parent=35 // pred_check_branch
          %1330 = sbr.rel target = $region910
        $region909: #{tpu_custom_call.1} parent=35 // pred_region
          // Predicated region
          $region922: #{tpu_custom_call.1} parent=909 // pred_check
            _
          $region923: #{tpu_custom_call.1} parent=909 // pred_check_branch
            %1346 = sbr.rel (0) target = $region925
          $region924: #{tpu_custom_call.1} parent=909 // pred_region
            %s1348 = ssub.s32 2, 1
            loop: start=0, step=1, limit=1
            $region926: #{tpu_custom_call.1} parent=924 // loop_pre_header
              _
            $region927: #{tpu_custom_call.1} parent=924 // loop_header
              %s1350 = sphi 0, %s1354
              %p1351 = scmp.ge.s32.totalorder %s1350, 1
              %s1355 = sphi %s1326, %s1326
              %s1356 = sphi %s1327, %s1327
            $region928: #{tpu_custom_call.1} parent=924 // loop_header_branch
              %1353 = sbr.rel (%p1351) target = $region932
            $region929: #{tpu_custom_call.1} parent=924 // loop_body
              %v1357 = vld [vmem:[%s1355] sm:%s1348]
              %1358 = vst [vmem:[%s1356] sm:%s1348] %v1357
            $region930: #{tpu_custom_call.1} parent=924 // loop_footer
              %s1354 = sadd.s32 1, %s1350
            $region931: #{tpu_custom_call.1} parent=924 // loop_footer_branch
              %1349 = sbr.rel target = $region927
            $region932: #{tpu_custom_call.1} parent=924 // loop_exit
              _
          $region925: #{tpu_custom_call.1} parent=909 // pred_fallthru
            _
        $region910: #{tpu_custom_call.1} parent=35 // pred_fallthru
          _
        // Predicated region
        $region911: #{tpu_custom_call.1} parent=35 // pred_check
          _
        $region912: #{tpu_custom_call.1} parent=35 // pred_check_branch
          %1332 = sbr.rel (0) target = $region914
        $region913: #{tpu_custom_call.1} parent=35 // pred_region
          %s1334 = ssub.s32 2, 1
          loop: start=0, step=1, limit=1
          $region915: #{tpu_custom_call.1} parent=913 // loop_pre_header
            _
          $region916: #{tpu_custom_call.1} parent=913 // loop_header
            %s1336 = sphi 0, %s1340
            %p1337 = scmp.ge.s32.totalorder %s1336, 1
            %s1341 = sphi %s1326, %s1326
            %s1342 = sphi %s1327, %s1327
          $region917: #{tpu_custom_call.1} parent=913 // loop_header_branch
            %1339 = sbr.rel (%p1337) target = $region921
          $region918: #{tpu_custom_call.1} parent=913 // loop_body
            %v1343 = vld [vmem:[%s1341] sm:%s1334]
            %1344 = vst [vmem:[%s1342] sm:%s1334] %v1343
          $region919: #{tpu_custom_call.1} parent=913 // loop_footer
            %s1340 = sadd.s32 1, %s1336
          $region920: #{tpu_custom_call.1} parent=913 // loop_footer_branch
            %1335 = sbr.rel target = $region916
          $region921: #{tpu_custom_call.1} parent=913 // loop_exit
            _
        $region914: #{tpu_custom_call.1} parent=35 // pred_fallthru
          _
        // Predicated region
        $region933: #{tpu_custom_call.1} parent=35 // pred_check
          _
        $region934: #{tpu_custom_call.1} parent=35 // pred_check_branch
          %1361 = sbr.rel (0) target = $region936
        $region935: #{tpu_custom_call.1} parent=35 // pred_region
          %1362 = vsyncadd %s1328, 16
        $region936: #{tpu_custom_call.1} parent=35 // pred_fallthru
          _
        %s1363 = sadd.s32 %s426, 3
        %s1364 = sld [smem:[#allocation5 + %s1363]]
        %s1365 = scalar_lea.vmem %s1, %s1364
        %s1366 = scalar_lea.vmem [#allocation2], 30
        %s1367 = scalar_lea.sflag [#allocation3], 30
        // Predicated region
        $region937: #{tpu_custom_call.1} parent=35 // pred_check
          _
        $region938: #{tpu_custom_call.1} parent=35 // pred_check_branch
          %1369 = sbr.rel target = $region940
        $region939: #{tpu_custom_call.1} parent=35 // pred_region
          // Predicated region
          $region952: #{tpu_custom_call.1} parent=939 // pred_check
            _
          $region953: #{tpu_custom_call.1} parent=939 // pred_check_branch
            %1385 = sbr.rel (0) target = $region955
          $region954: #{tpu_custom_call.1} parent=939 // pred_region
            %s1387 = ssub.s32 2, 1
            loop: start=0, step=1, limit=1
            $region956: #{tpu_custom_call.1} parent=954 // loop_pre_header
              _
            $region957: #{tpu_custom_call.1} parent=954 // loop_header
              %s1389 = sphi 0, %s1393
              %p1390 = scmp.ge.s32.totalorder %s1389, 1
              %s1394 = sphi %s1365, %s1365
              %s1395 = sphi %s1366, %s1366
            $region958: #{tpu_custom_call.1} parent=954 // loop_header_branch
              %1392 = sbr.rel (%p1390) target = $region962
            $region959: #{tpu_custom_call.1} parent=954 // loop_body
              %v1396 = vld [vmem:[%s1394] sm:%s1387]
              %1397 = vst [vmem:[%s1395] sm:%s1387] %v1396
            $region960: #{tpu_custom_call.1} parent=954 // loop_footer
              %s1393 = sadd.s32 1, %s1389
            $region961: #{tpu_custom_call.1} parent=954 // loop_footer_branch
              %1388 = sbr.rel target = $region957
            $region962: #{tpu_custom_call.1} parent=954 // loop_exit
              _
          $region955: #{tpu_custom_call.1} parent=939 // pred_fallthru
            _
        $region940: #{tpu_custom_call.1} parent=35 // pred_fallthru
          _
        // Predicated region
        $region941: #{tpu_custom_call.1} parent=35 // pred_check
          _
        $region942: #{tpu_custom_call.1} parent=35 // pred_check_branch
          %1371 = sbr.rel (0) target = $region944
        $region943: #{tpu_custom_call.1} parent=35 // pred_region
          %s1373 = ssub.s32 2, 1
          loop: start=0, step=1, limit=1
          $region945: #{tpu_custom_call.1} parent=943 // loop_pre_header
            _
          $region946: #{tpu_custom_call.1} parent=943 // loop_header
            %s1375 = sphi 0, %s1379
            %p1376 = scmp.ge.s32.totalorder %s1375, 1
            %s1380 = sphi %s1365, %s1365
            %s1381 = sphi %s1366, %s1366
          $region947: #{tpu_custom_call.1} parent=943 // loop_header_branch
            %1378 = sbr.rel (%p1376) target = $region951
          $region948: #{tpu_custom_call.1} parent=943 // loop_body
            %v1382 = vld [vmem:[%s1380] sm:%s1373]
            %1383 = vst [vmem:[%s1381] sm:%s1373] %v1382
          $region949: #{tpu_custom_call.1} parent=943 // loop_footer
            %s1379 = sadd.s32 1, %s1375
          $region950: #{tpu_custom_call.1} parent=943 // loop_footer_branch
            %1374 = sbr.rel target = $region946
          $region951: #{tpu_custom_call.1} parent=943 // loop_exit
            _
        $region944: #{tpu_custom_call.1} parent=35 // pred_fallthru
          _
        // Predicated region
        $region963: #{tpu_custom_call.1} parent=35 // pred_check
          _
        $region964: #{tpu_custom_call.1} parent=35 // pred_check_branch
          %1400 = sbr.rel (0) target = $region966
        $region965: #{tpu_custom_call.1} parent=35 // pred_region
          %1401 = vsyncadd %s1367, 16
        $region966: #{tpu_custom_call.1} parent=35 // pred_fallthru
          _
        %s1402 = sadd.s32 %s466, 3
        %s1403 = sld [smem:[#allocation5 + %s1402]]
        %s1404 = scalar_lea.vmem %s1, %s1403
        %s1405 = scalar_lea.vmem [#allocation2], 31
        %s1406 = scalar_lea.sflag [#allocation3], 31
        // Predicated region
        $region967: #{tpu_custom_call.1} parent=35 // pred_check
          _
        $region968: #{tpu_custom_call.1} parent=35 // pred_check_branch
          %1408 = sbr.rel target = $region970
        $region969: #{tpu_custom_call.1} parent=35 // pred_region
          // Predicated region
          $region982: #{tpu_custom_call.1} parent=969 // pred_check
            _
          $region983: #{tpu_custom_call.1} parent=969 // pred_check_branch
            %1424 = sbr.rel (0) target = $region985
          $region984: #{tpu_custom_call.1} parent=969 // pred_region
            %s1426 = ssub.s32 2, 1
            loop: start=0, step=1, limit=1
            $region986: #{tpu_custom_call.1} parent=984 // loop_pre_header
              _
            $region987: #{tpu_custom_call.1} parent=984 // loop_header
              %s1428 = sphi 0, %s1432
              %p1429 = scmp.ge.s32.totalorder %s1428, 1
              %s1433 = sphi %s1404, %s1404
              %s1434 = sphi %s1405, %s1405
            $region988: #{tpu_custom_call.1} parent=984 // loop_header_branch
              %1431 = sbr.rel (%p1429) target = $region992
            $region989: #{tpu_custom_call.1} parent=984 // loop_body
              %v1435 = vld [vmem:[%s1433] sm:%s1426]
              %1436 = vst [vmem:[%s1434] sm:%s1426] %v1435
            $region990: #{tpu_custom_call.1} parent=984 // loop_footer
              %s1432 = sadd.s32 1, %s1428
            $region991: #{tpu_custom_call.1} parent=984 // loop_footer_branch
              %1427 = sbr.rel target = $region987
            $region992: #{tpu_custom_call.1} parent=984 // loop_exit
              _
          $region985: #{tpu_custom_call.1} parent=969 // pred_fallthru
            _
        $region970: #{tpu_custom_call.1} parent=35 // pred_fallthru
          _
        // Predicated region
        $region971: #{tpu_custom_call.1} parent=35 // pred_check
          _
        $region972: #{tpu_custom_call.1} parent=35 // pred_check_branch
          %1410 = sbr.rel (0) target = $region974
        $region973: #{tpu_custom_call.1} parent=35 // pred_region
          %s1412 = ssub.s32 2, 1
          loop: start=0, step=1, limit=1
          $region975: #{tpu_custom_call.1} parent=973 // loop_pre_header
            _
          $region976: #{tpu_custom_call.1} parent=973 // loop_header
            %s1414 = sphi 0, %s1418
            %p1415 = scmp.ge.s32.totalorder %s1414, 1
            %s1419 = sphi %s1404, %s1404
            %s1420 = sphi %s1405, %s1405
          $region977: #{tpu_custom_call.1} parent=973 // loop_header_branch
            %1417 = sbr.rel (%p1415) target = $region981
          $region978: #{tpu_custom_call.1} parent=973 // loop_body
            %v1421 = vld [vmem:[%s1419] sm:%s1412]
            %1422 = vst [vmem:[%s1420] sm:%s1412] %v1421
          $region979: #{tpu_custom_call.1} parent=973 // loop_footer
            %s1418 = sadd.s32 1, %s1414
          $region980: #{tpu_custom_call.1} parent=973 // loop_footer_branch
            %1413 = sbr.rel target = $region976
          $region981: #{tpu_custom_call.1} parent=973 // loop_exit
            _
        $region974: #{tpu_custom_call.1} parent=35 // pred_fallthru
          _
        // Predicated region
        $region993: #{tpu_custom_call.1} parent=35 // pred_check
          _
        $region994: #{tpu_custom_call.1} parent=35 // pred_check_branch
          %1439 = sbr.rel (0) target = $region996
        $region995: #{tpu_custom_call.1} parent=35 // pred_region
          %1440 = vsyncadd %s1406, 16
        $region996: #{tpu_custom_call.1} parent=35 // pred_fallthru
          _
        %s1441 = sadd.s32 %s188, 4
        %s1442 = sld [smem:[#allocation5 + %s1441]]
        %s1443 = scalar_lea.vmem %s1, %s1442
        %s1444 = scalar_lea.vmem [#allocation2], 32
        %s1445 = scalar_lea.sflag [#allocation3], 32
        // Predicated region
        $region997: #{tpu_custom_call.1} parent=35 // pred_check
          _
        $region998: #{tpu_custom_call.1} parent=35 // pred_check_branch
          %1447 = sbr.rel target = $region1000
        $region999: #{tpu_custom_call.1} parent=35 // pred_region
          // Predicated region
          $region1012: #{tpu_custom_call.1} parent=999 // pred_check
            _
          $region1013: #{tpu_custom_call.1} parent=999 // pred_check_branch
            %1463 = sbr.rel (0) target = $region1015
          $region1014: #{tpu_custom_call.1} parent=999 // pred_region
            %s1465 = ssub.s32 2, 1
            loop: start=0, step=1, limit=1
            $region1016: #{tpu_custom_call.1} parent=1014 // loop_pre_header
              _
            $region1017: #{tpu_custom_call.1} parent=1014 // loop_header
              %s1467 = sphi 0, %s1471
              %p1468 = scmp.ge.s32.totalorder %s1467, 1
              %s1472 = sphi %s1443, %s1443
              %s1473 = sphi %s1444, %s1444
            $region1018: #{tpu_custom_call.1} parent=1014 // loop_header_branch
              %1470 = sbr.rel (%p1468) target = $region1022
            $region1019: #{tpu_custom_call.1} parent=1014 // loop_body
              %v1474 = vld [vmem:[%s1472] sm:%s1465]
              %1475 = vst [vmem:[%s1473] sm:%s1465] %v1474
            $region1020: #{tpu_custom_call.1} parent=1014 // loop_footer
              %s1471 = sadd.s32 1, %s1467
            $region1021: #{tpu_custom_call.1} parent=1014 // loop_footer_branch
              %1466 = sbr.rel target = $region1017
            $region1022: #{tpu_custom_call.1} parent=1014 // loop_exit
              _
          $region1015: #{tpu_custom_call.1} parent=999 // pred_fallthru
            _
        $region1000: #{tpu_custom_call.1} parent=35 // pred_fallthru
          _
        // Predicated region
        $region1001: #{tpu_custom_call.1} parent=35 // pred_check
          _
        $region1002: #{tpu_custom_call.1} parent=35 // pred_check_branch
          %1449 = sbr.rel (0) target = $region1004
        $region1003: #{tpu_custom_call.1} parent=35 // pred_region
          %s1451 = ssub.s32 2, 1
          loop: start=0, step=1, limit=1
          $region1005: #{tpu_custom_call.1} parent=1003 // loop_pre_header
            _
          $region1006: #{tpu_custom_call.1} parent=1003 // loop_header
            %s1453 = sphi 0, %s1457
            %p1454 = scmp.ge.s32.totalorder %s1453, 1
            %s1458 = sphi %s1443, %s1443
            %s1459 = sphi %s1444, %s1444
          $region1007: #{tpu_custom_call.1} parent=1003 // loop_header_branch
            %1456 = sbr.rel (%p1454) target = $region1011
          $region1008: #{tpu_custom_call.1} parent=1003 // loop_body
            %v1460 = vld [vmem:[%s1458] sm:%s1451]
            %1461 = vst [vmem:[%s1459] sm:%s1451] %v1460
          $region1009: #{tpu_custom_call.1} parent=1003 // loop_footer
            %s1457 = sadd.s32 1, %s1453
          $region1010: #{tpu_custom_call.1} parent=1003 // loop_footer_branch
            %1452 = sbr.rel target = $region1006
          $region1011: #{tpu_custom_call.1} parent=1003 // loop_exit
            _
        $region1004: #{tpu_custom_call.1} parent=35 // pred_fallthru
          _
        // Predicated region
        $region1023: #{tpu_custom_call.1} parent=35 // pred_check
          _
        $region1024: #{tpu_custom_call.1} parent=35 // pred_check_branch
          %1478 = sbr.rel (0) target = $region1026
        $region1025: #{tpu_custom_call.1} parent=35 // pred_region
          %1479 = vsyncadd %s1445, 16
        $region1026: #{tpu_custom_call.1} parent=35 // pred_fallthru
          _
        %s1480 = sadd.s32 %s226, 4
        %s1481 = sld [smem:[#allocation5 + %s1480]]
        %s1482 = scalar_lea.vmem %s1, %s1481
        %s1483 = scalar_lea.vmem [#allocation2], 33
        %s1484 = scalar_lea.sflag [#allocation3], 33
        // Predicated region
        $region1027: #{tpu_custom_call.1} parent=35 // pred_check
          _
        $region1028: #{tpu_custom_call.1} parent=35 // pred_check_branch
          %1486 = sbr.rel target = $region1030
        $region1029: #{tpu_custom_call.1} parent=35 // pred_region
          // Predicated region
          $region1042: #{tpu_custom_call.1} parent=1029 // pred_check
            _
          $region1043: #{tpu_custom_call.1} parent=1029 // pred_check_branch
            %1502 = sbr.rel (0) target = $region1045
          $region1044: #{tpu_custom_call.1} parent=1029 // pred_region
            %s1504 = ssub.s32 2, 1
            loop: start=0, step=1, limit=1
            $region1046: #{tpu_custom_call.1} parent=1044 // loop_pre_header
              _
            $region1047: #{tpu_custom_call.1} parent=1044 // loop_header
              %s1506 = sphi 0, %s1510
              %p1507 = scmp.ge.s32.totalorder %s1506, 1
              %s1511 = sphi %s1482, %s1482
              %s1512 = sphi %s1483, %s1483
            $region1048: #{tpu_custom_call.1} parent=1044 // loop_header_branch
              %1509 = sbr.rel (%p1507) target = $region1052
            $region1049: #{tpu_custom_call.1} parent=1044 // loop_body
              %v1513 = vld [vmem:[%s1511] sm:%s1504]
              %1514 = vst [vmem:[%s1512] sm:%s1504] %v1513
            $region1050: #{tpu_custom_call.1} parent=1044 // loop_footer
              %s1510 = sadd.s32 1, %s1506
            $region1051: #{tpu_custom_call.1} parent=1044 // loop_footer_branch
              %1505 = sbr.rel target = $region1047
            $region1052: #{tpu_custom_call.1} parent=1044 // loop_exit
              _
          $region1045: #{tpu_custom_call.1} parent=1029 // pred_fallthru
            _
        $region1030: #{tpu_custom_call.1} parent=35 // pred_fallthru
          _
        // Predicated region
        $region1031: #{tpu_custom_call.1} parent=35 // pred_check
          _
        $region1032: #{tpu_custom_call.1} parent=35 // pred_check_branch
          %1488 = sbr.rel (0) target = $region1034
        $region1033: #{tpu_custom_call.1} parent=35 // pred_region
          %s1490 = ssub.s32 2, 1
          loop: start=0, step=1, limit=1
          $region1035: #{tpu_custom_call.1} parent=1033 // loop_pre_header
            _
          $region1036: #{tpu_custom_call.1} parent=1033 // loop_header
            %s1492 = sphi 0, %s1496
            %p1493 = scmp.ge.s32.totalorder %s1492, 1
            %s1497 = sphi %s1482, %s1482
            %s1498 = sphi %s1483, %s1483
          $region1037: #{tpu_custom_call.1} parent=1033 // loop_header_branch
            %1495 = sbr.rel (%p1493) target = $region1041
          $region1038: #{tpu_custom_call.1} parent=1033 // loop_body
            %v1499 = vld [vmem:[%s1497] sm:%s1490]
            %1500 = vst [vmem:[%s1498] sm:%s1490] %v1499
          $region1039: #{tpu_custom_call.1} parent=1033 // loop_footer
            %s1496 = sadd.s32 1, %s1492
          $region1040: #{tpu_custom_call.1} parent=1033 // loop_footer_branch
            %1491 = sbr.rel target = $region1036
          $region1041: #{tpu_custom_call.1} parent=1033 // loop_exit
            _
        $region1034: #{tpu_custom_call.1} parent=35 // pred_fallthru
          _
        // Predicated region
        $region1053: #{tpu_custom_call.1} parent=35 // pred_check
          _
        $region1054: #{tpu_custom_call.1} parent=35 // pred_check_branch
          %1517 = sbr.rel (0) target = $region1056
        $region1055: #{tpu_custom_call.1} parent=35 // pred_region
          %1518 = vsyncadd %s1484, 16
        $region1056: #{tpu_custom_call.1} parent=35 // pred_fallthru
          _
        %s1519 = sadd.s32 %s266, 4
        %s1520 = sld [smem:[#allocation5 + %s1519]]
        %s1521 = scalar_lea.vmem %s1, %s1520
        %s1522 = scalar_lea.vmem [#allocation2], 34
        %s1523 = scalar_lea.sflag [#allocation3], 34
        // Predicated region
        $region1057: #{tpu_custom_call.1} parent=35 // pred_check
          _
        $region1058: #{tpu_custom_call.1} parent=35 // pred_check_branch
          %1525 = sbr.rel target = $region1060
        $region1059: #{tpu_custom_call.1} parent=35 // pred_region
          // Predicated region
          $region1072: #{tpu_custom_call.1} parent=1059 // pred_check
            _
          $region1073: #{tpu_custom_call.1} parent=1059 // pred_check_branch
            %1541 = sbr.rel (0) target = $region1075
          $region1074: #{tpu_custom_call.1} parent=1059 // pred_region
            %s1543 = ssub.s32 2, 1
            loop: start=0, step=1, limit=1
            $region1076: #{tpu_custom_call.1} parent=1074 // loop_pre_header
              _
            $region1077: #{tpu_custom_call.1} parent=1074 // loop_header
              %s1545 = sphi 0, %s1549
              %p1546 = scmp.ge.s32.totalorder %s1545, 1
              %s1550 = sphi %s1521, %s1521
              %s1551 = sphi %s1522, %s1522
            $region1078: #{tpu_custom_call.1} parent=1074 // loop_header_branch
              %1548 = sbr.rel (%p1546) target = $region1082
            $region1079: #{tpu_custom_call.1} parent=1074 // loop_body
              %v1552 = vld [vmem:[%s1550] sm:%s1543]
              %1553 = vst [vmem:[%s1551] sm:%s1543] %v1552
            $region1080: #{tpu_custom_call.1} parent=1074 // loop_footer
              %s1549 = sadd.s32 1, %s1545
            $region1081: #{tpu_custom_call.1} parent=1074 // loop_footer_branch
              %1544 = sbr.rel target = $region1077
            $region1082: #{tpu_custom_call.1} parent=1074 // loop_exit
              _
          $region1075: #{tpu_custom_call.1} parent=1059 // pred_fallthru
            _
        $region1060: #{tpu_custom_call.1} parent=35 // pred_fallthru
          _
        // Predicated region
        $region1061: #{tpu_custom_call.1} parent=35 // pred_check
          _
        $region1062: #{tpu_custom_call.1} parent=35 // pred_check_branch
          %1527 = sbr.rel (0) target = $region1064
        $region1063: #{tpu_custom_call.1} parent=35 // pred_region
          %s1529 = ssub.s32 2, 1
          loop: start=0, step=1, limit=1
          $region1065: #{tpu_custom_call.1} parent=1063 // loop_pre_header
            _
          $region1066: #{tpu_custom_call.1} parent=1063 // loop_header
            %s1531 = sphi 0, %s1535
            %p1532 = scmp.ge.s32.totalorder %s1531, 1
            %s1536 = sphi %s1521, %s1521
            %s1537 = sphi %s1522, %s1522
          $region1067: #{tpu_custom_call.1} parent=1063 // loop_header_branch
            %1534 = sbr.rel (%p1532) target = $region1071
          $region1068: #{tpu_custom_call.1} parent=1063 // loop_body
            %v1538 = vld [vmem:[%s1536] sm:%s1529]
            %1539 = vst [vmem:[%s1537] sm:%s1529] %v1538
          $region1069: #{tpu_custom_call.1} parent=1063 // loop_footer
            %s1535 = sadd.s32 1, %s1531
          $region1070: #{tpu_custom_call.1} parent=1063 // loop_footer_branch
            %1530 = sbr.rel target = $region1066
          $region1071: #{tpu_custom_call.1} parent=1063 // loop_exit
            _
        $region1064: #{tpu_custom_call.1} parent=35 // pred_fallthru
          _
        // Predicated region
        $region1083: #{tpu_custom_call.1} parent=35 // pred_check
          _
        $region1084: #{tpu_custom_call.1} parent=35 // pred_check_branch
          %1556 = sbr.rel (0) target = $region1086
        $region1085: #{tpu_custom_call.1} parent=35 // pred_region
          %1557 = vsyncadd %s1523, 16
        $region1086: #{tpu_custom_call.1} parent=35 // pred_fallthru
          _
        %s1558 = sadd.s32 %s306, 4
        %s1559 = sld [smem:[#allocation5 + %s1558]]
        %s1560 = scalar_lea.vmem %s1, %s1559
        %s1561 = scalar_lea.vmem [#allocation2], 35
        %s1562 = scalar_lea.sflag [#allocation3], 35
        // Predicated region
        $region1087: #{tpu_custom_call.1} parent=35 // pred_check
          _
        $region1088: #{tpu_custom_call.1} parent=35 // pred_check_branch
          %1564 = sbr.rel target = $region1090
        $region1089: #{tpu_custom_call.1} parent=35 // pred_region
          // Predicated region
          $region1102: #{tpu_custom_call.1} parent=1089 // pred_check
            _
          $region1103: #{tpu_custom_call.1} parent=1089 // pred_check_branch
            %1580 = sbr.rel (0) target = $region1105
          $region1104: #{tpu_custom_call.1} parent=1089 // pred_region
            %s1582 = ssub.s32 2, 1
            loop: start=0, step=1, limit=1
            $region1106: #{tpu_custom_call.1} parent=1104 // loop_pre_header
              _
            $region1107: #{tpu_custom_call.1} parent=1104 // loop_header
              %s1584 = sphi 0, %s1588
              %p1585 = scmp.ge.s32.totalorder %s1584, 1
              %s1589 = sphi %s1560, %s1560
              %s1590 = sphi %s1561, %s1561
            $region1108: #{tpu_custom_call.1} parent=1104 // loop_header_branch
              %1587 = sbr.rel (%p1585) target = $region1112
            $region1109: #{tpu_custom_call.1} parent=1104 // loop_body
              %v1591 = vld [vmem:[%s1589] sm:%s1582]
              %1592 = vst [vmem:[%s1590] sm:%s1582] %v1591
            $region1110: #{tpu_custom_call.1} parent=1104 // loop_footer
              %s1588 = sadd.s32 1, %s1584
            $region1111: #{tpu_custom_call.1} parent=1104 // loop_footer_branch
              %1583 = sbr.rel target = $region1107
            $region1112: #{tpu_custom_call.1} parent=1104 // loop_exit
              _
          $region1105: #{tpu_custom_call.1} parent=1089 // pred_fallthru
            _
        $region1090: #{tpu_custom_call.1} parent=35 // pred_fallthru
          _
        // Predicated region
        $region1091: #{tpu_custom_call.1} parent=35 // pred_check
          _
        $region1092: #{tpu_custom_call.1} parent=35 // pred_check_branch
          %1566 = sbr.rel (0) target = $region1094
        $region1093: #{tpu_custom_call.1} parent=35 // pred_region
          %s1568 = ssub.s32 2, 1
          loop: start=0, step=1, limit=1
          $region1095: #{tpu_custom_call.1} parent=1093 // loop_pre_header
            _
          $region1096: #{tpu_custom_call.1} parent=1093 // loop_header
            %s1570 = sphi 0, %s1574
            %p1571 = scmp.ge.s32.totalorder %s1570, 1
            %s1575 = sphi %s1560, %s1560
            %s1576 = sphi %s1561, %s1561
          $region1097: #{tpu_custom_call.1} parent=1093 // loop_header_branch
            %1573 = sbr.rel (%p1571) target = $region1101
          $region1098: #{tpu_custom_call.1} parent=1093 // loop_body
            %v1577 = vld [vmem:[%s1575] sm:%s1568]
            %1578 = vst [vmem:[%s1576] sm:%s1568] %v1577
          $region1099: #{tpu_custom_call.1} parent=1093 // loop_footer
            %s1574 = sadd.s32 1, %s1570
          $region1100: #{tpu_custom_call.1} parent=1093 // loop_footer_branch
            %1569 = sbr.rel target = $region1096
          $region1101: #{tpu_custom_call.1} parent=1093 // loop_exit
            _
        $region1094: #{tpu_custom_call.1} parent=35 // pred_fallthru
          _
        // Predicated region
        $region1113: #{tpu_custom_call.1} parent=35 // pred_check
          _
        $region1114: #{tpu_custom_call.1} parent=35 // pred_check_branch
          %1595 = sbr.rel (0) target = $region1116
        $region1115: #{tpu_custom_call.1} parent=35 // pred_region
          %1596 = vsyncadd %s1562, 16
        $region1116: #{tpu_custom_call.1} parent=35 // pred_fallthru
          _
        %s1597 = sadd.s32 %s346, 4
        %s1598 = sld [smem:[#allocation5 + %s1597]]
        %s1599 = scalar_lea.vmem %s1, %s1598
        %s1600 = scalar_lea.vmem [#allocation2], 36
        %s1601 = scalar_lea.sflag [#allocation3], 36
        // Predicated region
        $region1117: #{tpu_custom_call.1} parent=35 // pred_check
          _
        $region1118: #{tpu_custom_call.1} parent=35 // pred_check_branch
          %1603 = sbr.rel target = $region1120
        $region1119: #{tpu_custom_call.1} parent=35 // pred_region
          // Predicated region
          $region1132: #{tpu_custom_call.1} parent=1119 // pred_check
            _
          $region1133: #{tpu_custom_call.1} parent=1119 // pred_check_branch
            %1619 = sbr.rel (0) target = $region1135
          $region1134: #{tpu_custom_call.1} parent=1119 // pred_region
            %s1621 = ssub.s32 2, 1
            loop: start=0, step=1, limit=1
            $region1136: #{tpu_custom_call.1} parent=1134 // loop_pre_header
              _
            $region1137: #{tpu_custom_call.1} parent=1134 // loop_header
              %s1623 = sphi 0, %s1627
              %p1624 = scmp.ge.s32.totalorder %s1623, 1
              %s1628 = sphi %s1599, %s1599
              %s1629 = sphi %s1600, %s1600
            $region1138: #{tpu_custom_call.1} parent=1134 // loop_header_branch
              %1626 = sbr.rel (%p1624) target = $region1142
            $region1139: #{tpu_custom_call.1} parent=1134 // loop_body
              %v1630 = vld [vmem:[%s1628] sm:%s1621]
              %1631 = vst [vmem:[%s1629] sm:%s1621] %v1630
            $region1140: #{tpu_custom_call.1} parent=1134 // loop_footer
              %s1627 = sadd.s32 1, %s1623
            $region1141: #{tpu_custom_call.1} parent=1134 // loop_footer_branch
              %1622 = sbr.rel target = $region1137
            $region1142: #{tpu_custom_call.1} parent=1134 // loop_exit
              _
          $region1135: #{tpu_custom_call.1} parent=1119 // pred_fallthru
            _
        $region1120: #{tpu_custom_call.1} parent=35 // pred_fallthru
          _
        // Predicated region
        $region1121: #{tpu_custom_call.1} parent=35 // pred_check
          _
        $region1122: #{tpu_custom_call.1} parent=35 // pred_check_branch
          %1605 = sbr.rel (0) target = $region1124
        $region1123: #{tpu_custom_call.1} parent=35 // pred_region
          %s1607 = ssub.s32 2, 1
          loop: start=0, step=1, limit=1
          $region1125: #{tpu_custom_call.1} parent=1123 // loop_pre_header
            _
          $region1126: #{tpu_custom_call.1} parent=1123 // loop_header
            %s1609 = sphi 0, %s1613
            %p1610 = scmp.ge.s32.totalorder %s1609, 1
            %s1614 = sphi %s1599, %s1599
            %s1615 = sphi %s1600, %s1600
          $region1127: #{tpu_custom_call.1} parent=1123 // loop_header_branch
            %1612 = sbr.rel (%p1610) target = $region1131
          $region1128: #{tpu_custom_call.1} parent=1123 // loop_body
            %v1616 = vld [vmem:[%s1614] sm:%s1607]
            %1617 = vst [vmem:[%s1615] sm:%s1607] %v1616
          $region1129: #{tpu_custom_call.1} parent=1123 // loop_footer
            %s1613 = sadd.s32 1, %s1609
          $region1130: #{tpu_custom_call.1} parent=1123 // loop_footer_branch
            %1608 = sbr.rel target = $region1126
          $region1131: #{tpu_custom_call.1} parent=1123 // loop_exit
            _
        $region1124: #{tpu_custom_call.1} parent=35 // pred_fallthru
          _
        // Predicated region
        $region1143: #{tpu_custom_call.1} parent=35 // pred_check
          _
        $region1144: #{tpu_custom_call.1} parent=35 // pred_check_branch
          %1634 = sbr.rel (0) target = $region1146
        $region1145: #{tpu_custom_call.1} parent=35 // pred_region
          %1635 = vsyncadd %s1601, 16
        $region1146: #{tpu_custom_call.1} parent=35 // pred_fallthru
          _
        %s1636 = sadd.s32 %s386, 4
        %s1637 = sld [smem:[#allocation5 + %s1636]]
        %s1638 = scalar_lea.vmem %s1, %s1637
        %s1639 = scalar_lea.vmem [#allocation2], 37
        %s1640 = scalar_lea.sflag [#allocation3], 37
        // Predicated region
        $region1147: #{tpu_custom_call.1} parent=35 // pred_check
          _
        $region1148: #{tpu_custom_call.1} parent=35 // pred_check_branch
          %1642 = sbr.rel target = $region1150
        $region1149: #{tpu_custom_call.1} parent=35 // pred_region
          // Predicated region
          $region1162: #{tpu_custom_call.1} parent=1149 // pred_check
            _
          $region1163: #{tpu_custom_call.1} parent=1149 // pred_check_branch
            %1658 = sbr.rel (0) target = $region1165
          $region1164: #{tpu_custom_call.1} parent=1149 // pred_region
            %s1660 = ssub.s32 2, 1
            loop: start=0, step=1, limit=1
            $region1166: #{tpu_custom_call.1} parent=1164 // loop_pre_header
              _
            $region1167: #{tpu_custom_call.1} parent=1164 // loop_header
              %s1662 = sphi 0, %s1666
              %p1663 = scmp.ge.s32.totalorder %s1662, 1
              %s1667 = sphi %s1638, %s1638
              %s1668 = sphi %s1639, %s1639
            $region1168: #{tpu_custom_call.1} parent=1164 // loop_header_branch
              %1665 = sbr.rel (%p1663) target = $region1172
            $region1169: #{tpu_custom_call.1} parent=1164 // loop_body
              %v1669 = vld [vmem:[%s1667] sm:%s1660]
              %1670 = vst [vmem:[%s1668] sm:%s1660] %v1669
            $region1170: #{tpu_custom_call.1} parent=1164 // loop_footer
              %s1666 = sadd.s32 1, %s1662
            $region1171: #{tpu_custom_call.1} parent=1164 // loop_footer_branch
              %1661 = sbr.rel target = $region1167
            $region1172: #{tpu_custom_call.1} parent=1164 // loop_exit
              _
          $region1165: #{tpu_custom_call.1} parent=1149 // pred_fallthru
            _
        $region1150: #{tpu_custom_call.1} parent=35 // pred_fallthru
          _
        // Predicated region
        $region1151: #{tpu_custom_call.1} parent=35 // pred_check
          _
        $region1152: #{tpu_custom_call.1} parent=35 // pred_check_branch
          %1644 = sbr.rel (0) target = $region1154
        $region1153: #{tpu_custom_call.1} parent=35 // pred_region
          %s1646 = ssub.s32 2, 1
          loop: start=0, step=1, limit=1
          $region1155: #{tpu_custom_call.1} parent=1153 // loop_pre_header
            _
          $region1156: #{tpu_custom_call.1} parent=1153 // loop_header
            %s1648 = sphi 0, %s1652
            %p1649 = scmp.ge.s32.totalorder %s1648, 1
            %s1653 = sphi %s1638, %s1638
            %s1654 = sphi %s1639, %s1639
          $region1157: #{tpu_custom_call.1} parent=1153 // loop_header_branch
            %1651 = sbr.rel (%p1649) target = $region1161
          $region1158: #{tpu_custom_call.1} parent=1153 // loop_body
            %v1655 = vld [vmem:[%s1653] sm:%s1646]
            %1656 = vst [vmem:[%s1654] sm:%s1646] %v1655
          $region1159: #{tpu_custom_call.1} parent=1153 // loop_footer
            %s1652 = sadd.s32 1, %s1648
          $region1160: #{tpu_custom_call.1} parent=1153 // loop_footer_branch
            %1647 = sbr.rel target = $region1156
          $region1161: #{tpu_custom_call.1} parent=1153 // loop_exit
            _
        $region1154: #{tpu_custom_call.1} parent=35 // pred_fallthru
          _
        // Predicated region
        $region1173: #{tpu_custom_call.1} parent=35 // pred_check
          _
        $region1174: #{tpu_custom_call.1} parent=35 // pred_check_branch
          %1673 = sbr.rel (0) target = $region1176
        $region1175: #{tpu_custom_call.1} parent=35 // pred_region
          %1674 = vsyncadd %s1640, 16
        $region1176: #{tpu_custom_call.1} parent=35 // pred_fallthru
          _
        %s1675 = sadd.s32 %s426, 4
        %s1676 = sld [smem:[#allocation5 + %s1675]]
        %s1677 = scalar_lea.vmem %s1, %s1676
        %s1678 = scalar_lea.vmem [#allocation2], 38
        %s1679 = scalar_lea.sflag [#allocation3], 38
        // Predicated region
        $region1177: #{tpu_custom_call.1} parent=35 // pred_check
          _
        $region1178: #{tpu_custom_call.1} parent=35 // pred_check_branch
          %1681 = sbr.rel target = $region1180
        $region1179: #{tpu_custom_call.1} parent=35 // pred_region
          // Predicated region
          $region1192: #{tpu_custom_call.1} parent=1179 // pred_check
            _
          $region1193: #{tpu_custom_call.1} parent=1179 // pred_check_branch
            %1697 = sbr.rel (0) target = $region1195
          $region1194: #{tpu_custom_call.1} parent=1179 // pred_region
            %s1699 = ssub.s32 2, 1
            loop: start=0, step=1, limit=1
            $region1196: #{tpu_custom_call.1} parent=1194 // loop_pre_header
              _
            $region1197: #{tpu_custom_call.1} parent=1194 // loop_header
              %s1701 = sphi 0, %s1705
              %p1702 = scmp.ge.s32.totalorder %s1701, 1
              %s1706 = sphi %s1677, %s1677
              %s1707 = sphi %s1678, %s1678
            $region1198: #{tpu_custom_call.1} parent=1194 // loop_header_branch
              %1704 = sbr.rel (%p1702) target = $region1202
            $region1199: #{tpu_custom_call.1} parent=1194 // loop_body
              %v1708 = vld [vmem:[%s1706] sm:%s1699]
              %1709 = vst [vmem:[%s1707] sm:%s1699] %v1708
            $region1200: #{tpu_custom_call.1} parent=1194 // loop_footer
              %s1705 = sadd.s32 1, %s1701
            $region1201: #{tpu_custom_call.1} parent=1194 // loop_footer_branch
              %1700 = sbr.rel target = $region1197
            $region1202: #{tpu_custom_call.1} parent=1194 // loop_exit
              _
          $region1195: #{tpu_custom_call.1} parent=1179 // pred_fallthru
            _
        $region1180: #{tpu_custom_call.1} parent=35 // pred_fallthru
          _
        // Predicated region
        $region1181: #{tpu_custom_call.1} parent=35 // pred_check
          _
        $region1182: #{tpu_custom_call.1} parent=35 // pred_check_branch
          %1683 = sbr.rel (0) target = $region1184
        $region1183: #{tpu_custom_call.1} parent=35 // pred_region
          %s1685 = ssub.s32 2, 1
          loop: start=0, step=1, limit=1
          $region1185: #{tpu_custom_call.1} parent=1183 // loop_pre_header
            _
          $region1186: #{tpu_custom_call.1} parent=1183 // loop_header
            %s1687 = sphi 0, %s1691
            %p1688 = scmp.ge.s32.totalorder %s1687, 1
            %s1692 = sphi %s1677, %s1677
            %s1693 = sphi %s1678, %s1678
          $region1187: #{tpu_custom_call.1} parent=1183 // loop_header_branch
            %1690 = sbr.rel (%p1688) target = $region1191
          $region1188: #{tpu_custom_call.1} parent=1183 // loop_body
            %v1694 = vld [vmem:[%s1692] sm:%s1685]
            %1695 = vst [vmem:[%s1693] sm:%s1685] %v1694
          $region1189: #{tpu_custom_call.1} parent=1183 // loop_footer
            %s1691 = sadd.s32 1, %s1687
          $region1190: #{tpu_custom_call.1} parent=1183 // loop_footer_branch
            %1686 = sbr.rel target = $region1186
          $region1191: #{tpu_custom_call.1} parent=1183 // loop_exit
            _
        $region1184: #{tpu_custom_call.1} parent=35 // pred_fallthru
          _
        // Predicated region
        $region1203: #{tpu_custom_call.1} parent=35 // pred_check
          _
        $region1204: #{tpu_custom_call.1} parent=35 // pred_check_branch
          %1712 = sbr.rel (0) target = $region1206
        $region1205: #{tpu_custom_call.1} parent=35 // pred_region
          %1713 = vsyncadd %s1679, 16
        $region1206: #{tpu_custom_call.1} parent=35 // pred_fallthru
          _
        %s1714 = sadd.s32 %s466, 4
        %s1715 = sld [smem:[#allocation5 + %s1714]]
        %s1716 = scalar_lea.vmem %s1, %s1715
        %s1717 = scalar_lea.vmem [#allocation2], 39
        %s1718 = scalar_lea.sflag [#allocation3], 39
        // Predicated region
        $region1207: #{tpu_custom_call.1} parent=35 // pred_check
          _
        $region1208: #{tpu_custom_call.1} parent=35 // pred_check_branch
          %1720 = sbr.rel target = $region1210
        $region1209: #{tpu_custom_call.1} parent=35 // pred_region
          // Predicated region
          $region1222: #{tpu_custom_call.1} parent=1209 // pred_check
            _
          $region1223: #{tpu_custom_call.1} parent=1209 // pred_check_branch
            %1736 = sbr.rel (0) target = $region1225
          $region1224: #{tpu_custom_call.1} parent=1209 // pred_region
            %s1738 = ssub.s32 2, 1
            loop: start=0, step=1, limit=1
            $region1226: #{tpu_custom_call.1} parent=1224 // loop_pre_header
              _
            $region1227: #{tpu_custom_call.1} parent=1224 // loop_header
              %s1740 = sphi 0, %s1744
              %p1741 = scmp.ge.s32.totalorder %s1740, 1
              %s1745 = sphi %s1716, %s1716
              %s1746 = sphi %s1717, %s1717
            $region1228: #{tpu_custom_call.1} parent=1224 // loop_header_branch
              %1743 = sbr.rel (%p1741) target = $region1232
            $region1229: #{tpu_custom_call.1} parent=1224 // loop_body
              %v1747 = vld [vmem:[%s1745] sm:%s1738]
              %1748 = vst [vmem:[%s1746] sm:%s1738] %v1747
            $region1230: #{tpu_custom_call.1} parent=1224 // loop_footer
              %s1744 = sadd.s32 1, %s1740
            $region1231: #{tpu_custom_call.1} parent=1224 // loop_footer_branch
              %1739 = sbr.rel target = $region1227
            $region1232: #{tpu_custom_call.1} parent=1224 // loop_exit
              _
          $region1225: #{tpu_custom_call.1} parent=1209 // pred_fallthru
            _
        $region1210: #{tpu_custom_call.1} parent=35 // pred_fallthru
          _
        // Predicated region
        $region1211: #{tpu_custom_call.1} parent=35 // pred_check
          _
        $region1212: #{tpu_custom_call.1} parent=35 // pred_check_branch
          %1722 = sbr.rel (0) target = $region1214
        $region1213: #{tpu_custom_call.1} parent=35 // pred_region
          %s1724 = ssub.s32 2, 1
          loop: start=0, step=1, limit=1
          $region1215: #{tpu_custom_call.1} parent=1213 // loop_pre_header
            _
          $region1216: #{tpu_custom_call.1} parent=1213 // loop_header
            %s1726 = sphi 0, %s1730
            %p1727 = scmp.ge.s32.totalorder %s1726, 1
            %s1731 = sphi %s1716, %s1716
            %s1732 = sphi %s1717, %s1717
          $region1217: #{tpu_custom_call.1} parent=1213 // loop_header_branch
            %1729 = sbr.rel (%p1727) target = $region1221
          $region1218: #{tpu_custom_call.1} parent=1213 // loop_body
            %v1733 = vld [vmem:[%s1731] sm:%s1724]
            %1734 = vst [vmem:[%s1732] sm:%s1724] %v1733
          $region1219: #{tpu_custom_call.1} parent=1213 // loop_footer
            %s1730 = sadd.s32 1, %s1726
          $region1220: #{tpu_custom_call.1} parent=1213 // loop_footer_branch
            %1725 = sbr.rel target = $region1216
          $region1221: #{tpu_custom_call.1} parent=1213 // loop_exit
            _
        $region1214: #{tpu_custom_call.1} parent=35 // pred_fallthru
          _
        // Predicated region
        $region1233: #{tpu_custom_call.1} parent=35 // pred_check
          _
        $region1234: #{tpu_custom_call.1} parent=35 // pred_check_branch
          %1751 = sbr.rel (0) target = $region1236
        $region1235: #{tpu_custom_call.1} parent=35 // pred_region
          %1752 = vsyncadd %s1718, 16
        $region1236: #{tpu_custom_call.1} parent=35 // pred_fallthru
          _
        %s1753 = sadd.s32 %s188, 5
        %s1754 = sld [smem:[#allocation5 + %s1753]]
        %s1755 = scalar_lea.vmem %s1, %s1754
        %s1756 = scalar_lea.vmem [#allocation2], 40
        %s1757 = scalar_lea.sflag [#allocation3], 40
        // Predicated region
        $region1237: #{tpu_custom_call.1} parent=35 // pred_check
          _
        $region1238: #{tpu_custom_call.1} parent=35 // pred_check_branch
          %1759 = sbr.rel target = $region1240
        $region1239: #{tpu_custom_call.1} parent=35 // pred_region
          // Predicated region
          $region1252: #{tpu_custom_call.1} parent=1239 // pred_check
            _
          $region1253: #{tpu_custom_call.1} parent=1239 // pred_check_branch
            %1775 = sbr.rel (0) target = $region1255
          $region1254: #{tpu_custom_call.1} parent=1239 // pred_region
            %s1777 = ssub.s32 2, 1
            loop: start=0, step=1, limit=1
            $region1256: #{tpu_custom_call.1} parent=1254 // loop_pre_header
              _
            $region1257: #{tpu_custom_call.1} parent=1254 // loop_header
              %s1779 = sphi 0, %s1783
              %p1780 = scmp.ge.s32.totalorder %s1779, 1
              %s1784 = sphi %s1755, %s1755
              %s1785 = sphi %s1756, %s1756
            $region1258: #{tpu_custom_call.1} parent=1254 // loop_header_branch
              %1782 = sbr.rel (%p1780) target = $region1262
            $region1259: #{tpu_custom_call.1} parent=1254 // loop_body
              %v1786 = vld [vmem:[%s1784] sm:%s1777]
              %1787 = vst [vmem:[%s1785] sm:%s1777] %v1786
            $region1260: #{tpu_custom_call.1} parent=1254 // loop_footer
              %s1783 = sadd.s32 1, %s1779
            $region1261: #{tpu_custom_call.1} parent=1254 // loop_footer_branch
              %1778 = sbr.rel target = $region1257
            $region1262: #{tpu_custom_call.1} parent=1254 // loop_exit
              _
          $region1255: #{tpu_custom_call.1} parent=1239 // pred_fallthru
            _
        $region1240: #{tpu_custom_call.1} parent=35 // pred_fallthru
          _
        // Predicated region
        $region1241: #{tpu_custom_call.1} parent=35 // pred_check
          _
        $region1242: #{tpu_custom_call.1} parent=35 // pred_check_branch
          %1761 = sbr.rel (0) target = $region1244
        $region1243: #{tpu_custom_call.1} parent=35 // pred_region
          %s1763 = ssub.s32 2, 1
          loop: start=0, step=1, limit=1
          $region1245: #{tpu_custom_call.1} parent=1243 // loop_pre_header
            _
          $region1246: #{tpu_custom_call.1} parent=1243 // loop_header
            %s1765 = sphi 0, %s1769
            %p1766 = scmp.ge.s32.totalorder %s1765, 1
            %s1770 = sphi %s1755, %s1755
            %s1771 = sphi %s1756, %s1756
          $region1247: #{tpu_custom_call.1} parent=1243 // loop_header_branch
            %1768 = sbr.rel (%p1766) target = $region1251
          $region1248: #{tpu_custom_call.1} parent=1243 // loop_body
            %v1772 = vld [vmem:[%s1770] sm:%s1763]
            %1773 = vst [vmem:[%s1771] sm:%s1763] %v1772
          $region1249: #{tpu_custom_call.1} parent=1243 // loop_footer
            %s1769 = sadd.s32 1, %s1765
          $region1250: #{tpu_custom_call.1} parent=1243 // loop_footer_branch
            %1764 = sbr.rel target = $region1246
          $region1251: #{tpu_custom_call.1} parent=1243 // loop_exit
            _
        $region1244: #{tpu_custom_call.1} parent=35 // pred_fallthru
          _
        // Predicated region
        $region1263: #{tpu_custom_call.1} parent=35 // pred_check
          _
        $region1264: #{tpu_custom_call.1} parent=35 // pred_check_branch
          %1790 = sbr.rel (0) target = $region1266
        $region1265: #{tpu_custom_call.1} parent=35 // pred_region
          %1791 = vsyncadd %s1757, 16
        $region1266: #{tpu_custom_call.1} parent=35 // pred_fallthru
          _
        %s1792 = sadd.s32 %s226, 5
        %s1793 = sld [smem:[#allocation5 + %s1792]]
        %s1794 = scalar_lea.vmem %s1, %s1793
        %s1795 = scalar_lea.vmem [#allocation2], 41
        %s1796 = scalar_lea.sflag [#allocation3], 41
        // Predicated region
        $region1267: #{tpu_custom_call.1} parent=35 // pred_check
          _
        $region1268: #{tpu_custom_call.1} parent=35 // pred_check_branch
          %1798 = sbr.rel target = $region1270
        $region1269: #{tpu_custom_call.1} parent=35 // pred_region
          // Predicated region
          $region1282: #{tpu_custom_call.1} parent=1269 // pred_check
            _
          $region1283: #{tpu_custom_call.1} parent=1269 // pred_check_branch
            %1814 = sbr.rel (0) target = $region1285
          $region1284: #{tpu_custom_call.1} parent=1269 // pred_region
            %s1816 = ssub.s32 2, 1
            loop: start=0, step=1, limit=1
            $region1286: #{tpu_custom_call.1} parent=1284 // loop_pre_header
              _
            $region1287: #{tpu_custom_call.1} parent=1284 // loop_header
              %s1818 = sphi 0, %s1822
              %p1819 = scmp.ge.s32.totalorder %s1818, 1
              %s1823 = sphi %s1794, %s1794
              %s1824 = sphi %s1795, %s1795
            $region1288: #{tpu_custom_call.1} parent=1284 // loop_header_branch
              %1821 = sbr.rel (%p1819) target = $region1292
            $region1289: #{tpu_custom_call.1} parent=1284 // loop_body
              %v1825 = vld [vmem:[%s1823] sm:%s1816]
              %1826 = vst [vmem:[%s1824] sm:%s1816] %v1825
            $region1290: #{tpu_custom_call.1} parent=1284 // loop_footer
              %s1822 = sadd.s32 1, %s1818
            $region1291: #{tpu_custom_call.1} parent=1284 // loop_footer_branch
              %1817 = sbr.rel target = $region1287
            $region1292: #{tpu_custom_call.1} parent=1284 // loop_exit
              _
          $region1285: #{tpu_custom_call.1} parent=1269 // pred_fallthru
            _
        $region1270: #{tpu_custom_call.1} parent=35 // pred_fallthru
          _
        // Predicated region
        $region1271: #{tpu_custom_call.1} parent=35 // pred_check
          _
        $region1272: #{tpu_custom_call.1} parent=35 // pred_check_branch
          %1800 = sbr.rel (0) target = $region1274
        $region1273: #{tpu_custom_call.1} parent=35 // pred_region
          %s1802 = ssub.s32 2, 1
          loop: start=0, step=1, limit=1
          $region1275: #{tpu_custom_call.1} parent=1273 // loop_pre_header
            _
          $region1276: #{tpu_custom_call.1} parent=1273 // loop_header
            %s1804 = sphi 0, %s1808
            %p1805 = scmp.ge.s32.totalorder %s1804, 1
            %s1809 = sphi %s1794, %s1794
            %s1810 = sphi %s1795, %s1795
          $region1277: #{tpu_custom_call.1} parent=1273 // loop_header_branch
            %1807 = sbr.rel (%p1805) target = $region1281
          $region1278: #{tpu_custom_call.1} parent=1273 // loop_body
            %v1811 = vld [vmem:[%s1809] sm:%s1802]
            %1812 = vst [vmem:[%s1810] sm:%s1802] %v1811
          $region1279: #{tpu_custom_call.1} parent=1273 // loop_footer
            %s1808 = sadd.s32 1, %s1804
          $region1280: #{tpu_custom_call.1} parent=1273 // loop_footer_branch
            %1803 = sbr.rel target = $region1276
          $region1281: #{tpu_custom_call.1} parent=1273 // loop_exit
            _
        $region1274: #{tpu_custom_call.1} parent=35 // pred_fallthru
          _
        // Predicated region
        $region1293: #{tpu_custom_call.1} parent=35 // pred_check
          _
        $region1294: #{tpu_custom_call.1} parent=35 // pred_check_branch
          %1829 = sbr.rel (0) target = $region1296
        $region1295: #{tpu_custom_call.1} parent=35 // pred_region
          %1830 = vsyncadd %s1796, 16
        $region1296: #{tpu_custom_call.1} parent=35 // pred_fallthru
          _
        %s1831 = sadd.s32 %s266, 5
        %s1832 = sld [smem:[#allocation5 + %s1831]]
        %s1833 = scalar_lea.vmem %s1, %s1832
        %s1834 = scalar_lea.vmem [#allocation2], 42
        %s1835 = scalar_lea.sflag [#allocation3], 42
        // Predicated region
        $region1297: #{tpu_custom_call.1} parent=35 // pred_check
          _
        $region1298: #{tpu_custom_call.1} parent=35 // pred_check_branch
          %1837 = sbr.rel target = $region1300
        $region1299: #{tpu_custom_call.1} parent=35 // pred_region
          // Predicated region
          $region1312: #{tpu_custom_call.1} parent=1299 // pred_check
            _
          $region1313: #{tpu_custom_call.1} parent=1299 // pred_check_branch
            %1853 = sbr.rel (0) target = $region1315
          $region1314: #{tpu_custom_call.1} parent=1299 // pred_region
            %s1855 = ssub.s32 2, 1
            loop: start=0, step=1, limit=1
            $region1316: #{tpu_custom_call.1} parent=1314 // loop_pre_header
              _
            $region1317: #{tpu_custom_call.1} parent=1314 // loop_header
              %s1857 = sphi 0, %s1861
              %p1858 = scmp.ge.s32.totalorder %s1857, 1
              %s1862 = sphi %s1833, %s1833
              %s1863 = sphi %s1834, %s1834
            $region1318: #{tpu_custom_call.1} parent=1314 // loop_header_branch
              %1860 = sbr.rel (%p1858) target = $region1322
            $region1319: #{tpu_custom_call.1} parent=1314 // loop_body
              %v1864 = vld [vmem:[%s1862] sm:%s1855]
              %1865 = vst [vmem:[%s1863] sm:%s1855] %v1864
            $region1320: #{tpu_custom_call.1} parent=1314 // loop_footer
              %s1861 = sadd.s32 1, %s1857
            $region1321: #{tpu_custom_call.1} parent=1314 // loop_footer_branch
              %1856 = sbr.rel target = $region1317
            $region1322: #{tpu_custom_call.1} parent=1314 // loop_exit
              _
          $region1315: #{tpu_custom_call.1} parent=1299 // pred_fallthru
            _
        $region1300: #{tpu_custom_call.1} parent=35 // pred_fallthru
          _
        // Predicated region
        $region1301: #{tpu_custom_call.1} parent=35 // pred_check
          _
        $region1302: #{tpu_custom_call.1} parent=35 // pred_check_branch
          %1839 = sbr.rel (0) target = $region1304
        $region1303: #{tpu_custom_call.1} parent=35 // pred_region
          %s1841 = ssub.s32 2, 1
          loop: start=0, step=1, limit=1
          $region1305: #{tpu_custom_call.1} parent=1303 // loop_pre_header
            _
          $region1306: #{tpu_custom_call.1} parent=1303 // loop_header
            %s1843 = sphi 0, %s1847
            %p1844 = scmp.ge.s32.totalorder %s1843, 1
            %s1848 = sphi %s1833, %s1833
            %s1849 = sphi %s1834, %s1834
          $region1307: #{tpu_custom_call.1} parent=1303 // loop_header_branch
            %1846 = sbr.rel (%p1844) target = $region1311
          $region1308: #{tpu_custom_call.1} parent=1303 // loop_body
            %v1850 = vld [vmem:[%s1848] sm:%s1841]
            %1851 = vst [vmem:[%s1849] sm:%s1841] %v1850
          $region1309: #{tpu_custom_call.1} parent=1303 // loop_footer
            %s1847 = sadd.s32 1, %s1843
          $region1310: #{tpu_custom_call.1} parent=1303 // loop_footer_branch
            %1842 = sbr.rel target = $region1306
          $region1311: #{tpu_custom_call.1} parent=1303 // loop_exit
            _
        $region1304: #{tpu_custom_call.1} parent=35 // pred_fallthru
          _
        // Predicated region
        $region1323: #{tpu_custom_call.1} parent=35 // pred_check
          _
        $region1324: #{tpu_custom_call.1} parent=35 // pred_check_branch
          %1868 = sbr.rel (0) target = $region1326
        $region1325: #{tpu_custom_call.1} parent=35 // pred_region
          %1869 = vsyncadd %s1835, 16
        $region1326: #{tpu_custom_call.1} parent=35 // pred_fallthru
          _
        %s1870 = sadd.s32 %s306, 5
        %s1871 = sld [smem:[#allocation5 + %s1870]]
        %s1872 = scalar_lea.vmem %s1, %s1871
        %s1873 = scalar_lea.vmem [#allocation2], 43
        %s1874 = scalar_lea.sflag [#allocation3], 43
        // Predicated region
        $region1327: #{tpu_custom_call.1} parent=35 // pred_check
          _
        $region1328: #{tpu_custom_call.1} parent=35 // pred_check_branch
          %1876 = sbr.rel target = $region1330
        $region1329: #{tpu_custom_call.1} parent=35 // pred_region
          // Predicated region
          $region1342: #{tpu_custom_call.1} parent=1329 // pred_check
            _
          $region1343: #{tpu_custom_call.1} parent=1329 // pred_check_branch
            %1892 = sbr.rel (0) target = $region1345
          $region1344: #{tpu_custom_call.1} parent=1329 // pred_region
            %s1894 = ssub.s32 2, 1
            loop: start=0, step=1, limit=1
            $region1346: #{tpu_custom_call.1} parent=1344 // loop_pre_header
              _
            $region1347: #{tpu_custom_call.1} parent=1344 // loop_header
              %s1896 = sphi 0, %s1900
              %p1897 = scmp.ge.s32.totalorder %s1896, 1
              %s1901 = sphi %s1872, %s1872
              %s1902 = sphi %s1873, %s1873
            $region1348: #{tpu_custom_call.1} parent=1344 // loop_header_branch
              %1899 = sbr.rel (%p1897) target = $region1352
            $region1349: #{tpu_custom_call.1} parent=1344 // loop_body
              %v1903 = vld [vmem:[%s1901] sm:%s1894]
              %1904 = vst [vmem:[%s1902] sm:%s1894] %v1903
            $region1350: #{tpu_custom_call.1} parent=1344 // loop_footer
              %s1900 = sadd.s32 1, %s1896
            $region1351: #{tpu_custom_call.1} parent=1344 // loop_footer_branch
              %1895 = sbr.rel target = $region1347
            $region1352: #{tpu_custom_call.1} parent=1344 // loop_exit
              _
          $region1345: #{tpu_custom_call.1} parent=1329 // pred_fallthru
            _
        $region1330: #{tpu_custom_call.1} parent=35 // pred_fallthru
          _
        // Predicated region
        $region1331: #{tpu_custom_call.1} parent=35 // pred_check
          _
        $region1332: #{tpu_custom_call.1} parent=35 // pred_check_branch
          %1878 = sbr.rel (0) target = $region1334
        $region1333: #{tpu_custom_call.1} parent=35 // pred_region
          %s1880 = ssub.s32 2, 1
          loop: start=0, step=1, limit=1
          $region1335: #{tpu_custom_call.1} parent=1333 // loop_pre_header
            _
          $region1336: #{tpu_custom_call.1} parent=1333 // loop_header
            %s1882 = sphi 0, %s1886
            %p1883 = scmp.ge.s32.totalorder %s1882, 1
            %s1887 = sphi %s1872, %s1872
            %s1888 = sphi %s1873, %s1873
          $region1337: #{tpu_custom_call.1} parent=1333 // loop_header_branch
            %1885 = sbr.rel (%p1883) target = $region1341
          $region1338: #{tpu_custom_call.1} parent=1333 // loop_body
            %v1889 = vld [vmem:[%s1887] sm:%s1880]
            %1890 = vst [vmem:[%s1888] sm:%s1880] %v1889
          $region1339: #{tpu_custom_call.1} parent=1333 // loop_footer
            %s1886 = sadd.s32 1, %s1882
          $region1340: #{tpu_custom_call.1} parent=1333 // loop_footer_branch
            %1881 = sbr.rel target = $region1336
          $region1341: #{tpu_custom_call.1} parent=1333 // loop_exit
            _
        $region1334: #{tpu_custom_call.1} parent=35 // pred_fallthru
          _
        // Predicated region
        $region1353: #{tpu_custom_call.1} parent=35 // pred_check
          _
        $region1354: #{tpu_custom_call.1} parent=35 // pred_check_branch
          %1907 = sbr.rel (0) target = $region1356
        $region1355: #{tpu_custom_call.1} parent=35 // pred_region
          %1908 = vsyncadd %s1874, 16
        $region1356: #{tpu_custom_call.1} parent=35 // pred_fallthru
          _
        %s1909 = sadd.s32 %s346, 5
        %s1910 = sld [smem:[#allocation5 + %s1909]]
        %s1911 = scalar_lea.vmem %s1, %s1910
        %s1912 = scalar_lea.vmem [#allocation2], 44
        %s1913 = scalar_lea.sflag [#allocation3], 44
        // Predicated region
        $region1357: #{tpu_custom_call.1} parent=35 // pred_check
          _
        $region1358: #{tpu_custom_call.1} parent=35 // pred_check_branch
          %1915 = sbr.rel target = $region1360
        $region1359: #{tpu_custom_call.1} parent=35 // pred_region
          // Predicated region
          $region1372: #{tpu_custom_call.1} parent=1359 // pred_check
            _
          $region1373: #{tpu_custom_call.1} parent=1359 // pred_check_branch
            %1931 = sbr.rel (0) target = $region1375
          $region1374: #{tpu_custom_call.1} parent=1359 // pred_region
            %s1933 = ssub.s32 2, 1
            loop: start=0, step=1, limit=1
            $region1376: #{tpu_custom_call.1} parent=1374 // loop_pre_header
              _
            $region1377: #{tpu_custom_call.1} parent=1374 // loop_header
              %s1935 = sphi 0, %s1939
              %p1936 = scmp.ge.s32.totalorder %s1935, 1
              %s1940 = sphi %s1911, %s1911
              %s1941 = sphi %s1912, %s1912
            $region1378: #{tpu_custom_call.1} parent=1374 // loop_header_branch
              %1938 = sbr.rel (%p1936) target = $region1382
            $region1379: #{tpu_custom_call.1} parent=1374 // loop_body
              %v1942 = vld [vmem:[%s1940] sm:%s1933]
              %1943 = vst [vmem:[%s1941] sm:%s1933] %v1942
            $region1380: #{tpu_custom_call.1} parent=1374 // loop_footer
              %s1939 = sadd.s32 1, %s1935
            $region1381: #{tpu_custom_call.1} parent=1374 // loop_footer_branch
              %1934 = sbr.rel target = $region1377
            $region1382: #{tpu_custom_call.1} parent=1374 // loop_exit
              _
          $region1375: #{tpu_custom_call.1} parent=1359 // pred_fallthru
            _
        $region1360: #{tpu_custom_call.1} parent=35 // pred_fallthru
          _
        // Predicated region
        $region1361: #{tpu_custom_call.1} parent=35 // pred_check
          _
        $region1362: #{tpu_custom_call.1} parent=35 // pred_check_branch
          %1917 = sbr.rel (0) target = $region1364
        $region1363: #{tpu_custom_call.1} parent=35 // pred_region
          %s1919 = ssub.s32 2, 1
          loop: start=0, step=1, limit=1
          $region1365: #{tpu_custom_call.1} parent=1363 // loop_pre_header
            _
          $region1366: #{tpu_custom_call.1} parent=1363 // loop_header
            %s1921 = sphi 0, %s1925
            %p1922 = scmp.ge.s32.totalorder %s1921, 1
            %s1926 = sphi %s1911, %s1911
            %s1927 = sphi %s1912, %s1912
          $region1367: #{tpu_custom_call.1} parent=1363 // loop_header_branch
            %1924 = sbr.rel (%p1922) target = $region1371
          $region1368: #{tpu_custom_call.1} parent=1363 // loop_body
            %v1928 = vld [vmem:[%s1926] sm:%s1919]
            %1929 = vst [vmem:[%s1927] sm:%s1919] %v1928
          $region1369: #{tpu_custom_call.1} parent=1363 // loop_footer
            %s1925 = sadd.s32 1, %s1921
          $region1370: #{tpu_custom_call.1} parent=1363 // loop_footer_branch
            %1920 = sbr.rel target = $region1366
          $region1371: #{tpu_custom_call.1} parent=1363 // loop_exit
            _
        $region1364: #{tpu_custom_call.1} parent=35 // pred_fallthru
          _
        // Predicated region
        $region1383: #{tpu_custom_call.1} parent=35 // pred_check
          _
        $region1384: #{tpu_custom_call.1} parent=35 // pred_check_branch
          %1946 = sbr.rel (0) target = $region1386
        $region1385: #{tpu_custom_call.1} parent=35 // pred_region
          %1947 = vsyncadd %s1913, 16
        $region1386: #{tpu_custom_call.1} parent=35 // pred_fallthru
          _
        %s1948 = sadd.s32 %s386, 5
        %s1949 = sld [smem:[#allocation5 + %s1948]]
        %s1950 = scalar_lea.vmem %s1, %s1949
        %s1951 = scalar_lea.vmem [#allocation2], 45
        %s1952 = scalar_lea.sflag [#allocation3], 45
        // Predicated region
        $region1387: #{tpu_custom_call.1} parent=35 // pred_check
          _
        $region1388: #{tpu_custom_call.1} parent=35 // pred_check_branch
          %1954 = sbr.rel target = $region1390
        $region1389: #{tpu_custom_call.1} parent=35 // pred_region
          // Predicated region
          $region1402: #{tpu_custom_call.1} parent=1389 // pred_check
            _
          $region1403: #{tpu_custom_call.1} parent=1389 // pred_check_branch
            %1970 = sbr.rel (0) target = $region1405
          $region1404: #{tpu_custom_call.1} parent=1389 // pred_region
            %s1972 = ssub.s32 2, 1
            loop: start=0, step=1, limit=1
            $region1406: #{tpu_custom_call.1} parent=1404 // loop_pre_header
              _
            $region1407: #{tpu_custom_call.1} parent=1404 // loop_header
              %s1974 = sphi 0, %s1978
              %p1975 = scmp.ge.s32.totalorder %s1974, 1
              %s1979 = sphi %s1950, %s1950
              %s1980 = sphi %s1951, %s1951
            $region1408: #{tpu_custom_call.1} parent=1404 // loop_header_branch
              %1977 = sbr.rel (%p1975) target = $region1412
            $region1409: #{tpu_custom_call.1} parent=1404 // loop_body
              %v1981 = vld [vmem:[%s1979] sm:%s1972]
              %1982 = vst [vmem:[%s1980] sm:%s1972] %v1981
            $region1410: #{tpu_custom_call.1} parent=1404 // loop_footer
              %s1978 = sadd.s32 1, %s1974
            $region1411: #{tpu_custom_call.1} parent=1404 // loop_footer_branch
              %1973 = sbr.rel target = $region1407
            $region1412: #{tpu_custom_call.1} parent=1404 // loop_exit
              _
          $region1405: #{tpu_custom_call.1} parent=1389 // pred_fallthru
            _
        $region1390: #{tpu_custom_call.1} parent=35 // pred_fallthru
          _
        // Predicated region
        $region1391: #{tpu_custom_call.1} parent=35 // pred_check
          _
        $region1392: #{tpu_custom_call.1} parent=35 // pred_check_branch
          %1956 = sbr.rel (0) target = $region1394
        $region1393: #{tpu_custom_call.1} parent=35 // pred_region
          %s1958 = ssub.s32 2, 1
          loop: start=0, step=1, limit=1
          $region1395: #{tpu_custom_call.1} parent=1393 // loop_pre_header
            _
          $region1396: #{tpu_custom_call.1} parent=1393 // loop_header
            %s1960 = sphi 0, %s1964
            %p1961 = scmp.ge.s32.totalorder %s1960, 1
            %s1965 = sphi %s1950, %s1950
            %s1966 = sphi %s1951, %s1951
          $region1397: #{tpu_custom_call.1} parent=1393 // loop_header_branch
            %1963 = sbr.rel (%p1961) target = $region1401
          $region1398: #{tpu_custom_call.1} parent=1393 // loop_body
            %v1967 = vld [vmem:[%s1965] sm:%s1958]
            %1968 = vst [vmem:[%s1966] sm:%s1958] %v1967
          $region1399: #{tpu_custom_call.1} parent=1393 // loop_footer
            %s1964 = sadd.s32 1, %s1960
          $region1400: #{tpu_custom_call.1} parent=1393 // loop_footer_branch
            %1959 = sbr.rel target = $region1396
          $region1401: #{tpu_custom_call.1} parent=1393 // loop_exit
            _
        $region1394: #{tpu_custom_call.1} parent=35 // pred_fallthru
          _
        // Predicated region
        $region1413: #{tpu_custom_call.1} parent=35 // pred_check
          _
        $region1414: #{tpu_custom_call.1} parent=35 // pred_check_branch
          %1985 = sbr.rel (0) target = $region1416
        $region1415: #{tpu_custom_call.1} parent=35 // pred_region
          %1986 = vsyncadd %s1952, 16
        $region1416: #{tpu_custom_call.1} parent=35 // pred_fallthru
          _
        %s1987 = sadd.s32 %s426, 5
        %s1988 = sld [smem:[#allocation5 + %s1987]]
        %s1989 = scalar_lea.vmem %s1, %s1988
        %s1990 = scalar_lea.vmem [#allocation2], 46
        %s1991 = scalar_lea.sflag [#allocation3], 46
        // Predicated region
        $region1417: #{tpu_custom_call.1} parent=35 // pred_check
          _
        $region1418: #{tpu_custom_call.1} parent=35 // pred_check_branch
          %1993 = sbr.rel target = $region1420
        $region1419: #{tpu_custom_call.1} parent=35 // pred_region
          // Predicated region
          $region1432: #{tpu_custom_call.1} parent=1419 // pred_check
            _
          $region1433: #{tpu_custom_call.1} parent=1419 // pred_check_branch
            %2009 = sbr.rel (0) target = $region1435
          $region1434: #{tpu_custom_call.1} parent=1419 // pred_region
            %s2011 = ssub.s32 2, 1
            loop: start=0, step=1, limit=1
            $region1436: #{tpu_custom_call.1} parent=1434 // loop_pre_header
              _
            $region1437: #{tpu_custom_call.1} parent=1434 // loop_header
              %s2013 = sphi 0, %s2017
              %p2014 = scmp.ge.s32.totalorder %s2013, 1
              %s2018 = sphi %s1989, %s1989
              %s2019 = sphi %s1990, %s1990
            $region1438: #{tpu_custom_call.1} parent=1434 // loop_header_branch
              %2016 = sbr.rel (%p2014) target = $region1442
            $region1439: #{tpu_custom_call.1} parent=1434 // loop_body
              %v2020 = vld [vmem:[%s2018] sm:%s2011]
              %2021 = vst [vmem:[%s2019] sm:%s2011] %v2020
            $region1440: #{tpu_custom_call.1} parent=1434 // loop_footer
              %s2017 = sadd.s32 1, %s2013
            $region1441: #{tpu_custom_call.1} parent=1434 // loop_footer_branch
              %2012 = sbr.rel target = $region1437
            $region1442: #{tpu_custom_call.1} parent=1434 // loop_exit
              _
          $region1435: #{tpu_custom_call.1} parent=1419 // pred_fallthru
            _
        $region1420: #{tpu_custom_call.1} parent=35 // pred_fallthru
          _
        // Predicated region
        $region1421: #{tpu_custom_call.1} parent=35 // pred_check
          _
        $region1422: #{tpu_custom_call.1} parent=35 // pred_check_branch
          %1995 = sbr.rel (0) target = $region1424
        $region1423: #{tpu_custom_call.1} parent=35 // pred_region
          %s1997 = ssub.s32 2, 1
          loop: start=0, step=1, limit=1
          $region1425: #{tpu_custom_call.1} parent=1423 // loop_pre_header
            _
          $region1426: #{tpu_custom_call.1} parent=1423 // loop_header
            %s1999 = sphi 0, %s2003
            %p2000 = scmp.ge.s32.totalorder %s1999, 1
            %s2004 = sphi %s1989, %s1989
            %s2005 = sphi %s1990, %s1990
          $region1427: #{tpu_custom_call.1} parent=1423 // loop_header_branch
            %2002 = sbr.rel (%p2000) target = $region1431
          $region1428: #{tpu_custom_call.1} parent=1423 // loop_body
            %v2006 = vld [vmem:[%s2004] sm:%s1997]
            %2007 = vst [vmem:[%s2005] sm:%s1997] %v2006
          $region1429: #{tpu_custom_call.1} parent=1423 // loop_footer
            %s2003 = sadd.s32 1, %s1999
          $region1430: #{tpu_custom_call.1} parent=1423 // loop_footer_branch
            %1998 = sbr.rel target = $region1426
          $region1431: #{tpu_custom_call.1} parent=1423 // loop_exit
            _
        $region1424: #{tpu_custom_call.1} parent=35 // pred_fallthru
          _
        // Predicated region
        $region1443: #{tpu_custom_call.1} parent=35 // pred_check
          _
        $region1444: #{tpu_custom_call.1} parent=35 // pred_check_branch
          %2024 = sbr.rel (0) target = $region1446
        $region1445: #{tpu_custom_call.1} parent=35 // pred_region
          %2025 = vsyncadd %s1991, 16
        $region1446: #{tpu_custom_call.1} parent=35 // pred_fallthru
          _
        %s2026 = sadd.s32 %s466, 5
        %s2027 = sld [smem:[#allocation5 + %s2026]]
        %s2028 = scalar_lea.vmem %s1, %s2027
        %s2029 = scalar_lea.vmem [#allocation2], 47
        %s2030 = scalar_lea.sflag [#allocation3], 47
        // Predicated region
        $region1447: #{tpu_custom_call.1} parent=35 // pred_check
          _
        $region1448: #{tpu_custom_call.1} parent=35 // pred_check_branch
          %2032 = sbr.rel target = $region1450
        $region1449: #{tpu_custom_call.1} parent=35 // pred_region
          // Predicated region
          $region1462: #{tpu_custom_call.1} parent=1449 // pred_check
            _
          $region1463: #{tpu_custom_call.1} parent=1449 // pred_check_branch
            %2048 = sbr.rel (0) target = $region1465
          $region1464: #{tpu_custom_call.1} parent=1449 // pred_region
            %s2050 = ssub.s32 2, 1
            loop: start=0, step=1, limit=1
            $region1466: #{tpu_custom_call.1} parent=1464 // loop_pre_header
              _
            $region1467: #{tpu_custom_call.1} parent=1464 // loop_header
              %s2052 = sphi 0, %s2056
              %p2053 = scmp.ge.s32.totalorder %s2052, 1
              %s2057 = sphi %s2028, %s2028
              %s2058 = sphi %s2029, %s2029
            $region1468: #{tpu_custom_call.1} parent=1464 // loop_header_branch
              %2055 = sbr.rel (%p2053) target = $region1472
            $region1469: #{tpu_custom_call.1} parent=1464 // loop_body
              %v2059 = vld [vmem:[%s2057] sm:%s2050]
              %2060 = vst [vmem:[%s2058] sm:%s2050] %v2059
            $region1470: #{tpu_custom_call.1} parent=1464 // loop_footer
              %s2056 = sadd.s32 1, %s2052
            $region1471: #{tpu_custom_call.1} parent=1464 // loop_footer_branch
              %2051 = sbr.rel target = $region1467
            $region1472: #{tpu_custom_call.1} parent=1464 // loop_exit
              _
          $region1465: #{tpu_custom_call.1} parent=1449 // pred_fallthru
            _
        $region1450: #{tpu_custom_call.1} parent=35 // pred_fallthru
          _
        // Predicated region
        $region1451: #{tpu_custom_call.1} parent=35 // pred_check
          _
        $region1452: #{tpu_custom_call.1} parent=35 // pred_check_branch
          %2034 = sbr.rel (0) target = $region1454
        $region1453: #{tpu_custom_call.1} parent=35 // pred_region
          %s2036 = ssub.s32 2, 1
          loop: start=0, step=1, limit=1
          $region1455: #{tpu_custom_call.1} parent=1453 // loop_pre_header
            _
          $region1456: #{tpu_custom_call.1} parent=1453 // loop_header
            %s2038 = sphi 0, %s2042
            %p2039 = scmp.ge.s32.totalorder %s2038, 1
            %s2043 = sphi %s2028, %s2028
            %s2044 = sphi %s2029, %s2029
          $region1457: #{tpu_custom_call.1} parent=1453 // loop_header_branch
            %2041 = sbr.rel (%p2039) target = $region1461
          $region1458: #{tpu_custom_call.1} parent=1453 // loop_body
            %v2045 = vld [vmem:[%s2043] sm:%s2036]
            %2046 = vst [vmem:[%s2044] sm:%s2036] %v2045
          $region1459: #{tpu_custom_call.1} parent=1453 // loop_footer
            %s2042 = sadd.s32 1, %s2038
          $region1460: #{tpu_custom_call.1} parent=1453 // loop_footer_branch
            %2037 = sbr.rel target = $region1456
          $region1461: #{tpu_custom_call.1} parent=1453 // loop_exit
            _
        $region1454: #{tpu_custom_call.1} parent=35 // pred_fallthru
          _
        // Predicated region
        $region1473: #{tpu_custom_call.1} parent=35 // pred_check
          _
        $region1474: #{tpu_custom_call.1} parent=35 // pred_check_branch
          %2063 = sbr.rel (0) target = $region1476
        $region1475: #{tpu_custom_call.1} parent=35 // pred_region
          %2064 = vsyncadd %s2030, 16
        $region1476: #{tpu_custom_call.1} parent=35 // pred_fallthru
          _
        %s2065 = sadd.s32 %s188, 6
        %s2066 = sld [smem:[#allocation5 + %s2065]]
        %s2067 = scalar_lea.vmem %s1, %s2066
        %s2068 = scalar_lea.vmem [#allocation2], 48
        %s2069 = scalar_lea.sflag [#allocation3], 48
        // Predicated region
        $region1477: #{tpu_custom_call.1} parent=35 // pred_check
          _
        $region1478: #{tpu_custom_call.1} parent=35 // pred_check_branch
          %2071 = sbr.rel target = $region1480
        $region1479: #{tpu_custom_call.1} parent=35 // pred_region
          // Predicated region
          $region1492: #{tpu_custom_call.1} parent=1479 // pred_check
            _
          $region1493: #{tpu_custom_call.1} parent=1479 // pred_check_branch
            %2087 = sbr.rel (0) target = $region1495
          $region1494: #{tpu_custom_call.1} parent=1479 // pred_region
            %s2089 = ssub.s32 2, 1
            loop: start=0, step=1, limit=1
            $region1496: #{tpu_custom_call.1} parent=1494 // loop_pre_header
              _
            $region1497: #{tpu_custom_call.1} parent=1494 // loop_header
              %s2091 = sphi 0, %s2095
              %p2092 = scmp.ge.s32.totalorder %s2091, 1
              %s2096 = sphi %s2067, %s2067
              %s2097 = sphi %s2068, %s2068
            $region1498: #{tpu_custom_call.1} parent=1494 // loop_header_branch
              %2094 = sbr.rel (%p2092) target = $region1502
            $region1499: #{tpu_custom_call.1} parent=1494 // loop_body
              %v2098 = vld [vmem:[%s2096] sm:%s2089]
              %2099 = vst [vmem:[%s2097] sm:%s2089] %v2098
            $region1500: #{tpu_custom_call.1} parent=1494 // loop_footer
              %s2095 = sadd.s32 1, %s2091
            $region1501: #{tpu_custom_call.1} parent=1494 // loop_footer_branch
              %2090 = sbr.rel target = $region1497
            $region1502: #{tpu_custom_call.1} parent=1494 // loop_exit
              _
          $region1495: #{tpu_custom_call.1} parent=1479 // pred_fallthru
            _
        $region1480: #{tpu_custom_call.1} parent=35 // pred_fallthru
          _
        // Predicated region
        $region1481: #{tpu_custom_call.1} parent=35 // pred_check
          _
        $region1482: #{tpu_custom_call.1} parent=35 // pred_check_branch
          %2073 = sbr.rel (0) target = $region1484
        $region1483: #{tpu_custom_call.1} parent=35 // pred_region
          %s2075 = ssub.s32 2, 1
          loop: start=0, step=1, limit=1
          $region1485: #{tpu_custom_call.1} parent=1483 // loop_pre_header
            _
          $region1486: #{tpu_custom_call.1} parent=1483 // loop_header
            %s2077 = sphi 0, %s2081
            %p2078 = scmp.ge.s32.totalorder %s2077, 1
            %s2082 = sphi %s2067, %s2067
            %s2083 = sphi %s2068, %s2068
          $region1487: #{tpu_custom_call.1} parent=1483 // loop_header_branch
            %2080 = sbr.rel (%p2078) target = $region1491
          $region1488: #{tpu_custom_call.1} parent=1483 // loop_body
            %v2084 = vld [vmem:[%s2082] sm:%s2075]
            %2085 = vst [vmem:[%s2083] sm:%s2075] %v2084
          $region1489: #{tpu_custom_call.1} parent=1483 // loop_footer
            %s2081 = sadd.s32 1, %s2077
          $region1490: #{tpu_custom_call.1} parent=1483 // loop_footer_branch
            %2076 = sbr.rel target = $region1486
          $region1491: #{tpu_custom_call.1} parent=1483 // loop_exit
            _
        $region1484: #{tpu_custom_call.1} parent=35 // pred_fallthru
          _
        // Predicated region
        $region1503: #{tpu_custom_call.1} parent=35 // pred_check
          _
        $region1504: #{tpu_custom_call.1} parent=35 // pred_check_branch
          %2102 = sbr.rel (0) target = $region1506
        $region1505: #{tpu_custom_call.1} parent=35 // pred_region
          %2103 = vsyncadd %s2069, 16
        $region1506: #{tpu_custom_call.1} parent=35 // pred_fallthru
          _
        %s2104 = sadd.s32 %s226, 6
        %s2105 = sld [smem:[#allocation5 + %s2104]]
        %s2106 = scalar_lea.vmem %s1, %s2105
        %s2107 = scalar_lea.vmem [#allocation2], 49
        %s2108 = scalar_lea.sflag [#allocation3], 49
        // Predicated region
        $region1507: #{tpu_custom_call.1} parent=35 // pred_check
          _
        $region1508: #{tpu_custom_call.1} parent=35 // pred_check_branch
          %2110 = sbr.rel target = $region1510
        $region1509: #{tpu_custom_call.1} parent=35 // pred_region
          // Predicated region
          $region1522: #{tpu_custom_call.1} parent=1509 // pred_check
            _
          $region1523: #{tpu_custom_call.1} parent=1509 // pred_check_branch
            %2126 = sbr.rel (0) target = $region1525
          $region1524: #{tpu_custom_call.1} parent=1509 // pred_region
            %s2128 = ssub.s32 2, 1
            loop: start=0, step=1, limit=1
            $region1526: #{tpu_custom_call.1} parent=1524 // loop_pre_header
              _
            $region1527: #{tpu_custom_call.1} parent=1524 // loop_header
              %s2130 = sphi 0, %s2134
              %p2131 = scmp.ge.s32.totalorder %s2130, 1
              %s2135 = sphi %s2106, %s2106
              %s2136 = sphi %s2107, %s2107
            $region1528: #{tpu_custom_call.1} parent=1524 // loop_header_branch
              %2133 = sbr.rel (%p2131) target = $region1532
            $region1529: #{tpu_custom_call.1} parent=1524 // loop_body
              %v2137 = vld [vmem:[%s2135] sm:%s2128]
              %2138 = vst [vmem:[%s2136] sm:%s2128] %v2137
            $region1530: #{tpu_custom_call.1} parent=1524 // loop_footer
              %s2134 = sadd.s32 1, %s2130
            $region1531: #{tpu_custom_call.1} parent=1524 // loop_footer_branch
              %2129 = sbr.rel target = $region1527
            $region1532: #{tpu_custom_call.1} parent=1524 // loop_exit
              _
          $region1525: #{tpu_custom_call.1} parent=1509 // pred_fallthru
            _
        $region1510: #{tpu_custom_call.1} parent=35 // pred_fallthru
          _
        // Predicated region
        $region1511: #{tpu_custom_call.1} parent=35 // pred_check
          _
        $region1512: #{tpu_custom_call.1} parent=35 // pred_check_branch
          %2112 = sbr.rel (0) target = $region1514
        $region1513: #{tpu_custom_call.1} parent=35 // pred_region
          %s2114 = ssub.s32 2, 1
          loop: start=0, step=1, limit=1
          $region1515: #{tpu_custom_call.1} parent=1513 // loop_pre_header
            _
          $region1516: #{tpu_custom_call.1} parent=1513 // loop_header
            %s2116 = sphi 0, %s2120
            %p2117 = scmp.ge.s32.totalorder %s2116, 1
            %s2121 = sphi %s2106, %s2106
            %s2122 = sphi %s2107, %s2107
          $region1517: #{tpu_custom_call.1} parent=1513 // loop_header_branch
            %2119 = sbr.rel (%p2117) target = $region1521
          $region1518: #{tpu_custom_call.1} parent=1513 // loop_body
            %v2123 = vld [vmem:[%s2121] sm:%s2114]
            %2124 = vst [vmem:[%s2122] sm:%s2114] %v2123
          $region1519: #{tpu_custom_call.1} parent=1513 // loop_footer
            %s2120 = sadd.s32 1, %s2116
          $region1520: #{tpu_custom_call.1} parent=1513 // loop_footer_branch
            %2115 = sbr.rel target = $region1516
          $region1521: #{tpu_custom_call.1} parent=1513 // loop_exit
            _
        $region1514: #{tpu_custom_call.1} parent=35 // pred_fallthru
          _
        // Predicated region
        $region1533: #{tpu_custom_call.1} parent=35 // pred_check
          _
        $region1534: #{tpu_custom_call.1} parent=35 // pred_check_branch
          %2141 = sbr.rel (0) target = $region1536
        $region1535: #{tpu_custom_call.1} parent=35 // pred_region
          %2142 = vsyncadd %s2108, 16
        $region1536: #{tpu_custom_call.1} parent=35 // pred_fallthru
          _
        %s2143 = sadd.s32 %s266, 6
        %s2144 = sld [smem:[#allocation5 + %s2143]]
        %s2145 = scalar_lea.vmem %s1, %s2144
        %s2146 = scalar_lea.vmem [#allocation2], 50
        %s2147 = scalar_lea.sflag [#allocation3], 50
        // Predicated region
        $region1537: #{tpu_custom_call.1} parent=35 // pred_check
          _
        $region1538: #{tpu_custom_call.1} parent=35 // pred_check_branch
          %2149 = sbr.rel target = $region1540
        $region1539: #{tpu_custom_call.1} parent=35 // pred_region
          // Predicated region
          $region1552: #{tpu_custom_call.1} parent=1539 // pred_check
            _
          $region1553: #{tpu_custom_call.1} parent=1539 // pred_check_branch
            %2165 = sbr.rel (0) target = $region1555
          $region1554: #{tpu_custom_call.1} parent=1539 // pred_region
            %s2167 = ssub.s32 2, 1
            loop: start=0, step=1, limit=1
            $region1556: #{tpu_custom_call.1} parent=1554 // loop_pre_header
              _
            $region1557: #{tpu_custom_call.1} parent=1554 // loop_header
              %s2169 = sphi 0, %s2173
              %p2170 = scmp.ge.s32.totalorder %s2169, 1
              %s2174 = sphi %s2145, %s2145
              %s2175 = sphi %s2146, %s2146
            $region1558: #{tpu_custom_call.1} parent=1554 // loop_header_branch
              %2172 = sbr.rel (%p2170) target = $region1562
            $region1559: #{tpu_custom_call.1} parent=1554 // loop_body
              %v2176 = vld [vmem:[%s2174] sm:%s2167]
              %2177 = vst [vmem:[%s2175] sm:%s2167] %v2176
            $region1560: #{tpu_custom_call.1} parent=1554 // loop_footer
              %s2173 = sadd.s32 1, %s2169
            $region1561: #{tpu_custom_call.1} parent=1554 // loop_footer_branch
              %2168 = sbr.rel target = $region1557
            $region1562: #{tpu_custom_call.1} parent=1554 // loop_exit
              _
          $region1555: #{tpu_custom_call.1} parent=1539 // pred_fallthru
            _
        $region1540: #{tpu_custom_call.1} parent=35 // pred_fallthru
          _
        // Predicated region
        $region1541: #{tpu_custom_call.1} parent=35 // pred_check
          _
        $region1542: #{tpu_custom_call.1} parent=35 // pred_check_branch
          %2151 = sbr.rel (0) target = $region1544
        $region1543: #{tpu_custom_call.1} parent=35 // pred_region
          %s2153 = ssub.s32 2, 1
          loop: start=0, step=1, limit=1
          $region1545: #{tpu_custom_call.1} parent=1543 // loop_pre_header
            _
          $region1546: #{tpu_custom_call.1} parent=1543 // loop_header
            %s2155 = sphi 0, %s2159
            %p2156 = scmp.ge.s32.totalorder %s2155, 1
            %s2160 = sphi %s2145, %s2145
            %s2161 = sphi %s2146, %s2146
          $region1547: #{tpu_custom_call.1} parent=1543 // loop_header_branch
            %2158 = sbr.rel (%p2156) target = $region1551
          $region1548: #{tpu_custom_call.1} parent=1543 // loop_body
            %v2162 = vld [vmem:[%s2160] sm:%s2153]
            %2163 = vst [vmem:[%s2161] sm:%s2153] %v2162
          $region1549: #{tpu_custom_call.1} parent=1543 // loop_footer
            %s2159 = sadd.s32 1, %s2155
          $region1550: #{tpu_custom_call.1} parent=1543 // loop_footer_branch
            %2154 = sbr.rel target = $region1546
          $region1551: #{tpu_custom_call.1} parent=1543 // loop_exit
            _
        $region1544: #{tpu_custom_call.1} parent=35 // pred_fallthru
          _
        // Predicated region
        $region1563: #{tpu_custom_call.1} parent=35 // pred_check
          _
        $region1564: #{tpu_custom_call.1} parent=35 // pred_check_branch
          %2180 = sbr.rel (0) target = $region1566
        $region1565: #{tpu_custom_call.1} parent=35 // pred_region
          %2181 = vsyncadd %s2147, 16
        $region1566: #{tpu_custom_call.1} parent=35 // pred_fallthru
          _
        %s2182 = sadd.s32 %s306, 6
        %s2183 = sld [smem:[#allocation5 + %s2182]]
        %s2184 = scalar_lea.vmem %s1, %s2183
        %s2185 = scalar_lea.vmem [#allocation2], 51
        %s2186 = scalar_lea.sflag [#allocation3], 51
        // Predicated region
        $region1567: #{tpu_custom_call.1} parent=35 // pred_check
          _
        $region1568: #{tpu_custom_call.1} parent=35 // pred_check_branch
          %2188 = sbr.rel target = $region1570
        $region1569: #{tpu_custom_call.1} parent=35 // pred_region
          // Predicated region
          $region1582: #{tpu_custom_call.1} parent=1569 // pred_check
            _
          $region1583: #{tpu_custom_call.1} parent=1569 // pred_check_branch
            %2204 = sbr.rel (0) target = $region1585
          $region1584: #{tpu_custom_call.1} parent=1569 // pred_region
            %s2206 = ssub.s32 2, 1
            loop: start=0, step=1, limit=1
            $region1586: #{tpu_custom_call.1} parent=1584 // loop_pre_header
              _
            $region1587: #{tpu_custom_call.1} parent=1584 // loop_header
              %s2208 = sphi 0, %s2212
              %p2209 = scmp.ge.s32.totalorder %s2208, 1
              %s2213 = sphi %s2184, %s2184
              %s2214 = sphi %s2185, %s2185
            $region1588: #{tpu_custom_call.1} parent=1584 // loop_header_branch
              %2211 = sbr.rel (%p2209) target = $region1592
            $region1589: #{tpu_custom_call.1} parent=1584 // loop_body
              %v2215 = vld [vmem:[%s2213] sm:%s2206]
              %2216 = vst [vmem:[%s2214] sm:%s2206] %v2215
            $region1590: #{tpu_custom_call.1} parent=1584 // loop_footer
              %s2212 = sadd.s32 1, %s2208
            $region1591: #{tpu_custom_call.1} parent=1584 // loop_footer_branch
              %2207 = sbr.rel target = $region1587
            $region1592: #{tpu_custom_call.1} parent=1584 // loop_exit
              _
          $region1585: #{tpu_custom_call.1} parent=1569 // pred_fallthru
            _
        $region1570: #{tpu_custom_call.1} parent=35 // pred_fallthru
          _
        // Predicated region
        $region1571: #{tpu_custom_call.1} parent=35 // pred_check
          _
        $region1572: #{tpu_custom_call.1} parent=35 // pred_check_branch
          %2190 = sbr.rel (0) target = $region1574
        $region1573: #{tpu_custom_call.1} parent=35 // pred_region
          %s2192 = ssub.s32 2, 1
          loop: start=0, step=1, limit=1
          $region1575: #{tpu_custom_call.1} parent=1573 // loop_pre_header
            _
          $region1576: #{tpu_custom_call.1} parent=1573 // loop_header
            %s2194 = sphi 0, %s2198
            %p2195 = scmp.ge.s32.totalorder %s2194, 1
            %s2199 = sphi %s2184, %s2184
            %s2200 = sphi %s2185, %s2185
          $region1577: #{tpu_custom_call.1} parent=1573 // loop_header_branch
            %2197 = sbr.rel (%p2195) target = $region1581
          $region1578: #{tpu_custom_call.1} parent=1573 // loop_body
            %v2201 = vld [vmem:[%s2199] sm:%s2192]
            %2202 = vst [vmem:[%s2200] sm:%s2192] %v2201
          $region1579: #{tpu_custom_call.1} parent=1573 // loop_footer
            %s2198 = sadd.s32 1, %s2194
          $region1580: #{tpu_custom_call.1} parent=1573 // loop_footer_branch
            %2193 = sbr.rel target = $region1576
          $region1581: #{tpu_custom_call.1} parent=1573 // loop_exit
            _
        $region1574: #{tpu_custom_call.1} parent=35 // pred_fallthru
          _
        // Predicated region
        $region1593: #{tpu_custom_call.1} parent=35 // pred_check
          _
        $region1594: #{tpu_custom_call.1} parent=35 // pred_check_branch
          %2219 = sbr.rel (0) target = $region1596
        $region1595: #{tpu_custom_call.1} parent=35 // pred_region
          %2220 = vsyncadd %s2186, 16
        $region1596: #{tpu_custom_call.1} parent=35 // pred_fallthru
          _
        %s2221 = sadd.s32 %s346, 6
        %s2222 = sld [smem:[#allocation5 + %s2221]]
        %s2223 = scalar_lea.vmem %s1, %s2222
        %s2224 = scalar_lea.vmem [#allocation2], 52
        %s2225 = scalar_lea.sflag [#allocation3], 52
        // Predicated region
        $region1597: #{tpu_custom_call.1} parent=35 // pred_check
          _
        $region1598: #{tpu_custom_call.1} parent=35 // pred_check_branch
          %2227 = sbr.rel target = $region1600
        $region1599: #{tpu_custom_call.1} parent=35 // pred_region
          // Predicated region
          $region1612: #{tpu_custom_call.1} parent=1599 // pred_check
            _
          $region1613: #{tpu_custom_call.1} parent=1599 // pred_check_branch
            %2243 = sbr.rel (0) target = $region1615
          $region1614: #{tpu_custom_call.1} parent=1599 // pred_region
            %s2245 = ssub.s32 2, 1
            loop: start=0, step=1, limit=1
            $region1616: #{tpu_custom_call.1} parent=1614 // loop_pre_header
              _
            $region1617: #{tpu_custom_call.1} parent=1614 // loop_header
              %s2247 = sphi 0, %s2251
              %p2248 = scmp.ge.s32.totalorder %s2247, 1
              %s2252 = sphi %s2223, %s2223
              %s2253 = sphi %s2224, %s2224
            $region1618: #{tpu_custom_call.1} parent=1614 // loop_header_branch
              %2250 = sbr.rel (%p2248) target = $region1622
            $region1619: #{tpu_custom_call.1} parent=1614 // loop_body
              %v2254 = vld [vmem:[%s2252] sm:%s2245]
              %2255 = vst [vmem:[%s2253] sm:%s2245] %v2254
            $region1620: #{tpu_custom_call.1} parent=1614 // loop_footer
              %s2251 = sadd.s32 1, %s2247
            $region1621: #{tpu_custom_call.1} parent=1614 // loop_footer_branch
              %2246 = sbr.rel target = $region1617
            $region1622: #{tpu_custom_call.1} parent=1614 // loop_exit
              _
          $region1615: #{tpu_custom_call.1} parent=1599 // pred_fallthru
            _
        $region1600: #{tpu_custom_call.1} parent=35 // pred_fallthru
          _
        // Predicated region
        $region1601: #{tpu_custom_call.1} parent=35 // pred_check
          _
        $region1602: #{tpu_custom_call.1} parent=35 // pred_check_branch
          %2229 = sbr.rel (0) target = $region1604
        $region1603: #{tpu_custom_call.1} parent=35 // pred_region
          %s2231 = ssub.s32 2, 1
          loop: start=0, step=1, limit=1
          $region1605: #{tpu_custom_call.1} parent=1603 // loop_pre_header
            _
          $region1606: #{tpu_custom_call.1} parent=1603 // loop_header
            %s2233 = sphi 0, %s2237
            %p2234 = scmp.ge.s32.totalorder %s2233, 1
            %s2238 = sphi %s2223, %s2223
            %s2239 = sphi %s2224, %s2224
          $region1607: #{tpu_custom_call.1} parent=1603 // loop_header_branch
            %2236 = sbr.rel (%p2234) target = $region1611
          $region1608: #{tpu_custom_call.1} parent=1603 // loop_body
            %v2240 = vld [vmem:[%s2238] sm:%s2231]
            %2241 = vst [vmem:[%s2239] sm:%s2231] %v2240
          $region1609: #{tpu_custom_call.1} parent=1603 // loop_footer
            %s2237 = sadd.s32 1, %s2233
          $region1610: #{tpu_custom_call.1} parent=1603 // loop_footer_branch
            %2232 = sbr.rel target = $region1606
          $region1611: #{tpu_custom_call.1} parent=1603 // loop_exit
            _
        $region1604: #{tpu_custom_call.1} parent=35 // pred_fallthru
          _
        // Predicated region
        $region1623: #{tpu_custom_call.1} parent=35 // pred_check
          _
        $region1624: #{tpu_custom_call.1} parent=35 // pred_check_branch
          %2258 = sbr.rel (0) target = $region1626
        $region1625: #{tpu_custom_call.1} parent=35 // pred_region
          %2259 = vsyncadd %s2225, 16
        $region1626: #{tpu_custom_call.1} parent=35 // pred_fallthru
          _
        %s2260 = sadd.s32 %s386, 6
        %s2261 = sld [smem:[#allocation5 + %s2260]]
        %s2262 = scalar_lea.vmem %s1, %s2261
        %s2263 = scalar_lea.vmem [#allocation2], 53
        %s2264 = scalar_lea.sflag [#allocation3], 53
        // Predicated region
        $region1627: #{tpu_custom_call.1} parent=35 // pred_check
          _
        $region1628: #{tpu_custom_call.1} parent=35 // pred_check_branch
          %2266 = sbr.rel target = $region1630
        $region1629: #{tpu_custom_call.1} parent=35 // pred_region
          // Predicated region
          $region1642: #{tpu_custom_call.1} parent=1629 // pred_check
            _
          $region1643: #{tpu_custom_call.1} parent=1629 // pred_check_branch
            %2282 = sbr.rel (0) target = $region1645
          $region1644: #{tpu_custom_call.1} parent=1629 // pred_region
            %s2284 = ssub.s32 2, 1
            loop: start=0, step=1, limit=1
            $region1646: #{tpu_custom_call.1} parent=1644 // loop_pre_header
              _
            $region1647: #{tpu_custom_call.1} parent=1644 // loop_header
              %s2286 = sphi 0, %s2290
              %p2287 = scmp.ge.s32.totalorder %s2286, 1
              %s2291 = sphi %s2262, %s2262
              %s2292 = sphi %s2263, %s2263
            $region1648: #{tpu_custom_call.1} parent=1644 // loop_header_branch
              %2289 = sbr.rel (%p2287) target = $region1652
            $region1649: #{tpu_custom_call.1} parent=1644 // loop_body
              %v2293 = vld [vmem:[%s2291] sm:%s2284]
              %2294 = vst [vmem:[%s2292] sm:%s2284] %v2293
            $region1650: #{tpu_custom_call.1} parent=1644 // loop_footer
              %s2290 = sadd.s32 1, %s2286
            $region1651: #{tpu_custom_call.1} parent=1644 // loop_footer_branch
              %2285 = sbr.rel target = $region1647
            $region1652: #{tpu_custom_call.1} parent=1644 // loop_exit
              _
          $region1645: #{tpu_custom_call.1} parent=1629 // pred_fallthru
            _
        $region1630: #{tpu_custom_call.1} parent=35 // pred_fallthru
          _
        // Predicated region
        $region1631: #{tpu_custom_call.1} parent=35 // pred_check
          _
        $region1632: #{tpu_custom_call.1} parent=35 // pred_check_branch
          %2268 = sbr.rel (0) target = $region1634
        $region1633: #{tpu_custom_call.1} parent=35 // pred_region
          %s2270 = ssub.s32 2, 1
          loop: start=0, step=1, limit=1
          $region1635: #{tpu_custom_call.1} parent=1633 // loop_pre_header
            _
          $region1636: #{tpu_custom_call.1} parent=1633 // loop_header
            %s2272 = sphi 0, %s2276
            %p2273 = scmp.ge.s32.totalorder %s2272, 1
            %s2277 = sphi %s2262, %s2262
            %s2278 = sphi %s2263, %s2263
          $region1637: #{tpu_custom_call.1} parent=1633 // loop_header_branch
            %2275 = sbr.rel (%p2273) target = $region1641
          $region1638: #{tpu_custom_call.1} parent=1633 // loop_body
            %v2279 = vld [vmem:[%s2277] sm:%s2270]
            %2280 = vst [vmem:[%s2278] sm:%s2270] %v2279
          $region1639: #{tpu_custom_call.1} parent=1633 // loop_footer
            %s2276 = sadd.s32 1, %s2272
          $region1640: #{tpu_custom_call.1} parent=1633 // loop_footer_branch
            %2271 = sbr.rel target = $region1636
          $region1641: #{tpu_custom_call.1} parent=1633 // loop_exit
            _
        $region1634: #{tpu_custom_call.1} parent=35 // pred_fallthru
          _
        // Predicated region
        $region1653: #{tpu_custom_call.1} parent=35 // pred_check
          _
        $region1654: #{tpu_custom_call.1} parent=35 // pred_check_branch
          %2297 = sbr.rel (0) target = $region1656
        $region1655: #{tpu_custom_call.1} parent=35 // pred_region
          %2298 = vsyncadd %s2264, 16
        $region1656: #{tpu_custom_call.1} parent=35 // pred_fallthru
          _
        %s2299 = sadd.s32 %s426, 6
        %s2300 = sld [smem:[#allocation5 + %s2299]]
        %s2301 = scalar_lea.vmem %s1, %s2300
        %s2302 = scalar_lea.vmem [#allocation2], 54
        %s2303 = scalar_lea.sflag [#allocation3], 54
        // Predicated region
        $region1657: #{tpu_custom_call.1} parent=35 // pred_check
          _
        $region1658: #{tpu_custom_call.1} parent=35 // pred_check_branch
          %2305 = sbr.rel target = $region1660
        $region1659: #{tpu_custom_call.1} parent=35 // pred_region
          // Predicated region
          $region1672: #{tpu_custom_call.1} parent=1659 // pred_check
            _
          $region1673: #{tpu_custom_call.1} parent=1659 // pred_check_branch
            %2321 = sbr.rel (0) target = $region1675
          $region1674: #{tpu_custom_call.1} parent=1659 // pred_region
            %s2323 = ssub.s32 2, 1
            loop: start=0, step=1, limit=1
            $region1676: #{tpu_custom_call.1} parent=1674 // loop_pre_header
              _
            $region1677: #{tpu_custom_call.1} parent=1674 // loop_header
              %s2325 = sphi 0, %s2329
              %p2326 = scmp.ge.s32.totalorder %s2325, 1
              %s2330 = sphi %s2301, %s2301
              %s2331 = sphi %s2302, %s2302
            $region1678: #{tpu_custom_call.1} parent=1674 // loop_header_branch
              %2328 = sbr.rel (%p2326) target = $region1682
            $region1679: #{tpu_custom_call.1} parent=1674 // loop_body
              %v2332 = vld [vmem:[%s2330] sm:%s2323]
              %2333 = vst [vmem:[%s2331] sm:%s2323] %v2332
            $region1680: #{tpu_custom_call.1} parent=1674 // loop_footer
              %s2329 = sadd.s32 1, %s2325
            $region1681: #{tpu_custom_call.1} parent=1674 // loop_footer_branch
              %2324 = sbr.rel target = $region1677
            $region1682: #{tpu_custom_call.1} parent=1674 // loop_exit
              _
          $region1675: #{tpu_custom_call.1} parent=1659 // pred_fallthru
            _
        $region1660: #{tpu_custom_call.1} parent=35 // pred_fallthru
          _
        // Predicated region
        $region1661: #{tpu_custom_call.1} parent=35 // pred_check
          _
        $region1662: #{tpu_custom_call.1} parent=35 // pred_check_branch
          %2307 = sbr.rel (0) target = $region1664
        $region1663: #{tpu_custom_call.1} parent=35 // pred_region
          %s2309 = ssub.s32 2, 1
          loop: start=0, step=1, limit=1
          $region1665: #{tpu_custom_call.1} parent=1663 // loop_pre_header
            _
          $region1666: #{tpu_custom_call.1} parent=1663 // loop_header
            %s2311 = sphi 0, %s2315
            %p2312 = scmp.ge.s32.totalorder %s2311, 1
            %s2316 = sphi %s2301, %s2301
            %s2317 = sphi %s2302, %s2302
          $region1667: #{tpu_custom_call.1} parent=1663 // loop_header_branch
            %2314 = sbr.rel (%p2312) target = $region1671
          $region1668: #{tpu_custom_call.1} parent=1663 // loop_body
            %v2318 = vld [vmem:[%s2316] sm:%s2309]
            %2319 = vst [vmem:[%s2317] sm:%s2309] %v2318
          $region1669: #{tpu_custom_call.1} parent=1663 // loop_footer
            %s2315 = sadd.s32 1, %s2311
          $region1670: #{tpu_custom_call.1} parent=1663 // loop_footer_branch
            %2310 = sbr.rel target = $region1666
          $region1671: #{tpu_custom_call.1} parent=1663 // loop_exit
            _
        $region1664: #{tpu_custom_call.1} parent=35 // pred_fallthru
          _
        // Predicated region
        $region1683: #{tpu_custom_call.1} parent=35 // pred_check
          _
        $region1684: #{tpu_custom_call.1} parent=35 // pred_check_branch
          %2336 = sbr.rel (0) target = $region1686
        $region1685: #{tpu_custom_call.1} parent=35 // pred_region
          %2337 = vsyncadd %s2303, 16
        $region1686: #{tpu_custom_call.1} parent=35 // pred_fallthru
          _
        %s2338 = sadd.s32 %s466, 6
        %s2339 = sld [smem:[#allocation5 + %s2338]]
        %s2340 = scalar_lea.vmem %s1, %s2339
        %s2341 = scalar_lea.vmem [#allocation2], 55
        %s2342 = scalar_lea.sflag [#allocation3], 55
        // Predicated region
        $region1687: #{tpu_custom_call.1} parent=35 // pred_check
          _
        $region1688: #{tpu_custom_call.1} parent=35 // pred_check_branch
          %2344 = sbr.rel target = $region1690
        $region1689: #{tpu_custom_call.1} parent=35 // pred_region
          // Predicated region
          $region1702: #{tpu_custom_call.1} parent=1689 // pred_check
            _
          $region1703: #{tpu_custom_call.1} parent=1689 // pred_check_branch
            %2360 = sbr.rel (0) target = $region1705
          $region1704: #{tpu_custom_call.1} parent=1689 // pred_region
            %s2362 = ssub.s32 2, 1
            loop: start=0, step=1, limit=1
            $region1706: #{tpu_custom_call.1} parent=1704 // loop_pre_header
              _
            $region1707: #{tpu_custom_call.1} parent=1704 // loop_header
              %s2364 = sphi 0, %s2368
              %p2365 = scmp.ge.s32.totalorder %s2364, 1
              %s2369 = sphi %s2340, %s2340
              %s2370 = sphi %s2341, %s2341
            $region1708: #{tpu_custom_call.1} parent=1704 // loop_header_branch
              %2367 = sbr.rel (%p2365) target = $region1712
            $region1709: #{tpu_custom_call.1} parent=1704 // loop_body
              %v2371 = vld [vmem:[%s2369] sm:%s2362]
              %2372 = vst [vmem:[%s2370] sm:%s2362] %v2371
            $region1710: #{tpu_custom_call.1} parent=1704 // loop_footer
              %s2368 = sadd.s32 1, %s2364
            $region1711: #{tpu_custom_call.1} parent=1704 // loop_footer_branch
              %2363 = sbr.rel target = $region1707
            $region1712: #{tpu_custom_call.1} parent=1704 // loop_exit
              _
          $region1705: #{tpu_custom_call.1} parent=1689 // pred_fallthru
            _
        $region1690: #{tpu_custom_call.1} parent=35 // pred_fallthru
          _
        // Predicated region
        $region1691: #{tpu_custom_call.1} parent=35 // pred_check
          _
        $region1692: #{tpu_custom_call.1} parent=35 // pred_check_branch
          %2346 = sbr.rel (0) target = $region1694
        $region1693: #{tpu_custom_call.1} parent=35 // pred_region
          %s2348 = ssub.s32 2, 1
          loop: start=0, step=1, limit=1
          $region1695: #{tpu_custom_call.1} parent=1693 // loop_pre_header
            _
          $region1696: #{tpu_custom_call.1} parent=1693 // loop_header
            %s2350 = sphi 0, %s2354
            %p2351 = scmp.ge.s32.totalorder %s2350, 1
            %s2355 = sphi %s2340, %s2340
            %s2356 = sphi %s2341, %s2341
          $region1697: #{tpu_custom_call.1} parent=1693 // loop_header_branch
            %2353 = sbr.rel (%p2351) target = $region1701
          $region1698: #{tpu_custom_call.1} parent=1693 // loop_body
            %v2357 = vld [vmem:[%s2355] sm:%s2348]
            %2358 = vst [vmem:[%s2356] sm:%s2348] %v2357
          $region1699: #{tpu_custom_call.1} parent=1693 // loop_footer
            %s2354 = sadd.s32 1, %s2350
          $region1700: #{tpu_custom_call.1} parent=1693 // loop_footer_branch
            %2349 = sbr.rel target = $region1696
          $region1701: #{tpu_custom_call.1} parent=1693 // loop_exit
            _
        $region1694: #{tpu_custom_call.1} parent=35 // pred_fallthru
          _
        // Predicated region
        $region1713: #{tpu_custom_call.1} parent=35 // pred_check
          _
        $region1714: #{tpu_custom_call.1} parent=35 // pred_check_branch
          %2375 = sbr.rel (0) target = $region1716
        $region1715: #{tpu_custom_call.1} parent=35 // pred_region
          %2376 = vsyncadd %s2342, 16
        $region1716: #{tpu_custom_call.1} parent=35 // pred_fallthru
          _
        %s2377 = sadd.s32 %s188, 7
        %s2378 = sld [smem:[#allocation5 + %s2377]]
        %s2379 = scalar_lea.vmem %s1, %s2378
        %s2380 = scalar_lea.vmem [#allocation2], 56
        %s2381 = scalar_lea.sflag [#allocation3], 56
        // Predicated region
        $region1717: #{tpu_custom_call.1} parent=35 // pred_check
          _
        $region1718: #{tpu_custom_call.1} parent=35 // pred_check_branch
          %2383 = sbr.rel target = $region1720
        $region1719: #{tpu_custom_call.1} parent=35 // pred_region
          // Predicated region
          $region1732: #{tpu_custom_call.1} parent=1719 // pred_check
            _
          $region1733: #{tpu_custom_call.1} parent=1719 // pred_check_branch
            %2399 = sbr.rel (0) target = $region1735
          $region1734: #{tpu_custom_call.1} parent=1719 // pred_region
            %s2401 = ssub.s32 2, 1
            loop: start=0, step=1, limit=1
            $region1736: #{tpu_custom_call.1} parent=1734 // loop_pre_header
              _
            $region1737: #{tpu_custom_call.1} parent=1734 // loop_header
              %s2403 = sphi 0, %s2407
              %p2404 = scmp.ge.s32.totalorder %s2403, 1
              %s2408 = sphi %s2379, %s2379
              %s2409 = sphi %s2380, %s2380
            $region1738: #{tpu_custom_call.1} parent=1734 // loop_header_branch
              %2406 = sbr.rel (%p2404) target = $region1742
            $region1739: #{tpu_custom_call.1} parent=1734 // loop_body
              %v2410 = vld [vmem:[%s2408] sm:%s2401]
              %2411 = vst [vmem:[%s2409] sm:%s2401] %v2410
            $region1740: #{tpu_custom_call.1} parent=1734 // loop_footer
              %s2407 = sadd.s32 1, %s2403
            $region1741: #{tpu_custom_call.1} parent=1734 // loop_footer_branch
              %2402 = sbr.rel target = $region1737
            $region1742: #{tpu_custom_call.1} parent=1734 // loop_exit
              _
          $region1735: #{tpu_custom_call.1} parent=1719 // pred_fallthru
            _
        $region1720: #{tpu_custom_call.1} parent=35 // pred_fallthru
          _
        // Predicated region
        $region1721: #{tpu_custom_call.1} parent=35 // pred_check
          _
        $region1722: #{tpu_custom_call.1} parent=35 // pred_check_branch
          %2385 = sbr.rel (0) target = $region1724
        $region1723: #{tpu_custom_call.1} parent=35 // pred_region
          %s2387 = ssub.s32 2, 1
          loop: start=0, step=1, limit=1
          $region1725: #{tpu_custom_call.1} parent=1723 // loop_pre_header
            _
          $region1726: #{tpu_custom_call.1} parent=1723 // loop_header
            %s2389 = sphi 0, %s2393
            %p2390 = scmp.ge.s32.totalorder %s2389, 1
            %s2394 = sphi %s2379, %s2379
            %s2395 = sphi %s2380, %s2380
          $region1727: #{tpu_custom_call.1} parent=1723 // loop_header_branch
            %2392 = sbr.rel (%p2390) target = $region1731
          $region1728: #{tpu_custom_call.1} parent=1723 // loop_body
            %v2396 = vld [vmem:[%s2394] sm:%s2387]
            %2397 = vst [vmem:[%s2395] sm:%s2387] %v2396
          $region1729: #{tpu_custom_call.1} parent=1723 // loop_footer
            %s2393 = sadd.s32 1, %s2389
          $region1730: #{tpu_custom_call.1} parent=1723 // loop_footer_branch
            %2388 = sbr.rel target = $region1726
          $region1731: #{tpu_custom_call.1} parent=1723 // loop_exit
            _
        $region1724: #{tpu_custom_call.1} parent=35 // pred_fallthru
          _
        // Predicated region
        $region1743: #{tpu_custom_call.1} parent=35 // pred_check
          _
        $region1744: #{tpu_custom_call.1} parent=35 // pred_check_branch
          %2414 = sbr.rel (0) target = $region1746
        $region1745: #{tpu_custom_call.1} parent=35 // pred_region
          %2415 = vsyncadd %s2381, 16
        $region1746: #{tpu_custom_call.1} parent=35 // pred_fallthru
          _
        %s2416 = sadd.s32 %s226, 7
        %s2417 = sld [smem:[#allocation5 + %s2416]]
        %s2418 = scalar_lea.vmem %s1, %s2417
        %s2419 = scalar_lea.vmem [#allocation2], 57
        %s2420 = scalar_lea.sflag [#allocation3], 57
        // Predicated region
        $region1747: #{tpu_custom_call.1} parent=35 // pred_check
          _
        $region1748: #{tpu_custom_call.1} parent=35 // pred_check_branch
          %2422 = sbr.rel target = $region1750
        $region1749: #{tpu_custom_call.1} parent=35 // pred_region
          // Predicated region
          $region1762: #{tpu_custom_call.1} parent=1749 // pred_check
            _
          $region1763: #{tpu_custom_call.1} parent=1749 // pred_check_branch
            %2438 = sbr.rel (0) target = $region1765
          $region1764: #{tpu_custom_call.1} parent=1749 // pred_region
            %s2440 = ssub.s32 2, 1
            loop: start=0, step=1, limit=1
            $region1766: #{tpu_custom_call.1} parent=1764 // loop_pre_header
              _
            $region1767: #{tpu_custom_call.1} parent=1764 // loop_header
              %s2442 = sphi 0, %s2446
              %p2443 = scmp.ge.s32.totalorder %s2442, 1
              %s2447 = sphi %s2418, %s2418
              %s2448 = sphi %s2419, %s2419
            $region1768: #{tpu_custom_call.1} parent=1764 // loop_header_branch
              %2445 = sbr.rel (%p2443) target = $region1772
            $region1769: #{tpu_custom_call.1} parent=1764 // loop_body
              %v2449 = vld [vmem:[%s2447] sm:%s2440]
              %2450 = vst [vmem:[%s2448] sm:%s2440] %v2449
            $region1770: #{tpu_custom_call.1} parent=1764 // loop_footer
              %s2446 = sadd.s32 1, %s2442
            $region1771: #{tpu_custom_call.1} parent=1764 // loop_footer_branch
              %2441 = sbr.rel target = $region1767
            $region1772: #{tpu_custom_call.1} parent=1764 // loop_exit
              _
          $region1765: #{tpu_custom_call.1} parent=1749 // pred_fallthru
            _
        $region1750: #{tpu_custom_call.1} parent=35 // pred_fallthru
          _
        // Predicated region
        $region1751: #{tpu_custom_call.1} parent=35 // pred_check
          _
        $region1752: #{tpu_custom_call.1} parent=35 // pred_check_branch
          %2424 = sbr.rel (0) target = $region1754
        $region1753: #{tpu_custom_call.1} parent=35 // pred_region
          %s2426 = ssub.s32 2, 1
          loop: start=0, step=1, limit=1
          $region1755: #{tpu_custom_call.1} parent=1753 // loop_pre_header
            _
          $region1756: #{tpu_custom_call.1} parent=1753 // loop_header
            %s2428 = sphi 0, %s2432
            %p2429 = scmp.ge.s32.totalorder %s2428, 1
            %s2433 = sphi %s2418, %s2418
            %s2434 = sphi %s2419, %s2419
          $region1757: #{tpu_custom_call.1} parent=1753 // loop_header_branch
            %2431 = sbr.rel (%p2429) target = $region1761
          $region1758: #{tpu_custom_call.1} parent=1753 // loop_body
            %v2435 = vld [vmem:[%s2433] sm:%s2426]
            %2436 = vst [vmem:[%s2434] sm:%s2426] %v2435
          $region1759: #{tpu_custom_call.1} parent=1753 // loop_footer
            %s2432 = sadd.s32 1, %s2428
          $region1760: #{tpu_custom_call.1} parent=1753 // loop_footer_branch
            %2427 = sbr.rel target = $region1756
          $region1761: #{tpu_custom_call.1} parent=1753 // loop_exit
            _
        $region1754: #{tpu_custom_call.1} parent=35 // pred_fallthru
          _
        // Predicated region
        $region1773: #{tpu_custom_call.1} parent=35 // pred_check
          _
        $region1774: #{tpu_custom_call.1} parent=35 // pred_check_branch
          %2453 = sbr.rel (0) target = $region1776
        $region1775: #{tpu_custom_call.1} parent=35 // pred_region
          %2454 = vsyncadd %s2420, 16
        $region1776: #{tpu_custom_call.1} parent=35 // pred_fallthru
          _
        %s2455 = sadd.s32 %s266, 7
        %s2456 = sld [smem:[#allocation5 + %s2455]]
        %s2457 = scalar_lea.vmem %s1, %s2456
        %s2458 = scalar_lea.vmem [#allocation2], 58
        %s2459 = scalar_lea.sflag [#allocation3], 58
        // Predicated region
        $region1777: #{tpu_custom_call.1} parent=35 // pred_check
          _
        $region1778: #{tpu_custom_call.1} parent=35 // pred_check_branch
          %2461 = sbr.rel target = $region1780
        $region1779: #{tpu_custom_call.1} parent=35 // pred_region
          // Predicated region
          $region1792: #{tpu_custom_call.1} parent=1779 // pred_check
            _
          $region1793: #{tpu_custom_call.1} parent=1779 // pred_check_branch
            %2477 = sbr.rel (0) target = $region1795
          $region1794: #{tpu_custom_call.1} parent=1779 // pred_region
            %s2479 = ssub.s32 2, 1
            loop: start=0, step=1, limit=1
            $region1796: #{tpu_custom_call.1} parent=1794 // loop_pre_header
              _
            $region1797: #{tpu_custom_call.1} parent=1794 // loop_header
              %s2481 = sphi 0, %s2485
              %p2482 = scmp.ge.s32.totalorder %s2481, 1
              %s2486 = sphi %s2457, %s2457
              %s2487 = sphi %s2458, %s2458
            $region1798: #{tpu_custom_call.1} parent=1794 // loop_header_branch
              %2484 = sbr.rel (%p2482) target = $region1802
            $region1799: #{tpu_custom_call.1} parent=1794 // loop_body
              %v2488 = vld [vmem:[%s2486] sm:%s2479]
              %2489 = vst [vmem:[%s2487] sm:%s2479] %v2488
            $region1800: #{tpu_custom_call.1} parent=1794 // loop_footer
              %s2485 = sadd.s32 1, %s2481
            $region1801: #{tpu_custom_call.1} parent=1794 // loop_footer_branch
              %2480 = sbr.rel target = $region1797
            $region1802: #{tpu_custom_call.1} parent=1794 // loop_exit
              _
          $region1795: #{tpu_custom_call.1} parent=1779 // pred_fallthru
            _
        $region1780: #{tpu_custom_call.1} parent=35 // pred_fallthru
          _
        // Predicated region
        $region1781: #{tpu_custom_call.1} parent=35 // pred_check
          _
        $region1782: #{tpu_custom_call.1} parent=35 // pred_check_branch
          %2463 = sbr.rel (0) target = $region1784
        $region1783: #{tpu_custom_call.1} parent=35 // pred_region
          %s2465 = ssub.s32 2, 1
          loop: start=0, step=1, limit=1
          $region1785: #{tpu_custom_call.1} parent=1783 // loop_pre_header
            _
          $region1786: #{tpu_custom_call.1} parent=1783 // loop_header
            %s2467 = sphi 0, %s2471
            %p2468 = scmp.ge.s32.totalorder %s2467, 1
            %s2472 = sphi %s2457, %s2457
            %s2473 = sphi %s2458, %s2458
          $region1787: #{tpu_custom_call.1} parent=1783 // loop_header_branch
            %2470 = sbr.rel (%p2468) target = $region1791
          $region1788: #{tpu_custom_call.1} parent=1783 // loop_body
            %v2474 = vld [vmem:[%s2472] sm:%s2465]
            %2475 = vst [vmem:[%s2473] sm:%s2465] %v2474
          $region1789: #{tpu_custom_call.1} parent=1783 // loop_footer
            %s2471 = sadd.s32 1, %s2467
          $region1790: #{tpu_custom_call.1} parent=1783 // loop_footer_branch
            %2466 = sbr.rel target = $region1786
          $region1791: #{tpu_custom_call.1} parent=1783 // loop_exit
            _
        $region1784: #{tpu_custom_call.1} parent=35 // pred_fallthru
          _
        // Predicated region
        $region1803: #{tpu_custom_call.1} parent=35 // pred_check
          _
        $region1804: #{tpu_custom_call.1} parent=35 // pred_check_branch
          %2492 = sbr.rel (0) target = $region1806
        $region1805: #{tpu_custom_call.1} parent=35 // pred_region
          %2493 = vsyncadd %s2459, 16
        $region1806: #{tpu_custom_call.1} parent=35 // pred_fallthru
          _
        %s2494 = sadd.s32 %s306, 7
        %s2495 = sld [smem:[#allocation5 + %s2494]]
        %s2496 = scalar_lea.vmem %s1, %s2495
        %s2497 = scalar_lea.vmem [#allocation2], 59
        %s2498 = scalar_lea.sflag [#allocation3], 59
        // Predicated region
        $region1807: #{tpu_custom_call.1} parent=35 // pred_check
          _
        $region1808: #{tpu_custom_call.1} parent=35 // pred_check_branch
          %2500 = sbr.rel target = $region1810
        $region1809: #{tpu_custom_call.1} parent=35 // pred_region
          // Predicated region
          $region1822: #{tpu_custom_call.1} parent=1809 // pred_check
            _
          $region1823: #{tpu_custom_call.1} parent=1809 // pred_check_branch
            %2516 = sbr.rel (0) target = $region1825
          $region1824: #{tpu_custom_call.1} parent=1809 // pred_region
            %s2518 = ssub.s32 2, 1
            loop: start=0, step=1, limit=1
            $region1826: #{tpu_custom_call.1} parent=1824 // loop_pre_header
              _
            $region1827: #{tpu_custom_call.1} parent=1824 // loop_header
              %s2520 = sphi 0, %s2524
              %p2521 = scmp.ge.s32.totalorder %s2520, 1
              %s2525 = sphi %s2496, %s2496
              %s2526 = sphi %s2497, %s2497
            $region1828: #{tpu_custom_call.1} parent=1824 // loop_header_branch
              %2523 = sbr.rel (%p2521) target = $region1832
            $region1829: #{tpu_custom_call.1} parent=1824 // loop_body
              %v2527 = vld [vmem:[%s2525] sm:%s2518]
              %2528 = vst [vmem:[%s2526] sm:%s2518] %v2527
            $region1830: #{tpu_custom_call.1} parent=1824 // loop_footer
              %s2524 = sadd.s32 1, %s2520
            $region1831: #{tpu_custom_call.1} parent=1824 // loop_footer_branch
              %2519 = sbr.rel target = $region1827
            $region1832: #{tpu_custom_call.1} parent=1824 // loop_exit
              _
          $region1825: #{tpu_custom_call.1} parent=1809 // pred_fallthru
            _
        $region1810: #{tpu_custom_call.1} parent=35 // pred_fallthru
          _
        // Predicated region
        $region1811: #{tpu_custom_call.1} parent=35 // pred_check
          _
        $region1812: #{tpu_custom_call.1} parent=35 // pred_check_branch
          %2502 = sbr.rel (0) target = $region1814
        $region1813: #{tpu_custom_call.1} parent=35 // pred_region
          %s2504 = ssub.s32 2, 1
          loop: start=0, step=1, limit=1
          $region1815: #{tpu_custom_call.1} parent=1813 // loop_pre_header
            _
          $region1816: #{tpu_custom_call.1} parent=1813 // loop_header
            %s2506 = sphi 0, %s2510
            %p2507 = scmp.ge.s32.totalorder %s2506, 1
            %s2511 = sphi %s2496, %s2496
            %s2512 = sphi %s2497, %s2497
          $region1817: #{tpu_custom_call.1} parent=1813 // loop_header_branch
            %2509 = sbr.rel (%p2507) target = $region1821
          $region1818: #{tpu_custom_call.1} parent=1813 // loop_body
            %v2513 = vld [vmem:[%s2511] sm:%s2504]
            %2514 = vst [vmem:[%s2512] sm:%s2504] %v2513
          $region1819: #{tpu_custom_call.1} parent=1813 // loop_footer
            %s2510 = sadd.s32 1, %s2506
          $region1820: #{tpu_custom_call.1} parent=1813 // loop_footer_branch
            %2505 = sbr.rel target = $region1816
          $region1821: #{tpu_custom_call.1} parent=1813 // loop_exit
            _
        $region1814: #{tpu_custom_call.1} parent=35 // pred_fallthru
          _
        // Predicated region
        $region1833: #{tpu_custom_call.1} parent=35 // pred_check
          _
        $region1834: #{tpu_custom_call.1} parent=35 // pred_check_branch
          %2531 = sbr.rel (0) target = $region1836
        $region1835: #{tpu_custom_call.1} parent=35 // pred_region
          %2532 = vsyncadd %s2498, 16
        $region1836: #{tpu_custom_call.1} parent=35 // pred_fallthru
          _
        %s2533 = sadd.s32 %s346, 7
        %s2534 = sld [smem:[#allocation5 + %s2533]]
        %s2535 = scalar_lea.vmem %s1, %s2534
        %s2536 = scalar_lea.vmem [#allocation2], 60
        %s2537 = scalar_lea.sflag [#allocation3], 60
        // Predicated region
        $region1837: #{tpu_custom_call.1} parent=35 // pred_check
          _
        $region1838: #{tpu_custom_call.1} parent=35 // pred_check_branch
          %2539 = sbr.rel target = $region1840
        $region1839: #{tpu_custom_call.1} parent=35 // pred_region
          // Predicated region
          $region1852: #{tpu_custom_call.1} parent=1839 // pred_check
            _
          $region1853: #{tpu_custom_call.1} parent=1839 // pred_check_branch
            %2555 = sbr.rel (0) target = $region1855
          $region1854: #{tpu_custom_call.1} parent=1839 // pred_region
            %s2557 = ssub.s32 2, 1
            loop: start=0, step=1, limit=1
            $region1856: #{tpu_custom_call.1} parent=1854 // loop_pre_header
              _
            $region1857: #{tpu_custom_call.1} parent=1854 // loop_header
              %s2559 = sphi 0, %s2563
              %p2560 = scmp.ge.s32.totalorder %s2559, 1
              %s2564 = sphi %s2535, %s2535
              %s2565 = sphi %s2536, %s2536
            $region1858: #{tpu_custom_call.1} parent=1854 // loop_header_branch
              %2562 = sbr.rel (%p2560) target = $region1862
            $region1859: #{tpu_custom_call.1} parent=1854 // loop_body
              %v2566 = vld [vmem:[%s2564] sm:%s2557]
              %2567 = vst [vmem:[%s2565] sm:%s2557] %v2566
            $region1860: #{tpu_custom_call.1} parent=1854 // loop_footer
              %s2563 = sadd.s32 1, %s2559
            $region1861: #{tpu_custom_call.1} parent=1854 // loop_footer_branch
              %2558 = sbr.rel target = $region1857
            $region1862: #{tpu_custom_call.1} parent=1854 // loop_exit
              _
          $region1855: #{tpu_custom_call.1} parent=1839 // pred_fallthru
            _
        $region1840: #{tpu_custom_call.1} parent=35 // pred_fallthru
          _
        // Predicated region
        $region1841: #{tpu_custom_call.1} parent=35 // pred_check
          _
        $region1842: #{tpu_custom_call.1} parent=35 // pred_check_branch
          %2541 = sbr.rel (0) target = $region1844
        $region1843: #{tpu_custom_call.1} parent=35 // pred_region
          %s2543 = ssub.s32 2, 1
          loop: start=0, step=1, limit=1
          $region1845: #{tpu_custom_call.1} parent=1843 // loop_pre_header
            _
          $region1846: #{tpu_custom_call.1} parent=1843 // loop_header
            %s2545 = sphi 0, %s2549
            %p2546 = scmp.ge.s32.totalorder %s2545, 1
            %s2550 = sphi %s2535, %s2535
            %s2551 = sphi %s2536, %s2536
          $region1847: #{tpu_custom_call.1} parent=1843 // loop_header_branch
            %2548 = sbr.rel (%p2546) target = $region1851
          $region1848: #{tpu_custom_call.1} parent=1843 // loop_body
            %v2552 = vld [vmem:[%s2550] sm:%s2543]
            %2553 = vst [vmem:[%s2551] sm:%s2543] %v2552
          $region1849: #{tpu_custom_call.1} parent=1843 // loop_footer
            %s2549 = sadd.s32 1, %s2545
          $region1850: #{tpu_custom_call.1} parent=1843 // loop_footer_branch
            %2544 = sbr.rel target = $region1846
          $region1851: #{tpu_custom_call.1} parent=1843 // loop_exit
            _
        $region1844: #{tpu_custom_call.1} parent=35 // pred_fallthru
          _
        // Predicated region
        $region1863: #{tpu_custom_call.1} parent=35 // pred_check
          _
        $region1864: #{tpu_custom_call.1} parent=35 // pred_check_branch
          %2570 = sbr.rel (0) target = $region1866
        $region1865: #{tpu_custom_call.1} parent=35 // pred_region
          %2571 = vsyncadd %s2537, 16
        $region1866: #{tpu_custom_call.1} parent=35 // pred_fallthru
          _
        %s2572 = sadd.s32 %s386, 7
        %s2573 = sld [smem:[#allocation5 + %s2572]]
        %s2574 = scalar_lea.vmem %s1, %s2573
        %s2575 = scalar_lea.vmem [#allocation2], 61
        %s2576 = scalar_lea.sflag [#allocation3], 61
        // Predicated region
        $region1867: #{tpu_custom_call.1} parent=35 // pred_check
          _
        $region1868: #{tpu_custom_call.1} parent=35 // pred_check_branch
          %2578 = sbr.rel target = $region1870
        $region1869: #{tpu_custom_call.1} parent=35 // pred_region
          // Predicated region
          $region1882: #{tpu_custom_call.1} parent=1869 // pred_check
            _
          $region1883: #{tpu_custom_call.1} parent=1869 // pred_check_branch
            %2594 = sbr.rel (0) target = $region1885
          $region1884: #{tpu_custom_call.1} parent=1869 // pred_region
            %s2596 = ssub.s32 2, 1
            loop: start=0, step=1, limit=1
            $region1886: #{tpu_custom_call.1} parent=1884 // loop_pre_header
              _
            $region1887: #{tpu_custom_call.1} parent=1884 // loop_header
              %s2598 = sphi 0, %s2602
              %p2599 = scmp.ge.s32.totalorder %s2598, 1
              %s2603 = sphi %s2574, %s2574
              %s2604 = sphi %s2575, %s2575
            $region1888: #{tpu_custom_call.1} parent=1884 // loop_header_branch
              %2601 = sbr.rel (%p2599) target = $region1892
            $region1889: #{tpu_custom_call.1} parent=1884 // loop_body
              %v2605 = vld [vmem:[%s2603] sm:%s2596]
              %2606 = vst [vmem:[%s2604] sm:%s2596] %v2605
            $region1890: #{tpu_custom_call.1} parent=1884 // loop_footer
              %s2602 = sadd.s32 1, %s2598
            $region1891: #{tpu_custom_call.1} parent=1884 // loop_footer_branch
              %2597 = sbr.rel target = $region1887
            $region1892: #{tpu_custom_call.1} parent=1884 // loop_exit
              _
          $region1885: #{tpu_custom_call.1} parent=1869 // pred_fallthru
            _
        $region1870: #{tpu_custom_call.1} parent=35 // pred_fallthru
          _
        // Predicated region
        $region1871: #{tpu_custom_call.1} parent=35 // pred_check
          _
        $region1872: #{tpu_custom_call.1} parent=35 // pred_check_branch
          %2580 = sbr.rel (0) target = $region1874
        $region1873: #{tpu_custom_call.1} parent=35 // pred_region
          %s2582 = ssub.s32 2, 1
          loop: start=0, step=1, limit=1
          $region1875: #{tpu_custom_call.1} parent=1873 // loop_pre_header
            _
          $region1876: #{tpu_custom_call.1} parent=1873 // loop_header
            %s2584 = sphi 0, %s2588
            %p2585 = scmp.ge.s32.totalorder %s2584, 1
            %s2589 = sphi %s2574, %s2574
            %s2590 = sphi %s2575, %s2575
          $region1877: #{tpu_custom_call.1} parent=1873 // loop_header_branch
            %2587 = sbr.rel (%p2585) target = $region1881
          $region1878: #{tpu_custom_call.1} parent=1873 // loop_body
            %v2591 = vld [vmem:[%s2589] sm:%s2582]
            %2592 = vst [vmem:[%s2590] sm:%s2582] %v2591
          $region1879: #{tpu_custom_call.1} parent=1873 // loop_footer
            %s2588 = sadd.s32 1, %s2584
          $region1880: #{tpu_custom_call.1} parent=1873 // loop_footer_branch
            %2583 = sbr.rel target = $region1876
          $region1881: #{tpu_custom_call.1} parent=1873 // loop_exit
            _
        $region1874: #{tpu_custom_call.1} parent=35 // pred_fallthru
          _
        // Predicated region
        $region1893: #{tpu_custom_call.1} parent=35 // pred_check
          _
        $region1894: #{tpu_custom_call.1} parent=35 // pred_check_branch
          %2609 = sbr.rel (0) target = $region1896
        $region1895: #{tpu_custom_call.1} parent=35 // pred_region
          %2610 = vsyncadd %s2576, 16
        $region1896: #{tpu_custom_call.1} parent=35 // pred_fallthru
          _
        %s2611 = sadd.s32 %s426, 7
        %s2612 = sld [smem:[#allocation5 + %s2611]]
        %s2613 = scalar_lea.vmem %s1, %s2612
        %s2614 = scalar_lea.vmem [#allocation2], 62
        %s2615 = scalar_lea.sflag [#allocation3], 62
        // Predicated region
        $region1897: #{tpu_custom_call.1} parent=35 // pred_check
          _
        $region1898: #{tpu_custom_call.1} parent=35 // pred_check_branch
          %2617 = sbr.rel target = $region1900
        $region1899: #{tpu_custom_call.1} parent=35 // pred_region
          // Predicated region
          $region1912: #{tpu_custom_call.1} parent=1899 // pred_check
            _
          $region1913: #{tpu_custom_call.1} parent=1899 // pred_check_branch
            %2633 = sbr.rel (0) target = $region1915
          $region1914: #{tpu_custom_call.1} parent=1899 // pred_region
            %s2635 = ssub.s32 2, 1
            loop: start=0, step=1, limit=1
            $region1916: #{tpu_custom_call.1} parent=1914 // loop_pre_header
              _
            $region1917: #{tpu_custom_call.1} parent=1914 // loop_header
              %s2637 = sphi 0, %s2641
              %p2638 = scmp.ge.s32.totalorder %s2637, 1
              %s2642 = sphi %s2613, %s2613
              %s2643 = sphi %s2614, %s2614
            $region1918: #{tpu_custom_call.1} parent=1914 // loop_header_branch
              %2640 = sbr.rel (%p2638) target = $region1922
            $region1919: #{tpu_custom_call.1} parent=1914 // loop_body
              %v2644 = vld [vmem:[%s2642] sm:%s2635]
              %2645 = vst [vmem:[%s2643] sm:%s2635] %v2644
            $region1920: #{tpu_custom_call.1} parent=1914 // loop_footer
              %s2641 = sadd.s32 1, %s2637
            $region1921: #{tpu_custom_call.1} parent=1914 // loop_footer_branch
              %2636 = sbr.rel target = $region1917
            $region1922: #{tpu_custom_call.1} parent=1914 // loop_exit
              _
          $region1915: #{tpu_custom_call.1} parent=1899 // pred_fallthru
            _
        $region1900: #{tpu_custom_call.1} parent=35 // pred_fallthru
          _
        // Predicated region
        $region1901: #{tpu_custom_call.1} parent=35 // pred_check
          _
        $region1902: #{tpu_custom_call.1} parent=35 // pred_check_branch
          %2619 = sbr.rel (0) target = $region1904
        $region1903: #{tpu_custom_call.1} parent=35 // pred_region
          %s2621 = ssub.s32 2, 1
          loop: start=0, step=1, limit=1
          $region1905: #{tpu_custom_call.1} parent=1903 // loop_pre_header
            _
          $region1906: #{tpu_custom_call.1} parent=1903 // loop_header
            %s2623 = sphi 0, %s2627
            %p2624 = scmp.ge.s32.totalorder %s2623, 1
            %s2628 = sphi %s2613, %s2613
            %s2629 = sphi %s2614, %s2614
          $region1907: #{tpu_custom_call.1} parent=1903 // loop_header_branch
            %2626 = sbr.rel (%p2624) target = $region1911
          $region1908: #{tpu_custom_call.1} parent=1903 // loop_body
            %v2630 = vld [vmem:[%s2628] sm:%s2621]
            %2631 = vst [vmem:[%s2629] sm:%s2621] %v2630
          $region1909: #{tpu_custom_call.1} parent=1903 // loop_footer
            %s2627 = sadd.s32 1, %s2623
          $region1910: #{tpu_custom_call.1} parent=1903 // loop_footer_branch
            %2622 = sbr.rel target = $region1906
          $region1911: #{tpu_custom_call.1} parent=1903 // loop_exit
            _
        $region1904: #{tpu_custom_call.1} parent=35 // pred_fallthru
          _
        // Predicated region
        $region1923: #{tpu_custom_call.1} parent=35 // pred_check
          _
        $region1924: #{tpu_custom_call.1} parent=35 // pred_check_branch
          %2648 = sbr.rel (0) target = $region1926
        $region1925: #{tpu_custom_call.1} parent=35 // pred_region
          %2649 = vsyncadd %s2615, 16
        $region1926: #{tpu_custom_call.1} parent=35 // pred_fallthru
          _
        %s2650 = sadd.s32 %s466, 7
        %s2651 = sld [smem:[#allocation5 + %s2650]]
        %s2652 = scalar_lea.vmem %s1, %s2651
        %s2653 = scalar_lea.vmem [#allocation2], 63
        %s2654 = scalar_lea.sflag [#allocation3], 63
        // Predicated region
        $region1927: #{tpu_custom_call.1} parent=35 // pred_check
          _
        $region1928: #{tpu_custom_call.1} parent=35 // pred_check_branch
          %2656 = sbr.rel target = $region1930
        $region1929: #{tpu_custom_call.1} parent=35 // pred_region
          // Predicated region
          $region1942: #{tpu_custom_call.1} parent=1929 // pred_check
            _
          $region1943: #{tpu_custom_call.1} parent=1929 // pred_check_branch
            %2672 = sbr.rel (0) target = $region1945
          $region1944: #{tpu_custom_call.1} parent=1929 // pred_region
            %s2674 = ssub.s32 2, 1
            loop: start=0, step=1, limit=1
            $region1946: #{tpu_custom_call.1} parent=1944 // loop_pre_header
              _
            $region1947: #{tpu_custom_call.1} parent=1944 // loop_header
              %s2676 = sphi 0, %s2680
              %p2677 = scmp.ge.s32.totalorder %s2676, 1
              %s2681 = sphi %s2652, %s2652
              %s2682 = sphi %s2653, %s2653
            $region1948: #{tpu_custom_call.1} parent=1944 // loop_header_branch
              %2679 = sbr.rel (%p2677) target = $region1952
            $region1949: #{tpu_custom_call.1} parent=1944 // loop_body
              %v2683 = vld [vmem:[%s2681] sm:%s2674]
              %2684 = vst [vmem:[%s2682] sm:%s2674] %v2683
            $region1950: #{tpu_custom_call.1} parent=1944 // loop_footer
              %s2680 = sadd.s32 1, %s2676
            $region1951: #{tpu_custom_call.1} parent=1944 // loop_footer_branch
              %2675 = sbr.rel target = $region1947
            $region1952: #{tpu_custom_call.1} parent=1944 // loop_exit
              _
          $region1945: #{tpu_custom_call.1} parent=1929 // pred_fallthru
            _
        $region1930: #{tpu_custom_call.1} parent=35 // pred_fallthru
          _
        // Predicated region
        $region1931: #{tpu_custom_call.1} parent=35 // pred_check
          _
        $region1932: #{tpu_custom_call.1} parent=35 // pred_check_branch
          %2658 = sbr.rel (0) target = $region1934
        $region1933: #{tpu_custom_call.1} parent=35 // pred_region
          %s2660 = ssub.s32 2, 1
          loop: start=0, step=1, limit=1
          $region1935: #{tpu_custom_call.1} parent=1933 // loop_pre_header
            _
          $region1936: #{tpu_custom_call.1} parent=1933 // loop_header
            %s2662 = sphi 0, %s2666
            %p2663 = scmp.ge.s32.totalorder %s2662, 1
            %s2667 = sphi %s2652, %s2652
            %s2668 = sphi %s2653, %s2653
          $region1937: #{tpu_custom_call.1} parent=1933 // loop_header_branch
            %2665 = sbr.rel (%p2663) target = $region1941
          $region1938: #{tpu_custom_call.1} parent=1933 // loop_body
            %v2669 = vld [vmem:[%s2667] sm:%s2660]
            %2670 = vst [vmem:[%s2668] sm:%s2660] %v2669
          $region1939: #{tpu_custom_call.1} parent=1933 // loop_footer
            %s2666 = sadd.s32 1, %s2662
          $region1940: #{tpu_custom_call.1} parent=1933 // loop_footer_branch
            %2661 = sbr.rel target = $region1936
          $region1941: #{tpu_custom_call.1} parent=1933 // loop_exit
            _
        $region1934: #{tpu_custom_call.1} parent=35 // pred_fallthru
          _
        // Predicated region
        $region1953: #{tpu_custom_call.1} parent=35 // pred_check
          _
        $region1954: #{tpu_custom_call.1} parent=35 // pred_check_branch
          %2687 = sbr.rel (0) target = $region1956
        $region1955: #{tpu_custom_call.1} parent=35 // pred_region
          %2688 = vsyncadd %s2654, 16
        $region1956: #{tpu_custom_call.1} parent=35 // pred_fallthru
          _
        %s2689 = smul.u32 1, 1
        %s2690 = sshll.u32 %s2689, 4
        %2691 = dma.done [#allocation3], %s2690
        %s2692 = sshll.u32 %s2689, 4
        %2693 = dma.done %s230, %s2692
        %s2694 = sshll.u32 %s2689, 4
        %2695 = dma.done %s270, %s2694
        %s2696 = sshll.u32 %s2689, 4
        %2697 = dma.done %s310, %s2696
        %s2698 = sshll.u32 %s2689, 4
        %2699 = dma.done %s350, %s2698
        %s2700 = sshll.u32 %s2689, 4
        %2701 = dma.done %s390, %s2700
        %s2702 = sshll.u32 %s2689, 4
        %2703 = dma.done %s430, %s2702
        %s2704 = sshll.u32 %s2689, 4
        %2705 = dma.done %s470, %s2704
        %s2706 = sshll.u32 %s2689, 4
        %2707 = dma.done %s509, %s2706
        %s2708 = sshll.u32 %s2689, 4
        %2709 = dma.done %s548, %s2708
        %s2710 = sshll.u32 %s2689, 4
        %2711 = dma.done %s587, %s2710
        %s2712 = sshll.u32 %s2689, 4
        %2713 = dma.done %s626, %s2712
        %s2714 = sshll.u32 %s2689, 4
        %2715 = dma.done %s665, %s2714
        %s2716 = sshll.u32 %s2689, 4
        %2717 = dma.done %s704, %s2716
        %s2718 = sshll.u32 %s2689, 4
        %2719 = dma.done %s743, %s2718
        %s2720 = sshll.u32 %s2689, 4
        %2721 = dma.done %s782, %s2720
        %s2722 = sshll.u32 %s2689, 4
        %2723 = dma.done %s821, %s2722
        %s2724 = sshll.u32 %s2689, 4
        %2725 = dma.done %s860, %s2724
        %s2726 = sshll.u32 %s2689, 4
        %2727 = dma.done %s899, %s2726
        %s2728 = sshll.u32 %s2689, 4
        %2729 = dma.done %s938, %s2728
        %s2730 = sshll.u32 %s2689, 4
        %2731 = dma.done %s977, %s2730
        %s2732 = sshll.u32 %s2689, 4
        %2733 = dma.done %s1016, %s2732
        %s2734 = sshll.u32 %s2689, 4
        %2735 = dma.done %s1055, %s2734
        %s2736 = sshll.u32 %s2689, 4
        %2737 = dma.done %s1094, %s2736
        %s2738 = sshll.u32 %s2689, 4
        %2739 = dma.done %s1133, %s2738
        %s2740 = sshll.u32 %s2689, 4
        %2741 = dma.done %s1172, %s2740
        %s2742 = sshll.u32 %s2689, 4
        %2743 = dma.done %s1211, %s2742
        %s2744 = sshll.u32 %s2689, 4
        %2745 = dma.done %s1250, %s2744
        %s2746 = sshll.u32 %s2689, 4
        %2747 = dma.done %s1289, %s2746
        %s2748 = sshll.u32 %s2689, 4
        %2749 = dma.done %s1328, %s2748
        %s2750 = sshll.u32 %s2689, 4
        %2751 = dma.done %s1367, %s2750
        %s2752 = sshll.u32 %s2689, 4
        %2753 = dma.done %s1406, %s2752
        %s2754 = sshll.u32 %s2689, 4
        %2755 = dma.done %s1445, %s2754
        %s2756 = sshll.u32 %s2689, 4
        %2757 = dma.done %s1484, %s2756
        %s2758 = sshll.u32 %s2689, 4
        %2759 = dma.done %s1523, %s2758
        %s2760 = sshll.u32 %s2689, 4
        %2761 = dma.done %s1562, %s2760
        %s2762 = sshll.u32 %s2689, 4
        %2763 = dma.done %s1601, %s2762
        %s2764 = sshll.u32 %s2689, 4
        %2765 = dma.done %s1640, %s2764
        %s2766 = sshll.u32 %s2689, 4
        %2767 = dma.done %s1679, %s2766
        %s2768 = sshll.u32 %s2689, 4
        %2769 = dma.done %s1718, %s2768
        %s2770 = sshll.u32 %s2689, 4
        %2771 = dma.done %s1757, %s2770
        %s2772 = sshll.u32 %s2689, 4
        %2773 = dma.done %s1796, %s2772
        %s2774 = sshll.u32 %s2689, 4
        %2775 = dma.done %s1835, %s2774
        %s2776 = sshll.u32 %s2689, 4
        %2777 = dma.done %s1874, %s2776
        %s2778 = sshll.u32 %s2689, 4
        %2779 = dma.done %s1913, %s2778
        %s2780 = sshll.u32 %s2689, 4
        %2781 = dma.done %s1952, %s2780
        %s2782 = sshll.u32 %s2689, 4
        %2783 = dma.done %s1991, %s2782
        %s2784 = sshll.u32 %s2689, 4
        %2785 = dma.done %s2030, %s2784
        %s2786 = sshll.u32 %s2689, 4
        %2787 = dma.done %s2069, %s2786
        %s2788 = sshll.u32 %s2689, 4
        %2789 = dma.done %s2108, %s2788
        %s2790 = sshll.u32 %s2689, 4
        %2791 = dma.done %s2147, %s2790
        %s2792 = sshll.u32 %s2689, 4
        %2793 = dma.done %s2186, %s2792
        %s2794 = sshll.u32 %s2689, 4
        %2795 = dma.done %s2225, %s2794
        %s2796 = sshll.u32 %s2689, 4
        %2797 = dma.done %s2264, %s2796
        %s2798 = sshll.u32 %s2689, 4
        %2799 = dma.done %s2303, %s2798
        %s2800 = sshll.u32 %s2689, 4
        %2801 = dma.done %s2342, %s2800
        %s2802 = sshll.u32 %s2689, 4
        %2803 = dma.done %s2381, %s2802
        %s2804 = sshll.u32 %s2689, 4
        %2805 = dma.done %s2420, %s2804
        %s2806 = sshll.u32 %s2689, 4
        %2807 = dma.done %s2459, %s2806
        %s2808 = sshll.u32 %s2689, 4
        %2809 = dma.done %s2498, %s2808
        %s2810 = sshll.u32 %s2689, 4
        %2811 = dma.done %s2537, %s2810
        %s2812 = sshll.u32 %s2689, 4
        %2813 = dma.done %s2576, %s2812
        %s2814 = sshll.u32 %s2689, 4
        %2815 = dma.done %s2615, %s2814
        %s2816 = sshll.u32 %s2689, 4
        %2817 = dma.done %s2654, %s2816
        %v2818 = vld [vmem:[#allocation2] sm:$0xff]
        %v2819 = vld [vmem:[#allocation2 + $0x8] sm:$0xff]
        %v2820 = vld [vmem:[#allocation2 + $0x10] sm:$0xff]
        %v2821 = vld [vmem:[#allocation2 + $0x18] sm:$0xff]
        %v2822 = vld [vmem:[#allocation2 + $0x20] sm:$0xff]
        %v2823 = vld [vmem:[#allocation2 + $0x28] sm:$0xff]
        %v2824 = vld [vmem:[#allocation2 + $0x30] sm:$0xff]
        %v2825 = vld [vmem:[#allocation2 + $0x38] sm:$0xff]
        %v2826 = vpack.c.bf16 %v2819, %v2818
        %v2827 = vpack.c.bf16 %v2821, %v2820
        %v2828 = vpack.c.bf16 %v2823, %v2822
        %v2829 = vpack.c.bf16 %v2825, %v2824
        %v2830 = vld [vmem:[%s2] sm:$0xf]
        %v2831 = vld [vmem:[%s2 + $0x4] sm:$0xf]
        %v2832 = vld [vmem:[%s2 + $0x8] sm:$0xf]
        %v2833 = vld [vmem:[%s2 + $0xc] sm:$0xf]
        %v2834 = vld [vmem:[%s2 + $0x10] sm:$0xf]
        %v2835 = vld [vmem:[%s2 + $0x14] sm:$0xf]
        %v2836 = vld [vmem:[%s2 + $0x18] sm:$0xf]
        %v2837 = vld [vmem:[%s2 + $0x1c] sm:$0xf]
        %v2838 = vld [vmem:[%s3] sm:$0x1]
        %v2840 = vperm.slane %v2838, 0
        %v2850 = vunpack.c.l.b16 %v2830
        %v2851 = vunpack.c.l.b16 %v2831
        %v2852 = vunpack.c.l.b16 %v2832
        %v2853 = vunpack.c.l.b16 %v2833
        %v2854 = vunpack.c.l.b16 %v2834
        %v2855 = vunpack.c.l.b16 %v2835
        %v2856 = vunpack.c.l.b16 %v2836
        %v2857 = vunpack.c.l.b16 %v2837
        %v2858 = vpack.c.b16 %v2851, %v2850
        %v2859 = vpack.c.b16 %v2853, %v2852
        %v2860 = vpack.c.b16 %v2855, %v2854
        %v2861 = vpack.c.b16 %v2857, %v2856
        %vm2866 = vcmask 523264
        %v2868 = vsel %vm2866, %v2826, 0
        %v2871 = vsel %vm2866, %v2827, 0
        %v2874 = vsel %vm2866, %v2828, 0
        %v2877 = vsel %vm2866, %v2829, 0
        %2879 = vmatpush.bf16.msra.mxu0 0
        %2880 = vmatpush.bf16.msra.mxu0 0
        %2881 = vmatpush.bf16.msra.mxu0 0
        %2882 = vmatpush.bf16.msra.mxu0 0
        %2883 = vmatpush.bf16.msra.mxu0 %v2861
        %2884 = vmatpush.bf16.msra.mxu0 %v2860
        %2885 = vmatpush.bf16.msra.mxu0 %v2859
        %2886 = vmatpush.bf16.msra.mxu0 %v2858
        %2887 = vmatmul.bf16.gmra.mxu0 %v2868
        %v2888 = vpop.f32.mrf.mxu0
        %v2889 = vadd.f32 %v2840, %v2888
        %v2890 = vpop.f32.mrf.mxu0
        %v2891 = vadd.f32 %v2840, %v2890
        %2892 = vmatmul.bf16.gmra.mxu0 %v2871
        %v2893 = vpop.f32.mrf.mxu0
        %v2894 = vadd.f32 %v2840, %v2893
        %v2895 = vpop.f32.mrf.mxu0
        %v2896 = vadd.f32 %v2840, %v2895
        %2897 = vmatmul.bf16.gmra.mxu0 %v2874
        %v2898 = vpop.f32.mrf.mxu0
        %v2899 = vadd.f32 %v2840, %v2898
        %v2900 = vpop.f32.mrf.mxu0
        %v2901 = vadd.f32 %v2840, %v2900
        %2902 = vmatmul.bf16.gmra.mxu0 %v2877
        %v2903 = vpop.f32.mrf.mxu0
        %v2904 = vadd.f32 %v2840, %v2903
        %v2905 = vpop.f32.mrf.mxu0
        %v2906 = vadd.f32 %v2840, %v2905
        %2907 = vdwg.mxu0
        %v2908 = vmax.f32 %v2889, 0.0
        %v2909 = vmax.f32 %v2891, 0.0
        %v2910 = vmax.f32 %v2894, 0.0
        %v2911 = vmax.f32 %v2896, 0.0
        %v2912 = vmax.f32 %v2899, 0.0
        %v2913 = vmax.f32 %v2901, 0.0
        %v2914 = vmax.f32 %v2904, 0.0
        %v2915 = vmax.f32 %v2906, 0.0
        %v2916 = vmax.f32 %v2908, %v2909
        %v2917 = vmax.f32 %v2916, %v2910
        %v2918 = vmax.f32 %v2917, %v2911
        %v2919 = vmax.f32 %v2918, %v2912
        %v2920 = vmax.f32 %v2919, %v2913
        %v2921 = vmax.f32 %v2920, %v2914
        %v2922 = vmax.f32 %v2921, %v2915
        %v2923 = vpack.c.bf16 %v2922, %v2922
        %v2924 = vld [vmem:[%s4] sm:$0xf]
        %v2925 = vld [vmem:[%s4 + $0x4] sm:$0xf]
        %v2926 = vld [vmem:[%s4 + $0x8] sm:$0xf]
        %v2927 = vld [vmem:[%s4 + $0xc] sm:$0xf]
        %v2928 = vld [vmem:[%s4 + $0x10] sm:$0xf]
        %v2929 = vld [vmem:[%s4 + $0x14] sm:$0xf]
        %v2930 = vld [vmem:[%s4 + $0x18] sm:$0xf]
        %v2931 = vld [vmem:[%s4 + $0x1c] sm:$0xf]
        %v2932 = vld [vmem:[%s4 + $0x20] sm:$0xf]
        %v2933 = vld [vmem:[%s4 + $0x24] sm:$0xf]
        %v2934 = vld [vmem:[%s4 + $0x28] sm:$0xf]
        %v2935 = vld [vmem:[%s4 + $0x2c] sm:$0xf]
        %v2936 = vld [vmem:[%s4 + $0x30] sm:$0xf]
        %v2937 = vld [vmem:[%s4 + $0x34] sm:$0xf]
        %v2938 = vld [vmem:[%s4 + $0x38] sm:$0xf]
        %v2939 = vld [vmem:[%s4 + $0x3c] sm:$0xf]
        %v2940 = vld [vmem:[%s5] sm:$0x1]
        %v2942 = vperm.slane %v2940, 0
        %v2960 = vunpack.c.l.b16 %v2924
        %v2961 = vunpack.c.l.b16 %v2925
        %v2962 = vunpack.c.l.b16 %v2926
        %v2963 = vunpack.c.l.b16 %v2927
        %v2964 = vunpack.c.l.b16 %v2928
        %v2965 = vunpack.c.l.b16 %v2929
        %v2966 = vunpack.c.l.b16 %v2930
        %v2967 = vunpack.c.l.b16 %v2931
        %v2968 = vunpack.c.l.b16 %v2932
        %v2969 = vunpack.c.l.b16 %v2933
        %v2970 = vunpack.c.l.b16 %v2934
        %v2971 = vunpack.c.l.b16 %v2935
        %v2972 = vunpack.c.l.b16 %v2936
        %v2973 = vunpack.c.l.b16 %v2937
        %v2974 = vunpack.c.l.b16 %v2938
        %v2975 = vunpack.c.l.b16 %v2939
        %v2976 = vpack.c.b16 %v2961, %v2960
        %v2977 = vpack.c.b16 %v2963, %v2962
        %v2978 = vpack.c.b16 %v2965, %v2964
        %v2979 = vpack.c.b16 %v2967, %v2966
        %v2980 = vpack.c.b16 %v2969, %v2968
        %v2981 = vpack.c.b16 %v2971, %v2970
        %v2982 = vpack.c.b16 %v2973, %v2972
        %v2983 = vpack.c.b16 %v2975, %v2974
        %2992 = vmatpush.bf16.msra.mxu0 %v2983
        %2993 = vmatpush.bf16.msra.mxu0 %v2982
        %2994 = vmatpush.bf16.msra.mxu0 %v2981
        %2995 = vmatpush.bf16.msra.mxu0 %v2980
        %2996 = vmatpush.bf16.msra.mxu0 %v2979
        %2997 = vmatpush.bf16.msra.mxu0 %v2978
        %2998 = vmatpush.bf16.msra.mxu0 %v2977
        %2999 = vmatpush.bf16.msra.mxu0 %v2976
        %3000 = vmatmul.bf16.gmra.mxu0 %v2923
        %v3001 = vpop.f32.mrf.mxu0
        %v3002 = vadd.f32 %v2942, %v3001
        %v3003 = vpop.f32.mrf.mxu0
        %3004 = vdwg.mxu0
        %3005 = vst [vmem:[%s185] sm:$0xff] %v3002
        %s3006 = sand.u32 %s120, 1
        %s3007 = scalar_lea.sflag [#allocation7], %s3006
        %s3008 = sand.u32 %s120, 1
        %s3009 = smul.addr %s3008, 8
        %s3010 = scalar_lea.vmem [#allocation6], %s3009
        // Predicated region
        $region1957: #{tpu_custom_call.1} parent=35 // pred_check
          %p3011 = pneg %p130
        $region1958: #{tpu_custom_call.1} parent=35 // pred_check_branch
          %3013 = sbr.rel (%p3011) target = $region1960
        $region1959: #{tpu_custom_call.1} parent=35 // pred_region
          %3015 = vsyncadd %s3007, 0
          %s3016 = smul.addr %s28, 8
          %s3017 = scalar_lea.hbm %s6, %s3016
          %s3019 = sshll.u32 %s3010, 4
          %s3020 = int_to_ptr.vmem [resolvable:$true] %s3019
          %s3021 = sshll.u32 %s3017, 4
          %s3022 = int_to_ptr.hbm [resolvable:$true] %s3021
          %3024 = dma.vmem_to_hbm [thread:$0]  %s3020, 128, %s3022, %s3007
        $region1960: #{tpu_custom_call.1} parent=35 // pred_fallthru
          _
      $region36: #{tpu_custom_call.1} parent=5 // pred_fallthru
        _
      %p3025 = scmp.le.s32.totalorder 2, %s23
      // Predicated region
      $region1961: #{tpu_custom_call.1} parent=5 // pred_check
        %p3026 = pneg %p3025
      $region1962: #{tpu_custom_call.1} parent=5 // pred_check_branch
        %3028 = sbr.rel (%p3026) target = $region1964
      $region1963: #{tpu_custom_call.1} parent=5 // pred_region
        %s3029 = ssub.s32 %s23, 2
        // Predicated region
        $region1965: #{tpu_custom_call.1} parent=1963 // pred_check
          %p3030 = pneg %p136
        $region1966: #{tpu_custom_call.1} parent=1963 // pred_check_branch
          %3032 = sbr.rel (%p3030) target = $region1968
        $region1967: #{tpu_custom_call.1} parent=1963 // pred_region
          %s3033 = sand.u32 %s121, 1
          %s3034 = scalar_lea.sflag [#allocation7], %s3033
          %s3035 = sand.u32 %s121, 1
          %s3036 = smul.addr %s3035, 8
          %s3037 = scalar_lea.vmem [#allocation6], %s3036
          %3039 = dma.done %s3034, 128
        $region1968: #{tpu_custom_call.1} parent=1963 // pred_fallthru
          _
      $region1964: #{tpu_custom_call.1} parent=5 // pred_fallthru
        _
    $region6: #{tpu_custom_call.1} parent=1 // loop_footer
      %s27 = sadd.s32 1, %s23
    $region7: #{tpu_custom_call.1} parent=1 // loop_footer_branch
      %22 = sbr.rel target = $region3
    $region8: #{tpu_custom_call.1} parent=1 // loop_exit
      _
    %3040 = vsyncpa [#allocation7], 1
    %s3041 = scalar_lea.sflag [#allocation7], 1
    %3042 = vsyncpa %s3041, 1
  %3043 = vsyncmov [#allocation3]
  %s3044 = vpop.sfrf %3043
  %p3045 = scmp.eq.s32.totalorder %s3044, 0
  %p3046 = pneg %p3045
  %3048 = shalt.err (%p3046)
  %s3049 = scalar_lea.sflag [#allocation3], 1
  %3050 = vsyncmov %s3049
  %s3051 = vpop.sfrf %3050
  %p3052 = scmp.eq.s32.totalorder %s3051, 0
  %p3053 = pneg %p3052
  %3055 = shalt.err (%p3053)
  %s3056 = scalar_lea.sflag [#allocation3], 2
  %3057 = vsyncmov %s3056
  %s3058 = vpop.sfrf %3057
  %p3059 = scmp.eq.s32.totalorder %s3058, 0
  %p3060 = pneg %p3059
  %3062 = shalt.err (%p3060)
  %s3063 = scalar_lea.sflag [#allocation3], 3
  %3064 = vsyncmov %s3063
  %s3065 = vpop.sfrf %3064
  %p3066 = scmp.eq.s32.totalorder %s3065, 0
  %p3067 = pneg %p3066
  %3069 = shalt.err (%p3067)
  %s3070 = scalar_lea.sflag [#allocation3], 4
  %3071 = vsyncmov %s3070
  %s3072 = vpop.sfrf %3071
  %p3073 = scmp.eq.s32.totalorder %s3072, 0
  %p3074 = pneg %p3073
  %3076 = shalt.err (%p3074)
  %s3077 = scalar_lea.sflag [#allocation3], 5
  %3078 = vsyncmov %s3077
  %s3079 = vpop.sfrf %3078
  %p3080 = scmp.eq.s32.totalorder %s3079, 0
  %p3081 = pneg %p3080
  %3083 = shalt.err (%p3081)
  %s3084 = scalar_lea.sflag [#allocation3], 6
  %3085 = vsyncmov %s3084
  %s3086 = vpop.sfrf %3085
  %p3087 = scmp.eq.s32.totalorder %s3086, 0
  %p3088 = pneg %p3087
  %3090 = shalt.err (%p3088)
  %s3091 = scalar_lea.sflag [#allocation3], 7
  %3092 = vsyncmov %s3091
  %s3093 = vpop.sfrf %3092
  %p3094 = scmp.eq.s32.totalorder %s3093, 0
  %p3095 = pneg %p3094
  %3097 = shalt.err (%p3095)
  %s3098 = scalar_lea.sflag [#allocation3], 8
  %3099 = vsyncmov %s3098
  %s3100 = vpop.sfrf %3099
  %p3101 = scmp.eq.s32.totalorder %s3100, 0
  %p3102 = pneg %p3101
  %3104 = shalt.err (%p3102)
  %s3105 = scalar_lea.sflag [#allocation3], 9
  %3106 = vsyncmov %s3105
  %s3107 = vpop.sfrf %3106
  %p3108 = scmp.eq.s32.totalorder %s3107, 0
  %p3109 = pneg %p3108
  %3111 = shalt.err (%p3109)
  %s3112 = scalar_lea.sflag [#allocation3], 10
  %3113 = vsyncmov %s3112
  %s3114 = vpop.sfrf %3113
  %p3115 = scmp.eq.s32.totalorder %s3114, 0
  %p3116 = pneg %p3115
  %3118 = shalt.err (%p3116)
  %s3119 = scalar_lea.sflag [#allocation3], 11
  %3120 = vsyncmov %s3119
  %s3121 = vpop.sfrf %3120
  %p3122 = scmp.eq.s32.totalorder %s3121, 0
  %p3123 = pneg %p3122
  %3125 = shalt.err (%p3123)
  %s3126 = scalar_lea.sflag [#allocation3], 12
  %3127 = vsyncmov %s3126
  %s3128 = vpop.sfrf %3127
  %p3129 = scmp.eq.s32.totalorder %s3128, 0
  %p3130 = pneg %p3129
  %3132 = shalt.err (%p3130)
  %s3133 = scalar_lea.sflag [#allocation3], 13
  %3134 = vsyncmov %s3133
  %s3135 = vpop.sfrf %3134
  %p3136 = scmp.eq.s32.totalorder %s3135, 0
  %p3137 = pneg %p3136
  %3139 = shalt.err (%p3137)
  %s3140 = scalar_lea.sflag [#allocation3], 14
  %3141 = vsyncmov %s3140
  %s3142 = vpop.sfrf %3141
  %p3143 = scmp.eq.s32.totalorder %s3142, 0
  %p3144 = pneg %p3143
  %3146 = shalt.err (%p3144)
  %s3147 = scalar_lea.sflag [#allocation3], 15
  %3148 = vsyncmov %s3147
  %s3149 = vpop.sfrf %3148
  %p3150 = scmp.eq.s32.totalorder %s3149, 0
  %p3151 = pneg %p3150
  %3153 = shalt.err (%p3151)
  %s3154 = scalar_lea.sflag [#allocation3], 16
  %3155 = vsyncmov %s3154
  %s3156 = vpop.sfrf %3155
  %p3157 = scmp.eq.s32.totalorder %s3156, 0
  %p3158 = pneg %p3157
  %3160 = shalt.err (%p3158)
  %s3161 = scalar_lea.sflag [#allocation3], 17
  %3162 = vsyncmov %s3161
  %s3163 = vpop.sfrf %3162
  %p3164 = scmp.eq.s32.totalorder %s3163, 0
  %p3165 = pneg %p3164
  %3167 = shalt.err (%p3165)
  %s3168 = scalar_lea.sflag [#allocation3], 18
  %3169 = vsyncmov %s3168
  %s3170 = vpop.sfrf %3169
  %p3171 = scmp.eq.s32.totalorder %s3170, 0
  %p3172 = pneg %p3171
  %3174 = shalt.err (%p3172)
  %s3175 = scalar_lea.sflag [#allocation3], 19
  %3176 = vsyncmov %s3175
  %s3177 = vpop.sfrf %3176
  %p3178 = scmp.eq.s32.totalorder %s3177, 0
  %p3179 = pneg %p3178
  %3181 = shalt.err (%p3179)
  %s3182 = scalar_lea.sflag [#allocation3], 20
  %3183 = vsyncmov %s3182
  %s3184 = vpop.sfrf %3183
  %p3185 = scmp.eq.s32.totalorder %s3184, 0
  %p3186 = pneg %p3185
  %3188 = shalt.err (%p3186)
  %s3189 = scalar_lea.sflag [#allocation3], 21
  %3190 = vsyncmov %s3189
  %s3191 = vpop.sfrf %3190
  %p3192 = scmp.eq.s32.totalorder %s3191, 0
  %p3193 = pneg %p3192
  %3195 = shalt.err (%p3193)
  %s3196 = scalar_lea.sflag [#allocation3], 22
  %3197 = vsyncmov %s3196
  %s3198 = vpop.sfrf %3197
  %p3199 = scmp.eq.s32.totalorder %s3198, 0
  %p3200 = pneg %p3199
  %3202 = shalt.err (%p3200)
  %s3203 = scalar_lea.sflag [#allocation3], 23
  %3204 = vsyncmov %s3203
  %s3205 = vpop.sfrf %3204
  %p3206 = scmp.eq.s32.totalorder %s3205, 0
  %p3207 = pneg %p3206
  %3209 = shalt.err (%p3207)
  %s3210 = scalar_lea.sflag [#allocation3], 24
  %3211 = vsyncmov %s3210
  %s3212 = vpop.sfrf %3211
  %p3213 = scmp.eq.s32.totalorder %s3212, 0
  %p3214 = pneg %p3213
  %3216 = shalt.err (%p3214)
  %s3217 = scalar_lea.sflag [#allocation3], 25
  %3218 = vsyncmov %s3217
  %s3219 = vpop.sfrf %3218
  %p3220 = scmp.eq.s32.totalorder %s3219, 0
  %p3221 = pneg %p3220
  %3223 = shalt.err (%p3221)
  %s3224 = scalar_lea.sflag [#allocation3], 26
  %3225 = vsyncmov %s3224
  %s3226 = vpop.sfrf %3225
  %p3227 = scmp.eq.s32.totalorder %s3226, 0
  %p3228 = pneg %p3227
  %3230 = shalt.err (%p3228)
  %s3231 = scalar_lea.sflag [#allocation3], 27
  %3232 = vsyncmov %s3231
  %s3233 = vpop.sfrf %3232
  %p3234 = scmp.eq.s32.totalorder %s3233, 0
  %p3235 = pneg %p3234
  %3237 = shalt.err (%p3235)
  %s3238 = scalar_lea.sflag [#allocation3], 28
  %3239 = vsyncmov %s3238
  %s3240 = vpop.sfrf %3239
  %p3241 = scmp.eq.s32.totalorder %s3240, 0
  %p3242 = pneg %p3241
  %3244 = shalt.err (%p3242)
  %s3245 = scalar_lea.sflag [#allocation3], 29
  %3246 = vsyncmov %s3245
  %s3247 = vpop.sfrf %3246
  %p3248 = scmp.eq.s32.totalorder %s3247, 0
  %p3249 = pneg %p3248
  %3251 = shalt.err (%p3249)
  %s3252 = scalar_lea.sflag [#allocation3], 30
  %3253 = vsyncmov %s3252
  %s3254 = vpop.sfrf %3253
  %p3255 = scmp.eq.s32.totalorder %s3254, 0
  %p3256 = pneg %p3255
  %3258 = shalt.err (%p3256)
  %s3259 = scalar_lea.sflag [#allocation3], 31
  %3260 = vsyncmov %s3259
  %s3261 = vpop.sfrf %3260
  %p3262 = scmp.eq.s32.totalorder %s3261, 0
  %p3263 = pneg %p3262
  %3265 = shalt.err (%p3263)
  %s3266 = scalar_lea.sflag [#allocation3], 32
  %3267 = vsyncmov %s3266
  %s3268 = vpop.sfrf %3267
  %p3269 = scmp.eq.s32.totalorder %s3268, 0
  %p3270 = pneg %p3269
  %3272 = shalt.err (%p3270)
  %s3273 = scalar_lea.sflag [#allocation3], 33
  %3274 = vsyncmov %s3273
  %s3275 = vpop.sfrf %3274
  %p3276 = scmp.eq.s32.totalorder %s3275, 0
  %p3277 = pneg %p3276
  %3279 = shalt.err (%p3277)
  %s3280 = scalar_lea.sflag [#allocation3], 34
  %3281 = vsyncmov %s3280
  %s3282 = vpop.sfrf %3281
  %p3283 = scmp.eq.s32.totalorder %s3282, 0
  %p3284 = pneg %p3283
  %3286 = shalt.err (%p3284)
  %s3287 = scalar_lea.sflag [#allocation3], 35
  %3288 = vsyncmov %s3287
  %s3289 = vpop.sfrf %3288
  %p3290 = scmp.eq.s32.totalorder %s3289, 0
  %p3291 = pneg %p3290
  %3293 = shalt.err (%p3291)
  %s3294 = scalar_lea.sflag [#allocation3], 36
  %3295 = vsyncmov %s3294
  %s3296 = vpop.sfrf %3295
  %p3297 = scmp.eq.s32.totalorder %s3296, 0
  %p3298 = pneg %p3297
  %3300 = shalt.err (%p3298)
  %s3301 = scalar_lea.sflag [#allocation3], 37
  %3302 = vsyncmov %s3301
  %s3303 = vpop.sfrf %3302
  %p3304 = scmp.eq.s32.totalorder %s3303, 0
  %p3305 = pneg %p3304
  %3307 = shalt.err (%p3305)
  %s3308 = scalar_lea.sflag [#allocation3], 38
  %3309 = vsyncmov %s3308
  %s3310 = vpop.sfrf %3309
  %p3311 = scmp.eq.s32.totalorder %s3310, 0
  %p3312 = pneg %p3311
  %3314 = shalt.err (%p3312)
  %s3315 = scalar_lea.sflag [#allocation3], 39
  %3316 = vsyncmov %s3315
  %s3317 = vpop.sfrf %3316
  %p3318 = scmp.eq.s32.totalorder %s3317, 0
  %p3319 = pneg %p3318
  %3321 = shalt.err (%p3319)
  %s3322 = scalar_lea.sflag [#allocation3], 40
  %3323 = vsyncmov %s3322
  %s3324 = vpop.sfrf %3323
  %p3325 = scmp.eq.s32.totalorder %s3324, 0
  %p3326 = pneg %p3325
  %3328 = shalt.err (%p3326)
  %s3329 = scalar_lea.sflag [#allocation3], 41
  %3330 = vsyncmov %s3329
  %s3331 = vpop.sfrf %3330
  %p3332 = scmp.eq.s32.totalorder %s3331, 0
  %p3333 = pneg %p3332
  %3335 = shalt.err (%p3333)
  %s3336 = scalar_lea.sflag [#allocation3], 42
  %3337 = vsyncmov %s3336
  %s3338 = vpop.sfrf %3337
  %p3339 = scmp.eq.s32.totalorder %s3338, 0
  %p3340 = pneg %p3339
  %3342 = shalt.err (%p3340)
  %s3343 = scalar_lea.sflag [#allocation3], 43
  %3344 = vsyncmov %s3343
  %s3345 = vpop.sfrf %3344
  %p3346 = scmp.eq.s32.totalorder %s3345, 0
  %p3347 = pneg %p3346
  %3349 = shalt.err (%p3347)
  %s3350 = scalar_lea.sflag [#allocation3], 44
  %3351 = vsyncmov %s3350
  %s3352 = vpop.sfrf %3351
  %p3353 = scmp.eq.s32.totalorder %s3352, 0
  %p3354 = pneg %p3353
  %3356 = shalt.err (%p3354)
  %s3357 = scalar_lea.sflag [#allocation3], 45
  %3358 = vsyncmov %s3357
  %s3359 = vpop.sfrf %3358
  %p3360 = scmp.eq.s32.totalorder %s3359, 0
  %p3361 = pneg %p3360
  %3363 = shalt.err (%p3361)
  %s3364 = scalar_lea.sflag [#allocation3], 46
  %3365 = vsyncmov %s3364
  %s3366 = vpop.sfrf %3365
  %p3367 = scmp.eq.s32.totalorder %s3366, 0
  %p3368 = pneg %p3367
  %3370 = shalt.err (%p3368)
  %s3371 = scalar_lea.sflag [#allocation3], 47
  %3372 = vsyncmov %s3371
  %s3373 = vpop.sfrf %3372
  %p3374 = scmp.eq.s32.totalorder %s3373, 0
  %p3375 = pneg %p3374
  %3377 = shalt.err (%p3375)
  %s3378 = scalar_lea.sflag [#allocation3], 48
  %3379 = vsyncmov %s3378
  %s3380 = vpop.sfrf %3379
  %p3381 = scmp.eq.s32.totalorder %s3380, 0
  %p3382 = pneg %p3381
  %3384 = shalt.err (%p3382)
  %s3385 = scalar_lea.sflag [#allocation3], 49
  %3386 = vsyncmov %s3385
  %s3387 = vpop.sfrf %3386
  %p3388 = scmp.eq.s32.totalorder %s3387, 0
  %p3389 = pneg %p3388
  %3391 = shalt.err (%p3389)
  %s3392 = scalar_lea.sflag [#allocation3], 50
  %3393 = vsyncmov %s3392
  %s3394 = vpop.sfrf %3393
  %p3395 = scmp.eq.s32.totalorder %s3394, 0
  %p3396 = pneg %p3395
  %3398 = shalt.err (%p3396)
  %s3399 = scalar_lea.sflag [#allocation3], 51
  %3400 = vsyncmov %s3399
  %s3401 = vpop.sfrf %3400
  %p3402 = scmp.eq.s32.totalorder %s3401, 0
  %p3403 = pneg %p3402
  %3405 = shalt.err (%p3403)
  %s3406 = scalar_lea.sflag [#allocation3], 52
  %3407 = vsyncmov %s3406
  %s3408 = vpop.sfrf %3407
  %p3409 = scmp.eq.s32.totalorder %s3408, 0
  %p3410 = pneg %p3409
  %3412 = shalt.err (%p3410)
  %s3413 = scalar_lea.sflag [#allocation3], 53
  %3414 = vsyncmov %s3413
  %s3415 = vpop.sfrf %3414
  %p3416 = scmp.eq.s32.totalorder %s3415, 0
  %p3417 = pneg %p3416
  %3419 = shalt.err (%p3417)
  %s3420 = scalar_lea.sflag [#allocation3], 54
  %3421 = vsyncmov %s3420
  %s3422 = vpop.sfrf %3421
  %p3423 = scmp.eq.s32.totalorder %s3422, 0
  %p3424 = pneg %p3423
  %3426 = shalt.err (%p3424)
  %s3427 = scalar_lea.sflag [#allocation3], 55
  %3428 = vsyncmov %s3427
  %s3429 = vpop.sfrf %3428
  %p3430 = scmp.eq.s32.totalorder %s3429, 0
  %p3431 = pneg %p3430
  %3433 = shalt.err (%p3431)
  %s3434 = scalar_lea.sflag [#allocation3], 56
  %3435 = vsyncmov %s3434
  %s3436 = vpop.sfrf %3435
  %p3437 = scmp.eq.s32.totalorder %s3436, 0
  %p3438 = pneg %p3437
  %3440 = shalt.err (%p3438)
  %s3441 = scalar_lea.sflag [#allocation3], 57
  %3442 = vsyncmov %s3441
  %s3443 = vpop.sfrf %3442
  %p3444 = scmp.eq.s32.totalorder %s3443, 0
  %p3445 = pneg %p3444
  %3447 = shalt.err (%p3445)
  %s3448 = scalar_lea.sflag [#allocation3], 58
  %3449 = vsyncmov %s3448
  %s3450 = vpop.sfrf %3449
  %p3451 = scmp.eq.s32.totalorder %s3450, 0
  %p3452 = pneg %p3451
  %3454 = shalt.err (%p3452)
  %s3455 = scalar_lea.sflag [#allocation3], 59
  %3456 = vsyncmov %s3455
  %s3457 = vpop.sfrf %3456
  %p3458 = scmp.eq.s32.totalorder %s3457, 0
  %p3459 = pneg %p3458
  %3461 = shalt.err (%p3459)
  %s3462 = scalar_lea.sflag [#allocation3], 60
  %3463 = vsyncmov %s3462
  %s3464 = vpop.sfrf %3463
  %p3465 = scmp.eq.s32.totalorder %s3464, 0
  %p3466 = pneg %p3465
  %3468 = shalt.err (%p3466)
  %s3469 = scalar_lea.sflag [#allocation3], 61
  %3470 = vsyncmov %s3469
  %s3471 = vpop.sfrf %3470
  %p3472 = scmp.eq.s32.totalorder %s3471, 0
  %p3473 = pneg %p3472
  %3475 = shalt.err (%p3473)
  %s3476 = scalar_lea.sflag [#allocation3], 62
  %3477 = vsyncmov %s3476
  %s3478 = vpop.sfrf %3477
  %p3479 = scmp.eq.s32.totalorder %s3478, 0
  %p3480 = pneg %p3479
  %3482 = shalt.err (%p3480)
  %s3483 = scalar_lea.sflag [#allocation3], 63
  %3484 = vsyncmov %s3483
  %s3485 = vpop.sfrf %3484
  %p3486 = scmp.eq.s32.totalorder %s3485, 0
  %p3487 = pneg %p3486
  %3489 = shalt.err (%p3487)

</llo_original>
